<compile_context>
chip_gen: v7x
topology: tpu7x:2x2x1
jax: 0.10.0
libtpu: 0.0.40
codegen_flags: <defaults>
</compile_context>

<pallas_src>
import functools

import jax
import jax.numpy as jnp
from jax import lax
from jax.experimental import pallas as pl
from jax.experimental.pallas import tpu as pltpu

BN_EPS = 1e-5
NUM_CLASSES = 7
STAGE_CHANNELS = [(3, 32), (32, 64), (64, 128), (128, 256)]


# ----------------------------------------------------------------------------
# In-kernel helpers (operate on values / VMEM refs).
# ----------------------------------------------------------------------------
def _maxpool2x2(y, B, Hs, Ws, C):
    """y: (B*Hs*Ws, C) f32 -> (B, Hs//2, Ws//2, C) 2x2/stride-2 max pool."""
    y = y.reshape(B * (Hs // 2), 2, Ws, C)
    y = jnp.max(y, axis=1)
    y = y.reshape(B * (Hs // 2) * (Ws // 2), 2, C)
    y = jnp.max(y, axis=1)
    return y.reshape(B, Hs // 2, Ws // 2, C)


def _conv_block(pad_ref, w_ref, p_ref, B, Hs, Ws, Cin):
    """3x3 conv(+bias) -> ReLU -> BatchNorm(eval) on a zero-padded bf16 tile.

    pad_ref: (B, Hs+2, Ws+2, Cin) bf16 scratch; halo zeroed, interior filled.
    w_ref  : (3, 3*Cin, Cout) bf16; per-ky weight block, rows ordered (kx, cin).
    p_ref  : (3, Cout) f32; rows = [conv bias, bn scale, bn bias].
    returns (B*Hs*Ws, Cout) f32 post-BN activation.
    """
    acc = None
    for ky in range(3):
        # Fold the 3 kx taps into the contraction dim: one K=3*Cin dot per ky
        # (the sub-128-lane concat is XLU/store work in otherwise idle slots).
        lhs = jnp.concatenate(
            [pad_ref[:, ky:ky + Hs, kx:kx + Ws, :] for kx in range(3)],
            axis=-1).reshape(B * Hs * Ws, 3 * Cin)
        d = jnp.dot(lhs, w_ref[ky], preferred_element_type=jnp.float32)
        acc = d if acc is None else acc + d
    # Conv(+bias) -> ReLU -> BN (same op order as the nn.Sequential).
    y = jnp.maximum(acc + p_ref[0:1, :], 0.0)
    return y * p_ref[1:2, :] + p_ref[2:3, :]


# ----------------------------------------------------------------------------
# Fused forward kernel: 4 conv stages + classifier, whole batch in one call.
# ----------------------------------------------------------------------------
def _fused_kernel(x_ref, w0_ref, p0_ref, w1_ref, p1_ref, w2_ref, p2_ref,
                  w3_ref, p3_ref, fcw_ref, fcb_ref, o_ref,
                  pad1, pad2, pad3, *, B, H, W):
    H1, W1 = H // 2, W // 2
    H2, W2 = H // 4, W // 4
    H3, W3 = H // 8, W // 8

    # No grid -> the body runs exactly once, so the halo scratches are zeroed
    # exactly once per launch (interiors are fully overwritten below).
    pad1[...] = jnp.zeros_like(pad1)
    pad2[...] = jnp.zeros_like(pad2)
    pad3[...] = jnp.zeros_like(pad3)

    # ---- stage 0: im2col'd 3x3 conv over 3 channels: ONE K=27 dot, M=B*H*W --
    lhs0 = x_ref[...].reshape(B * H * W, 27)                   # bf16 patches
    acc0 = jnp.dot(lhs0, w0_ref[...], preferred_element_type=jnp.float32)
    y0 = jnp.maximum(acc0 + p0_ref[0:1, :], 0.0) * p0_ref[1:2, :] + p0_ref[2:3, :]
    pad1[:, 1:H1 + 1, 1:W1 + 1, :] = _maxpool2x2(y0, B, H, W, 32).astype(pad1.dtype)

    # ---- stage 1: 32 -> 64 (per-ky K=96 dots), maxpool ----------------------
    y1 = _conv_block(pad1, w1_ref, p1_ref, B, H1, W1, 32)
    pad2[:, 1:H2 + 1, 1:W2 + 1, :] = _maxpool2x2(y1, B, H1, W1, 64).astype(pad2.dtype)

    # ---- stage 2: 64 -> 128 (per-ky K=192 dots), maxpool --------------------
    y2 = _conv_block(pad2, w2_ref, p2_ref, B, H2, W2, 64)
    pad3[:, 1:H3 + 1, 1:W3 + 1, :] = _maxpool2x2(y2, B, H2, W2, 128).astype(pad3.dtype)

    # ---- stage 3: 128 -> 256 (per-ky K=384 dots), global mean, fused FC -----
    y3 = _conv_block(pad3, w3_ref, p3_ref, B, H3, W3, 128)
    feat = jnp.mean(y3.reshape(B, H3 * W3, 256), axis=1)       # (B, 256) f32
    logits = jnp.dot(feat, fcw_ref[...],
                     preferred_element_type=jnp.float32) + fcb_ref[...]
    o_ref[...] = logits.astype(o_ref.dtype)                    # single batched store


def _fused_forward(x27, w0, p0, w1, p1, w2, p2, w3, p3, fcw, fcb, *, B, H, W):
    """x27: (B, H, W, 27) bf16 im2col'd input; returns (B, NUM_CLASSES) f32."""
    kernel = functools.partial(_fused_kernel, B=B, H=H, W=W)
    vmem_spec = lambda: pl.BlockSpec(memory_space=pltpu.MemorySpace.VMEM)
    return pl.pallas_call(
        kernel,
        out_shape=jax.ShapeDtypeStruct((B, NUM_CLASSES), jnp.float32),
        in_specs=[vmem_spec() for _ in range(11)],
        out_specs=vmem_spec(),
        scratch_shapes=[
            pltpu.VMEM((B, H // 2 + 2, W // 2 + 2, 32), jnp.bfloat16),   # stage-1 in
            pltpu.VMEM((B, H // 4 + 2, W // 4 + 2, 64), jnp.bfloat16),   # stage-2 in
            pltpu.VMEM((B, H // 8 + 2, W // 8 + 2, 128), jnp.bfloat16),  # stage-3 in
        ],
    )(x27, w0, p0, w1, p1, w2, p2, w3, p3, fcw, fcb)


# ----------------------------------------------------------------------------
# Parameter construction (deterministic, synthetic) and full forward pass.
# ----------------------------------------------------------------------------
def init_params(key):
    params = {}
    for i, (cin, cout) in enumerate(STAGE_CHANNELS):
        key, kw, kb, kg, kbe, km, kv = jax.random.split(key, 7)
        params[f"conv{i}_w"] = 0.1 * jax.random.normal(kw, (3, 3, cin, cout), jnp.float32)
        params[f"conv{i}_b"] = 0.05 * jax.random.normal(kb, (cout,), jnp.float32)
        params[f"bn{i}_gamma"] = jax.random.uniform(kg, (cout,), jnp.float32, 0.8, 1.2)
        params[f"bn{i}_beta"] = 0.1 * jax.random.normal(kbe, (cout,), jnp.float32)
        params[f"bn{i}_mean"] = 0.1 * jax.random.normal(km, (cout,), jnp.float32)
        params[f"bn{i}_var"] = jax.random.uniform(kv, (cout,), jnp.float32, 0.5, 1.5)
    key, kw, kb = jax.random.split(key, 3)
    params["fc_w"] = 0.1 * jax.random.normal(kw, (256, NUM_CLASSES), jnp.float32)
    params["fc_b"] = 0.05 * jax.random.normal(kb, (NUM_CLASSES,), jnp.float32)
    return params


@jax.jit
def simplified_st_model_forward(x, params):
    # x: (B, 1, 3, H, W) — same input convention as the PyTorch module.
    x = jnp.squeeze(x, axis=1)                 # (B, 3, H, W)
    x = jnp.transpose(x, (0, 2, 3, 1))         # NCHW -> NHWC
    B, H, W, _ = x.shape
    assert H % 8 == 0 and W % 8 == 0, "needs three 2x2 maxpools"

    # Stage-0 im2col (the only wrapper-side data prep): replaces nine K=3 MXU
    # dots with a single K=27 dot in-kernel.  Shifted taps of the zero-padded
    # image, channel-concat, rows ordered (ky, kx, cin).
    xp = jnp.pad(x, ((0, 0), (1, 1), (1, 1), (0, 0)))
    x27 = jnp.concatenate(
        [xp[:, ky:ky + H, kx:kx + W, :] for ky in range(3) for kx in range(3)],
        axis=-1).astype(jnp.bfloat16)          # (B, H, W, 27)

    def bn_fold(i):
        scale = params[f"bn{i}_gamma"] * lax.rsqrt(params[f"bn{i}_var"] + BN_EPS)
        bias = params[f"bn{i}_beta"] - params[f"bn{i}_mean"] * scale
        return jnp.stack([params[f"conv{i}_b"], scale, bias]).astype(jnp.float32)

    # Fold conv weights for the in-kernel contraction layouts (bf16 on the MXU):
    #   stage 0: (3,3,3,32)     -> (27, 32)        rows ordered (ky, kx, cin)
    #   stage i: (3,3,Cin,Cout) -> (3, 3*Cin, Cout) per-ky rows ordered (kx, cin)
    w0 = params["conv0_w"].reshape(27, 32).astype(jnp.bfloat16)
    w1 = params["conv1_w"].reshape(3, 3 * 32, 64).astype(jnp.bfloat16)
    w2 = params["conv2_w"].reshape(3, 3 * 64, 128).astype(jnp.bfloat16)
    w3 = params["conv3_w"].reshape(3, 3 * 128, 256).astype(jnp.bfloat16)

    fcw = params["fc_w"].astype(jnp.float32)
    fcb = params["fc_b"].reshape(1, NUM_CLASSES).astype(jnp.float32)

    return _fused_forward(x27, w0, bn_fold(0), w1, bn_fold(1), w2, bn_fold(2),
                          w3, bn_fold(3), fcw, fcb, B=B, H=H, W=W)


if __name__ == "__main__":
    key = jax.random.PRNGKey(0)
    kp, kx = jax.random.split(key)
    params = init_params(kp)
    # Small image size (16x16) instead of 224x224; everything else matches.
    x = jax.random.normal(kx, (2, 1, 3, 16, 16), jnp.float32)
    logits = simplified_st_model_forward(x, params)
    jax.block_until_ready(logits)
    assert logits.shape == (2, NUM_CLASSES)
    print("KERNEL_OK")
</pallas_src>

<mosaic_0001>
module attributes {stable_mosaic.version = 11 : i64} {
  func.func @_fused_kernel(%arg0: memref<2x16x16x27xbf16, #tpu.memory_space<vmem>>, %arg1: memref<27x32xbf16, #tpu.memory_space<vmem>>, %arg2: memref<3x32xf32, #tpu.memory_space<vmem>>, %arg3: memref<3x96x64xbf16, #tpu.memory_space<vmem>>, %arg4: memref<3x64xf32, #tpu.memory_space<vmem>>, %arg5: memref<3x192x128xbf16, #tpu.memory_space<vmem>>, %arg6: memref<3x128xf32, #tpu.memory_space<vmem>>, %arg7: memref<3x384x256xbf16, #tpu.memory_space<vmem>>, %arg8: memref<3x256xf32, #tpu.memory_space<vmem>>, %arg9: memref<256x7xf32, #tpu.memory_space<vmem>>, %arg10: memref<1x7xf32, #tpu.memory_space<vmem>>, %arg11: memref<2x7xf32, #tpu.memory_space<vmem>>, %arg12: memref<2x10x10x32xbf16, #tpu.memory_space<vmem>>, %arg13: memref<2x6x6x64xbf16, #tpu.memory_space<vmem>>, %arg14: memref<2x4x4x128xbf16, #tpu.memory_space<vmem>>) attributes {dimension_semantics = [], scalar_prefetch = 0 : i64, scratch_operands = 3 : i64, tpu.core_type = #tpu.core_type<tc>} {
    %cst = arith.constant 0.000000e+00 : bf16
    %0 = vector.broadcast %cst : bf16 to vector<2x10x10x32xbf16>
    %c0 = arith.constant 0 : index
    %c0_0 = arith.constant 0 : index
    %c0_1 = arith.constant 0 : index
    %c0_2 = arith.constant 0 : index
    %1 = vector.load %arg12[%c0, %c0_0, %c0_1, %c0_2] : memref<2x10x10x32xbf16, #tpu.memory_space<vmem>>, vector<2x10x10x32xbf16>
    tpu.vector_store %arg12[%c0, %c0_0, %c0_1, %c0_2], %0 {strides = array<i32>} : memref<2x10x10x32xbf16, #tpu.memory_space<vmem>>, vector<2x10x10x32xbf16>,
    %cst_3 = arith.constant 0.000000e+00 : bf16
    %2 = vector.broadcast %cst_3 : bf16 to vector<2x6x6x64xbf16>
    %c0_4 = arith.constant 0 : index
    %c0_5 = arith.constant 0 : index
    %c0_6 = arith.constant 0 : index
    %c0_7 = arith.constant 0 : index
    %3 = vector.load %arg13[%c0_4, %c0_5, %c0_6, %c0_7] : memref<2x6x6x64xbf16, #tpu.memory_space<vmem>>, vector<2x6x6x64xbf16>
    tpu.vector_store %arg13[%c0_4, %c0_5, %c0_6, %c0_7], %2 {strides = array<i32>} : memref<2x6x6x64xbf16, #tpu.memory_space<vmem>>, vector<2x6x6x64xbf16>,
    %cst_8 = arith.constant 0.000000e+00 : bf16
    %4 = vector.broadcast %cst_8 : bf16 to vector<2x4x4x128xbf16>
    %c0_9 = arith.constant 0 : index
    %c0_10 = arith.constant 0 : index
    %c0_11 = arith.constant 0 : index
    %c0_12 = arith.constant 0 : index
    %5 = vector.load %arg14[%c0_9, %c0_10, %c0_11, %c0_12] : memref<2x4x4x128xbf16, #tpu.memory_space<vmem>>, vector<2x4x4x128xbf16>
    tpu.vector_store %arg14[%c0_9, %c0_10, %c0_11, %c0_12], %4 {strides = array<i32>} : memref<2x4x4x128xbf16, #tpu.memory_space<vmem>>, vector<2x4x4x128xbf16>,
    %c0_13 = arith.constant 0 : index
    %c0_14 = arith.constant 0 : index
    %c0_15 = arith.constant 0 : index
    %c0_16 = arith.constant 0 : index
    %6 = vector.load %arg0[%c0_13, %c0_14, %c0_15, %c0_16] : memref<2x16x16x27xbf16, #tpu.memory_space<vmem>>, vector<2x16x16x27xbf16>
    %7 = vector.shape_cast %6 : vector<2x16x16x27xbf16> to vector<512x27xbf16>
    %c0_17 = arith.constant 0 : index
    %c0_18 = arith.constant 0 : index
    %8 = vector.load %arg1[%c0_17, %c0_18] : memref<27x32xbf16, #tpu.memory_space<vmem>>, vector<27x32xbf16>
    %cst_19 = arith.constant dense<0.000000e+00> : vector<512x32xf32>
    %9 = tpu.matmul %7, %8, %cst_19 {dimension_numbers = #tpu.dot_dimension_numbers<[1], [0], [0], [1], [0, 0, 1, 1], [], []>} : vector<512x27xbf16>, vector<27x32xbf16>, vector<512x32xf32> -> vector<512x32xf32>
    %c0_20 = arith.constant 0 : index
    %c0_21 = arith.constant 0 : index
    %10 = vector.load %arg2[%c0_20, %c0_21] : memref<3x32xf32, #tpu.memory_space<vmem>>, vector<1x32xf32>
    %11 = vector.broadcast %10 : vector<1x32xf32> to vector<512x32xf32>
    %12 = arith.addf %9, %11 : vector<512x32xf32>
    %cst_22 = arith.constant 0.000000e+00 : f32
    %13 = vector.broadcast %cst_22 : f32 to vector<512x32xf32>
    %14 = arith.maximumf %12, %13 : vector<512x32xf32>
    %c1 = arith.constant 1 : index
    %c0_23 = arith.constant 0 : index
    %15 = vector.load %arg2[%c1, %c0_23] : memref<3x32xf32, #tpu.memory_space<vmem>>, vector<1x32xf32>
    %16 = vector.broadcast %15 : vector<1x32xf32> to vector<512x32xf32>
    %17 = arith.mulf %14, %16 : vector<512x32xf32>
    %c2 = arith.constant 2 : index
    %c0_24 = arith.constant 0 : index
    %18 = vector.load %arg2[%c2, %c0_24] : memref<3x32xf32, #tpu.memory_space<vmem>>, vector<1x32xf32>
    %19 = vector.broadcast %18 : vector<1x32xf32> to vector<512x32xf32>
    %20 = arith.addf %17, %19 : vector<512x32xf32>
    %21 = vector.shape_cast %20 : vector<512x32xf32> to vector<16x2x16x32xf32>
    %cst_25 = arith.constant dense<0xFF800000> : vector<16x16x32xf32>
    %22 = vector.multi_reduction <maximumf>, %21, %cst_25 [1] : vector<16x2x16x32xf32> to vector<16x16x32xf32>
    %23 = vector.shape_cast %22 : vector<16x16x32xf32> to vector<128x2x32xf32>
    %cst_26 = arith.constant dense<0xFF800000> : vector<128x32xf32>
    %24 = vector.multi_reduction <maximumf>, %23, %cst_26 [1] : vector<128x2x32xf32> to vector<128x32xf32>
    %25 = vector.shape_cast %24 : vector<128x32xf32> to vector<2x8x8x32xf32>
    %26 = arith.truncf %25 : vector<2x8x8x32xf32> to vector<2x8x8x32xbf16>
    %c0_27 = arith.constant 0 : index
    %c1_28 = arith.constant 1 : index
    %c1_29 = arith.constant 1 : index
    %c0_30 = arith.constant 0 : index
    %27 = vector.load %arg12[%c0_27, %c1_28, %c1_29, %c0_30] : memref<2x10x10x32xbf16, #tpu.memory_space<vmem>>, vector<2x8x8x32xbf16>
    tpu.vector_store %arg12[%c0_27, %c1_28, %c1_29, %c0_30], %26 {strides = array<i32>} : memref<2x10x10x32xbf16, #tpu.memory_space<vmem>>, vector<2x8x8x32xbf16>,
    %c0_31 = arith.constant 0 : index
    %c0_32 = arith.constant 0 : index
    %c0_33 = arith.constant 0 : index
    %c0_34 = arith.constant 0 : index
    %28 = vector.load %arg12[%c0_31, %c0_32, %c0_33, %c0_34] : memref<2x10x10x32xbf16, #tpu.memory_space<vmem>>, vector<2x8x8x32xbf16>
    %c0_35 = arith.constant 0 : index
    %c0_36 = arith.constant 0 : index
    %c1_37 = arith.constant 1 : index
    %c0_38 = arith.constant 0 : index
    %29 = vector.load %arg12[%c0_35, %c0_36, %c1_37, %c0_38] : memref<2x10x10x32xbf16, #tpu.memory_space<vmem>>, vector<2x8x8x32xbf16>
    %c0_39 = arith.constant 0 : index
    %c0_40 = arith.constant 0 : index
    %c2_41 = arith.constant 2 : index
    %c0_42 = arith.constant 0 : index
    %30 = vector.load %arg12[%c0_39, %c0_40, %c2_41, %c0_42] : memref<2x10x10x32xbf16, #tpu.memory_space<vmem>>, vector<2x8x8x32xbf16>
    %31 = tpu.concatenate %28, %29, %30 in 3 : vector<2x8x8x32xbf16>, vector<2x8x8x32xbf16>, vector<2x8x8x32xbf16> -> vector<2x8x8x96xbf16>
    %32 = vector.shape_cast %31 : vector<2x8x8x96xbf16> to vector<128x96xbf16>
    %c0_43 = arith.constant 0 : index
    %c0_44 = arith.constant 0 : index
    %c0_45 = arith.constant 0 : index
    %33 = vector.load %arg3[%c0_43, %c0_44, %c0_45] : memref<3x96x64xbf16, #tpu.memory_space<vmem>>, vector<1x96x64xbf16>
    %34 = vector.shape_cast %33 : vector<1x96x64xbf16> to vector<96x64xbf16>
    %cst_46 = arith.constant dense<0.000000e+00> : vector<128x64xf32>
    %35 = tpu.matmul %32, %34, %cst_46 {dimension_numbers = #tpu.dot_dimension_numbers<[1], [0], [0], [1], [0, 0, 1, 1], [], []>} : vector<128x96xbf16>, vector<96x64xbf16>, vector<128x64xf32> -> vector<128x64xf32>
    %c0_47 = arith.constant 0 : index
    %c1_48 = arith.constant 1 : index
    %c0_49 = arith.constant 0 : index
    %c0_50 = arith.constant 0 : index
    %36 = vector.load %arg12[%c0_47, %c1_48, %c0_49, %c0_50] : memref<2x10x10x32xbf16, #tpu.memory_space<vmem>>, vector<2x8x8x32xbf16>
    %c0_51 = arith.constant 0 : index
    %c1_52 = arith.constant 1 : index
    %c1_53 = arith.constant 1 : index
    %c0_54 = arith.constant 0 : index
    %37 = vector.load %arg12[%c0_51, %c1_52, %c1_53, %c0_54] : memref<2x10x10x32xbf16, #tpu.memory_space<vmem>>, vector<2x8x8x32xbf16>
    %c0_55 = arith.constant 0 : index
    %c1_56 = arith.constant 1 : index
    %c2_57 = arith.constant 2 : index
    %c0_58 = arith.constant 0 : index
    %38 = vector.load %arg12[%c0_55, %c1_56, %c2_57, %c0_58] : memref<2x10x10x32xbf16, #tpu.memory_space<vmem>>, vector<2x8x8x32xbf16>
    %39 = tpu.concatenate %36, %37, %38 in 3 : vector<2x8x8x32xbf16>, vector<2x8x8x32xbf16>, vector<2x8x8x32xbf16> -> vector<2x8x8x96xbf16>
    %40 = vector.shape_cast %39 : vector<2x8x8x96xbf16> to vector<128x96xbf16>
    %c1_59 = arith.constant 1 : index
    %c0_60 = arith.constant 0 : index
    %c0_61 = arith.constant 0 : index
    %41 = vector.load %arg3[%c1_59, %c0_60, %c0_61] : memref<3x96x64xbf16, #tpu.memory_space<vmem>>, vector<1x96x64xbf16>
    %42 = vector.shape_cast %41 : vector<1x96x64xbf16> to vector<96x64xbf16>
    %cst_62 = arith.constant dense<0.000000e+00> : vector<128x64xf32>
    %43 = tpu.matmul %40, %42, %cst_62 {dimension_numbers = #tpu.dot_dimension_numbers<[1], [0], [0], [1], [0, 0, 1, 1], [], []>} : vector<128x96xbf16>, vector<96x64xbf16>, vector<128x64xf32> -> vector<128x64xf32>
    %44 = arith.addf %35, %43 : vector<128x64xf32>
    %c0_63 = arith.constant 0 : index
    %c2_64 = arith.constant 2 : index
    %c0_65 = arith.constant 0 : index
    %c0_66 = arith.constant 0 : index
    %45 = vector.load %arg12[%c0_63, %c2_64, %c0_65, %c0_66] : memref<2x10x10x32xbf16, #tpu.memory_space<vmem>>, vector<2x8x8x32xbf16>
    %c0_67 = arith.constant 0 : index
    %c2_68 = arith.constant 2 : index
    %c1_69 = arith.constant 1 : index
    %c0_70 = arith.constant 0 : index
    %46 = vector.load %arg12[%c0_67, %c2_68, %c1_69, %c0_70] : memref<2x10x10x32xbf16, #tpu.memory_space<vmem>>, vector<2x8x8x32xbf16>
    %c0_71 = arith.constant 0 : index
    %c2_72 = arith.constant 2 : index
    %c2_73 = arith.constant 2 : index
    %c0_74 = arith.constant 0 : index
    %47 = vector.load %arg12[%c0_71, %c2_72, %c2_73, %c0_74] : memref<2x10x10x32xbf16, #tpu.memory_space<vmem>>, vector<2x8x8x32xbf16>
    %48 = tpu.concatenate %45, %46, %47 in 3 : vector<2x8x8x32xbf16>, vector<2x8x8x32xbf16>, vector<2x8x8x32xbf16> -> vector<2x8x8x96xbf16>
    %49 = vector.shape_cast %48 : vector<2x8x8x96xbf16> to vector<128x96xbf16>
    %c2_75 = arith.constant 2 : index
    %c0_76 = arith.constant 0 : index
    %c0_77 = arith.constant 0 : index
    %50 = vector.load %arg3[%c2_75, %c0_76, %c0_77] : memref<3x96x64xbf16, #tpu.memory_space<vmem>>, vector<1x96x64xbf16>
    %51 = vector.shape_cast %50 : vector<1x96x64xbf16> to vector<96x64xbf16>
    %cst_78 = arith.constant dense<0.000000e+00> : vector<128x64xf32>
    %52 = tpu.matmul %49, %51, %cst_78 {dimension_numbers = #tpu.dot_dimension_numbers<[1], [0], [0], [1], [0, 0, 1, 1], [], []>} : vector<128x96xbf16>, vector<96x64xbf16>, vector<128x64xf32> -> vector<128x64xf32>
    %53 = arith.addf %44, %52 : vector<128x64xf32>
    %c0_79 = arith.constant 0 : index
    %c0_80 = arith.constant 0 : index
    %54 = vector.load %arg4[%c0_79, %c0_80] : memref<3x64xf32, #tpu.memory_space<vmem>>, vector<1x64xf32>
    %55 = vector.broadcast %54 : vector<1x64xf32> to vector<128x64xf32>
    %56 = arith.addf %53, %55 : vector<128x64xf32>
    %cst_81 = arith.constant 0.000000e+00 : f32
    %57 = vector.broadcast %cst_81 : f32 to vector<128x64xf32>
    %58 = arith.maximumf %56, %57 : vector<128x64xf32>
    %c1_82 = arith.constant 1 : index
    %c0_83 = arith.constant 0 : index
    %59 = vector.load %arg4[%c1_82, %c0_83] : memref<3x64xf32, #tpu.memory_space<vmem>>, vector<1x64xf32>
    %60 = vector.broadcast %59 : vector<1x64xf32> to vector<128x64xf32>
    %61 = arith.mulf %58, %60 : vector<128x64xf32>
    %c2_84 = arith.constant 2 : index
    %c0_85 = arith.constant 0 : index
    %62 = vector.load %arg4[%c2_84, %c0_85] : memref<3x64xf32, #tpu.memory_space<vmem>>, vector<1x64xf32>
    %63 = vector.broadcast %62 : vector<1x64xf32> to vector<128x64xf32>
    %64 = arith.addf %61, %63 : vector<128x64xf32>
    %65 = vector.shape_cast %64 : vector<128x64xf32> to vector<8x2x8x64xf32>
    %cst_86 = arith.constant dense<0xFF800000> : vector<8x8x64xf32>
    %66 = vector.multi_reduction <maximumf>, %65, %cst_86 [1] : vector<8x2x8x64xf32> to vector<8x8x64xf32>
    %67 = vector.shape_cast %66 : vector<8x8x64xf32> to vector<32x2x64xf32>
    %cst_87 = arith.constant dense<0xFF800000> : vector<32x64xf32>
    %68 = vector.multi_reduction <maximumf>, %67, %cst_87 [1] : vector<32x2x64xf32> to vector<32x64xf32>
    %69 = vector.shape_cast %68 : vector<32x64xf32> to vector<2x4x4x64xf32>
    %70 = arith.truncf %69 : vector<2x4x4x64xf32> to vector<2x4x4x64xbf16>
    %c0_88 = arith.constant 0 : index
    %c1_89 = arith.constant 1 : index
    %c1_90 = arith.constant 1 : index
    %c0_91 = arith.constant 0 : index
    %71 = vector.load %arg13[%c0_88, %c1_89, %c1_90, %c0_91] : memref<2x6x6x64xbf16, #tpu.memory_space<vmem>>, vector<2x4x4x64xbf16>
    tpu.vector_store %arg13[%c0_88, %c1_89, %c1_90, %c0_91], %70 {strides = array<i32>} : memref<2x6x6x64xbf16, #tpu.memory_space<vmem>>, vector<2x4x4x64xbf16>,
    %c0_92 = arith.constant 0 : index
    %c0_93 = arith.constant 0 : index
    %c0_94 = arith.constant 0 : index
    %c0_95 = arith.constant 0 : index
    %72 = vector.load %arg13[%c0_92, %c0_93, %c0_94, %c0_95] : memref<2x6x6x64xbf16, #tpu.memory_space<vmem>>, vector<2x4x4x64xbf16>
    %c0_96 = arith.constant 0 : index
    %c0_97 = arith.constant 0 : index
    %c1_98 = arith.constant 1 : index
    %c0_99 = arith.constant 0 : index
    %73 = vector.load %arg13[%c0_96, %c0_97, %c1_98, %c0_99] : memref<2x6x6x64xbf16, #tpu.memory_space<vmem>>, vector<2x4x4x64xbf16>
    %c0_100 = arith.constant 0 : index
    %c0_101 = arith.constant 0 : index
    %c2_102 = arith.constant 2 : index
    %c0_103 = arith.constant 0 : index
    %74 = vector.load %arg13[%c0_100, %c0_101, %c2_102, %c0_103] : memref<2x6x6x64xbf16, #tpu.memory_space<vmem>>, vector<2x4x4x64xbf16>
    %75 = tpu.concatenate %72, %73, %74 in 3 : vector<2x4x4x64xbf16>, vector<2x4x4x64xbf16>, vector<2x4x4x64xbf16> -> vector<2x4x4x192xbf16>
    %76 = vector.shape_cast %75 : vector<2x4x4x192xbf16> to vector<32x192xbf16>
    %c0_104 = arith.constant 0 : index
    %c0_105 = arith.constant 0 : index
    %c0_106 = arith.constant 0 : index
    %77 = vector.load %arg5[%c0_104, %c0_105, %c0_106] : memref<3x192x128xbf16, #tpu.memory_space<vmem>>, vector<1x192x128xbf16>
    %78 = vector.shape_cast %77 : vector<1x192x128xbf16> to vector<192x128xbf16>
    %cst_107 = arith.constant dense<0.000000e+00> : vector<32x128xf32>
    %79 = tpu.matmul %76, %78, %cst_107 {dimension_numbers = #tpu.dot_dimension_numbers<[1], [0], [0], [1], [0, 0, 1, 1], [], []>} : vector<32x192xbf16>, vector<192x128xbf16>, vector<32x128xf32> -> vector<32x128xf32>
    %c0_108 = arith.constant 0 : index
    %c1_109 = arith.constant 1 : index
    %c0_110 = arith.constant 0 : index
    %c0_111 = arith.constant 0 : index
    %80 = vector.load %arg13[%c0_108, %c1_109, %c0_110, %c0_111] : memref<2x6x6x64xbf16, #tpu.memory_space<vmem>>, vector<2x4x4x64xbf16>
    %c0_112 = arith.constant 0 : index
    %c1_113 = arith.constant 1 : index
    %c1_114 = arith.constant 1 : index
    %c0_115 = arith.constant 0 : index
    %81 = vector.load %arg13[%c0_112, %c1_113, %c1_114, %c0_115] : memref<2x6x6x64xbf16, #tpu.memory_space<vmem>>, vector<2x4x4x64xbf16>
    %c0_116 = arith.constant 0 : index
    %c1_117 = arith.constant 1 : index
    %c2_118 = arith.constant 2 : index
    %c0_119 = arith.constant 0 : index
    %82 = vector.load %arg13[%c0_116, %c1_117, %c2_118, %c0_119] : memref<2x6x6x64xbf16, #tpu.memory_space<vmem>>, vector<2x4x4x64xbf16>
    %83 = tpu.concatenate %80, %81, %82 in 3 : vector<2x4x4x64xbf16>, vector<2x4x4x64xbf16>, vector<2x4x4x64xbf16> -> vector<2x4x4x192xbf16>
    %84 = vector.shape_cast %83 : vector<2x4x4x192xbf16> to vector<32x192xbf16>
    %c1_120 = arith.constant 1 : index
    %c0_121 = arith.constant 0 : index
    %c0_122 = arith.constant 0 : index
    %85 = vector.load %arg5[%c1_120, %c0_121, %c0_122] : memref<3x192x128xbf16, #tpu.memory_space<vmem>>, vector<1x192x128xbf16>
    %86 = vector.shape_cast %85 : vector<1x192x128xbf16> to vector<192x128xbf16>
    %cst_123 = arith.constant dense<0.000000e+00> : vector<32x128xf32>
    %87 = tpu.matmul %84, %86, %cst_123 {dimension_numbers = #tpu.dot_dimension_numbers<[1], [0], [0], [1], [0, 0, 1, 1], [], []>} : vector<32x192xbf16>, vector<192x128xbf16>, vector<32x128xf32> -> vector<32x128xf32>
    %88 = arith.addf %79, %87 : vector<32x128xf32>
    %c0_124 = arith.constant 0 : index
    %c2_125 = arith.constant 2 : index
    %c0_126 = arith.constant 0 : index
    %c0_127 = arith.constant 0 : index
    %89 = vector.load %arg13[%c0_124, %c2_125, %c0_126, %c0_127] : memref<2x6x6x64xbf16, #tpu.memory_space<vmem>>, vector<2x4x4x64xbf16>
    %c0_128 = arith.constant 0 : index
    %c2_129 = arith.constant 2 : index
    %c1_130 = arith.constant 1 : index
    %c0_131 = arith.constant 0 : index
    %90 = vector.load %arg13[%c0_128, %c2_129, %c1_130, %c0_131] : memref<2x6x6x64xbf16, #tpu.memory_space<vmem>>, vector<2x4x4x64xbf16>
    %c0_132 = arith.constant 0 : index
    %c2_133 = arith.constant 2 : index
    %c2_134 = arith.constant 2 : index
    %c0_135 = arith.constant 0 : index
    %91 = vector.load %arg13[%c0_132, %c2_133, %c2_134, %c0_135] : memref<2x6x6x64xbf16, #tpu.memory_space<vmem>>, vector<2x4x4x64xbf16>
    %92 = tpu.concatenate %89, %90, %91 in 3 : vector<2x4x4x64xbf16>, vector<2x4x4x64xbf16>, vector<2x4x4x64xbf16> -> vector<2x4x4x192xbf16>
    %93 = vector.shape_cast %92 : vector<2x4x4x192xbf16> to vector<32x192xbf16>
    %c2_136 = arith.constant 2 : index
    %c0_137 = arith.constant 0 : index
    %c0_138 = arith.constant 0 : index
    %94 = vector.load %arg5[%c2_136, %c0_137, %c0_138] : memref<3x192x128xbf16, #tpu.memory_space<vmem>>, vector<1x192x128xbf16>
    %95 = vector.shape_cast %94 : vector<1x192x128xbf16> to vector<192x128xbf16>
    %cst_139 = arith.constant dense<0.000000e+00> : vector<32x128xf32>
    %96 = tpu.matmul %93, %95, %cst_139 {dimension_numbers = #tpu.dot_dimension_numbers<[1], [0], [0], [1], [0, 0, 1, 1], [], []>} : vector<32x192xbf16>, vector<192x128xbf16>, vector<32x128xf32> -> vector<32x128xf32>
    %97 = arith.addf %88, %96 : vector<32x128xf32>
    %c0_140 = arith.constant 0 : index
    %c0_141 = arith.constant 0 : index
    %98 = vector.load %arg6[%c0_140, %c0_141] : memref<3x128xf32, #tpu.memory_space<vmem>>, vector<1x128xf32>
    %99 = vector.broadcast %98 : vector<1x128xf32> to vector<32x128xf32>
    %100 = arith.addf %97, %99 : vector<32x128xf32>
    %cst_142 = arith.constant 0.000000e+00 : f32
    %101 = vector.broadcast %cst_142 : f32 to vector<32x128xf32>
    %102 = arith.maximumf %100, %101 : vector<32x128xf32>
    %c1_143 = arith.constant 1 : index
    %c0_144 = arith.constant 0 : index
    %103 = vector.load %arg6[%c1_143, %c0_144] : memref<3x128xf32, #tpu.memory_space<vmem>>, vector<1x128xf32>
    %104 = vector.broadcast %103 : vector<1x128xf32> to vector<32x128xf32>
    %105 = arith.mulf %102, %104 : vector<32x128xf32>
    %c2_145 = arith.constant 2 : index
    %c0_146 = arith.constant 0 : index
    %106 = vector.load %arg6[%c2_145, %c0_146] : memref<3x128xf32, #tpu.memory_space<vmem>>, vector<1x128xf32>
    %107 = vector.broadcast %106 : vector<1x128xf32> to vector<32x128xf32>
    %108 = arith.addf %105, %107 : vector<32x128xf32>
    %109 = vector.shape_cast %108 : vector<32x128xf32> to vector<4x2x4x128xf32>
    %cst_147 = arith.constant dense<0xFF800000> : vector<4x4x128xf32>
    %110 = vector.multi_reduction <maximumf>, %109, %cst_147 [1] : vector<4x2x4x128xf32> to vector<4x4x128xf32>
    %111 = vector.shape_cast %110 : vector<4x4x128xf32> to vector<8x2x128xf32>
    %cst_148 = arith.constant dense<0xFF800000> : vector<8x128xf32>
    %112 = vector.multi_reduction <maximumf>, %111, %cst_148 [1] : vector<8x2x128xf32> to vector<8x128xf32>
    %113 = vector.shape_cast %112 : vector<8x128xf32> to vector<2x2x2x128xf32>
    %114 = arith.truncf %113 : vector<2x2x2x128xf32> to vector<2x2x2x128xbf16>
    %c0_149 = arith.constant 0 : index
    %c1_150 = arith.constant 1 : index
    %c1_151 = arith.constant 1 : index
    %c0_152 = arith.constant 0 : index
    %115 = vector.load %arg14[%c0_149, %c1_150, %c1_151, %c0_152] : memref<2x4x4x128xbf16, #tpu.memory_space<vmem>>, vector<2x2x2x128xbf16>
    tpu.vector_store %arg14[%c0_149, %c1_150, %c1_151, %c0_152], %114 {strides = array<i32>} : memref<2x4x4x128xbf16, #tpu.memory_space<vmem>>, vector<2x2x2x128xbf16>,
    %c0_153 = arith.constant 0 : index
    %c0_154 = arith.constant 0 : index
    %c0_155 = arith.constant 0 : index
    %c0_156 = arith.constant 0 : index
    %116 = vector.load %arg14[%c0_153, %c0_154, %c0_155, %c0_156] : memref<2x4x4x128xbf16, #tpu.memory_space<vmem>>, vector<2x2x2x128xbf16>
    %c0_157 = arith.constant 0 : index
    %c0_158 = arith.constant 0 : index
    %c1_159 = arith.constant 1 : index
    %c0_160 = arith.constant 0 : index
    %117 = vector.load %arg14[%c0_157, %c0_158, %c1_159, %c0_160] : memref<2x4x4x128xbf16, #tpu.memory_space<vmem>>, vector<2x2x2x128xbf16>
    %c0_161 = arith.constant 0 : index
    %c0_162 = arith.constant 0 : index
    %c2_163 = arith.constant 2 : index
    %c0_164 = arith.constant 0 : index
    %118 = vector.load %arg14[%c0_161, %c0_162, %c2_163, %c0_164] : memref<2x4x4x128xbf16, #tpu.memory_space<vmem>>, vector<2x2x2x128xbf16>
    %119 = tpu.concatenate %116, %117, %118 in 3 : vector<2x2x2x128xbf16>, vector<2x2x2x128xbf16>, vector<2x2x2x128xbf16> -> vector<2x2x2x384xbf16>
    %120 = vector.shape_cast %119 : vector<2x2x2x384xbf16> to vector<8x384xbf16>
    %c0_165 = arith.constant 0 : index
    %c0_166 = arith.constant 0 : index
    %c0_167 = arith.constant 0 : index
    %121 = vector.load %arg7[%c0_165, %c0_166, %c0_167] : memref<3x384x256xbf16, #tpu.memory_space<vmem>>, vector<1x384x256xbf16>
    %122 = vector.shape_cast %121 : vector<1x384x256xbf16> to vector<384x256xbf16>
    %cst_168 = arith.constant dense<0.000000e+00> : vector<8x256xf32>
    %123 = tpu.matmul %120, %122, %cst_168 {dimension_numbers = #tpu.dot_dimension_numbers<[1], [0], [0], [1], [0, 0, 1, 1], [], []>} : vector<8x384xbf16>, vector<384x256xbf16>, vector<8x256xf32> -> vector<8x256xf32>
    %c0_169 = arith.constant 0 : index
    %c1_170 = arith.constant 1 : index
    %c0_171 = arith.constant 0 : index
    %c0_172 = arith.constant 0 : index
    %124 = vector.load %arg14[%c0_169, %c1_170, %c0_171, %c0_172] : memref<2x4x4x128xbf16, #tpu.memory_space<vmem>>, vector<2x2x2x128xbf16>
    %c0_173 = arith.constant 0 : index
    %c1_174 = arith.constant 1 : index
    %c1_175 = arith.constant 1 : index
    %c0_176 = arith.constant 0 : index
    %125 = vector.load %arg14[%c0_173, %c1_174, %c1_175, %c0_176] : memref<2x4x4x128xbf16, #tpu.memory_space<vmem>>, vector<2x2x2x128xbf16>
    %c0_177 = arith.constant 0 : index
    %c1_178 = arith.constant 1 : index
    %c2_179 = arith.constant 2 : index
    %c0_180 = arith.constant 0 : index
    %126 = vector.load %arg14[%c0_177, %c1_178, %c2_179, %c0_180] : memref<2x4x4x128xbf16, #tpu.memory_space<vmem>>, vector<2x2x2x128xbf16>
    %127 = tpu.concatenate %124, %125, %126 in 3 : vector<2x2x2x128xbf16>, vector<2x2x2x128xbf16>, vector<2x2x2x128xbf16> -> vector<2x2x2x384xbf16>
    %128 = vector.shape_cast %127 : vector<2x2x2x384xbf16> to vector<8x384xbf16>
    %c1_181 = arith.constant 1 : index
    %c0_182 = arith.constant 0 : index
    %c0_183 = arith.constant 0 : index
    %129 = vector.load %arg7[%c1_181, %c0_182, %c0_183] : memref<3x384x256xbf16, #tpu.memory_space<vmem>>, vector<1x384x256xbf16>
    %130 = vector.shape_cast %129 : vector<1x384x256xbf16> to vector<384x256xbf16>
    %cst_184 = arith.constant dense<0.000000e+00> : vector<8x256xf32>
    %131 = tpu.matmul %128, %130, %cst_184 {dimension_numbers = #tpu.dot_dimension_numbers<[1], [0], [0], [1], [0, 0, 1, 1], [], []>} : vector<8x384xbf16>, vector<384x256xbf16>, vector<8x256xf32> -> vector<8x256xf32>
    %132 = arith.addf %123, %131 : vector<8x256xf32>
    %c0_185 = arith.constant 0 : index
    %c2_186 = arith.constant 2 : index
    %c0_187 = arith.constant 0 : index
    %c0_188 = arith.constant 0 : index
    %133 = vector.load %arg14[%c0_185, %c2_186, %c0_187, %c0_188] : memref<2x4x4x128xbf16, #tpu.memory_space<vmem>>, vector<2x2x2x128xbf16>
    %c0_189 = arith.constant 0 : index
    %c2_190 = arith.constant 2 : index
    %c1_191 = arith.constant 1 : index
    %c0_192 = arith.constant 0 : index
    %134 = vector.load %arg14[%c0_189, %c2_190, %c1_191, %c0_192] : memref<2x4x4x128xbf16, #tpu.memory_space<vmem>>, vector<2x2x2x128xbf16>
    %c0_193 = arith.constant 0 : index
    %c2_194 = arith.constant 2 : index
    %c2_195 = arith.constant 2 : index
    %c0_196 = arith.constant 0 : index
    %135 = vector.load %arg14[%c0_193, %c2_194, %c2_195, %c0_196] : memref<2x4x4x128xbf16, #tpu.memory_space<vmem>>, vector<2x2x2x128xbf16>
    %136 = tpu.concatenate %133, %134, %135 in 3 : vector<2x2x2x128xbf16>, vector<2x2x2x128xbf16>, vector<2x2x2x128xbf16> -> vector<2x2x2x384xbf16>
    %137 = vector.shape_cast %136 : vector<2x2x2x384xbf16> to vector<8x384xbf16>
    %c2_197 = arith.constant 2 : index
    %c0_198 = arith.constant 0 : index
    %c0_199 = arith.constant 0 : index
    %138 = vector.load %arg7[%c2_197, %c0_198, %c0_199] : memref<3x384x256xbf16, #tpu.memory_space<vmem>>, vector<1x384x256xbf16>
    %139 = vector.shape_cast %138 : vector<1x384x256xbf16> to vector<384x256xbf16>
    %cst_200 = arith.constant dense<0.000000e+00> : vector<8x256xf32>
    %140 = tpu.matmul %137, %139, %cst_200 {dimension_numbers = #tpu.dot_dimension_numbers<[1], [0], [0], [1], [0, 0, 1, 1], [], []>} : vector<8x384xbf16>, vector<384x256xbf16>, vector<8x256xf32> -> vector<8x256xf32>
    %141 = arith.addf %132, %140 : vector<8x256xf32>
    %c0_201 = arith.constant 0 : index
    %c0_202 = arith.constant 0 : index
    %142 = vector.load %arg8[%c0_201, %c0_202] : memref<3x256xf32, #tpu.memory_space<vmem>>, vector<1x256xf32>
    %143 = vector.broadcast %142 : vector<1x256xf32> to vector<8x256xf32>
    %144 = arith.addf %141, %143 : vector<8x256xf32>
    %cst_203 = arith.constant 0.000000e+00 : f32
    %145 = vector.broadcast %cst_203 : f32 to vector<8x256xf32>
    %146 = arith.maximumf %144, %145 : vector<8x256xf32>
    %c1_204 = arith.constant 1 : index
    %c0_205 = arith.constant 0 : index
    %147 = vector.load %arg8[%c1_204, %c0_205] : memref<3x256xf32, #tpu.memory_space<vmem>>, vector<1x256xf32>
    %148 = vector.broadcast %147 : vector<1x256xf32> to vector<8x256xf32>
    %149 = arith.mulf %146, %148 : vector<8x256xf32>
    %c2_206 = arith.constant 2 : index
    %c0_207 = arith.constant 0 : index
    %150 = vector.load %arg8[%c2_206, %c0_207] : memref<3x256xf32, #tpu.memory_space<vmem>>, vector<1x256xf32>
    %151 = vector.broadcast %150 : vector<1x256xf32> to vector<8x256xf32>
    %152 = arith.addf %149, %151 : vector<8x256xf32>
    %153 = vector.shape_cast %152 : vector<8x256xf32> to vector<2x4x256xf32>
    %cst_208 = arith.constant dense<0.000000e+00> : vector<2x256xf32>
    %154 = vector.multi_reduction <add>, %153, %cst_208 [1] : vector<2x4x256xf32> to vector<2x256xf32>
    %cst_209 = arith.constant 4.000000e+00 : f32
    %155 = vector.broadcast %cst_209 : f32 to vector<2x256xf32>
    %156 = arith.divf %154, %155 : vector<2x256xf32>
    %c0_210 = arith.constant 0 : index
    %c0_211 = arith.constant 0 : index
    %157 = vector.load %arg9[%c0_210, %c0_211] : memref<256x7xf32, #tpu.memory_space<vmem>>, vector<256x7xf32>
    %cst_212 = arith.constant dense<0.000000e+00> : vector<2x7xf32>
    %158 = tpu.matmul %156, %157, %cst_212 {dimension_numbers = #tpu.dot_dimension_numbers<[1], [0], [0], [1], [0, 0, 1, 1], [], []>} : vector<2x256xf32>, vector<256x7xf32>, vector<2x7xf32> -> vector<2x7xf32>
    %c0_213 = arith.constant 0 : index
    %c0_214 = arith.constant 0 : index
    %159 = vector.load %arg10[%c0_213, %c0_214] : memref<1x7xf32, #tpu.memory_space<vmem>>, vector<1x7xf32>
    %160 = vector.broadcast %159 : vector<1x7xf32> to vector<2x7xf32>
    %161 = arith.addf %158, %160 : vector<2x7xf32>
    %c0_215 = arith.constant 0 : index
    %c0_216 = arith.constant 0 : index
    %162 = vector.load %arg11[%c0_215, %c0_216] : memref<2x7xf32, #tpu.memory_space<vmem>>, vector<2x7xf32>
    tpu.vector_store %arg11[%c0_215, %c0_216], %161 {strides = array<i32>} : memref<2x7xf32, #tpu.memory_space<vmem>>, vector<2x7xf32>,
    return
  }
}

</mosaic_0001>

<llo_original>
// kernel: simplified_st_model_forward.1
$region0: #{simplified_st_model_forward.1}
  #allocation0 [shape = 'u32[]', space=smem, size = 0x4, offset = 0x4, fixed_abs, tag = 'smem constant byte address 0x4 - core index']
  #allocation1 [shape = 'u32[144,128]{1,0:T(1,128)}', space=vmem, size = 0x12000, scoped, tag = 'internal scratch']
  #allocation2 [shape = 'bf16[2,10,10,32]{3,2,1,0:T(8,128)(2,1)}', space=vmem, size = 0x14000, scoped, tag = 'scratch operand']
  #allocation3 [shape = 'bf16[2,6,6,64]{3,2,1,0:T(8,128)(2,1)}', space=vmem, size = 0x6000, scoped, tag = 'scratch operand']
  #allocation4 [shape = 'bf16[2,4,4,128]{3,2,1,0:T(4,128)(2,1)}', space=vmem, size = 0x2000, scoped, tag = 'scratch operand']
  %s0 = inlined_call_operand.vmem [shape: bf16[2,16,16,27], index: 0, kind: input, shape index: {}]
  %s1 = inlined_call_operand.vmem [shape: bf16[27,32], index: 1, kind: input, shape index: {}]
  %s2 = inlined_call_operand.vmem [shape: f32[3,32], index: 2, kind: input, shape index: {}]
  %s3 = inlined_call_operand.vmem [shape: bf16[3,96,64], index: 3, kind: input, shape index: {}]
  %s4 = inlined_call_operand.vmem [shape: f32[3,64], index: 4, kind: input, shape index: {}]
  %s5 = inlined_call_operand.vmem [shape: bf16[3,192,128], index: 5, kind: input, shape index: {}]
  %s6 = inlined_call_operand.vmem [shape: f32[3,128], index: 6, kind: input, shape index: {}]
  %s7 = inlined_call_operand.vmem [shape: bf16[3,384,256], index: 7, kind: input, shape index: {}]
  %s8 = inlined_call_operand.vmem [shape: f32[3,256], index: 8, kind: input, shape index: {}]
  %s9 = inlined_call_operand.vmem [shape: f32[256,7], index: 9, kind: input, shape index: {}]
  %s10 = inlined_call_operand.vmem [shape: f32[1,7], index: 10, kind: input, shape index: {}]
  %s11 = inlined_call_operand.hbm [shape: f32[2,7], index: 11, kind: output, shape index: {}]
  %s12 = sld [smem:[#allocation0]]
  $region54: #{simplified_st_model_forward.1} parent=0
    _
  %s14 = ssub.s32 1, %s12
  %s15 = scalar_select 0, %s14, %s12
  $region1: #{simplified_st_model_forward.1} parent=0
    #allocation5 [shape = 'u8[1024]{0}', space=vmem, size = 0x400, scoped, tag = 'output window, operand 0, single buffered']
    #allocation6 [shape = 's32[1]{0}', space=sflag, size = 0x4, scoped, tag = 'scoped memory for simplified_st_model_forward.1']
    %16 = vsyncpa [#allocation6], 0
    // Predicated region
    $region2: #{simplified_st_model_forward.1} parent=1 // pred_check
      _
    $region3: #{simplified_st_model_forward.1} parent=1 // pred_check_branch
      %18 = sbr.rel (0) target = $region5
    $region4: #{simplified_st_model_forward.1} parent=1 // pred_region
      _
    $region5: #{simplified_st_model_forward.1} parent=1 // pred_fallthru
      _
    // Predicated region
    $region6: #{simplified_st_model_forward.1} parent=1 // pred_check
      _
    $region7: #{simplified_st_model_forward.1} parent=1 // pred_check_branch
      %20 = sbr.rel (0) target = $region9
    $region8: #{simplified_st_model_forward.1} parent=1 // pred_region
      _
    $region9: #{simplified_st_model_forward.1} parent=1 // pred_fallthru
      _
    // Predicated region
    $region10: #{simplified_st_model_forward.1} parent=1 // pred_check
      _
    $region11: #{simplified_st_model_forward.1} parent=1 // pred_check_branch
      %22 = sbr.rel (0) target = $region13
    $region12: #{simplified_st_model_forward.1} parent=1 // pred_region
      _
    $region13: #{simplified_st_model_forward.1} parent=1 // pred_fallthru
      _
    // Predicated region
    $region14: #{simplified_st_model_forward.1} parent=1 // pred_check
      _
    $region15: #{simplified_st_model_forward.1} parent=1 // pred_check_branch
      %24 = sbr.rel (0) target = $region17
    $region16: #{simplified_st_model_forward.1} parent=1 // pred_region
      _
    $region17: #{simplified_st_model_forward.1} parent=1 // pred_fallthru
      _
    // Predicated region
    $region18: #{simplified_st_model_forward.1} parent=1 // pred_check
      _
    $region19: #{simplified_st_model_forward.1} parent=1 // pred_check_branch
      %26 = sbr.rel (0) target = $region21
    $region20: #{simplified_st_model_forward.1} parent=1 // pred_region
      _
    $region21: #{simplified_st_model_forward.1} parent=1 // pred_fallthru
      _
    // Predicated region
    $region22: #{simplified_st_model_forward.1} parent=1 // pred_check
      _
    $region23: #{simplified_st_model_forward.1} parent=1 // pred_check_branch
      %28 = sbr.rel (0) target = $region25
    $region24: #{simplified_st_model_forward.1} parent=1 // pred_region
      _
    $region25: #{simplified_st_model_forward.1} parent=1 // pred_fallthru
      _
    // Predicated region
    $region26: #{simplified_st_model_forward.1} parent=1 // pred_check
      _
    $region27: #{simplified_st_model_forward.1} parent=1 // pred_check_branch
      %30 = sbr.rel (0) target = $region29
    $region28: #{simplified_st_model_forward.1} parent=1 // pred_region
      _
    $region29: #{simplified_st_model_forward.1} parent=1 // pred_fallthru
      _
    // Predicated region
    $region30: #{simplified_st_model_forward.1} parent=1 // pred_check
      _
    $region31: #{simplified_st_model_forward.1} parent=1 // pred_check_branch
      %32 = sbr.rel (0) target = $region33
    $region32: #{simplified_st_model_forward.1} parent=1 // pred_region
      _
    $region33: #{simplified_st_model_forward.1} parent=1 // pred_fallthru
      _
    // Predicated region
    $region34: #{simplified_st_model_forward.1} parent=1 // pred_check
      _
    $region35: #{simplified_st_model_forward.1} parent=1 // pred_check_branch
      %34 = sbr.rel (0) target = $region37
    $region36: #{simplified_st_model_forward.1} parent=1 // pred_region
      _
    $region37: #{simplified_st_model_forward.1} parent=1 // pred_fallthru
      _
    // Predicated region
    $region38: #{simplified_st_model_forward.1} parent=1 // pred_check
      _
    $region39: #{simplified_st_model_forward.1} parent=1 // pred_check_branch
      %36 = sbr.rel (0) target = $region41
    $region40: #{simplified_st_model_forward.1} parent=1 // pred_region
      _
    $region41: #{simplified_st_model_forward.1} parent=1 // pred_fallthru
      _
    // Predicated region
    $region42: #{simplified_st_model_forward.1} parent=1 // pred_check
      _
    $region43: #{simplified_st_model_forward.1} parent=1 // pred_check_branch
      %38 = sbr.rel (0) target = $region45
    $region44: #{simplified_st_model_forward.1} parent=1 // pred_region
      _
    $region45: #{simplified_st_model_forward.1} parent=1 // pred_fallthru
      _
    %vm40 = vcmask 257024
    %41 = vst.msk [vmem:[#allocation2] sm:$0xf] %vm40, 0
    %vm42 = vcmask 253952
    %43 = vst.msk [vmem:[#allocation2 + $0x4] sm:$0x1] %vm42, 0
    %44 = vst.msk [vmem:[#allocation2 + $0x8] sm:$0xf] %vm40, 0
    %45 = vst.msk [vmem:[#allocation2 + $0xc] sm:$0x1] %vm42, 0
    %46 = vst.msk [vmem:[#allocation2 + $0x10] sm:$0xf] %vm40, 0
    %47 = vst.msk [vmem:[#allocation2 + $0x14] sm:$0x1] %vm42, 0
    %48 = vst.msk [vmem:[#allocation2 + $0x18] sm:$0xf] %vm40, 0
    %49 = vst.msk [vmem:[#allocation2 + $0x1c] sm:$0x1] %vm42, 0
    %50 = vst.msk [vmem:[#allocation2 + $0x20] sm:$0xf] %vm40, 0
    %51 = vst.msk [vmem:[#allocation2 + $0x24] sm:$0x1] %vm42, 0
    %52 = vst.msk [vmem:[#allocation2 + $0x28] sm:$0xf] %vm40, 0
    %53 = vst.msk [vmem:[#allocation2 + $0x2c] sm:$0x1] %vm42, 0
    %54 = vst.msk [vmem:[#allocation2 + $0x30] sm:$0xf] %vm40, 0
    %55 = vst.msk [vmem:[#allocation2 + $0x34] sm:$0x1] %vm42, 0
    %56 = vst.msk [vmem:[#allocation2 + $0x38] sm:$0xf] %vm40, 0
    %57 = vst.msk [vmem:[#allocation2 + $0x3c] sm:$0x1] %vm42, 0
    %58 = vst.msk [vmem:[#allocation2 + $0x40] sm:$0xf] %vm40, 0
    %59 = vst.msk [vmem:[#allocation2 + $0x44] sm:$0x1] %vm42, 0
    %60 = vst.msk [vmem:[#allocation2 + $0x48] sm:$0xf] %vm40, 0
    %61 = vst.msk [vmem:[#allocation2 + $0x4c] sm:$0x1] %vm42, 0
    %62 = vst.msk [vmem:[#allocation2 + $0x50] sm:$0xf] %vm40, 0
    %63 = vst.msk [vmem:[#allocation2 + $0x54] sm:$0x1] %vm42, 0
    %64 = vst.msk [vmem:[#allocation2 + $0x58] sm:$0xf] %vm40, 0
    %65 = vst.msk [vmem:[#allocation2 + $0x5c] sm:$0x1] %vm42, 0
    %66 = vst.msk [vmem:[#allocation2 + $0x60] sm:$0xf] %vm40, 0
    %67 = vst.msk [vmem:[#allocation2 + $0x64] sm:$0x1] %vm42, 0
    %68 = vst.msk [vmem:[#allocation2 + $0x68] sm:$0xf] %vm40, 0
    %69 = vst.msk [vmem:[#allocation2 + $0x6c] sm:$0x1] %vm42, 0
    %70 = vst.msk [vmem:[#allocation2 + $0x70] sm:$0xf] %vm40, 0
    %71 = vst.msk [vmem:[#allocation2 + $0x74] sm:$0x1] %vm42, 0
    %72 = vst.msk [vmem:[#allocation2 + $0x78] sm:$0xf] %vm40, 0
    %73 = vst.msk [vmem:[#allocation2 + $0x7c] sm:$0x1] %vm42, 0
    %74 = vst.msk [vmem:[#allocation2 + $0x80] sm:$0xf] %vm40, 0
    %75 = vst.msk [vmem:[#allocation2 + $0x84] sm:$0x1] %vm42, 0
    %76 = vst.msk [vmem:[#allocation2 + $0x88] sm:$0xf] %vm40, 0
    %77 = vst.msk [vmem:[#allocation2 + $0x8c] sm:$0x1] %vm42, 0
    %78 = vst.msk [vmem:[#allocation2 + $0x90] sm:$0xf] %vm40, 0
    %79 = vst.msk [vmem:[#allocation2 + $0x94] sm:$0x1] %vm42, 0
    %80 = vst.msk [vmem:[#allocation2 + $0x98] sm:$0xf] %vm40, 0
    %81 = vst.msk [vmem:[#allocation2 + $0x9c] sm:$0x1] %vm42, 0
    %vm82 = vcmask 518144
    %83 = vst.msk [vmem:[#allocation3] sm:$0x7] %vm82, 0
    %84 = vst.msk [vmem:[#allocation3 + $0x4] sm:$0x7] %vm82, 0
    %85 = vst.msk [vmem:[#allocation3 + $0x8] sm:$0x7] %vm82, 0
    %86 = vst.msk [vmem:[#allocation3 + $0xc] sm:$0x7] %vm82, 0
    %87 = vst.msk [vmem:[#allocation3 + $0x10] sm:$0x7] %vm82, 0
    %88 = vst.msk [vmem:[#allocation3 + $0x14] sm:$0x7] %vm82, 0
    %89 = vst.msk [vmem:[#allocation3 + $0x18] sm:$0x7] %vm82, 0
    %90 = vst.msk [vmem:[#allocation3 + $0x1c] sm:$0x7] %vm82, 0
    %91 = vst.msk [vmem:[#allocation3 + $0x20] sm:$0x7] %vm82, 0
    %92 = vst.msk [vmem:[#allocation3 + $0x24] sm:$0x7] %vm82, 0
    %93 = vst.msk [vmem:[#allocation3 + $0x28] sm:$0x7] %vm82, 0
    %94 = vst.msk [vmem:[#allocation3 + $0x2c] sm:$0x7] %vm82, 0
    %95 = vst [vmem:[#allocation4] sm:$0x3] 0
    %96 = vst [vmem:[#allocation4 + $0x2] sm:$0x3] 0
    %97 = vst [vmem:[#allocation4 + $0x4] sm:$0x3] 0
    %98 = vst [vmem:[#allocation4 + $0x6] sm:$0x3] 0
    %99 = vst [vmem:[#allocation4 + $0x8] sm:$0x3] 0
    %100 = vst [vmem:[#allocation4 + $0xa] sm:$0x3] 0
    %101 = vst [vmem:[#allocation4 + $0xc] sm:$0x3] 0
    %102 = vst [vmem:[#allocation4 + $0xe] sm:$0x3] 0
    %v103 = vld [vmem:[%s0] sm:$0xf]
    %v104 = vld [vmem:[%s0 + $0x4] sm:$0xf]
    %v105 = vld [vmem:[%s0 + $0x8] sm:$0xf]
    %v106 = vld [vmem:[%s0 + $0xc] sm:$0xf]
    %v107 = vld [vmem:[%s0 + $0x10] sm:$0xf]
    %v108 = vld [vmem:[%s0 + $0x14] sm:$0xf]
    %v109 = vld [vmem:[%s0 + $0x18] sm:$0xf]
    %v110 = vld [vmem:[%s0 + $0x1c] sm:$0xf]
    %v111 = vld [vmem:[%s0 + $0x20] sm:$0xf]
    %v112 = vld [vmem:[%s0 + $0x24] sm:$0xf]
    %v113 = vld [vmem:[%s0 + $0x28] sm:$0xf]
    %v114 = vld [vmem:[%s0 + $0x2c] sm:$0xf]
    %v115 = vld [vmem:[%s0 + $0x30] sm:$0xf]
    %v116 = vld [vmem:[%s0 + $0x34] sm:$0xf]
    %v117 = vld [vmem:[%s0 + $0x38] sm:$0xf]
    %v118 = vld [vmem:[%s0 + $0x3c] sm:$0xf]
    %v119 = vld [vmem:[%s0 + $0x40] sm:$0xf]
    %v120 = vld [vmem:[%s0 + $0x44] sm:$0xf]
    %v121 = vld [vmem:[%s0 + $0x48] sm:$0xf]
    %v122 = vld [vmem:[%s0 + $0x4c] sm:$0xf]
    %v123 = vld [vmem:[%s0 + $0x50] sm:$0xf]
    %v124 = vld [vmem:[%s0 + $0x54] sm:$0xf]
    %v125 = vld [vmem:[%s0 + $0x58] sm:$0xf]
    %v126 = vld [vmem:[%s0 + $0x5c] sm:$0xf]
    %v127 = vld [vmem:[%s0 + $0x60] sm:$0xf]
    %v128 = vld [vmem:[%s0 + $0x64] sm:$0xf]
    %v129 = vld [vmem:[%s0 + $0x68] sm:$0xf]
    %v130 = vld [vmem:[%s0 + $0x6c] sm:$0xf]
    %v131 = vld [vmem:[%s0 + $0x70] sm:$0xf]
    %v132 = vld [vmem:[%s0 + $0x74] sm:$0xf]
    %v133 = vld [vmem:[%s0 + $0x78] sm:$0xf]
    %v134 = vld [vmem:[%s0 + $0x7c] sm:$0xf]
    %v135 = vld [vmem:[%s0 + $0x80] sm:$0xf]
    %v136 = vld [vmem:[%s0 + $0x84] sm:$0xf]
    %v137 = vld [vmem:[%s0 + $0x88] sm:$0xf]
    %v138 = vld [vmem:[%s0 + $0x8c] sm:$0xf]
    %v139 = vld [vmem:[%s0 + $0x90] sm:$0xf]
    %v140 = vld [vmem:[%s0 + $0x94] sm:$0xf]
    %v141 = vld [vmem:[%s0 + $0x98] sm:$0xf]
    %v142 = vld [vmem:[%s0 + $0x9c] sm:$0xf]
    %v143 = vld [vmem:[%s0 + $0xa0] sm:$0xf]
    %v144 = vld [vmem:[%s0 + $0xa4] sm:$0xf]
    %v145 = vld [vmem:[%s0 + $0xa8] sm:$0xf]
    %v146 = vld [vmem:[%s0 + $0xac] sm:$0xf]
    %v147 = vld [vmem:[%s0 + $0xb0] sm:$0xf]
    %v148 = vld [vmem:[%s0 + $0xb4] sm:$0xf]
    %v149 = vld [vmem:[%s0 + $0xb8] sm:$0xf]
    %v150 = vld [vmem:[%s0 + $0xbc] sm:$0xf]
    %v151 = vld [vmem:[%s0 + $0xc0] sm:$0xf]
    %v152 = vld [vmem:[%s0 + $0xc4] sm:$0xf]
    %v153 = vld [vmem:[%s0 + $0xc8] sm:$0xf]
    %v154 = vld [vmem:[%s0 + $0xcc] sm:$0xf]
    %v155 = vld [vmem:[%s0 + $0xd0] sm:$0xf]
    %v156 = vld [vmem:[%s0 + $0xd4] sm:$0xf]
    %v157 = vld [vmem:[%s0 + $0xd8] sm:$0xf]
    %v158 = vld [vmem:[%s0 + $0xdc] sm:$0xf]
    %v159 = vld [vmem:[%s0 + $0xe0] sm:$0xf]
    %v160 = vld [vmem:[%s0 + $0xe4] sm:$0xf]
    %v161 = vld [vmem:[%s0 + $0xe8] sm:$0xf]
    %v162 = vld [vmem:[%s0 + $0xec] sm:$0xf]
    %v163 = vld [vmem:[%s0 + $0xf0] sm:$0xf]
    %v164 = vld [vmem:[%s0 + $0xf4] sm:$0xf]
    %v165 = vld [vmem:[%s0 + $0xf8] sm:$0xf]
    %v166 = vld [vmem:[%s0 + $0xfc] sm:$0xf]
    %v167 = vld [vmem:[%s1] sm:$0xf]
    %v168 = vld [vmem:[%s1 + $0x4] sm:$0xf]
    %v169 = vld [vmem:[%s1 + $0x8] sm:$0xf]
    %v170 = vld [vmem:[%s1 + $0xc] sm:$0x3]
    %v171 = vld [vmem:[%s2] sm:$0x1]
    %v172 = vlaneseq
    %v173 = vshrl.u32 %v172, 7
    %v174 = vsub.s32 0, %v173
    %v175 = vrot.slane %v171, %v174
    %v240 = vunpack.c.l.b16 %v103
    %v241 = vunpack.c.l.b16 %v104
    %v242 = vunpack.c.l.b16 %v105
    %v243 = vunpack.c.l.b16 %v106
    %v244 = vunpack.c.l.b16 %v107
    %v245 = vunpack.c.l.b16 %v108
    %v246 = vunpack.c.l.b16 %v109
    %v247 = vunpack.c.l.b16 %v110
    %v248 = vunpack.c.l.b16 %v111
    %v249 = vunpack.c.l.b16 %v112
    %v250 = vunpack.c.l.b16 %v113
    %v251 = vunpack.c.l.b16 %v114
    %v252 = vunpack.c.l.b16 %v115
    %v253 = vunpack.c.l.b16 %v116
    %v254 = vunpack.c.l.b16 %v117
    %v255 = vunpack.c.l.b16 %v118
    %v256 = vunpack.c.l.b16 %v119
    %v257 = vunpack.c.l.b16 %v120
    %v258 = vunpack.c.l.b16 %v121
    %v259 = vunpack.c.l.b16 %v122
    %v260 = vunpack.c.l.b16 %v123
    %v261 = vunpack.c.l.b16 %v124
    %v262 = vunpack.c.l.b16 %v125
    %v263 = vunpack.c.l.b16 %v126
    %v264 = vunpack.c.l.b16 %v127
    %v265 = vunpack.c.l.b16 %v128
    %v266 = vunpack.c.l.b16 %v129
    %v267 = vunpack.c.l.b16 %v130
    %v268 = vunpack.c.l.b16 %v131
    %v269 = vunpack.c.l.b16 %v132
    %v270 = vunpack.c.l.b16 %v133
    %v271 = vunpack.c.l.b16 %v134
    %v272 = vunpack.c.l.b16 %v135
    %v273 = vunpack.c.l.b16 %v136
    %v274 = vunpack.c.l.b16 %v137
    %v275 = vunpack.c.l.b16 %v138
    %v276 = vunpack.c.l.b16 %v139
    %v277 = vunpack.c.l.b16 %v140
    %v278 = vunpack.c.l.b16 %v141
    %v279 = vunpack.c.l.b16 %v142
    %v280 = vunpack.c.l.b16 %v143
    %v281 = vunpack.c.l.b16 %v144
    %v282 = vunpack.c.l.b16 %v145
    %v283 = vunpack.c.l.b16 %v146
    %v284 = vunpack.c.l.b16 %v147
    %v285 = vunpack.c.l.b16 %v148
    %v286 = vunpack.c.l.b16 %v149
    %v287 = vunpack.c.l.b16 %v150
    %v288 = vunpack.c.l.b16 %v151
    %v289 = vunpack.c.l.b16 %v152
    %v290 = vunpack.c.l.b16 %v153
    %v291 = vunpack.c.l.b16 %v154
    %v292 = vunpack.c.l.b16 %v155
    %v293 = vunpack.c.l.b16 %v156
    %v294 = vunpack.c.l.b16 %v157
    %v295 = vunpack.c.l.b16 %v158
    %v296 = vunpack.c.l.b16 %v159
    %v297 = vunpack.c.l.b16 %v160
    %v298 = vunpack.c.l.b16 %v161
    %v299 = vunpack.c.l.b16 %v162
    %v300 = vunpack.c.l.b16 %v163
    %v301 = vunpack.c.l.b16 %v164
    %v302 = vunpack.c.l.b16 %v165
    %v303 = vunpack.c.l.b16 %v166
    %v304 = vpack.c.b16 %v241, %v240
    %v305 = vpack.c.b16 %v243, %v242
    %v306 = vpack.c.b16 %v245, %v244
    %v307 = vpack.c.b16 %v247, %v246
    %v308 = vpack.c.b16 %v249, %v248
    %v309 = vpack.c.b16 %v251, %v250
    %v310 = vpack.c.b16 %v253, %v252
    %v311 = vpack.c.b16 %v255, %v254
    %v312 = vpack.c.b16 %v257, %v256
    %v313 = vpack.c.b16 %v259, %v258
    %v314 = vpack.c.b16 %v261, %v260
    %v315 = vpack.c.b16 %v263, %v262
    %v316 = vpack.c.b16 %v265, %v264
    %v317 = vpack.c.b16 %v267, %v266
    %v318 = vpack.c.b16 %v269, %v268
    %v319 = vpack.c.b16 %v271, %v270
    %v320 = vpack.c.b16 %v273, %v272
    %v321 = vpack.c.b16 %v275, %v274
    %v322 = vpack.c.b16 %v277, %v276
    %v323 = vpack.c.b16 %v279, %v278
    %v324 = vpack.c.b16 %v281, %v280
    %v325 = vpack.c.b16 %v283, %v282
    %v326 = vpack.c.b16 %v285, %v284
    %v327 = vpack.c.b16 %v287, %v286
    %v328 = vpack.c.b16 %v289, %v288
    %v329 = vpack.c.b16 %v291, %v290
    %v330 = vpack.c.b16 %v293, %v292
    %v331 = vpack.c.b16 %v295, %v294
    %v332 = vpack.c.b16 %v297, %v296
    %v333 = vpack.c.b16 %v299, %v298
    %v334 = vpack.c.b16 %v301, %v300
    %v335 = vpack.c.b16 %v303, %v302
    %v340 = vunpack.c.l.b16 %v167
    %v341 = vunpack.c.l.b16 %v168
    %v342 = vunpack.c.l.b16 %v169
    %v343 = vunpack.c.l.b16 %v170
    %v344 = vpack.c.b16 %v341, %v340
    %v345 = vpack.c.b16 %v343, %v342
    %vm347 = vcmask 220160
    %v349 = vsel %vm347, %v304, 0
    %v352 = vsel %vm347, %v305, 0
    %v355 = vsel %vm347, %v306, 0
    %v358 = vsel %vm347, %v307, 0
    %v361 = vsel %vm347, %v308, 0
    %v364 = vsel %vm347, %v309, 0
    %v367 = vsel %vm347, %v310, 0
    %v370 = vsel %vm347, %v311, 0
    %v373 = vsel %vm347, %v312, 0
    %v376 = vsel %vm347, %v313, 0
    %v379 = vsel %vm347, %v314, 0
    %v382 = vsel %vm347, %v315, 0
    %v385 = vsel %vm347, %v316, 0
    %v388 = vsel %vm347, %v317, 0
    %v391 = vsel %vm347, %v318, 0
    %v394 = vsel %vm347, %v319, 0
    %v397 = vsel %vm347, %v320, 0
    %v400 = vsel %vm347, %v321, 0
    %v403 = vsel %vm347, %v322, 0
    %v406 = vsel %vm347, %v323, 0
    %v409 = vsel %vm347, %v324, 0
    %v412 = vsel %vm347, %v325, 0
    %v415 = vsel %vm347, %v326, 0
    %v418 = vsel %vm347, %v327, 0
    %v421 = vsel %vm347, %v328, 0
    %v424 = vsel %vm347, %v329, 0
    %v427 = vsel %vm347, %v330, 0
    %v430 = vsel %vm347, %v331, 0
    %v433 = vsel %vm347, %v332, 0
    %v436 = vsel %vm347, %v333, 0
    %v439 = vsel %vm347, %v334, 0
    %v442 = vsel %vm347, %v335, 0
    %vm444 = vcmask 1044480
    %vm445 = vcmask 1045504
    %v446 = vsel %vm444, 4294967295, 65535
    %v447 = vsel %vm445, %v446, 0
    %v449 = vand.u32 %v345, %v447
    %451 = vmatprep.subr.bf16.mxu0 0
    %452 = vmatpush1.bf16.msra.mxu0 %v344
    %453 = vmatprep.subr.bf16.mxu0 0
    %454 = vmatpush1.bf16.msra.mxu0 %v449
    %455 = vmatprep.subr.bf16.mxu0 0
    %456 = vmatpush1.bf16.msra.mxu0 0
    %457 = vmatprep.subr.bf16.mxu0 0
    %458 = vmatpush1.bf16.msra.mxu0 0
    %459 = vmatprep.subr.bf16.mxu0 0
    %460 = vmatpush1.bf16.msra.mxu0 0
    %461 = vmatprep.subr.bf16.mxu0 0
    %462 = vmatpush1.bf16.msra.mxu0 0
    %463 = vmatprep.subr.bf16.mxu0 0
    %464 = vmatpush1.bf16.msra.mxu0 0
    %465 = vmatprep.subr.bf16.mxu0 0
    %466 = vmatpush1.bf16.msra.mxu0 0
    %467 = vmatprep.subr.bf16.mxu0 0
    %468 = vmatpush1.bf16.msra.mxu0 0
    %469 = vmatprep.subr.bf16.mxu0 0
    %470 = vmatpush1.bf16.msra.mxu0 0
    %471 = vmatprep.subr.bf16.mxu0 0
    %472 = vmatpush1.bf16.msra.mxu0 0
    %473 = vmatprep.subr.bf16.mxu0 0
    %474 = vmatpush1.bf16.msra.mxu0 0
    %475 = vmatprep.subr.bf16.mxu0 0
    %476 = vmatpush1.bf16.msra.mxu0 0
    %477 = vmatprep.subr.bf16.mxu0 0
    %478 = vmatpush1.bf16.msra.mxu0 0
    %479 = vmatprep.subr.bf16.mxu0 0
    %480 = vmatpush1.bf16.msra.mxu0 0
    %481 = vmatprep.subr.bf16.mxu0 0
    %482 = vmatpush1.bf16.msra.mxu0 0
    %483 = vmatprep.mubr.bf16.mxu0 0
    %484 = vmatmul.mubr.bf16.gmra.mrb[0].mxu0 %v349
    %v485 = vpop.f32.mrb[0].mxu0
    %v486 = vadd.f32 %v175, %v485
    %v487 = vpop.f32.mrb[0].mxu0
    %v488 = vpop.f32.mrb[0].mxu0
    %v489 = vadd.f32 %v175, %v488
    %v490 = vpop.f32.mrb[0].mxu0
    %491 = vmatprep.mubr.bf16.mxu0 0
    %492 = vmatmul.mubr.bf16.gmra.mrb[0].mxu0 %v352
    %v493 = vpop.f32.mrb[0].mxu0
    %v494 = vadd.f32 %v175, %v493
    %v495 = vpop.f32.mrb[0].mxu0
    %v496 = vpop.f32.mrb[0].mxu0
    %v497 = vadd.f32 %v175, %v496
    %v498 = vpop.f32.mrb[0].mxu0
    %499 = vmatprep.mubr.bf16.mxu0 0
    %500 = vmatmul.mubr.bf16.gmra.mrb[0].mxu0 %v355
    %v501 = vpop.f32.mrb[0].mxu0
    %v502 = vadd.f32 %v175, %v501
    %v503 = vpop.f32.mrb[0].mxu0
    %v504 = vpop.f32.mrb[0].mxu0
    %v505 = vadd.f32 %v175, %v504
    %v506 = vpop.f32.mrb[0].mxu0
    %507 = vmatprep.mubr.bf16.mxu0 0
    %508 = vmatmul.mubr.bf16.gmra.mrb[0].mxu0 %v358
    %v509 = vpop.f32.mrb[0].mxu0
    %v510 = vadd.f32 %v175, %v509
    %v511 = vpop.f32.mrb[0].mxu0
    %v512 = vpop.f32.mrb[0].mxu0
    %v513 = vadd.f32 %v175, %v512
    %v514 = vpop.f32.mrb[0].mxu0
    %515 = vmatprep.mubr.bf16.mxu0 0
    %516 = vmatmul.mubr.bf16.gmra.mrb[0].mxu0 %v361
    %v517 = vpop.f32.mrb[0].mxu0
    %v518 = vadd.f32 %v175, %v517
    %v519 = vpop.f32.mrb[0].mxu0
    %v520 = vpop.f32.mrb[0].mxu0
    %v521 = vadd.f32 %v175, %v520
    %v522 = vpop.f32.mrb[0].mxu0
    %523 = vmatprep.mubr.bf16.mxu0 0
    %524 = vmatmul.mubr.bf16.gmra.mrb[0].mxu0 %v364
    %v525 = vpop.f32.mrb[0].mxu0
    %v526 = vadd.f32 %v175, %v525
    %v527 = vpop.f32.mrb[0].mxu0
    %v528 = vpop.f32.mrb[0].mxu0
    %v529 = vadd.f32 %v175, %v528
    %v530 = vpop.f32.mrb[0].mxu0
    %531 = vmatprep.mubr.bf16.mxu0 0
    %532 = vmatmul.mubr.bf16.gmra.mrb[0].mxu0 %v367
    %v533 = vpop.f32.mrb[0].mxu0
    %v534 = vadd.f32 %v175, %v533
    %v535 = vpop.f32.mrb[0].mxu0
    %v536 = vpop.f32.mrb[0].mxu0
    %v537 = vadd.f32 %v175, %v536
    %v538 = vpop.f32.mrb[0].mxu0
    %539 = vmatprep.mubr.bf16.mxu0 0
    %540 = vmatmul.mubr.bf16.gmra.mrb[0].mxu0 %v370
    %v541 = vpop.f32.mrb[0].mxu0
    %v542 = vadd.f32 %v175, %v541
    %v543 = vpop.f32.mrb[0].mxu0
    %v544 = vpop.f32.mrb[0].mxu0
    %v545 = vadd.f32 %v175, %v544
    %v546 = vpop.f32.mrb[0].mxu0
    %547 = vmatprep.mubr.bf16.mxu0 0
    %548 = vmatmul.mubr.bf16.gmra.mrb[0].mxu0 %v373
    %v549 = vpop.f32.mrb[0].mxu0
    %v550 = vadd.f32 %v175, %v549
    %v551 = vpop.f32.mrb[0].mxu0
    %v552 = vpop.f32.mrb[0].mxu0
    %v553 = vadd.f32 %v175, %v552
    %v554 = vpop.f32.mrb[0].mxu0
    %555 = vmatprep.mubr.bf16.mxu0 0
    %556 = vmatmul.mubr.bf16.gmra.mrb[0].mxu0 %v376
    %v557 = vpop.f32.mrb[0].mxu0
    %v558 = vadd.f32 %v175, %v557
    %v559 = vpop.f32.mrb[0].mxu0
    %v560 = vpop.f32.mrb[0].mxu0
    %v561 = vadd.f32 %v175, %v560
    %v562 = vpop.f32.mrb[0].mxu0
    %563 = vmatprep.mubr.bf16.mxu0 0
    %564 = vmatmul.mubr.bf16.gmra.mrb[0].mxu0 %v379
    %v565 = vpop.f32.mrb[0].mxu0
    %v566 = vadd.f32 %v175, %v565
    %v567 = vpop.f32.mrb[0].mxu0
    %v568 = vpop.f32.mrb[0].mxu0
    %v569 = vadd.f32 %v175, %v568
    %v570 = vpop.f32.mrb[0].mxu0
    %571 = vmatprep.mubr.bf16.mxu0 0
    %572 = vmatmul.mubr.bf16.gmra.mrb[0].mxu0 %v382
    %v573 = vpop.f32.mrb[0].mxu0
    %v574 = vadd.f32 %v175, %v573
    %v575 = vpop.f32.mrb[0].mxu0
    %v576 = vpop.f32.mrb[0].mxu0
    %v577 = vadd.f32 %v175, %v576
    %v578 = vpop.f32.mrb[0].mxu0
    %579 = vmatprep.mubr.bf16.mxu0 0
    %580 = vmatmul.mubr.bf16.gmra.mrb[0].mxu0 %v385
    %v581 = vpop.f32.mrb[0].mxu0
    %v582 = vadd.f32 %v175, %v581
    %v583 = vpop.f32.mrb[0].mxu0
    %v584 = vpop.f32.mrb[0].mxu0
    %v585 = vadd.f32 %v175, %v584
    %v586 = vpop.f32.mrb[0].mxu0
    %587 = vmatprep.mubr.bf16.mxu0 0
    %588 = vmatmul.mubr.bf16.gmra.mrb[0].mxu0 %v388
    %v589 = vpop.f32.mrb[0].mxu0
    %v590 = vadd.f32 %v175, %v589
    %v591 = vpop.f32.mrb[0].mxu0
    %v592 = vpop.f32.mrb[0].mxu0
    %v593 = vadd.f32 %v175, %v592
    %v594 = vpop.f32.mrb[0].mxu0
    %595 = vmatprep.mubr.bf16.mxu0 0
    %596 = vmatmul.mubr.bf16.gmra.mrb[0].mxu0 %v391
    %v597 = vpop.f32.mrb[0].mxu0
    %v598 = vadd.f32 %v175, %v597
    %v599 = vpop.f32.mrb[0].mxu0
    %v600 = vpop.f32.mrb[0].mxu0
    %v601 = vadd.f32 %v175, %v600
    %v602 = vpop.f32.mrb[0].mxu0
    %603 = vmatprep.mubr.bf16.mxu0 0
    %604 = vmatmul.mubr.bf16.gmra.mrb[0].mxu0 %v394
    %v605 = vpop.f32.mrb[0].mxu0
    %v606 = vadd.f32 %v175, %v605
    %v607 = vpop.f32.mrb[0].mxu0
    %v608 = vpop.f32.mrb[0].mxu0
    %v609 = vadd.f32 %v175, %v608
    %v610 = vpop.f32.mrb[0].mxu0
    %611 = vmatprep.mubr.bf16.mxu0 0
    %612 = vmatmul.mubr.bf16.gmra.mrb[0].mxu0 %v397
    %v613 = vpop.f32.mrb[0].mxu0
    %v614 = vadd.f32 %v175, %v613
    %v615 = vpop.f32.mrb[0].mxu0
    %v616 = vpop.f32.mrb[0].mxu0
    %v617 = vadd.f32 %v175, %v616
    %v618 = vpop.f32.mrb[0].mxu0
    %619 = vmatprep.mubr.bf16.mxu0 0
    %620 = vmatmul.mubr.bf16.gmra.mrb[0].mxu0 %v400
    %v621 = vpop.f32.mrb[0].mxu0
    %v622 = vadd.f32 %v175, %v621
    %v623 = vpop.f32.mrb[0].mxu0
    %v624 = vpop.f32.mrb[0].mxu0
    %v625 = vadd.f32 %v175, %v624
    %v626 = vpop.f32.mrb[0].mxu0
    %627 = vmatprep.mubr.bf16.mxu0 0
    %628 = vmatmul.mubr.bf16.gmra.mrb[0].mxu0 %v403
    %v629 = vpop.f32.mrb[0].mxu0
    %v630 = vadd.f32 %v175, %v629
    %v631 = vpop.f32.mrb[0].mxu0
    %v632 = vpop.f32.mrb[0].mxu0
    %v633 = vadd.f32 %v175, %v632
    %v634 = vpop.f32.mrb[0].mxu0
    %635 = vmatprep.mubr.bf16.mxu0 0
    %636 = vmatmul.mubr.bf16.gmra.mrb[0].mxu0 %v406
    %v637 = vpop.f32.mrb[0].mxu0
    %v638 = vadd.f32 %v175, %v637
    %v639 = vpop.f32.mrb[0].mxu0
    %v640 = vpop.f32.mrb[0].mxu0
    %v641 = vadd.f32 %v175, %v640
    %v642 = vpop.f32.mrb[0].mxu0
    %643 = vmatprep.mubr.bf16.mxu0 0
    %644 = vmatmul.mubr.bf16.gmra.mrb[0].mxu0 %v409
    %v645 = vpop.f32.mrb[0].mxu0
    %v646 = vadd.f32 %v175, %v645
    %v647 = vpop.f32.mrb[0].mxu0
    %v648 = vpop.f32.mrb[0].mxu0
    %v649 = vadd.f32 %v175, %v648
    %v650 = vpop.f32.mrb[0].mxu0
    %651 = vmatprep.mubr.bf16.mxu0 0
    %652 = vmatmul.mubr.bf16.gmra.mrb[0].mxu0 %v412
    %v653 = vpop.f32.mrb[0].mxu0
    %v654 = vadd.f32 %v175, %v653
    %v655 = vpop.f32.mrb[0].mxu0
    %v656 = vpop.f32.mrb[0].mxu0
    %v657 = vadd.f32 %v175, %v656
    %v658 = vpop.f32.mrb[0].mxu0
    %659 = vmatprep.mubr.bf16.mxu0 0
    %660 = vmatmul.mubr.bf16.gmra.mrb[0].mxu0 %v415
    %v661 = vpop.f32.mrb[0].mxu0
    %v662 = vadd.f32 %v175, %v661
    %v663 = vpop.f32.mrb[0].mxu0
    %v664 = vpop.f32.mrb[0].mxu0
    %v665 = vadd.f32 %v175, %v664
    %v666 = vpop.f32.mrb[0].mxu0
    %667 = vmatprep.mubr.bf16.mxu0 0
    %668 = vmatmul.mubr.bf16.gmra.mrb[0].mxu0 %v418
    %v669 = vpop.f32.mrb[0].mxu0
    %v670 = vadd.f32 %v175, %v669
    %v671 = vpop.f32.mrb[0].mxu0
    %v672 = vpop.f32.mrb[0].mxu0
    %v673 = vadd.f32 %v175, %v672
    %v674 = vpop.f32.mrb[0].mxu0
    %675 = vmatprep.mubr.bf16.mxu0 0
    %676 = vmatmul.mubr.bf16.gmra.mrb[0].mxu0 %v421
    %v677 = vpop.f32.mrb[0].mxu0
    %v678 = vadd.f32 %v175, %v677
    %v679 = vpop.f32.mrb[0].mxu0
    %v680 = vpop.f32.mrb[0].mxu0
    %v681 = vadd.f32 %v175, %v680
    %v682 = vpop.f32.mrb[0].mxu0
    %683 = vmatprep.mubr.bf16.mxu0 0
    %684 = vmatmul.mubr.bf16.gmra.mrb[0].mxu0 %v424
    %v685 = vpop.f32.mrb[0].mxu0
    %v686 = vadd.f32 %v175, %v685
    %v687 = vpop.f32.mrb[0].mxu0
    %v688 = vpop.f32.mrb[0].mxu0
    %v689 = vadd.f32 %v175, %v688
    %v690 = vpop.f32.mrb[0].mxu0
    %691 = vmatprep.mubr.bf16.mxu0 0
    %692 = vmatmul.mubr.bf16.gmra.mrb[0].mxu0 %v427
    %v693 = vpop.f32.mrb[0].mxu0
    %v694 = vadd.f32 %v175, %v693
    %v695 = vpop.f32.mrb[0].mxu0
    %v696 = vpop.f32.mrb[0].mxu0
    %v697 = vadd.f32 %v175, %v696
    %v698 = vpop.f32.mrb[0].mxu0
    %699 = vmatprep.mubr.bf16.mxu0 0
    %700 = vmatmul.mubr.bf16.gmra.mrb[0].mxu0 %v430
    %v701 = vpop.f32.mrb[0].mxu0
    %v702 = vadd.f32 %v175, %v701
    %v703 = vpop.f32.mrb[0].mxu0
    %v704 = vpop.f32.mrb[0].mxu0
    %v705 = vadd.f32 %v175, %v704
    %v706 = vpop.f32.mrb[0].mxu0
    %707 = vmatprep.mubr.bf16.mxu0 0
    %708 = vmatmul.mubr.bf16.gmra.mrb[0].mxu0 %v433
    %v709 = vpop.f32.mrb[0].mxu0
    %v710 = vadd.f32 %v175, %v709
    %v711 = vpop.f32.mrb[0].mxu0
    %v712 = vpop.f32.mrb[0].mxu0
    %v713 = vadd.f32 %v175, %v712
    %v714 = vpop.f32.mrb[0].mxu0
    %715 = vmatprep.mubr.bf16.mxu0 0
    %716 = vmatmul.mubr.bf16.gmra.mrb[0].mxu0 %v436
    %v717 = vpop.f32.mrb[0].mxu0
    %v718 = vadd.f32 %v175, %v717
    %v719 = vpop.f32.mrb[0].mxu0
    %v720 = vpop.f32.mrb[0].mxu0
    %v721 = vadd.f32 %v175, %v720
    %v722 = vpop.f32.mrb[0].mxu0
    %723 = vmatprep.mubr.bf16.mxu0 0
    %724 = vmatmul.mubr.bf16.gmra.mrb[0].mxu0 %v439
    %v725 = vpop.f32.mrb[0].mxu0
    %v726 = vadd.f32 %v175, %v725
    %v727 = vpop.f32.mrb[0].mxu0
    %v728 = vpop.f32.mrb[0].mxu0
    %v729 = vadd.f32 %v175, %v728
    %v730 = vpop.f32.mrb[0].mxu0
    %731 = vmatprep.mubr.bf16.mxu0 0
    %732 = vmatmul.mubr.bf16.gmra.mrb[0].mxu0 %v442
    %v733 = vpop.f32.mrb[0].mxu0
    %v734 = vadd.f32 %v175, %v733
    %v735 = vpop.f32.mrb[0].mxu0
    %v736 = vpop.f32.mrb[0].mxu0
    %v737 = vadd.f32 %v175, %v736
    %v738 = vpop.f32.mrb[0].mxu0
    %739 = vdwg.mxu0
    %v740 = vmax.f32 %v486, 0.0
    %v741 = vmax.f32 %v489, 0.0
    %v742 = vmax.f32 %v494, 0.0
    %v743 = vmax.f32 %v497, 0.0
    %v744 = vmax.f32 %v502, 0.0
    %v745 = vmax.f32 %v505, 0.0
    %v746 = vmax.f32 %v510, 0.0
    %v747 = vmax.f32 %v513, 0.0
    %v748 = vmax.f32 %v518, 0.0
    %v749 = vmax.f32 %v521, 0.0
    %v750 = vmax.f32 %v526, 0.0
    %v751 = vmax.f32 %v529, 0.0
    %v752 = vmax.f32 %v534, 0.0
    %v753 = vmax.f32 %v537, 0.0
    %v754 = vmax.f32 %v542, 0.0
    %v755 = vmax.f32 %v545, 0.0
    %v756 = vmax.f32 %v550, 0.0
    %v757 = vmax.f32 %v553, 0.0
    %v758 = vmax.f32 %v558, 0.0
    %v759 = vmax.f32 %v561, 0.0
    %v760 = vmax.f32 %v566, 0.0
    %v761 = vmax.f32 %v569, 0.0
    %v762 = vmax.f32 %v574, 0.0
    %v763 = vmax.f32 %v577, 0.0
    %v764 = vmax.f32 %v582, 0.0
    %v765 = vmax.f32 %v585, 0.0
    %v766 = vmax.f32 %v590, 0.0
    %v767 = vmax.f32 %v593, 0.0
    %v768 = vmax.f32 %v598, 0.0
    %v769 = vmax.f32 %v601, 0.0
    %v770 = vmax.f32 %v606, 0.0
    %v771 = vmax.f32 %v609, 0.0
    %v772 = vmax.f32 %v614, 0.0
    %v773 = vmax.f32 %v617, 0.0
    %v774 = vmax.f32 %v622, 0.0
    %v775 = vmax.f32 %v625, 0.0
    %v776 = vmax.f32 %v630, 0.0
    %v777 = vmax.f32 %v633, 0.0
    %v778 = vmax.f32 %v638, 0.0
    %v779 = vmax.f32 %v641, 0.0
    %v780 = vmax.f32 %v646, 0.0
    %v781 = vmax.f32 %v649, 0.0
    %v782 = vmax.f32 %v654, 0.0
    %v783 = vmax.f32 %v657, 0.0
    %v784 = vmax.f32 %v662, 0.0
    %v785 = vmax.f32 %v665, 0.0
    %v786 = vmax.f32 %v670, 0.0
    %v787 = vmax.f32 %v673, 0.0
    %v788 = vmax.f32 %v678, 0.0
    %v789 = vmax.f32 %v681, 0.0
    %v790 = vmax.f32 %v686, 0.0
    %v791 = vmax.f32 %v689, 0.0
    %v792 = vmax.f32 %v694, 0.0
    %v793 = vmax.f32 %v697, 0.0
    %v794 = vmax.f32 %v702, 0.0
    %v795 = vmax.f32 %v705, 0.0
    %v796 = vmax.f32 %v710, 0.0
    %v797 = vmax.f32 %v713, 0.0
    %v798 = vmax.f32 %v718, 0.0
    %v799 = vmax.f32 %v721, 0.0
    %v800 = vmax.f32 %v726, 0.0
    %v801 = vmax.f32 %v729, 0.0
    %v802 = vmax.f32 %v734, 0.0
    %v803 = vmax.f32 %v737, 0.0
    %v804 = vld [vmem:[%s2 + $0x1] sm:$0x1]
    %v805 = vlaneseq
    %v806 = vshrl.u32 %v805, 7
    %v807 = vsub.s32 0, %v806
    %v808 = vrot.slane %v804, %v807
    %v809 = vmul.f32 %v740, %v808
    %v810 = vmul.f32 %v741, %v808
    %v811 = vmul.f32 %v742, %v808
    %v812 = vmul.f32 %v743, %v808
    %v813 = vmul.f32 %v744, %v808
    %v814 = vmul.f32 %v745, %v808
    %v815 = vmul.f32 %v746, %v808
    %v816 = vmul.f32 %v747, %v808
    %v817 = vmul.f32 %v748, %v808
    %v818 = vmul.f32 %v749, %v808
    %v819 = vmul.f32 %v750, %v808
    %v820 = vmul.f32 %v751, %v808
    %v821 = vmul.f32 %v752, %v808
    %v822 = vmul.f32 %v753, %v808
    %v823 = vmul.f32 %v754, %v808
    %v824 = vmul.f32 %v755, %v808
    %v825 = vmul.f32 %v756, %v808
    %v826 = vmul.f32 %v757, %v808
    %v827 = vmul.f32 %v758, %v808
    %v828 = vmul.f32 %v759, %v808
    %v829 = vmul.f32 %v760, %v808
    %v830 = vmul.f32 %v761, %v808
    %v831 = vmul.f32 %v762, %v808
    %v832 = vmul.f32 %v763, %v808
    %v833 = vmul.f32 %v764, %v808
    %v834 = vmul.f32 %v765, %v808
    %v835 = vmul.f32 %v766, %v808
    %v836 = vmul.f32 %v767, %v808
    %v837 = vmul.f32 %v768, %v808
    %v838 = vmul.f32 %v769, %v808
    %v839 = vmul.f32 %v770, %v808
    %v840 = vmul.f32 %v771, %v808
    %v841 = vmul.f32 %v772, %v808
    %v842 = vmul.f32 %v773, %v808
    %v843 = vmul.f32 %v774, %v808
    %v844 = vmul.f32 %v775, %v808
    %v845 = vmul.f32 %v776, %v808
    %v846 = vmul.f32 %v777, %v808
    %v847 = vmul.f32 %v778, %v808
    %v848 = vmul.f32 %v779, %v808
    %v849 = vmul.f32 %v780, %v808
    %v850 = vmul.f32 %v781, %v808
    %v851 = vmul.f32 %v782, %v808
    %v852 = vmul.f32 %v783, %v808
    %v853 = vmul.f32 %v784, %v808
    %v854 = vmul.f32 %v785, %v808
    %v855 = vmul.f32 %v786, %v808
    %v856 = vmul.f32 %v787, %v808
    %v857 = vmul.f32 %v788, %v808
    %v858 = vmul.f32 %v789, %v808
    %v859 = vmul.f32 %v790, %v808
    %v860 = vmul.f32 %v791, %v808
    %v861 = vmul.f32 %v792, %v808
    %v862 = vmul.f32 %v793, %v808
    %v863 = vmul.f32 %v794, %v808
    %v864 = vmul.f32 %v795, %v808
    %v865 = vmul.f32 %v796, %v808
    %v866 = vmul.f32 %v797, %v808
    %v867 = vmul.f32 %v798, %v808
    %v868 = vmul.f32 %v799, %v808
    %v869 = vmul.f32 %v800, %v808
    %v870 = vmul.f32 %v801, %v808
    %v871 = vmul.f32 %v802, %v808
    %v872 = vmul.f32 %v803, %v808
    %v873 = vld [vmem:[%s2 + $0x2] sm:$0x1]
    %v874 = vlaneseq
    %v875 = vshrl.u32 %v874, 7
    %v876 = vsub.s32 0, %v875
    %v877 = vrot.slane %v873, %v876
    %v878 = vadd.f32 %v809, %v877
    %v879 = vadd.f32 %v810, %v877
    %v880 = vadd.f32 %v811, %v877
    %v881 = vadd.f32 %v812, %v877
    %v882 = vadd.f32 %v813, %v877
    %v883 = vadd.f32 %v814, %v877
    %v884 = vadd.f32 %v815, %v877
    %v885 = vadd.f32 %v816, %v877
    %v886 = vadd.f32 %v817, %v877
    %v887 = vadd.f32 %v818, %v877
    %v888 = vadd.f32 %v819, %v877
    %v889 = vadd.f32 %v820, %v877
    %v890 = vadd.f32 %v821, %v877
    %v891 = vadd.f32 %v822, %v877
    %v892 = vadd.f32 %v823, %v877
    %v893 = vadd.f32 %v824, %v877
    %v894 = vadd.f32 %v825, %v877
    %v895 = vadd.f32 %v826, %v877
    %v896 = vadd.f32 %v827, %v877
    %v897 = vadd.f32 %v828, %v877
    %v898 = vadd.f32 %v829, %v877
    %v899 = vadd.f32 %v830, %v877
    %v900 = vadd.f32 %v831, %v877
    %v901 = vadd.f32 %v832, %v877
    %v902 = vadd.f32 %v833, %v877
    %v903 = vadd.f32 %v834, %v877
    %v904 = vadd.f32 %v835, %v877
    %v905 = vadd.f32 %v836, %v877
    %v906 = vadd.f32 %v837, %v877
    %v907 = vadd.f32 %v838, %v877
    %v908 = vadd.f32 %v839, %v877
    %v909 = vadd.f32 %v840, %v877
    %v910 = vadd.f32 %v841, %v877
    %v911 = vadd.f32 %v842, %v877
    %v912 = vadd.f32 %v843, %v877
    %v913 = vadd.f32 %v844, %v877
    %v914 = vadd.f32 %v845, %v877
    %v915 = vadd.f32 %v846, %v877
    %v916 = vadd.f32 %v847, %v877
    %v917 = vadd.f32 %v848, %v877
    %v918 = vadd.f32 %v849, %v877
    %v919 = vadd.f32 %v850, %v877
    %v920 = vadd.f32 %v851, %v877
    %v921 = vadd.f32 %v852, %v877
    %v922 = vadd.f32 %v853, %v877
    %v923 = vadd.f32 %v854, %v877
    %v924 = vadd.f32 %v855, %v877
    %v925 = vadd.f32 %v856, %v877
    %v926 = vadd.f32 %v857, %v877
    %v927 = vadd.f32 %v858, %v877
    %v928 = vadd.f32 %v859, %v877
    %v929 = vadd.f32 %v860, %v877
    %v930 = vadd.f32 %v861, %v877
    %v931 = vadd.f32 %v862, %v877
    %v932 = vadd.f32 %v863, %v877
    %v933 = vadd.f32 %v864, %v877
    %v934 = vadd.f32 %v865, %v877
    %v935 = vadd.f32 %v866, %v877
    %v936 = vadd.f32 %v867, %v877
    %v937 = vadd.f32 %v868, %v877
    %v938 = vadd.f32 %v869, %v877
    %v939 = vadd.f32 %v870, %v877
    %v940 = vadd.f32 %v871, %v877
    %v941 = vadd.f32 %v872, %v877
    %vm942 = vcmask 261120
    %v943 = vsel %vm942, %v878, -inf
    %v944 = vsel %vm942, %v880, -inf
    %v945 = vmax.f32 %v943, %v944
    %v946 = vsel %vm942, %v879, -inf
    %v947 = vsel %vm942, %v881, -inf
    %v948 = vmax.f32 %v946, %v947
    %v949 = vsel %vm942, %v882, -inf
    %v950 = vsel %vm942, %v884, -inf
    %v951 = vmax.f32 %v949, %v950
    %v952 = vsel %vm942, %v883, -inf
    %v953 = vsel %vm942, %v885, -inf
    %v954 = vmax.f32 %v952, %v953
    %v955 = vsel %vm942, %v886, -inf
    %v956 = vsel %vm942, %v888, -inf
    %v957 = vmax.f32 %v955, %v956
    %v958 = vsel %vm942, %v887, -inf
    %v959 = vsel %vm942, %v889, -inf
    %v960 = vmax.f32 %v958, %v959
    %v961 = vsel %vm942, %v890, -inf
    %v962 = vsel %vm942, %v892, -inf
    %v963 = vmax.f32 %v961, %v962
    %v964 = vsel %vm942, %v891, -inf
    %v965 = vsel %vm942, %v893, -inf
    %v966 = vmax.f32 %v964, %v965
    %v967 = vsel %vm942, %v894, -inf
    %v968 = vsel %vm942, %v896, -inf
    %v969 = vmax.f32 %v967, %v968
    %v970 = vsel %vm942, %v895, -inf
    %v971 = vsel %vm942, %v897, -inf
    %v972 = vmax.f32 %v970, %v971
    %v973 = vsel %vm942, %v898, -inf
    %v974 = vsel %vm942, %v900, -inf
    %v975 = vmax.f32 %v973, %v974
    %v976 = vsel %vm942, %v899, -inf
    %v977 = vsel %vm942, %v901, -inf
    %v978 = vmax.f32 %v976, %v977
    %v979 = vsel %vm942, %v902, -inf
    %v980 = vsel %vm942, %v904, -inf
    %v981 = vmax.f32 %v979, %v980
    %v982 = vsel %vm942, %v903, -inf
    %v983 = vsel %vm942, %v905, -inf
    %v984 = vmax.f32 %v982, %v983
    %v985 = vsel %vm942, %v906, -inf
    %v986 = vsel %vm942, %v908, -inf
    %v987 = vmax.f32 %v985, %v986
    %v988 = vsel %vm942, %v907, -inf
    %v989 = vsel %vm942, %v909, -inf
    %v990 = vmax.f32 %v988, %v989
    %v991 = vsel %vm942, %v910, -inf
    %v992 = vsel %vm942, %v912, -inf
    %v993 = vmax.f32 %v991, %v992
    %v994 = vsel %vm942, %v911, -inf
    %v995 = vsel %vm942, %v913, -inf
    %v996 = vmax.f32 %v994, %v995
    %v997 = vsel %vm942, %v914, -inf
    %v998 = vsel %vm942, %v916, -inf
    %v999 = vmax.f32 %v997, %v998
    %v1000 = vsel %vm942, %v915, -inf
    %v1001 = vsel %vm942, %v917, -inf
    %v1002 = vmax.f32 %v1000, %v1001
    %v1003 = vsel %vm942, %v918, -inf
    %v1004 = vsel %vm942, %v920, -inf
    %v1005 = vmax.f32 %v1003, %v1004
    %v1006 = vsel %vm942, %v919, -inf
    %v1007 = vsel %vm942, %v921, -inf
    %v1008 = vmax.f32 %v1006, %v1007
    %v1009 = vsel %vm942, %v922, -inf
    %v1010 = vsel %vm942, %v924, -inf
    %v1011 = vmax.f32 %v1009, %v1010
    %v1012 = vsel %vm942, %v923, -inf
    %v1013 = vsel %vm942, %v925, -inf
    %v1014 = vmax.f32 %v1012, %v1013
    %v1015 = vsel %vm942, %v926, -inf
    %v1016 = vsel %vm942, %v928, -inf
    %v1017 = vmax.f32 %v1015, %v1016
    %v1018 = vsel %vm942, %v927, -inf
    %v1019 = vsel %vm942, %v929, -inf
    %v1020 = vmax.f32 %v1018, %v1019
    %v1021 = vsel %vm942, %v930, -inf
    %v1022 = vsel %vm942, %v932, -inf
    %v1023 = vmax.f32 %v1021, %v1022
    %v1024 = vsel %vm942, %v931, -inf
    %v1025 = vsel %vm942, %v933, -inf
    %v1026 = vmax.f32 %v1024, %v1025
    %v1027 = vsel %vm942, %v934, -inf
    %v1028 = vsel %vm942, %v936, -inf
    %v1029 = vmax.f32 %v1027, %v1028
    %v1030 = vsel %vm942, %v935, -inf
    %v1031 = vsel %vm942, %v937, -inf
    %v1032 = vmax.f32 %v1030, %v1031
    %v1033 = vsel %vm942, %v938, -inf
    %v1034 = vsel %vm942, %v940, -inf
    %v1035 = vmax.f32 %v1033, %v1034
    %v1036 = vsel %vm942, %v939, -inf
    %v1037 = vsel %vm942, %v941, -inf
    %v1038 = vmax.f32 %v1036, %v1037
    %v1071 = vcombine.high %v945, %v945
    %v1073 = vunpack.c.l.s4 1983009808
    %v1074 = vunpack.c.0.s8 %v1073
    %v1075 = vlaneseq
    %v1076 = vshrl.u32 %v1075, 7
    %v1077 = vsub.s32 %v1074, %v1076
    %v1078 = vrot.slane %v945, %v1077
    %v1080 = vunpack.c.l.s4 1983009808
    %v1081 = vunpack.c.0.s8 %v1080
    %v1082 = vlaneseq
    %v1083 = vshrl.u32 %v1082, 7
    %v1084 = vsub.s32 %v1081, %v1083
    %v1085 = vrot.slane %v1071, %v1084
    %v1086 = vcombine.high %v1078, %v1078
    %v1087 = vcombine.high %v1085, %v1085
    %v1088 = vcombine.high %v948, %v948
    %v1090 = vunpack.c.l.s4 1983009808
    %v1091 = vunpack.c.0.s8 %v1090
    %v1092 = vlaneseq
    %v1093 = vshrl.u32 %v1092, 7
    %v1094 = vsub.s32 %v1091, %v1093
    %v1095 = vrot.slane %v948, %v1094
    %v1097 = vunpack.c.l.s4 1983009808
    %v1098 = vunpack.c.0.s8 %v1097
    %v1099 = vlaneseq
    %v1100 = vshrl.u32 %v1099, 7
    %v1101 = vsub.s32 %v1098, %v1100
    %v1102 = vrot.slane %v1088, %v1101
    %v1103 = vcombine.high %v1095, %v1095
    %v1104 = vcombine.high %v1102, %v1102
    %v1105 = vcombine.high %v951, %v951
    %v1107 = vunpack.c.l.s4 1983009808
    %v1108 = vunpack.c.0.s8 %v1107
    %v1109 = vlaneseq
    %v1110 = vshrl.u32 %v1109, 7
    %v1111 = vsub.s32 %v1108, %v1110
    %v1112 = vrot.slane %v951, %v1111
    %v1114 = vunpack.c.l.s4 1983009808
    %v1115 = vunpack.c.0.s8 %v1114
    %v1116 = vlaneseq
    %v1117 = vshrl.u32 %v1116, 7
    %v1118 = vsub.s32 %v1115, %v1117
    %v1119 = vrot.slane %v1105, %v1118
    %v1120 = vcombine.high %v1112, %v1112
    %v1121 = vcombine.high %v1119, %v1119
    %v1122 = vcombine.high %v954, %v954
    %v1124 = vunpack.c.l.s4 1983009808
    %v1125 = vunpack.c.0.s8 %v1124
    %v1126 = vlaneseq
    %v1127 = vshrl.u32 %v1126, 7
    %v1128 = vsub.s32 %v1125, %v1127
    %v1129 = vrot.slane %v954, %v1128
    %v1131 = vunpack.c.l.s4 1983009808
    %v1132 = vunpack.c.0.s8 %v1131
    %v1133 = vlaneseq
    %v1134 = vshrl.u32 %v1133, 7
    %v1135 = vsub.s32 %v1132, %v1134
    %v1136 = vrot.slane %v1122, %v1135
    %v1137 = vcombine.high %v1129, %v1129
    %v1138 = vcombine.high %v1136, %v1136
    %v1139 = vcombine.high %v957, %v957
    %v1141 = vunpack.c.l.s4 1983009808
    %v1142 = vunpack.c.0.s8 %v1141
    %v1143 = vlaneseq
    %v1144 = vshrl.u32 %v1143, 7
    %v1145 = vsub.s32 %v1142, %v1144
    %v1146 = vrot.slane %v957, %v1145
    %v1148 = vunpack.c.l.s4 1983009808
    %v1149 = vunpack.c.0.s8 %v1148
    %v1150 = vlaneseq
    %v1151 = vshrl.u32 %v1150, 7
    %v1152 = vsub.s32 %v1149, %v1151
    %v1153 = vrot.slane %v1139, %v1152
    %v1154 = vcombine.high %v1146, %v1146
    %v1155 = vcombine.high %v1153, %v1153
    %v1156 = vcombine.high %v960, %v960
    %v1158 = vunpack.c.l.s4 1983009808
    %v1159 = vunpack.c.0.s8 %v1158
    %v1160 = vlaneseq
    %v1161 = vshrl.u32 %v1160, 7
    %v1162 = vsub.s32 %v1159, %v1161
    %v1163 = vrot.slane %v960, %v1162
    %v1165 = vunpack.c.l.s4 1983009808
    %v1166 = vunpack.c.0.s8 %v1165
    %v1167 = vlaneseq
    %v1168 = vshrl.u32 %v1167, 7
    %v1169 = vsub.s32 %v1166, %v1168
    %v1170 = vrot.slane %v1156, %v1169
    %v1171 = vcombine.high %v1163, %v1163
    %v1172 = vcombine.high %v1170, %v1170
    %v1173 = vcombine.high %v963, %v963
    %v1175 = vunpack.c.l.s4 1983009808
    %v1176 = vunpack.c.0.s8 %v1175
    %v1177 = vlaneseq
    %v1178 = vshrl.u32 %v1177, 7
    %v1179 = vsub.s32 %v1176, %v1178
    %v1180 = vrot.slane %v963, %v1179
    %v1182 = vunpack.c.l.s4 1983009808
    %v1183 = vunpack.c.0.s8 %v1182
    %v1184 = vlaneseq
    %v1185 = vshrl.u32 %v1184, 7
    %v1186 = vsub.s32 %v1183, %v1185
    %v1187 = vrot.slane %v1173, %v1186
    %v1188 = vcombine.high %v1180, %v1180
    %v1189 = vcombine.high %v1187, %v1187
    %v1190 = vcombine.high %v966, %v966
    %v1192 = vunpack.c.l.s4 1983009808
    %v1193 = vunpack.c.0.s8 %v1192
    %v1194 = vlaneseq
    %v1195 = vshrl.u32 %v1194, 7
    %v1196 = vsub.s32 %v1193, %v1195
    %v1197 = vrot.slane %v966, %v1196
    %v1199 = vunpack.c.l.s4 1983009808
    %v1200 = vunpack.c.0.s8 %v1199
    %v1201 = vlaneseq
    %v1202 = vshrl.u32 %v1201, 7
    %v1203 = vsub.s32 %v1200, %v1202
    %v1204 = vrot.slane %v1190, %v1203
    %v1205 = vcombine.high %v1197, %v1197
    %v1206 = vcombine.high %v1204, %v1204
    %v1207 = vcombine.high %v969, %v969
    %v1209 = vunpack.c.l.s4 1983009808
    %v1210 = vunpack.c.0.s8 %v1209
    %v1211 = vlaneseq
    %v1212 = vshrl.u32 %v1211, 7
    %v1213 = vsub.s32 %v1210, %v1212
    %v1214 = vrot.slane %v969, %v1213
    %v1216 = vunpack.c.l.s4 1983009808
    %v1217 = vunpack.c.0.s8 %v1216
    %v1218 = vlaneseq
    %v1219 = vshrl.u32 %v1218, 7
    %v1220 = vsub.s32 %v1217, %v1219
    %v1221 = vrot.slane %v1207, %v1220
    %v1222 = vcombine.high %v1214, %v1214
    %v1223 = vcombine.high %v1221, %v1221
    %v1224 = vcombine.high %v972, %v972
    %v1226 = vunpack.c.l.s4 1983009808
    %v1227 = vunpack.c.0.s8 %v1226
    %v1228 = vlaneseq
    %v1229 = vshrl.u32 %v1228, 7
    %v1230 = vsub.s32 %v1227, %v1229
    %v1231 = vrot.slane %v972, %v1230
    %v1233 = vunpack.c.l.s4 1983009808
    %v1234 = vunpack.c.0.s8 %v1233
    %v1235 = vlaneseq
    %v1236 = vshrl.u32 %v1235, 7
    %v1237 = vsub.s32 %v1234, %v1236
    %v1238 = vrot.slane %v1224, %v1237
    %v1239 = vcombine.high %v1231, %v1231
    %v1240 = vcombine.high %v1238, %v1238
    %v1241 = vcombine.high %v975, %v975
    %v1243 = vunpack.c.l.s4 1983009808
    %v1244 = vunpack.c.0.s8 %v1243
    %v1245 = vlaneseq
    %v1246 = vshrl.u32 %v1245, 7
    %v1247 = vsub.s32 %v1244, %v1246
    %v1248 = vrot.slane %v975, %v1247
    %v1250 = vunpack.c.l.s4 1983009808
    %v1251 = vunpack.c.0.s8 %v1250
    %v1252 = vlaneseq
    %v1253 = vshrl.u32 %v1252, 7
    %v1254 = vsub.s32 %v1251, %v1253
    %v1255 = vrot.slane %v1241, %v1254
    %v1256 = vcombine.high %v1248, %v1248
    %v1257 = vcombine.high %v1255, %v1255
    %v1258 = vcombine.high %v978, %v978
    %v1260 = vunpack.c.l.s4 1983009808
    %v1261 = vunpack.c.0.s8 %v1260
    %v1262 = vlaneseq
    %v1263 = vshrl.u32 %v1262, 7
    %v1264 = vsub.s32 %v1261, %v1263
    %v1265 = vrot.slane %v978, %v1264
    %v1267 = vunpack.c.l.s4 1983009808
    %v1268 = vunpack.c.0.s8 %v1267
    %v1269 = vlaneseq
    %v1270 = vshrl.u32 %v1269, 7
    %v1271 = vsub.s32 %v1268, %v1270
    %v1272 = vrot.slane %v1258, %v1271
    %v1273 = vcombine.high %v1265, %v1265
    %v1274 = vcombine.high %v1272, %v1272
    %v1275 = vcombine.high %v981, %v981
    %v1277 = vunpack.c.l.s4 1983009808
    %v1278 = vunpack.c.0.s8 %v1277
    %v1279 = vlaneseq
    %v1280 = vshrl.u32 %v1279, 7
    %v1281 = vsub.s32 %v1278, %v1280
    %v1282 = vrot.slane %v981, %v1281
    %v1284 = vunpack.c.l.s4 1983009808
    %v1285 = vunpack.c.0.s8 %v1284
    %v1286 = vlaneseq
    %v1287 = vshrl.u32 %v1286, 7
    %v1288 = vsub.s32 %v1285, %v1287
    %v1289 = vrot.slane %v1275, %v1288
    %v1290 = vcombine.high %v1282, %v1282
    %v1291 = vcombine.high %v1289, %v1289
    %v1292 = vcombine.high %v984, %v984
    %v1294 = vunpack.c.l.s4 1983009808
    %v1295 = vunpack.c.0.s8 %v1294
    %v1296 = vlaneseq
    %v1297 = vshrl.u32 %v1296, 7
    %v1298 = vsub.s32 %v1295, %v1297
    %v1299 = vrot.slane %v984, %v1298
    %v1301 = vunpack.c.l.s4 1983009808
    %v1302 = vunpack.c.0.s8 %v1301
    %v1303 = vlaneseq
    %v1304 = vshrl.u32 %v1303, 7
    %v1305 = vsub.s32 %v1302, %v1304
    %v1306 = vrot.slane %v1292, %v1305
    %v1307 = vcombine.high %v1299, %v1299
    %v1308 = vcombine.high %v1306, %v1306
    %v1309 = vcombine.high %v987, %v987
    %v1311 = vunpack.c.l.s4 1983009808
    %v1312 = vunpack.c.0.s8 %v1311
    %v1313 = vlaneseq
    %v1314 = vshrl.u32 %v1313, 7
    %v1315 = vsub.s32 %v1312, %v1314
    %v1316 = vrot.slane %v987, %v1315
    %v1318 = vunpack.c.l.s4 1983009808
    %v1319 = vunpack.c.0.s8 %v1318
    %v1320 = vlaneseq
    %v1321 = vshrl.u32 %v1320, 7
    %v1322 = vsub.s32 %v1319, %v1321
    %v1323 = vrot.slane %v1309, %v1322
    %v1324 = vcombine.high %v1316, %v1316
    %v1325 = vcombine.high %v1323, %v1323
    %v1326 = vcombine.high %v990, %v990
    %v1328 = vunpack.c.l.s4 1983009808
    %v1329 = vunpack.c.0.s8 %v1328
    %v1330 = vlaneseq
    %v1331 = vshrl.u32 %v1330, 7
    %v1332 = vsub.s32 %v1329, %v1331
    %v1333 = vrot.slane %v990, %v1332
    %v1335 = vunpack.c.l.s4 1983009808
    %v1336 = vunpack.c.0.s8 %v1335
    %v1337 = vlaneseq
    %v1338 = vshrl.u32 %v1337, 7
    %v1339 = vsub.s32 %v1336, %v1338
    %v1340 = vrot.slane %v1326, %v1339
    %v1341 = vcombine.high %v1333, %v1333
    %v1342 = vcombine.high %v1340, %v1340
    %v1343 = vcombine.high %v993, %v993
    %v1345 = vunpack.c.l.s4 1983009808
    %v1346 = vunpack.c.0.s8 %v1345
    %v1347 = vlaneseq
    %v1348 = vshrl.u32 %v1347, 7
    %v1349 = vsub.s32 %v1346, %v1348
    %v1350 = vrot.slane %v993, %v1349
    %v1352 = vunpack.c.l.s4 1983009808
    %v1353 = vunpack.c.0.s8 %v1352
    %v1354 = vlaneseq
    %v1355 = vshrl.u32 %v1354, 7
    %v1356 = vsub.s32 %v1353, %v1355
    %v1357 = vrot.slane %v1343, %v1356
    %v1358 = vcombine.high %v1350, %v1350
    %v1359 = vcombine.high %v1357, %v1357
    %v1360 = vcombine.high %v996, %v996
    %v1362 = vunpack.c.l.s4 1983009808
    %v1363 = vunpack.c.0.s8 %v1362
    %v1364 = vlaneseq
    %v1365 = vshrl.u32 %v1364, 7
    %v1366 = vsub.s32 %v1363, %v1365
    %v1367 = vrot.slane %v996, %v1366
    %v1369 = vunpack.c.l.s4 1983009808
    %v1370 = vunpack.c.0.s8 %v1369
    %v1371 = vlaneseq
    %v1372 = vshrl.u32 %v1371, 7
    %v1373 = vsub.s32 %v1370, %v1372
    %v1374 = vrot.slane %v1360, %v1373
    %v1375 = vcombine.high %v1367, %v1367
    %v1376 = vcombine.high %v1374, %v1374
    %v1377 = vcombine.high %v999, %v999
    %v1379 = vunpack.c.l.s4 1983009808
    %v1380 = vunpack.c.0.s8 %v1379
    %v1381 = vlaneseq
    %v1382 = vshrl.u32 %v1381, 7
    %v1383 = vsub.s32 %v1380, %v1382
    %v1384 = vrot.slane %v999, %v1383
    %v1386 = vunpack.c.l.s4 1983009808
    %v1387 = vunpack.c.0.s8 %v1386
    %v1388 = vlaneseq
    %v1389 = vshrl.u32 %v1388, 7
    %v1390 = vsub.s32 %v1387, %v1389
    %v1391 = vrot.slane %v1377, %v1390
    %v1392 = vcombine.high %v1384, %v1384
    %v1393 = vcombine.high %v1391, %v1391
    %v1394 = vcombine.high %v1002, %v1002
    %v1396 = vunpack.c.l.s4 1983009808
    %v1397 = vunpack.c.0.s8 %v1396
    %v1398 = vlaneseq
    %v1399 = vshrl.u32 %v1398, 7
    %v1400 = vsub.s32 %v1397, %v1399
    %v1401 = vrot.slane %v1002, %v1400
    %v1403 = vunpack.c.l.s4 1983009808
    %v1404 = vunpack.c.0.s8 %v1403
    %v1405 = vlaneseq
    %v1406 = vshrl.u32 %v1405, 7
    %v1407 = vsub.s32 %v1404, %v1406
    %v1408 = vrot.slane %v1394, %v1407
    %v1409 = vcombine.high %v1401, %v1401
    %v1410 = vcombine.high %v1408, %v1408
    %v1411 = vcombine.high %v1005, %v1005
    %v1413 = vunpack.c.l.s4 1983009808
    %v1414 = vunpack.c.0.s8 %v1413
    %v1415 = vlaneseq
    %v1416 = vshrl.u32 %v1415, 7
    %v1417 = vsub.s32 %v1414, %v1416
    %v1418 = vrot.slane %v1005, %v1417
    %v1420 = vunpack.c.l.s4 1983009808
    %v1421 = vunpack.c.0.s8 %v1420
    %v1422 = vlaneseq
    %v1423 = vshrl.u32 %v1422, 7
    %v1424 = vsub.s32 %v1421, %v1423
    %v1425 = vrot.slane %v1411, %v1424
    %v1426 = vcombine.high %v1418, %v1418
    %v1427 = vcombine.high %v1425, %v1425
    %v1428 = vcombine.high %v1008, %v1008
    %v1430 = vunpack.c.l.s4 1983009808
    %v1431 = vunpack.c.0.s8 %v1430
    %v1432 = vlaneseq
    %v1433 = vshrl.u32 %v1432, 7
    %v1434 = vsub.s32 %v1431, %v1433
    %v1435 = vrot.slane %v1008, %v1434
    %v1437 = vunpack.c.l.s4 1983009808
    %v1438 = vunpack.c.0.s8 %v1437
    %v1439 = vlaneseq
    %v1440 = vshrl.u32 %v1439, 7
    %v1441 = vsub.s32 %v1438, %v1440
    %v1442 = vrot.slane %v1428, %v1441
    %v1443 = vcombine.high %v1435, %v1435
    %v1444 = vcombine.high %v1442, %v1442
    %v1445 = vcombine.high %v1011, %v1011
    %v1447 = vunpack.c.l.s4 1983009808
    %v1448 = vunpack.c.0.s8 %v1447
    %v1449 = vlaneseq
    %v1450 = vshrl.u32 %v1449, 7
    %v1451 = vsub.s32 %v1448, %v1450
    %v1452 = vrot.slane %v1011, %v1451
    %v1454 = vunpack.c.l.s4 1983009808
    %v1455 = vunpack.c.0.s8 %v1454
    %v1456 = vlaneseq
    %v1457 = vshrl.u32 %v1456, 7
    %v1458 = vsub.s32 %v1455, %v1457
    %v1459 = vrot.slane %v1445, %v1458
    %v1460 = vcombine.high %v1452, %v1452
    %v1461 = vcombine.high %v1459, %v1459
    %v1462 = vcombine.high %v1014, %v1014
    %v1464 = vunpack.c.l.s4 1983009808
    %v1465 = vunpack.c.0.s8 %v1464
    %v1466 = vlaneseq
    %v1467 = vshrl.u32 %v1466, 7
    %v1468 = vsub.s32 %v1465, %v1467
    %v1469 = vrot.slane %v1014, %v1468
    %v1471 = vunpack.c.l.s4 1983009808
    %v1472 = vunpack.c.0.s8 %v1471
    %v1473 = vlaneseq
    %v1474 = vshrl.u32 %v1473, 7
    %v1475 = vsub.s32 %v1472, %v1474
    %v1476 = vrot.slane %v1462, %v1475
    %v1477 = vcombine.high %v1469, %v1469
    %v1478 = vcombine.high %v1476, %v1476
    %v1479 = vcombine.high %v1017, %v1017
    %v1481 = vunpack.c.l.s4 1983009808
    %v1482 = vunpack.c.0.s8 %v1481
    %v1483 = vlaneseq
    %v1484 = vshrl.u32 %v1483, 7
    %v1485 = vsub.s32 %v1482, %v1484
    %v1486 = vrot.slane %v1017, %v1485
    %v1488 = vunpack.c.l.s4 1983009808
    %v1489 = vunpack.c.0.s8 %v1488
    %v1490 = vlaneseq
    %v1491 = vshrl.u32 %v1490, 7
    %v1492 = vsub.s32 %v1489, %v1491
    %v1493 = vrot.slane %v1479, %v1492
    %v1494 = vcombine.high %v1486, %v1486
    %v1495 = vcombine.high %v1493, %v1493
    %v1496 = vcombine.high %v1020, %v1020
    %v1498 = vunpack.c.l.s4 1983009808
    %v1499 = vunpack.c.0.s8 %v1498
    %v1500 = vlaneseq
    %v1501 = vshrl.u32 %v1500, 7
    %v1502 = vsub.s32 %v1499, %v1501
    %v1503 = vrot.slane %v1020, %v1502
    %v1505 = vunpack.c.l.s4 1983009808
    %v1506 = vunpack.c.0.s8 %v1505
    %v1507 = vlaneseq
    %v1508 = vshrl.u32 %v1507, 7
    %v1509 = vsub.s32 %v1506, %v1508
    %v1510 = vrot.slane %v1496, %v1509
    %v1511 = vcombine.high %v1503, %v1503
    %v1512 = vcombine.high %v1510, %v1510
    %v1513 = vcombine.high %v1023, %v1023
    %v1515 = vunpack.c.l.s4 1983009808
    %v1516 = vunpack.c.0.s8 %v1515
    %v1517 = vlaneseq
    %v1518 = vshrl.u32 %v1517, 7
    %v1519 = vsub.s32 %v1516, %v1518
    %v1520 = vrot.slane %v1023, %v1519
    %v1522 = vunpack.c.l.s4 1983009808
    %v1523 = vunpack.c.0.s8 %v1522
    %v1524 = vlaneseq
    %v1525 = vshrl.u32 %v1524, 7
    %v1526 = vsub.s32 %v1523, %v1525
    %v1527 = vrot.slane %v1513, %v1526
    %v1528 = vcombine.high %v1520, %v1520
    %v1529 = vcombine.high %v1527, %v1527
    %v1530 = vcombine.high %v1026, %v1026
    %v1532 = vunpack.c.l.s4 1983009808
    %v1533 = vunpack.c.0.s8 %v1532
    %v1534 = vlaneseq
    %v1535 = vshrl.u32 %v1534, 7
    %v1536 = vsub.s32 %v1533, %v1535
    %v1537 = vrot.slane %v1026, %v1536
    %v1539 = vunpack.c.l.s4 1983009808
    %v1540 = vunpack.c.0.s8 %v1539
    %v1541 = vlaneseq
    %v1542 = vshrl.u32 %v1541, 7
    %v1543 = vsub.s32 %v1540, %v1542
    %v1544 = vrot.slane %v1530, %v1543
    %v1545 = vcombine.high %v1537, %v1537
    %v1546 = vcombine.high %v1544, %v1544
    %v1547 = vcombine.high %v1029, %v1029
    %v1549 = vunpack.c.l.s4 1983009808
    %v1550 = vunpack.c.0.s8 %v1549
    %v1551 = vlaneseq
    %v1552 = vshrl.u32 %v1551, 7
    %v1553 = vsub.s32 %v1550, %v1552
    %v1554 = vrot.slane %v1029, %v1553
    %v1556 = vunpack.c.l.s4 1983009808
    %v1557 = vunpack.c.0.s8 %v1556
    %v1558 = vlaneseq
    %v1559 = vshrl.u32 %v1558, 7
    %v1560 = vsub.s32 %v1557, %v1559
    %v1561 = vrot.slane %v1547, %v1560
    %v1562 = vcombine.high %v1554, %v1554
    %v1563 = vcombine.high %v1561, %v1561
    %v1564 = vcombine.high %v1032, %v1032
    %v1566 = vunpack.c.l.s4 1983009808
    %v1567 = vunpack.c.0.s8 %v1566
    %v1568 = vlaneseq
    %v1569 = vshrl.u32 %v1568, 7
    %v1570 = vsub.s32 %v1567, %v1569
    %v1571 = vrot.slane %v1032, %v1570
    %v1573 = vunpack.c.l.s4 1983009808
    %v1574 = vunpack.c.0.s8 %v1573
    %v1575 = vlaneseq
    %v1576 = vshrl.u32 %v1575, 7
    %v1577 = vsub.s32 %v1574, %v1576
    %v1578 = vrot.slane %v1564, %v1577
    %v1579 = vcombine.high %v1571, %v1571
    %v1580 = vcombine.high %v1578, %v1578
    %v1581 = vcombine.high %v1035, %v1035
    %v1583 = vunpack.c.l.s4 1983009808
    %v1584 = vunpack.c.0.s8 %v1583
    %v1585 = vlaneseq
    %v1586 = vshrl.u32 %v1585, 7
    %v1587 = vsub.s32 %v1584, %v1586
    %v1588 = vrot.slane %v1035, %v1587
    %v1590 = vunpack.c.l.s4 1983009808
    %v1591 = vunpack.c.0.s8 %v1590
    %v1592 = vlaneseq
    %v1593 = vshrl.u32 %v1592, 7
    %v1594 = vsub.s32 %v1591, %v1593
    %v1595 = vrot.slane %v1581, %v1594
    %v1596 = vcombine.high %v1588, %v1588
    %v1597 = vcombine.high %v1595, %v1595
    %v1598 = vcombine.high %v1038, %v1038
    %v1600 = vunpack.c.l.s4 1983009808
    %v1601 = vunpack.c.0.s8 %v1600
    %v1602 = vlaneseq
    %v1603 = vshrl.u32 %v1602, 7
    %v1604 = vsub.s32 %v1601, %v1603
    %v1605 = vrot.slane %v1038, %v1604
    %v1607 = vunpack.c.l.s4 1983009808
    %v1608 = vunpack.c.0.s8 %v1607
    %v1609 = vlaneseq
    %v1610 = vshrl.u32 %v1609, 7
    %v1611 = vsub.s32 %v1608, %v1610
    %v1612 = vrot.slane %v1598, %v1611
    %v1613 = vcombine.high %v1605, %v1605
    %v1614 = vcombine.high %v1612, %v1612
    %vm1743 = vcmask 254976
    %v1744 = vsel %vm1743, %v1078, -inf
    %v1745 = vrot.slane %v1744, 4
    %v1746 = vmax.f32 %v1744, %v1745
    %v1747 = vrot.slane %v1746, 2
    %v1748 = vmax.f32 %v1746, %v1747
    %v1749 = vrot.slane %v1748, 1
    %v1750 = vmax.f32 %v1748, %v1749
    %v1751 = vsel %vm1743, %v1086, -inf
    %v1752 = vrot.slane %v1751, 4
    %v1753 = vmax.f32 %v1751, %v1752
    %v1754 = vrot.slane %v1753, 2
    %v1755 = vmax.f32 %v1753, %v1754
    %v1756 = vrot.slane %v1755, 1
    %v1757 = vmax.f32 %v1755, %v1756
    %v1758 = vsel %vm1743, %v1085, -inf
    %v1759 = vrot.slane %v1758, 4
    %v1760 = vmax.f32 %v1758, %v1759
    %v1761 = vrot.slane %v1760, 2
    %v1762 = vmax.f32 %v1760, %v1761
    %v1763 = vrot.slane %v1762, 1
    %v1764 = vmax.f32 %v1762, %v1763
    %v1765 = vsel %vm1743, %v1087, -inf
    %v1766 = vrot.slane %v1765, 4
    %v1767 = vmax.f32 %v1765, %v1766
    %v1768 = vrot.slane %v1767, 2
    %v1769 = vmax.f32 %v1767, %v1768
    %v1770 = vrot.slane %v1769, 1
    %v1771 = vmax.f32 %v1769, %v1770
    %v1772 = vsel %vm1743, %v1095, -inf
    %v1773 = vrot.slane %v1772, 4
    %v1774 = vmax.f32 %v1772, %v1773
    %v1775 = vrot.slane %v1774, 2
    %v1776 = vmax.f32 %v1774, %v1775
    %v1777 = vrot.slane %v1776, 1
    %v1778 = vmax.f32 %v1776, %v1777
    %v1779 = vsel %vm1743, %v1103, -inf
    %v1780 = vrot.slane %v1779, 4
    %v1781 = vmax.f32 %v1779, %v1780
    %v1782 = vrot.slane %v1781, 2
    %v1783 = vmax.f32 %v1781, %v1782
    %v1784 = vrot.slane %v1783, 1
    %v1785 = vmax.f32 %v1783, %v1784
    %v1786 = vsel %vm1743, %v1102, -inf
    %v1787 = vrot.slane %v1786, 4
    %v1788 = vmax.f32 %v1786, %v1787
    %v1789 = vrot.slane %v1788, 2
    %v1790 = vmax.f32 %v1788, %v1789
    %v1791 = vrot.slane %v1790, 1
    %v1792 = vmax.f32 %v1790, %v1791
    %v1793 = vsel %vm1743, %v1104, -inf
    %v1794 = vrot.slane %v1793, 4
    %v1795 = vmax.f32 %v1793, %v1794
    %v1796 = vrot.slane %v1795, 2
    %v1797 = vmax.f32 %v1795, %v1796
    %v1798 = vrot.slane %v1797, 1
    %v1799 = vmax.f32 %v1797, %v1798
    %v1800 = vsel %vm1743, %v1112, -inf
    %v1801 = vrot.slane %v1800, 4
    %v1802 = vmax.f32 %v1800, %v1801
    %v1803 = vrot.slane %v1802, 2
    %v1804 = vmax.f32 %v1802, %v1803
    %v1805 = vrot.slane %v1804, 1
    %v1806 = vmax.f32 %v1804, %v1805
    %v1807 = vsel %vm1743, %v1120, -inf
    %v1808 = vrot.slane %v1807, 4
    %v1809 = vmax.f32 %v1807, %v1808
    %v1810 = vrot.slane %v1809, 2
    %v1811 = vmax.f32 %v1809, %v1810
    %v1812 = vrot.slane %v1811, 1
    %v1813 = vmax.f32 %v1811, %v1812
    %v1814 = vsel %vm1743, %v1119, -inf
    %v1815 = vrot.slane %v1814, 4
    %v1816 = vmax.f32 %v1814, %v1815
    %v1817 = vrot.slane %v1816, 2
    %v1818 = vmax.f32 %v1816, %v1817
    %v1819 = vrot.slane %v1818, 1
    %v1820 = vmax.f32 %v1818, %v1819
    %v1821 = vsel %vm1743, %v1121, -inf
    %v1822 = vrot.slane %v1821, 4
    %v1823 = vmax.f32 %v1821, %v1822
    %v1824 = vrot.slane %v1823, 2
    %v1825 = vmax.f32 %v1823, %v1824
    %v1826 = vrot.slane %v1825, 1
    %v1827 = vmax.f32 %v1825, %v1826
    %v1828 = vsel %vm1743, %v1129, -inf
    %v1829 = vrot.slane %v1828, 4
    %v1830 = vmax.f32 %v1828, %v1829
    %v1831 = vrot.slane %v1830, 2
    %v1832 = vmax.f32 %v1830, %v1831
    %v1833 = vrot.slane %v1832, 1
    %v1834 = vmax.f32 %v1832, %v1833
    %v1835 = vsel %vm1743, %v1137, -inf
    %v1836 = vrot.slane %v1835, 4
    %v1837 = vmax.f32 %v1835, %v1836
    %v1838 = vrot.slane %v1837, 2
    %v1839 = vmax.f32 %v1837, %v1838
    %v1840 = vrot.slane %v1839, 1
    %v1841 = vmax.f32 %v1839, %v1840
    %v1842 = vsel %vm1743, %v1136, -inf
    %v1843 = vrot.slane %v1842, 4
    %v1844 = vmax.f32 %v1842, %v1843
    %v1845 = vrot.slane %v1844, 2
    %v1846 = vmax.f32 %v1844, %v1845
    %v1847 = vrot.slane %v1846, 1
    %v1848 = vmax.f32 %v1846, %v1847
    %v1849 = vsel %vm1743, %v1138, -inf
    %v1850 = vrot.slane %v1849, 4
    %v1851 = vmax.f32 %v1849, %v1850
    %v1852 = vrot.slane %v1851, 2
    %v1853 = vmax.f32 %v1851, %v1852
    %v1854 = vrot.slane %v1853, 1
    %v1855 = vmax.f32 %v1853, %v1854
    %v1856 = vsel %vm1743, %v1146, -inf
    %v1857 = vrot.slane %v1856, 4
    %v1858 = vmax.f32 %v1856, %v1857
    %v1859 = vrot.slane %v1858, 2
    %v1860 = vmax.f32 %v1858, %v1859
    %v1861 = vrot.slane %v1860, 1
    %v1862 = vmax.f32 %v1860, %v1861
    %v1863 = vsel %vm1743, %v1154, -inf
    %v1864 = vrot.slane %v1863, 4
    %v1865 = vmax.f32 %v1863, %v1864
    %v1866 = vrot.slane %v1865, 2
    %v1867 = vmax.f32 %v1865, %v1866
    %v1868 = vrot.slane %v1867, 1
    %v1869 = vmax.f32 %v1867, %v1868
    %v1870 = vsel %vm1743, %v1153, -inf
    %v1871 = vrot.slane %v1870, 4
    %v1872 = vmax.f32 %v1870, %v1871
    %v1873 = vrot.slane %v1872, 2
    %v1874 = vmax.f32 %v1872, %v1873
    %v1875 = vrot.slane %v1874, 1
    %v1876 = vmax.f32 %v1874, %v1875
    %v1877 = vsel %vm1743, %v1155, -inf
    %v1878 = vrot.slane %v1877, 4
    %v1879 = vmax.f32 %v1877, %v1878
    %v1880 = vrot.slane %v1879, 2
    %v1881 = vmax.f32 %v1879, %v1880
    %v1882 = vrot.slane %v1881, 1
    %v1883 = vmax.f32 %v1881, %v1882
    %v1884 = vsel %vm1743, %v1163, -inf
    %v1885 = vrot.slane %v1884, 4
    %v1886 = vmax.f32 %v1884, %v1885
    %v1887 = vrot.slane %v1886, 2
    %v1888 = vmax.f32 %v1886, %v1887
    %v1889 = vrot.slane %v1888, 1
    %v1890 = vmax.f32 %v1888, %v1889
    %v1891 = vsel %vm1743, %v1171, -inf
    %v1892 = vrot.slane %v1891, 4
    %v1893 = vmax.f32 %v1891, %v1892
    %v1894 = vrot.slane %v1893, 2
    %v1895 = vmax.f32 %v1893, %v1894
    %v1896 = vrot.slane %v1895, 1
    %v1897 = vmax.f32 %v1895, %v1896
    %v1898 = vsel %vm1743, %v1170, -inf
    %v1899 = vrot.slane %v1898, 4
    %v1900 = vmax.f32 %v1898, %v1899
    %v1901 = vrot.slane %v1900, 2
    %v1902 = vmax.f32 %v1900, %v1901
    %v1903 = vrot.slane %v1902, 1
    %v1904 = vmax.f32 %v1902, %v1903
    %v1905 = vsel %vm1743, %v1172, -inf
    %v1906 = vrot.slane %v1905, 4
    %v1907 = vmax.f32 %v1905, %v1906
    %v1908 = vrot.slane %v1907, 2
    %v1909 = vmax.f32 %v1907, %v1908
    %v1910 = vrot.slane %v1909, 1
    %v1911 = vmax.f32 %v1909, %v1910
    %v1912 = vsel %vm1743, %v1180, -inf
    %v1913 = vrot.slane %v1912, 4
    %v1914 = vmax.f32 %v1912, %v1913
    %v1915 = vrot.slane %v1914, 2
    %v1916 = vmax.f32 %v1914, %v1915
    %v1917 = vrot.slane %v1916, 1
    %v1918 = vmax.f32 %v1916, %v1917
    %v1919 = vsel %vm1743, %v1188, -inf
    %v1920 = vrot.slane %v1919, 4
    %v1921 = vmax.f32 %v1919, %v1920
    %v1922 = vrot.slane %v1921, 2
    %v1923 = vmax.f32 %v1921, %v1922
    %v1924 = vrot.slane %v1923, 1
    %v1925 = vmax.f32 %v1923, %v1924
    %v1926 = vsel %vm1743, %v1187, -inf
    %v1927 = vrot.slane %v1926, 4
    %v1928 = vmax.f32 %v1926, %v1927
    %v1929 = vrot.slane %v1928, 2
    %v1930 = vmax.f32 %v1928, %v1929
    %v1931 = vrot.slane %v1930, 1
    %v1932 = vmax.f32 %v1930, %v1931
    %v1933 = vsel %vm1743, %v1189, -inf
    %v1934 = vrot.slane %v1933, 4
    %v1935 = vmax.f32 %v1933, %v1934
    %v1936 = vrot.slane %v1935, 2
    %v1937 = vmax.f32 %v1935, %v1936
    %v1938 = vrot.slane %v1937, 1
    %v1939 = vmax.f32 %v1937, %v1938
    %v1940 = vsel %vm1743, %v1197, -inf
    %v1941 = vrot.slane %v1940, 4
    %v1942 = vmax.f32 %v1940, %v1941
    %v1943 = vrot.slane %v1942, 2
    %v1944 = vmax.f32 %v1942, %v1943
    %v1945 = vrot.slane %v1944, 1
    %v1946 = vmax.f32 %v1944, %v1945
    %v1947 = vsel %vm1743, %v1205, -inf
    %v1948 = vrot.slane %v1947, 4
    %v1949 = vmax.f32 %v1947, %v1948
    %v1950 = vrot.slane %v1949, 2
    %v1951 = vmax.f32 %v1949, %v1950
    %v1952 = vrot.slane %v1951, 1
    %v1953 = vmax.f32 %v1951, %v1952
    %v1954 = vsel %vm1743, %v1204, -inf
    %v1955 = vrot.slane %v1954, 4
    %v1956 = vmax.f32 %v1954, %v1955
    %v1957 = vrot.slane %v1956, 2
    %v1958 = vmax.f32 %v1956, %v1957
    %v1959 = vrot.slane %v1958, 1
    %v1960 = vmax.f32 %v1958, %v1959
    %v1961 = vsel %vm1743, %v1206, -inf
    %v1962 = vrot.slane %v1961, 4
    %v1963 = vmax.f32 %v1961, %v1962
    %v1964 = vrot.slane %v1963, 2
    %v1965 = vmax.f32 %v1963, %v1964
    %v1966 = vrot.slane %v1965, 1
    %v1967 = vmax.f32 %v1965, %v1966
    %v1968 = vsel %vm1743, %v1214, -inf
    %v1969 = vrot.slane %v1968, 4
    %v1970 = vmax.f32 %v1968, %v1969
    %v1971 = vrot.slane %v1970, 2
    %v1972 = vmax.f32 %v1970, %v1971
    %v1973 = vrot.slane %v1972, 1
    %v1974 = vmax.f32 %v1972, %v1973
    %v1975 = vsel %vm1743, %v1222, -inf
    %v1976 = vrot.slane %v1975, 4
    %v1977 = vmax.f32 %v1975, %v1976
    %v1978 = vrot.slane %v1977, 2
    %v1979 = vmax.f32 %v1977, %v1978
    %v1980 = vrot.slane %v1979, 1
    %v1981 = vmax.f32 %v1979, %v1980
    %v1982 = vsel %vm1743, %v1221, -inf
    %v1983 = vrot.slane %v1982, 4
    %v1984 = vmax.f32 %v1982, %v1983
    %v1985 = vrot.slane %v1984, 2
    %v1986 = vmax.f32 %v1984, %v1985
    %v1987 = vrot.slane %v1986, 1
    %v1988 = vmax.f32 %v1986, %v1987
    %v1989 = vsel %vm1743, %v1223, -inf
    %v1990 = vrot.slane %v1989, 4
    %v1991 = vmax.f32 %v1989, %v1990
    %v1992 = vrot.slane %v1991, 2
    %v1993 = vmax.f32 %v1991, %v1992
    %v1994 = vrot.slane %v1993, 1
    %v1995 = vmax.f32 %v1993, %v1994
    %v1996 = vsel %vm1743, %v1231, -inf
    %v1997 = vrot.slane %v1996, 4
    %v1998 = vmax.f32 %v1996, %v1997
    %v1999 = vrot.slane %v1998, 2
    %v2000 = vmax.f32 %v1998, %v1999
    %v2001 = vrot.slane %v2000, 1
    %v2002 = vmax.f32 %v2000, %v2001
    %v2003 = vsel %vm1743, %v1239, -inf
    %v2004 = vrot.slane %v2003, 4
    %v2005 = vmax.f32 %v2003, %v2004
    %v2006 = vrot.slane %v2005, 2
    %v2007 = vmax.f32 %v2005, %v2006
    %v2008 = vrot.slane %v2007, 1
    %v2009 = vmax.f32 %v2007, %v2008
    %v2010 = vsel %vm1743, %v1238, -inf
    %v2011 = vrot.slane %v2010, 4
    %v2012 = vmax.f32 %v2010, %v2011
    %v2013 = vrot.slane %v2012, 2
    %v2014 = vmax.f32 %v2012, %v2013
    %v2015 = vrot.slane %v2014, 1
    %v2016 = vmax.f32 %v2014, %v2015
    %v2017 = vsel %vm1743, %v1240, -inf
    %v2018 = vrot.slane %v2017, 4
    %v2019 = vmax.f32 %v2017, %v2018
    %v2020 = vrot.slane %v2019, 2
    %v2021 = vmax.f32 %v2019, %v2020
    %v2022 = vrot.slane %v2021, 1
    %v2023 = vmax.f32 %v2021, %v2022
    %v2024 = vsel %vm1743, %v1248, -inf
    %v2025 = vrot.slane %v2024, 4
    %v2026 = vmax.f32 %v2024, %v2025
    %v2027 = vrot.slane %v2026, 2
    %v2028 = vmax.f32 %v2026, %v2027
    %v2029 = vrot.slane %v2028, 1
    %v2030 = vmax.f32 %v2028, %v2029
    %v2031 = vsel %vm1743, %v1256, -inf
    %v2032 = vrot.slane %v2031, 4
    %v2033 = vmax.f32 %v2031, %v2032
    %v2034 = vrot.slane %v2033, 2
    %v2035 = vmax.f32 %v2033, %v2034
    %v2036 = vrot.slane %v2035, 1
    %v2037 = vmax.f32 %v2035, %v2036
    %v2038 = vsel %vm1743, %v1255, -inf
    %v2039 = vrot.slane %v2038, 4
    %v2040 = vmax.f32 %v2038, %v2039
    %v2041 = vrot.slane %v2040, 2
    %v2042 = vmax.f32 %v2040, %v2041
    %v2043 = vrot.slane %v2042, 1
    %v2044 = vmax.f32 %v2042, %v2043
    %v2045 = vsel %vm1743, %v1257, -inf
    %v2046 = vrot.slane %v2045, 4
    %v2047 = vmax.f32 %v2045, %v2046
    %v2048 = vrot.slane %v2047, 2
    %v2049 = vmax.f32 %v2047, %v2048
    %v2050 = vrot.slane %v2049, 1
    %v2051 = vmax.f32 %v2049, %v2050
    %v2052 = vsel %vm1743, %v1265, -inf
    %v2053 = vrot.slane %v2052, 4
    %v2054 = vmax.f32 %v2052, %v2053
    %v2055 = vrot.slane %v2054, 2
    %v2056 = vmax.f32 %v2054, %v2055
    %v2057 = vrot.slane %v2056, 1
    %v2058 = vmax.f32 %v2056, %v2057
    %v2059 = vsel %vm1743, %v1273, -inf
    %v2060 = vrot.slane %v2059, 4
    %v2061 = vmax.f32 %v2059, %v2060
    %v2062 = vrot.slane %v2061, 2
    %v2063 = vmax.f32 %v2061, %v2062
    %v2064 = vrot.slane %v2063, 1
    %v2065 = vmax.f32 %v2063, %v2064
    %v2066 = vsel %vm1743, %v1272, -inf
    %v2067 = vrot.slane %v2066, 4
    %v2068 = vmax.f32 %v2066, %v2067
    %v2069 = vrot.slane %v2068, 2
    %v2070 = vmax.f32 %v2068, %v2069
    %v2071 = vrot.slane %v2070, 1
    %v2072 = vmax.f32 %v2070, %v2071
    %v2073 = vsel %vm1743, %v1274, -inf
    %v2074 = vrot.slane %v2073, 4
    %v2075 = vmax.f32 %v2073, %v2074
    %v2076 = vrot.slane %v2075, 2
    %v2077 = vmax.f32 %v2075, %v2076
    %v2078 = vrot.slane %v2077, 1
    %v2079 = vmax.f32 %v2077, %v2078
    %v2080 = vsel %vm1743, %v1282, -inf
    %v2081 = vrot.slane %v2080, 4
    %v2082 = vmax.f32 %v2080, %v2081
    %v2083 = vrot.slane %v2082, 2
    %v2084 = vmax.f32 %v2082, %v2083
    %v2085 = vrot.slane %v2084, 1
    %v2086 = vmax.f32 %v2084, %v2085
    %v2087 = vsel %vm1743, %v1290, -inf
    %v2088 = vrot.slane %v2087, 4
    %v2089 = vmax.f32 %v2087, %v2088
    %v2090 = vrot.slane %v2089, 2
    %v2091 = vmax.f32 %v2089, %v2090
    %v2092 = vrot.slane %v2091, 1
    %v2093 = vmax.f32 %v2091, %v2092
    %v2094 = vsel %vm1743, %v1289, -inf
    %v2095 = vrot.slane %v2094, 4
    %v2096 = vmax.f32 %v2094, %v2095
    %v2097 = vrot.slane %v2096, 2
    %v2098 = vmax.f32 %v2096, %v2097
    %v2099 = vrot.slane %v2098, 1
    %v2100 = vmax.f32 %v2098, %v2099
    %v2101 = vsel %vm1743, %v1291, -inf
    %v2102 = vrot.slane %v2101, 4
    %v2103 = vmax.f32 %v2101, %v2102
    %v2104 = vrot.slane %v2103, 2
    %v2105 = vmax.f32 %v2103, %v2104
    %v2106 = vrot.slane %v2105, 1
    %v2107 = vmax.f32 %v2105, %v2106
    %v2108 = vsel %vm1743, %v1299, -inf
    %v2109 = vrot.slane %v2108, 4
    %v2110 = vmax.f32 %v2108, %v2109
    %v2111 = vrot.slane %v2110, 2
    %v2112 = vmax.f32 %v2110, %v2111
    %v2113 = vrot.slane %v2112, 1
    %v2114 = vmax.f32 %v2112, %v2113
    %v2115 = vsel %vm1743, %v1307, -inf
    %v2116 = vrot.slane %v2115, 4
    %v2117 = vmax.f32 %v2115, %v2116
    %v2118 = vrot.slane %v2117, 2
    %v2119 = vmax.f32 %v2117, %v2118
    %v2120 = vrot.slane %v2119, 1
    %v2121 = vmax.f32 %v2119, %v2120
    %v2122 = vsel %vm1743, %v1306, -inf
    %v2123 = vrot.slane %v2122, 4
    %v2124 = vmax.f32 %v2122, %v2123
    %v2125 = vrot.slane %v2124, 2
    %v2126 = vmax.f32 %v2124, %v2125
    %v2127 = vrot.slane %v2126, 1
    %v2128 = vmax.f32 %v2126, %v2127
    %v2129 = vsel %vm1743, %v1308, -inf
    %v2130 = vrot.slane %v2129, 4
    %v2131 = vmax.f32 %v2129, %v2130
    %v2132 = vrot.slane %v2131, 2
    %v2133 = vmax.f32 %v2131, %v2132
    %v2134 = vrot.slane %v2133, 1
    %v2135 = vmax.f32 %v2133, %v2134
    %v2136 = vsel %vm1743, %v1316, -inf
    %v2137 = vrot.slane %v2136, 4
    %v2138 = vmax.f32 %v2136, %v2137
    %v2139 = vrot.slane %v2138, 2
    %v2140 = vmax.f32 %v2138, %v2139
    %v2141 = vrot.slane %v2140, 1
    %v2142 = vmax.f32 %v2140, %v2141
    %v2143 = vsel %vm1743, %v1324, -inf
    %v2144 = vrot.slane %v2143, 4
    %v2145 = vmax.f32 %v2143, %v2144
    %v2146 = vrot.slane %v2145, 2
    %v2147 = vmax.f32 %v2145, %v2146
    %v2148 = vrot.slane %v2147, 1
    %v2149 = vmax.f32 %v2147, %v2148
    %v2150 = vsel %vm1743, %v1323, -inf
    %v2151 = vrot.slane %v2150, 4
    %v2152 = vmax.f32 %v2150, %v2151
    %v2153 = vrot.slane %v2152, 2
    %v2154 = vmax.f32 %v2152, %v2153
    %v2155 = vrot.slane %v2154, 1
    %v2156 = vmax.f32 %v2154, %v2155
    %v2157 = vsel %vm1743, %v1325, -inf
    %v2158 = vrot.slane %v2157, 4
    %v2159 = vmax.f32 %v2157, %v2158
    %v2160 = vrot.slane %v2159, 2
    %v2161 = vmax.f32 %v2159, %v2160
    %v2162 = vrot.slane %v2161, 1
    %v2163 = vmax.f32 %v2161, %v2162
    %v2164 = vsel %vm1743, %v1333, -inf
    %v2165 = vrot.slane %v2164, 4
    %v2166 = vmax.f32 %v2164, %v2165
    %v2167 = vrot.slane %v2166, 2
    %v2168 = vmax.f32 %v2166, %v2167
    %v2169 = vrot.slane %v2168, 1
    %v2170 = vmax.f32 %v2168, %v2169
    %v2171 = vsel %vm1743, %v1341, -inf
    %v2172 = vrot.slane %v2171, 4
    %v2173 = vmax.f32 %v2171, %v2172
    %v2174 = vrot.slane %v2173, 2
    %v2175 = vmax.f32 %v2173, %v2174
    %v2176 = vrot.slane %v2175, 1
    %v2177 = vmax.f32 %v2175, %v2176
    %v2178 = vsel %vm1743, %v1340, -inf
    %v2179 = vrot.slane %v2178, 4
    %v2180 = vmax.f32 %v2178, %v2179
    %v2181 = vrot.slane %v2180, 2
    %v2182 = vmax.f32 %v2180, %v2181
    %v2183 = vrot.slane %v2182, 1
    %v2184 = vmax.f32 %v2182, %v2183
    %v2185 = vsel %vm1743, %v1342, -inf
    %v2186 = vrot.slane %v2185, 4
    %v2187 = vmax.f32 %v2185, %v2186
    %v2188 = vrot.slane %v2187, 2
    %v2189 = vmax.f32 %v2187, %v2188
    %v2190 = vrot.slane %v2189, 1
    %v2191 = vmax.f32 %v2189, %v2190
    %v2192 = vsel %vm1743, %v1350, -inf
    %v2193 = vrot.slane %v2192, 4
    %v2194 = vmax.f32 %v2192, %v2193
    %v2195 = vrot.slane %v2194, 2
    %v2196 = vmax.f32 %v2194, %v2195
    %v2197 = vrot.slane %v2196, 1
    %v2198 = vmax.f32 %v2196, %v2197
    %v2199 = vsel %vm1743, %v1358, -inf
    %v2200 = vrot.slane %v2199, 4
    %v2201 = vmax.f32 %v2199, %v2200
    %v2202 = vrot.slane %v2201, 2
    %v2203 = vmax.f32 %v2201, %v2202
    %v2204 = vrot.slane %v2203, 1
    %v2205 = vmax.f32 %v2203, %v2204
    %v2206 = vsel %vm1743, %v1357, -inf
    %v2207 = vrot.slane %v2206, 4
    %v2208 = vmax.f32 %v2206, %v2207
    %v2209 = vrot.slane %v2208, 2
    %v2210 = vmax.f32 %v2208, %v2209
    %v2211 = vrot.slane %v2210, 1
    %v2212 = vmax.f32 %v2210, %v2211
    %v2213 = vsel %vm1743, %v1359, -inf
    %v2214 = vrot.slane %v2213, 4
    %v2215 = vmax.f32 %v2213, %v2214
    %v2216 = vrot.slane %v2215, 2
    %v2217 = vmax.f32 %v2215, %v2216
    %v2218 = vrot.slane %v2217, 1
    %v2219 = vmax.f32 %v2217, %v2218
    %v2220 = vsel %vm1743, %v1367, -inf
    %v2221 = vrot.slane %v2220, 4
    %v2222 = vmax.f32 %v2220, %v2221
    %v2223 = vrot.slane %v2222, 2
    %v2224 = vmax.f32 %v2222, %v2223
    %v2225 = vrot.slane %v2224, 1
    %v2226 = vmax.f32 %v2224, %v2225
    %v2227 = vsel %vm1743, %v1375, -inf
    %v2228 = vrot.slane %v2227, 4
    %v2229 = vmax.f32 %v2227, %v2228
    %v2230 = vrot.slane %v2229, 2
    %v2231 = vmax.f32 %v2229, %v2230
    %v2232 = vrot.slane %v2231, 1
    %v2233 = vmax.f32 %v2231, %v2232
    %v2234 = vsel %vm1743, %v1374, -inf
    %v2235 = vrot.slane %v2234, 4
    %v2236 = vmax.f32 %v2234, %v2235
    %v2237 = vrot.slane %v2236, 2
    %v2238 = vmax.f32 %v2236, %v2237
    %v2239 = vrot.slane %v2238, 1
    %v2240 = vmax.f32 %v2238, %v2239
    %v2241 = vsel %vm1743, %v1376, -inf
    %v2242 = vrot.slane %v2241, 4
    %v2243 = vmax.f32 %v2241, %v2242
    %v2244 = vrot.slane %v2243, 2
    %v2245 = vmax.f32 %v2243, %v2244
    %v2246 = vrot.slane %v2245, 1
    %v2247 = vmax.f32 %v2245, %v2246
    %v2248 = vsel %vm1743, %v1384, -inf
    %v2249 = vrot.slane %v2248, 4
    %v2250 = vmax.f32 %v2248, %v2249
    %v2251 = vrot.slane %v2250, 2
    %v2252 = vmax.f32 %v2250, %v2251
    %v2253 = vrot.slane %v2252, 1
    %v2254 = vmax.f32 %v2252, %v2253
    %v2255 = vsel %vm1743, %v1392, -inf
    %v2256 = vrot.slane %v2255, 4
    %v2257 = vmax.f32 %v2255, %v2256
    %v2258 = vrot.slane %v2257, 2
    %v2259 = vmax.f32 %v2257, %v2258
    %v2260 = vrot.slane %v2259, 1
    %v2261 = vmax.f32 %v2259, %v2260
    %v2262 = vsel %vm1743, %v1391, -inf
    %v2263 = vrot.slane %v2262, 4
    %v2264 = vmax.f32 %v2262, %v2263
    %v2265 = vrot.slane %v2264, 2
    %v2266 = vmax.f32 %v2264, %v2265
    %v2267 = vrot.slane %v2266, 1
    %v2268 = vmax.f32 %v2266, %v2267
    %v2269 = vsel %vm1743, %v1393, -inf
    %v2270 = vrot.slane %v2269, 4
    %v2271 = vmax.f32 %v2269, %v2270
    %v2272 = vrot.slane %v2271, 2
    %v2273 = vmax.f32 %v2271, %v2272
    %v2274 = vrot.slane %v2273, 1
    %v2275 = vmax.f32 %v2273, %v2274
    %v2276 = vsel %vm1743, %v1401, -inf
    %v2277 = vrot.slane %v2276, 4
    %v2278 = vmax.f32 %v2276, %v2277
    %v2279 = vrot.slane %v2278, 2
    %v2280 = vmax.f32 %v2278, %v2279
    %v2281 = vrot.slane %v2280, 1
    %v2282 = vmax.f32 %v2280, %v2281
    %v2283 = vsel %vm1743, %v1409, -inf
    %v2284 = vrot.slane %v2283, 4
    %v2285 = vmax.f32 %v2283, %v2284
    %v2286 = vrot.slane %v2285, 2
    %v2287 = vmax.f32 %v2285, %v2286
    %v2288 = vrot.slane %v2287, 1
    %v2289 = vmax.f32 %v2287, %v2288
    %v2290 = vsel %vm1743, %v1408, -inf
    %v2291 = vrot.slane %v2290, 4
    %v2292 = vmax.f32 %v2290, %v2291
    %v2293 = vrot.slane %v2292, 2
    %v2294 = vmax.f32 %v2292, %v2293
    %v2295 = vrot.slane %v2294, 1
    %v2296 = vmax.f32 %v2294, %v2295
    %v2297 = vsel %vm1743, %v1410, -inf
    %v2298 = vrot.slane %v2297, 4
    %v2299 = vmax.f32 %v2297, %v2298
    %v2300 = vrot.slane %v2299, 2
    %v2301 = vmax.f32 %v2299, %v2300
    %v2302 = vrot.slane %v2301, 1
    %v2303 = vmax.f32 %v2301, %v2302
    %v2304 = vsel %vm1743, %v1418, -inf
    %v2305 = vrot.slane %v2304, 4
    %v2306 = vmax.f32 %v2304, %v2305
    %v2307 = vrot.slane %v2306, 2
    %v2308 = vmax.f32 %v2306, %v2307
    %v2309 = vrot.slane %v2308, 1
    %v2310 = vmax.f32 %v2308, %v2309
    %v2311 = vsel %vm1743, %v1426, -inf
    %v2312 = vrot.slane %v2311, 4
    %v2313 = vmax.f32 %v2311, %v2312
    %v2314 = vrot.slane %v2313, 2
    %v2315 = vmax.f32 %v2313, %v2314
    %v2316 = vrot.slane %v2315, 1
    %v2317 = vmax.f32 %v2315, %v2316
    %v2318 = vsel %vm1743, %v1425, -inf
    %v2319 = vrot.slane %v2318, 4
    %v2320 = vmax.f32 %v2318, %v2319
    %v2321 = vrot.slane %v2320, 2
    %v2322 = vmax.f32 %v2320, %v2321
    %v2323 = vrot.slane %v2322, 1
    %v2324 = vmax.f32 %v2322, %v2323
    %v2325 = vsel %vm1743, %v1427, -inf
    %v2326 = vrot.slane %v2325, 4
    %v2327 = vmax.f32 %v2325, %v2326
    %v2328 = vrot.slane %v2327, 2
    %v2329 = vmax.f32 %v2327, %v2328
    %v2330 = vrot.slane %v2329, 1
    %v2331 = vmax.f32 %v2329, %v2330
    %v2332 = vsel %vm1743, %v1435, -inf
    %v2333 = vrot.slane %v2332, 4
    %v2334 = vmax.f32 %v2332, %v2333
    %v2335 = vrot.slane %v2334, 2
    %v2336 = vmax.f32 %v2334, %v2335
    %v2337 = vrot.slane %v2336, 1
    %v2338 = vmax.f32 %v2336, %v2337
    %v2339 = vsel %vm1743, %v1443, -inf
    %v2340 = vrot.slane %v2339, 4
    %v2341 = vmax.f32 %v2339, %v2340
    %v2342 = vrot.slane %v2341, 2
    %v2343 = vmax.f32 %v2341, %v2342
    %v2344 = vrot.slane %v2343, 1
    %v2345 = vmax.f32 %v2343, %v2344
    %v2346 = vsel %vm1743, %v1442, -inf
    %v2347 = vrot.slane %v2346, 4
    %v2348 = vmax.f32 %v2346, %v2347
    %v2349 = vrot.slane %v2348, 2
    %v2350 = vmax.f32 %v2348, %v2349
    %v2351 = vrot.slane %v2350, 1
    %v2352 = vmax.f32 %v2350, %v2351
    %v2353 = vsel %vm1743, %v1444, -inf
    %v2354 = vrot.slane %v2353, 4
    %v2355 = vmax.f32 %v2353, %v2354
    %v2356 = vrot.slane %v2355, 2
    %v2357 = vmax.f32 %v2355, %v2356
    %v2358 = vrot.slane %v2357, 1
    %v2359 = vmax.f32 %v2357, %v2358
    %v2360 = vsel %vm1743, %v1452, -inf
    %v2361 = vrot.slane %v2360, 4
    %v2362 = vmax.f32 %v2360, %v2361
    %v2363 = vrot.slane %v2362, 2
    %v2364 = vmax.f32 %v2362, %v2363
    %v2365 = vrot.slane %v2364, 1
    %v2366 = vmax.f32 %v2364, %v2365
    %v2367 = vsel %vm1743, %v1460, -inf
    %v2368 = vrot.slane %v2367, 4
    %v2369 = vmax.f32 %v2367, %v2368
    %v2370 = vrot.slane %v2369, 2
    %v2371 = vmax.f32 %v2369, %v2370
    %v2372 = vrot.slane %v2371, 1
    %v2373 = vmax.f32 %v2371, %v2372
    %v2374 = vsel %vm1743, %v1459, -inf
    %v2375 = vrot.slane %v2374, 4
    %v2376 = vmax.f32 %v2374, %v2375
    %v2377 = vrot.slane %v2376, 2
    %v2378 = vmax.f32 %v2376, %v2377
    %v2379 = vrot.slane %v2378, 1
    %v2380 = vmax.f32 %v2378, %v2379
    %v2381 = vsel %vm1743, %v1461, -inf
    %v2382 = vrot.slane %v2381, 4
    %v2383 = vmax.f32 %v2381, %v2382
    %v2384 = vrot.slane %v2383, 2
    %v2385 = vmax.f32 %v2383, %v2384
    %v2386 = vrot.slane %v2385, 1
    %v2387 = vmax.f32 %v2385, %v2386
    %v2388 = vsel %vm1743, %v1469, -inf
    %v2389 = vrot.slane %v2388, 4
    %v2390 = vmax.f32 %v2388, %v2389
    %v2391 = vrot.slane %v2390, 2
    %v2392 = vmax.f32 %v2390, %v2391
    %v2393 = vrot.slane %v2392, 1
    %v2394 = vmax.f32 %v2392, %v2393
    %v2395 = vsel %vm1743, %v1477, -inf
    %v2396 = vrot.slane %v2395, 4
    %v2397 = vmax.f32 %v2395, %v2396
    %v2398 = vrot.slane %v2397, 2
    %v2399 = vmax.f32 %v2397, %v2398
    %v2400 = vrot.slane %v2399, 1
    %v2401 = vmax.f32 %v2399, %v2400
    %v2402 = vsel %vm1743, %v1476, -inf
    %v2403 = vrot.slane %v2402, 4
    %v2404 = vmax.f32 %v2402, %v2403
    %v2405 = vrot.slane %v2404, 2
    %v2406 = vmax.f32 %v2404, %v2405
    %v2407 = vrot.slane %v2406, 1
    %v2408 = vmax.f32 %v2406, %v2407
    %v2409 = vsel %vm1743, %v1478, -inf
    %v2410 = vrot.slane %v2409, 4
    %v2411 = vmax.f32 %v2409, %v2410
    %v2412 = vrot.slane %v2411, 2
    %v2413 = vmax.f32 %v2411, %v2412
    %v2414 = vrot.slane %v2413, 1
    %v2415 = vmax.f32 %v2413, %v2414
    %v2416 = vsel %vm1743, %v1486, -inf
    %v2417 = vrot.slane %v2416, 4
    %v2418 = vmax.f32 %v2416, %v2417
    %v2419 = vrot.slane %v2418, 2
    %v2420 = vmax.f32 %v2418, %v2419
    %v2421 = vrot.slane %v2420, 1
    %v2422 = vmax.f32 %v2420, %v2421
    %v2423 = vsel %vm1743, %v1494, -inf
    %v2424 = vrot.slane %v2423, 4
    %v2425 = vmax.f32 %v2423, %v2424
    %v2426 = vrot.slane %v2425, 2
    %v2427 = vmax.f32 %v2425, %v2426
    %v2428 = vrot.slane %v2427, 1
    %v2429 = vmax.f32 %v2427, %v2428
    %v2430 = vsel %vm1743, %v1493, -inf
    %v2431 = vrot.slane %v2430, 4
    %v2432 = vmax.f32 %v2430, %v2431
    %v2433 = vrot.slane %v2432, 2
    %v2434 = vmax.f32 %v2432, %v2433
    %v2435 = vrot.slane %v2434, 1
    %v2436 = vmax.f32 %v2434, %v2435
    %v2437 = vsel %vm1743, %v1495, -inf
    %v2438 = vrot.slane %v2437, 4
    %v2439 = vmax.f32 %v2437, %v2438
    %v2440 = vrot.slane %v2439, 2
    %v2441 = vmax.f32 %v2439, %v2440
    %v2442 = vrot.slane %v2441, 1
    %v2443 = vmax.f32 %v2441, %v2442
    %v2444 = vsel %vm1743, %v1503, -inf
    %v2445 = vrot.slane %v2444, 4
    %v2446 = vmax.f32 %v2444, %v2445
    %v2447 = vrot.slane %v2446, 2
    %v2448 = vmax.f32 %v2446, %v2447
    %v2449 = vrot.slane %v2448, 1
    %v2450 = vmax.f32 %v2448, %v2449
    %v2451 = vsel %vm1743, %v1511, -inf
    %v2452 = vrot.slane %v2451, 4
    %v2453 = vmax.f32 %v2451, %v2452
    %v2454 = vrot.slane %v2453, 2
    %v2455 = vmax.f32 %v2453, %v2454
    %v2456 = vrot.slane %v2455, 1
    %v2457 = vmax.f32 %v2455, %v2456
    %v2458 = vsel %vm1743, %v1510, -inf
    %v2459 = vrot.slane %v2458, 4
    %v2460 = vmax.f32 %v2458, %v2459
    %v2461 = vrot.slane %v2460, 2
    %v2462 = vmax.f32 %v2460, %v2461
    %v2463 = vrot.slane %v2462, 1
    %v2464 = vmax.f32 %v2462, %v2463
    %v2465 = vsel %vm1743, %v1512, -inf
    %v2466 = vrot.slane %v2465, 4
    %v2467 = vmax.f32 %v2465, %v2466
    %v2468 = vrot.slane %v2467, 2
    %v2469 = vmax.f32 %v2467, %v2468
    %v2470 = vrot.slane %v2469, 1
    %v2471 = vmax.f32 %v2469, %v2470
    %v2472 = vsel %vm1743, %v1520, -inf
    %v2473 = vrot.slane %v2472, 4
    %v2474 = vmax.f32 %v2472, %v2473
    %v2475 = vrot.slane %v2474, 2
    %v2476 = vmax.f32 %v2474, %v2475
    %v2477 = vrot.slane %v2476, 1
    %v2478 = vmax.f32 %v2476, %v2477
    %v2479 = vsel %vm1743, %v1528, -inf
    %v2480 = vrot.slane %v2479, 4
    %v2481 = vmax.f32 %v2479, %v2480
    %v2482 = vrot.slane %v2481, 2
    %v2483 = vmax.f32 %v2481, %v2482
    %v2484 = vrot.slane %v2483, 1
    %v2485 = vmax.f32 %v2483, %v2484
    %v2486 = vsel %vm1743, %v1527, -inf
    %v2487 = vrot.slane %v2486, 4
    %v2488 = vmax.f32 %v2486, %v2487
    %v2489 = vrot.slane %v2488, 2
    %v2490 = vmax.f32 %v2488, %v2489
    %v2491 = vrot.slane %v2490, 1
    %v2492 = vmax.f32 %v2490, %v2491
    %v2493 = vsel %vm1743, %v1529, -inf
    %v2494 = vrot.slane %v2493, 4
    %v2495 = vmax.f32 %v2493, %v2494
    %v2496 = vrot.slane %v2495, 2
    %v2497 = vmax.f32 %v2495, %v2496
    %v2498 = vrot.slane %v2497, 1
    %v2499 = vmax.f32 %v2497, %v2498
    %v2500 = vsel %vm1743, %v1537, -inf
    %v2501 = vrot.slane %v2500, 4
    %v2502 = vmax.f32 %v2500, %v2501
    %v2503 = vrot.slane %v2502, 2
    %v2504 = vmax.f32 %v2502, %v2503
    %v2505 = vrot.slane %v2504, 1
    %v2506 = vmax.f32 %v2504, %v2505
    %v2507 = vsel %vm1743, %v1545, -inf
    %v2508 = vrot.slane %v2507, 4
    %v2509 = vmax.f32 %v2507, %v2508
    %v2510 = vrot.slane %v2509, 2
    %v2511 = vmax.f32 %v2509, %v2510
    %v2512 = vrot.slane %v2511, 1
    %v2513 = vmax.f32 %v2511, %v2512
    %v2514 = vsel %vm1743, %v1544, -inf
    %v2515 = vrot.slane %v2514, 4
    %v2516 = vmax.f32 %v2514, %v2515
    %v2517 = vrot.slane %v2516, 2
    %v2518 = vmax.f32 %v2516, %v2517
    %v2519 = vrot.slane %v2518, 1
    %v2520 = vmax.f32 %v2518, %v2519
    %v2521 = vsel %vm1743, %v1546, -inf
    %v2522 = vrot.slane %v2521, 4
    %v2523 = vmax.f32 %v2521, %v2522
    %v2524 = vrot.slane %v2523, 2
    %v2525 = vmax.f32 %v2523, %v2524
    %v2526 = vrot.slane %v2525, 1
    %v2527 = vmax.f32 %v2525, %v2526
    %v2528 = vsel %vm1743, %v1554, -inf
    %v2529 = vrot.slane %v2528, 4
    %v2530 = vmax.f32 %v2528, %v2529
    %v2531 = vrot.slane %v2530, 2
    %v2532 = vmax.f32 %v2530, %v2531
    %v2533 = vrot.slane %v2532, 1
    %v2534 = vmax.f32 %v2532, %v2533
    %v2535 = vsel %vm1743, %v1562, -inf
    %v2536 = vrot.slane %v2535, 4
    %v2537 = vmax.f32 %v2535, %v2536
    %v2538 = vrot.slane %v2537, 2
    %v2539 = vmax.f32 %v2537, %v2538
    %v2540 = vrot.slane %v2539, 1
    %v2541 = vmax.f32 %v2539, %v2540
    %v2542 = vsel %vm1743, %v1561, -inf
    %v2543 = vrot.slane %v2542, 4
    %v2544 = vmax.f32 %v2542, %v2543
    %v2545 = vrot.slane %v2544, 2
    %v2546 = vmax.f32 %v2544, %v2545
    %v2547 = vrot.slane %v2546, 1
    %v2548 = vmax.f32 %v2546, %v2547
    %v2549 = vsel %vm1743, %v1563, -inf
    %v2550 = vrot.slane %v2549, 4
    %v2551 = vmax.f32 %v2549, %v2550
    %v2552 = vrot.slane %v2551, 2
    %v2553 = vmax.f32 %v2551, %v2552
    %v2554 = vrot.slane %v2553, 1
    %v2555 = vmax.f32 %v2553, %v2554
    %v2556 = vsel %vm1743, %v1571, -inf
    %v2557 = vrot.slane %v2556, 4
    %v2558 = vmax.f32 %v2556, %v2557
    %v2559 = vrot.slane %v2558, 2
    %v2560 = vmax.f32 %v2558, %v2559
    %v2561 = vrot.slane %v2560, 1
    %v2562 = vmax.f32 %v2560, %v2561
    %v2563 = vsel %vm1743, %v1579, -inf
    %v2564 = vrot.slane %v2563, 4
    %v2565 = vmax.f32 %v2563, %v2564
    %v2566 = vrot.slane %v2565, 2
    %v2567 = vmax.f32 %v2565, %v2566
    %v2568 = vrot.slane %v2567, 1
    %v2569 = vmax.f32 %v2567, %v2568
    %v2570 = vsel %vm1743, %v1578, -inf
    %v2571 = vrot.slane %v2570, 4
    %v2572 = vmax.f32 %v2570, %v2571
    %v2573 = vrot.slane %v2572, 2
    %v2574 = vmax.f32 %v2572, %v2573
    %v2575 = vrot.slane %v2574, 1
    %v2576 = vmax.f32 %v2574, %v2575
    %v2577 = vsel %vm1743, %v1580, -inf
    %v2578 = vrot.slane %v2577, 4
    %v2579 = vmax.f32 %v2577, %v2578
    %v2580 = vrot.slane %v2579, 2
    %v2581 = vmax.f32 %v2579, %v2580
    %v2582 = vrot.slane %v2581, 1
    %v2583 = vmax.f32 %v2581, %v2582
    %v2584 = vsel %vm1743, %v1588, -inf
    %v2585 = vrot.slane %v2584, 4
    %v2586 = vmax.f32 %v2584, %v2585
    %v2587 = vrot.slane %v2586, 2
    %v2588 = vmax.f32 %v2586, %v2587
    %v2589 = vrot.slane %v2588, 1
    %v2590 = vmax.f32 %v2588, %v2589
    %v2591 = vsel %vm1743, %v1596, -inf
    %v2592 = vrot.slane %v2591, 4
    %v2593 = vmax.f32 %v2591, %v2592
    %v2594 = vrot.slane %v2593, 2
    %v2595 = vmax.f32 %v2593, %v2594
    %v2596 = vrot.slane %v2595, 1
    %v2597 = vmax.f32 %v2595, %v2596
    %v2598 = vsel %vm1743, %v1595, -inf
    %v2599 = vrot.slane %v2598, 4
    %v2600 = vmax.f32 %v2598, %v2599
    %v2601 = vrot.slane %v2600, 2
    %v2602 = vmax.f32 %v2600, %v2601
    %v2603 = vrot.slane %v2602, 1
    %v2604 = vmax.f32 %v2602, %v2603
    %v2605 = vsel %vm1743, %v1597, -inf
    %v2606 = vrot.slane %v2605, 4
    %v2607 = vmax.f32 %v2605, %v2606
    %v2608 = vrot.slane %v2607, 2
    %v2609 = vmax.f32 %v2607, %v2608
    %v2610 = vrot.slane %v2609, 1
    %v2611 = vmax.f32 %v2609, %v2610
    %v2612 = vsel %vm1743, %v1605, -inf
    %v2613 = vrot.slane %v2612, 4
    %v2614 = vmax.f32 %v2612, %v2613
    %v2615 = vrot.slane %v2614, 2
    %v2616 = vmax.f32 %v2614, %v2615
    %v2617 = vrot.slane %v2616, 1
    %v2618 = vmax.f32 %v2616, %v2617
    %v2619 = vsel %vm1743, %v1613, -inf
    %v2620 = vrot.slane %v2619, 4
    %v2621 = vmax.f32 %v2619, %v2620
    %v2622 = vrot.slane %v2621, 2
    %v2623 = vmax.f32 %v2621, %v2622
    %v2624 = vrot.slane %v2623, 1
    %v2625 = vmax.f32 %v2623, %v2624
    %v2626 = vsel %vm1743, %v1612, -inf
    %v2627 = vrot.slane %v2626, 4
    %v2628 = vmax.f32 %v2626, %v2627
    %v2629 = vrot.slane %v2628, 2
    %v2630 = vmax.f32 %v2628, %v2629
    %v2631 = vrot.slane %v2630, 1
    %v2632 = vmax.f32 %v2630, %v2631
    %v2633 = vsel %vm1743, %v1614, -inf
    %v2634 = vrot.slane %v2633, 4
    %v2635 = vmax.f32 %v2633, %v2634
    %v2636 = vrot.slane %v2635, 2
    %v2637 = vmax.f32 %v2635, %v2636
    %v2638 = vrot.slane %v2637, 1
    %v2639 = vmax.f32 %v2637, %v2638
    %v2640 = vpack.c.bf16 %v1750, %v1750
    %v2641 = vpack.c.bf16 %v1757, %v1757
    %v2642 = vpack.c.bf16 %v1764, %v1764
    %v2643 = vpack.c.bf16 %v1771, %v1771
    %v2644 = vpack.c.bf16 %v1778, %v1778
    %v2645 = vpack.c.bf16 %v1785, %v1785
    %v2646 = vpack.c.bf16 %v1792, %v1792
    %v2647 = vpack.c.bf16 %v1799, %v1799
    %v2648 = vpack.c.bf16 %v1806, %v1806
    %v2649 = vpack.c.bf16 %v1813, %v1813
    %v2650 = vpack.c.bf16 %v1820, %v1820
    %v2651 = vpack.c.bf16 %v1827, %v1827
    %v2652 = vpack.c.bf16 %v1834, %v1834
    %v2653 = vpack.c.bf16 %v1841, %v1841
    %v2654 = vpack.c.bf16 %v1848, %v1848
    %v2655 = vpack.c.bf16 %v1855, %v1855
    %v2656 = vpack.c.bf16 %v1862, %v1862
    %v2657 = vpack.c.bf16 %v1869, %v1869
    %v2658 = vpack.c.bf16 %v1876, %v1876
    %v2659 = vpack.c.bf16 %v1883, %v1883
    %v2660 = vpack.c.bf16 %v1890, %v1890
    %v2661 = vpack.c.bf16 %v1897, %v1897
    %v2662 = vpack.c.bf16 %v1904, %v1904
    %v2663 = vpack.c.bf16 %v1911, %v1911
    %v2664 = vpack.c.bf16 %v1918, %v1918
    %v2665 = vpack.c.bf16 %v1925, %v1925
    %v2666 = vpack.c.bf16 %v1932, %v1932
    %v2667 = vpack.c.bf16 %v1939, %v1939
    %v2668 = vpack.c.bf16 %v1946, %v1946
    %v2669 = vpack.c.bf16 %v1953, %v1953
    %v2670 = vpack.c.bf16 %v1960, %v1960
    %v2671 = vpack.c.bf16 %v1967, %v1967
    %v2672 = vpack.c.bf16 %v1974, %v1974
    %v2673 = vpack.c.bf16 %v1981, %v1981
    %v2674 = vpack.c.bf16 %v1988, %v1988
    %v2675 = vpack.c.bf16 %v1995, %v1995
    %v2676 = vpack.c.bf16 %v2002, %v2002
    %v2677 = vpack.c.bf16 %v2009, %v2009
    %v2678 = vpack.c.bf16 %v2016, %v2016
    %v2679 = vpack.c.bf16 %v2023, %v2023
    %v2680 = vpack.c.bf16 %v2030, %v2030
    %v2681 = vpack.c.bf16 %v2037, %v2037
    %v2682 = vpack.c.bf16 %v2044, %v2044
    %v2683 = vpack.c.bf16 %v2051, %v2051
    %v2684 = vpack.c.bf16 %v2058, %v2058
    %v2685 = vpack.c.bf16 %v2065, %v2065
    %v2686 = vpack.c.bf16 %v2072, %v2072
    %v2687 = vpack.c.bf16 %v2079, %v2079
    %v2688 = vpack.c.bf16 %v2086, %v2086
    %v2689 = vpack.c.bf16 %v2093, %v2093
    %v2690 = vpack.c.bf16 %v2100, %v2100
    %v2691 = vpack.c.bf16 %v2107, %v2107
    %v2692 = vpack.c.bf16 %v2114, %v2114
    %v2693 = vpack.c.bf16 %v2121, %v2121
    %v2694 = vpack.c.bf16 %v2128, %v2128
    %v2695 = vpack.c.bf16 %v2135, %v2135
    %v2696 = vpack.c.bf16 %v2142, %v2142
    %v2697 = vpack.c.bf16 %v2149, %v2149
    %v2698 = vpack.c.bf16 %v2156, %v2156
    %v2699 = vpack.c.bf16 %v2163, %v2163
    %v2700 = vpack.c.bf16 %v2170, %v2170
    %v2701 = vpack.c.bf16 %v2177, %v2177
    %v2702 = vpack.c.bf16 %v2184, %v2184
    %v2703 = vpack.c.bf16 %v2191, %v2191
    %v2704 = vpack.c.bf16 %v2198, %v2198
    %v2705 = vpack.c.bf16 %v2205, %v2205
    %v2706 = vpack.c.bf16 %v2212, %v2212
    %v2707 = vpack.c.bf16 %v2219, %v2219
    %v2708 = vpack.c.bf16 %v2226, %v2226
    %v2709 = vpack.c.bf16 %v2233, %v2233
    %v2710 = vpack.c.bf16 %v2240, %v2240
    %v2711 = vpack.c.bf16 %v2247, %v2247
    %v2712 = vpack.c.bf16 %v2254, %v2254
    %v2713 = vpack.c.bf16 %v2261, %v2261
    %v2714 = vpack.c.bf16 %v2268, %v2268
    %v2715 = vpack.c.bf16 %v2275, %v2275
    %v2716 = vpack.c.bf16 %v2282, %v2282
    %v2717 = vpack.c.bf16 %v2289, %v2289
    %v2718 = vpack.c.bf16 %v2296, %v2296
    %v2719 = vpack.c.bf16 %v2303, %v2303
    %v2720 = vpack.c.bf16 %v2310, %v2310
    %v2721 = vpack.c.bf16 %v2317, %v2317
    %v2722 = vpack.c.bf16 %v2324, %v2324
    %v2723 = vpack.c.bf16 %v2331, %v2331
    %v2724 = vpack.c.bf16 %v2338, %v2338
    %v2725 = vpack.c.bf16 %v2345, %v2345
    %v2726 = vpack.c.bf16 %v2352, %v2352
    %v2727 = vpack.c.bf16 %v2359, %v2359
    %v2728 = vpack.c.bf16 %v2366, %v2366
    %v2729 = vpack.c.bf16 %v2373, %v2373
    %v2730 = vpack.c.bf16 %v2380, %v2380
    %v2731 = vpack.c.bf16 %v2387, %v2387
    %v2732 = vpack.c.bf16 %v2394, %v2394
    %v2733 = vpack.c.bf16 %v2401, %v2401
    %v2734 = vpack.c.bf16 %v2408, %v2408
    %v2735 = vpack.c.bf16 %v2415, %v2415
    %v2736 = vpack.c.bf16 %v2422, %v2422
    %v2737 = vpack.c.bf16 %v2429, %v2429
    %v2738 = vpack.c.bf16 %v2436, %v2436
    %v2739 = vpack.c.bf16 %v2443, %v2443
    %v2740 = vpack.c.bf16 %v2450, %v2450
    %v2741 = vpack.c.bf16 %v2457, %v2457
    %v2742 = vpack.c.bf16 %v2464, %v2464
    %v2743 = vpack.c.bf16 %v2471, %v2471
    %v2744 = vpack.c.bf16 %v2478, %v2478
    %v2745 = vpack.c.bf16 %v2485, %v2485
    %v2746 = vpack.c.bf16 %v2492, %v2492
    %v2747 = vpack.c.bf16 %v2499, %v2499
    %v2748 = vpack.c.bf16 %v2506, %v2506
    %v2749 = vpack.c.bf16 %v2513, %v2513
    %v2750 = vpack.c.bf16 %v2520, %v2520
    %v2751 = vpack.c.bf16 %v2527, %v2527
    %v2752 = vpack.c.bf16 %v2534, %v2534
    %v2753 = vpack.c.bf16 %v2541, %v2541
    %v2754 = vpack.c.bf16 %v2548, %v2548
    %v2755 = vpack.c.bf16 %v2555, %v2555
    %v2756 = vpack.c.bf16 %v2562, %v2562
    %v2757 = vpack.c.bf16 %v2569, %v2569
    %v2758 = vpack.c.bf16 %v2576, %v2576
    %v2759 = vpack.c.bf16 %v2583, %v2583
    %v2760 = vpack.c.bf16 %v2590, %v2590
    %v2761 = vpack.c.bf16 %v2597, %v2597
    %v2762 = vpack.c.bf16 %v2604, %v2604
    %v2763 = vpack.c.bf16 %v2611, %v2611
    %v2764 = vpack.c.bf16 %v2618, %v2618
    %v2765 = vpack.c.bf16 %v2625, %v2625
    %v2766 = vpack.c.bf16 %v2632, %v2632
    %v2767 = vpack.c.bf16 %v2639, %v2639
    %v2896 = vunpack.c.l.b16 %v2640
    %v2897 = vunpack.c.l.b16 %v2641
    %v2898 = vunpack.c.l.b16 %v2642
    %v2899 = vunpack.c.l.b16 %v2643
    %v2900 = vunpack.c.l.b16 %v2644
    %v2901 = vunpack.c.l.b16 %v2645
    %v2902 = vunpack.c.l.b16 %v2646
    %v2903 = vunpack.c.l.b16 %v2647
    %v2904 = vunpack.c.l.b16 %v2648
    %v2905 = vunpack.c.l.b16 %v2649
    %v2906 = vunpack.c.l.b16 %v2650
    %v2907 = vunpack.c.l.b16 %v2651
    %v2908 = vunpack.c.l.b16 %v2652
    %v2909 = vunpack.c.l.b16 %v2653
    %v2910 = vunpack.c.l.b16 %v2654
    %v2911 = vunpack.c.l.b16 %v2655
    %v2912 = vunpack.c.l.b16 %v2656
    %v2913 = vunpack.c.l.b16 %v2657
    %v2914 = vunpack.c.l.b16 %v2658
    %v2915 = vunpack.c.l.b16 %v2659
    %v2916 = vunpack.c.l.b16 %v2660
    %v2917 = vunpack.c.l.b16 %v2661
    %v2918 = vunpack.c.l.b16 %v2662
    %v2919 = vunpack.c.l.b16 %v2663
    %v2920 = vunpack.c.l.b16 %v2664
    %v2921 = vunpack.c.l.b16 %v2665
    %v2922 = vunpack.c.l.b16 %v2666
    %v2923 = vunpack.c.l.b16 %v2667
    %v2924 = vunpack.c.l.b16 %v2668
    %v2925 = vunpack.c.l.b16 %v2669
    %v2926 = vunpack.c.l.b16 %v2670
    %v2927 = vunpack.c.l.b16 %v2671
    %v2928 = vunpack.c.l.b16 %v2672
    %v2929 = vunpack.c.l.b16 %v2673
    %v2930 = vunpack.c.l.b16 %v2674
    %v2931 = vunpack.c.l.b16 %v2675
    %v2932 = vunpack.c.l.b16 %v2676
    %v2933 = vunpack.c.l.b16 %v2677
    %v2934 = vunpack.c.l.b16 %v2678
    %v2935 = vunpack.c.l.b16 %v2679
    %v2936 = vunpack.c.l.b16 %v2680
    %v2937 = vunpack.c.l.b16 %v2681
    %v2938 = vunpack.c.l.b16 %v2682
    %v2939 = vunpack.c.l.b16 %v2683
    %v2940 = vunpack.c.l.b16 %v2684
    %v2941 = vunpack.c.l.b16 %v2685
    %v2942 = vunpack.c.l.b16 %v2686
    %v2943 = vunpack.c.l.b16 %v2687
    %v2944 = vunpack.c.l.b16 %v2688
    %v2945 = vunpack.c.l.b16 %v2689
    %v2946 = vunpack.c.l.b16 %v2690
    %v2947 = vunpack.c.l.b16 %v2691
    %v2948 = vunpack.c.l.b16 %v2692
    %v2949 = vunpack.c.l.b16 %v2693
    %v2950 = vunpack.c.l.b16 %v2694
    %v2951 = vunpack.c.l.b16 %v2695
    %v2952 = vunpack.c.l.b16 %v2696
    %v2953 = vunpack.c.l.b16 %v2697
    %v2954 = vunpack.c.l.b16 %v2698
    %v2955 = vunpack.c.l.b16 %v2699
    %v2956 = vunpack.c.l.b16 %v2700
    %v2957 = vunpack.c.l.b16 %v2701
    %v2958 = vunpack.c.l.b16 %v2702
    %v2959 = vunpack.c.l.b16 %v2703
    %v2960 = vunpack.c.l.b16 %v2704
    %v2961 = vunpack.c.l.b16 %v2705
    %v2962 = vunpack.c.l.b16 %v2706
    %v2963 = vunpack.c.l.b16 %v2707
    %v2964 = vunpack.c.l.b16 %v2708
    %v2965 = vunpack.c.l.b16 %v2709
    %v2966 = vunpack.c.l.b16 %v2710
    %v2967 = vunpack.c.l.b16 %v2711
    %v2968 = vunpack.c.l.b16 %v2712
    %v2969 = vunpack.c.l.b16 %v2713
    %v2970 = vunpack.c.l.b16 %v2714
    %v2971 = vunpack.c.l.b16 %v2715
    %v2972 = vunpack.c.l.b16 %v2716
    %v2973 = vunpack.c.l.b16 %v2717
    %v2974 = vunpack.c.l.b16 %v2718
    %v2975 = vunpack.c.l.b16 %v2719
    %v2976 = vunpack.c.l.b16 %v2720
    %v2977 = vunpack.c.l.b16 %v2721
    %v2978 = vunpack.c.l.b16 %v2722
    %v2979 = vunpack.c.l.b16 %v2723
    %v2980 = vunpack.c.l.b16 %v2724
    %v2981 = vunpack.c.l.b16 %v2725
    %v2982 = vunpack.c.l.b16 %v2726
    %v2983 = vunpack.c.l.b16 %v2727
    %v2984 = vunpack.c.l.b16 %v2728
    %v2985 = vunpack.c.l.b16 %v2729
    %v2986 = vunpack.c.l.b16 %v2730
    %v2987 = vunpack.c.l.b16 %v2731
    %v2988 = vunpack.c.l.b16 %v2732
    %v2989 = vunpack.c.l.b16 %v2733
    %v2990 = vunpack.c.l.b16 %v2734
    %v2991 = vunpack.c.l.b16 %v2735
    %v2992 = vunpack.c.l.b16 %v2736
    %v2993 = vunpack.c.l.b16 %v2737
    %v2994 = vunpack.c.l.b16 %v2738
    %v2995 = vunpack.c.l.b16 %v2739
    %v2996 = vunpack.c.l.b16 %v2740
    %v2997 = vunpack.c.l.b16 %v2741
    %v2998 = vunpack.c.l.b16 %v2742
    %v2999 = vunpack.c.l.b16 %v2743
    %v3000 = vunpack.c.l.b16 %v2744
    %v3001 = vunpack.c.l.b16 %v2745
    %v3002 = vunpack.c.l.b16 %v2746
    %v3003 = vunpack.c.l.b16 %v2747
    %v3004 = vunpack.c.l.b16 %v2748
    %v3005 = vunpack.c.l.b16 %v2749
    %v3006 = vunpack.c.l.b16 %v2750
    %v3007 = vunpack.c.l.b16 %v2751
    %v3008 = vunpack.c.l.b16 %v2752
    %v3009 = vunpack.c.l.b16 %v2753
    %v3010 = vunpack.c.l.b16 %v2754
    %v3011 = vunpack.c.l.b16 %v2755
    %v3012 = vunpack.c.l.b16 %v2756
    %v3013 = vunpack.c.l.b16 %v2757
    %v3014 = vunpack.c.l.b16 %v2758
    %v3015 = vunpack.c.l.b16 %v2759
    %v3016 = vunpack.c.l.b16 %v2760
    %v3017 = vunpack.c.l.b16 %v2761
    %v3018 = vunpack.c.l.b16 %v2762
    %v3019 = vunpack.c.l.b16 %v2763
    %v3020 = vunpack.c.l.b16 %v2764
    %v3021 = vunpack.c.l.b16 %v2765
    %v3022 = vunpack.c.l.b16 %v2766
    %v3023 = vunpack.c.l.b16 %v2767
    %v3024 = vpack.c.b16 %v2896, %v2896
    %v3025 = vpack.c.b16 %v2897, %v2897
    %v3026 = vpack.c.b16 %v2898, %v2898
    %v3027 = vpack.c.b16 %v2899, %v2899
    %v3028 = vpack.c.b16 %v2900, %v2900
    %v3029 = vpack.c.b16 %v2901, %v2901
    %v3030 = vpack.c.b16 %v2902, %v2902
    %v3031 = vpack.c.b16 %v2903, %v2903
    %v3032 = vpack.c.b16 %v2904, %v2904
    %v3033 = vpack.c.b16 %v2905, %v2905
    %v3034 = vpack.c.b16 %v2906, %v2906
    %v3035 = vpack.c.b16 %v2907, %v2907
    %v3036 = vpack.c.b16 %v2908, %v2908
    %v3037 = vpack.c.b16 %v2909, %v2909
    %v3038 = vpack.c.b16 %v2910, %v2910
    %v3039 = vpack.c.b16 %v2911, %v2911
    %v3040 = vpack.c.b16 %v2912, %v2912
    %v3041 = vpack.c.b16 %v2913, %v2913
    %v3042 = vpack.c.b16 %v2914, %v2914
    %v3043 = vpack.c.b16 %v2915, %v2915
    %v3044 = vpack.c.b16 %v2916, %v2916
    %v3045 = vpack.c.b16 %v2917, %v2917
    %v3046 = vpack.c.b16 %v2918, %v2918
    %v3047 = vpack.c.b16 %v2919, %v2919
    %v3048 = vpack.c.b16 %v2920, %v2920
    %v3049 = vpack.c.b16 %v2921, %v2921
    %v3050 = vpack.c.b16 %v2922, %v2922
    %v3051 = vpack.c.b16 %v2923, %v2923
    %v3052 = vpack.c.b16 %v2924, %v2924
    %v3053 = vpack.c.b16 %v2925, %v2925
    %v3054 = vpack.c.b16 %v2926, %v2926
    %v3055 = vpack.c.b16 %v2927, %v2927
    %v3056 = vpack.c.b16 %v2928, %v2928
    %v3057 = vpack.c.b16 %v2929, %v2929
    %v3058 = vpack.c.b16 %v2930, %v2930
    %v3059 = vpack.c.b16 %v2931, %v2931
    %v3060 = vpack.c.b16 %v2932, %v2932
    %v3061 = vpack.c.b16 %v2933, %v2933
    %v3062 = vpack.c.b16 %v2934, %v2934
    %v3063 = vpack.c.b16 %v2935, %v2935
    %v3064 = vpack.c.b16 %v2936, %v2936
    %v3065 = vpack.c.b16 %v2937, %v2937
    %v3066 = vpack.c.b16 %v2938, %v2938
    %v3067 = vpack.c.b16 %v2939, %v2939
    %v3068 = vpack.c.b16 %v2940, %v2940
    %v3069 = vpack.c.b16 %v2941, %v2941
    %v3070 = vpack.c.b16 %v2942, %v2942
    %v3071 = vpack.c.b16 %v2943, %v2943
    %v3072 = vpack.c.b16 %v2944, %v2944
    %v3073 = vpack.c.b16 %v2945, %v2945
    %v3074 = vpack.c.b16 %v2946, %v2946
    %v3075 = vpack.c.b16 %v2947, %v2947
    %v3076 = vpack.c.b16 %v2948, %v2948
    %v3077 = vpack.c.b16 %v2949, %v2949
    %v3078 = vpack.c.b16 %v2950, %v2950
    %v3079 = vpack.c.b16 %v2951, %v2951
    %v3080 = vpack.c.b16 %v2952, %v2952
    %v3081 = vpack.c.b16 %v2953, %v2953
    %v3082 = vpack.c.b16 %v2954, %v2954
    %v3083 = vpack.c.b16 %v2955, %v2955
    %v3084 = vpack.c.b16 %v2956, %v2956
    %v3085 = vpack.c.b16 %v2957, %v2957
    %v3086 = vpack.c.b16 %v2958, %v2958
    %v3087 = vpack.c.b16 %v2959, %v2959
    %v3088 = vpack.c.b16 %v2960, %v2960
    %v3089 = vpack.c.b16 %v2961, %v2961
    %v3090 = vpack.c.b16 %v2962, %v2962
    %v3091 = vpack.c.b16 %v2963, %v2963
    %v3092 = vpack.c.b16 %v2964, %v2964
    %v3093 = vpack.c.b16 %v2965, %v2965
    %v3094 = vpack.c.b16 %v2966, %v2966
    %v3095 = vpack.c.b16 %v2967, %v2967
    %v3096 = vpack.c.b16 %v2968, %v2968
    %v3097 = vpack.c.b16 %v2969, %v2969
    %v3098 = vpack.c.b16 %v2970, %v2970
    %v3099 = vpack.c.b16 %v2971, %v2971
    %v3100 = vpack.c.b16 %v2972, %v2972
    %v3101 = vpack.c.b16 %v2973, %v2973
    %v3102 = vpack.c.b16 %v2974, %v2974
    %v3103 = vpack.c.b16 %v2975, %v2975
    %v3104 = vpack.c.b16 %v2976, %v2976
    %v3105 = vpack.c.b16 %v2977, %v2977
    %v3106 = vpack.c.b16 %v2978, %v2978
    %v3107 = vpack.c.b16 %v2979, %v2979
    %v3108 = vpack.c.b16 %v2980, %v2980
    %v3109 = vpack.c.b16 %v2981, %v2981
    %v3110 = vpack.c.b16 %v2982, %v2982
    %v3111 = vpack.c.b16 %v2983, %v2983
    %v3112 = vpack.c.b16 %v2984, %v2984
    %v3113 = vpack.c.b16 %v2985, %v2985
    %v3114 = vpack.c.b16 %v2986, %v2986
    %v3115 = vpack.c.b16 %v2987, %v2987
    %v3116 = vpack.c.b16 %v2988, %v2988
    %v3117 = vpack.c.b16 %v2989, %v2989
    %v3118 = vpack.c.b16 %v2990, %v2990
    %v3119 = vpack.c.b16 %v2991, %v2991
    %v3120 = vpack.c.b16 %v2992, %v2992
    %v3121 = vpack.c.b16 %v2993, %v2993
    %v3122 = vpack.c.b16 %v2994, %v2994
    %v3123 = vpack.c.b16 %v2995, %v2995
    %v3124 = vpack.c.b16 %v2996, %v2996
    %v3125 = vpack.c.b16 %v2997, %v2997
    %v3126 = vpack.c.b16 %v2998, %v2998
    %v3127 = vpack.c.b16 %v2999, %v2999
    %v3128 = vpack.c.b16 %v3000, %v3000
    %v3129 = vpack.c.b16 %v3001, %v3001
    %v3130 = vpack.c.b16 %v3002, %v3002
    %v3131 = vpack.c.b16 %v3003, %v3003
    %v3132 = vpack.c.b16 %v3004, %v3004
    %v3133 = vpack.c.b16 %v3005, %v3005
    %v3134 = vpack.c.b16 %v3006, %v3006
    %v3135 = vpack.c.b16 %v3007, %v3007
    %v3136 = vpack.c.b16 %v3008, %v3008
    %v3137 = vpack.c.b16 %v3009, %v3009
    %v3138 = vpack.c.b16 %v3010, %v3010
    %v3139 = vpack.c.b16 %v3011, %v3011
    %v3140 = vpack.c.b16 %v3012, %v3012
    %v3141 = vpack.c.b16 %v3013, %v3013
    %v3142 = vpack.c.b16 %v3014, %v3014
    %v3143 = vpack.c.b16 %v3015, %v3015
    %v3144 = vpack.c.b16 %v3016, %v3016
    %v3145 = vpack.c.b16 %v3017, %v3017
    %v3146 = vpack.c.b16 %v3018, %v3018
    %v3147 = vpack.c.b16 %v3019, %v3019
    %v3148 = vpack.c.b16 %v3020, %v3020
    %v3149 = vpack.c.b16 %v3021, %v3021
    %v3150 = vpack.c.b16 %v3022, %v3022
    %v3151 = vpack.c.b16 %v3023, %v3023
    %v3152 = vunpack.c.l.b16 %v3024
    %v3153 = vunpack.c.l.b16 %v3025
    %v3154 = vunpack.c.l.b16 %v3026
    %v3155 = vunpack.c.l.b16 %v3027
    %v3156 = vunpack.c.l.b16 %v3028
    %v3157 = vunpack.c.l.b16 %v3029
    %v3158 = vunpack.c.l.b16 %v3030
    %v3159 = vunpack.c.l.b16 %v3031
    %v3160 = vunpack.c.l.b16 %v3032
    %v3161 = vunpack.c.l.b16 %v3033
    %v3162 = vunpack.c.l.b16 %v3034
    %v3163 = vunpack.c.l.b16 %v3035
    %v3164 = vunpack.c.l.b16 %v3036
    %v3165 = vunpack.c.l.b16 %v3037
    %v3166 = vunpack.c.l.b16 %v3038
    %v3167 = vunpack.c.l.b16 %v3039
    %v3168 = vunpack.c.l.b16 %v3040
    %v3169 = vunpack.c.l.b16 %v3041
    %v3170 = vunpack.c.l.b16 %v3042
    %v3171 = vunpack.c.l.b16 %v3043
    %v3172 = vunpack.c.l.b16 %v3044
    %v3173 = vunpack.c.l.b16 %v3045
    %v3174 = vunpack.c.l.b16 %v3046
    %v3175 = vunpack.c.l.b16 %v3047
    %v3176 = vunpack.c.l.b16 %v3048
    %v3177 = vunpack.c.l.b16 %v3049
    %v3178 = vunpack.c.l.b16 %v3050
    %v3179 = vunpack.c.l.b16 %v3051
    %v3180 = vunpack.c.l.b16 %v3052
    %v3181 = vunpack.c.l.b16 %v3053
    %v3182 = vunpack.c.l.b16 %v3054
    %v3183 = vunpack.c.l.b16 %v3055
    %v3184 = vunpack.c.l.b16 %v3056
    %v3185 = vunpack.c.l.b16 %v3057
    %v3186 = vunpack.c.l.b16 %v3058
    %v3187 = vunpack.c.l.b16 %v3059
    %v3188 = vunpack.c.l.b16 %v3060
    %v3189 = vunpack.c.l.b16 %v3061
    %v3190 = vunpack.c.l.b16 %v3062
    %v3191 = vunpack.c.l.b16 %v3063
    %v3192 = vunpack.c.l.b16 %v3064
    %v3193 = vunpack.c.l.b16 %v3065
    %v3194 = vunpack.c.l.b16 %v3066
    %v3195 = vunpack.c.l.b16 %v3067
    %v3196 = vunpack.c.l.b16 %v3068
    %v3197 = vunpack.c.l.b16 %v3069
    %v3198 = vunpack.c.l.b16 %v3070
    %v3199 = vunpack.c.l.b16 %v3071
    %v3200 = vunpack.c.l.b16 %v3072
    %v3201 = vunpack.c.l.b16 %v3073
    %v3202 = vunpack.c.l.b16 %v3074
    %v3203 = vunpack.c.l.b16 %v3075
    %v3204 = vunpack.c.l.b16 %v3076
    %v3205 = vunpack.c.l.b16 %v3077
    %v3206 = vunpack.c.l.b16 %v3078
    %v3207 = vunpack.c.l.b16 %v3079
    %v3208 = vunpack.c.l.b16 %v3080
    %v3209 = vunpack.c.l.b16 %v3081
    %v3210 = vunpack.c.l.b16 %v3082
    %v3211 = vunpack.c.l.b16 %v3083
    %v3212 = vunpack.c.l.b16 %v3084
    %v3213 = vunpack.c.l.b16 %v3085
    %v3214 = vunpack.c.l.b16 %v3086
    %v3215 = vunpack.c.l.b16 %v3087
    %v3216 = vunpack.c.l.b16 %v3088
    %v3217 = vunpack.c.l.b16 %v3089
    %v3218 = vunpack.c.l.b16 %v3090
    %v3219 = vunpack.c.l.b16 %v3091
    %v3220 = vunpack.c.l.b16 %v3092
    %v3221 = vunpack.c.l.b16 %v3093
    %v3222 = vunpack.c.l.b16 %v3094
    %v3223 = vunpack.c.l.b16 %v3095
    %v3224 = vunpack.c.l.b16 %v3096
    %v3225 = vunpack.c.l.b16 %v3097
    %v3226 = vunpack.c.l.b16 %v3098
    %v3227 = vunpack.c.l.b16 %v3099
    %v3228 = vunpack.c.l.b16 %v3100
    %v3229 = vunpack.c.l.b16 %v3101
    %v3230 = vunpack.c.l.b16 %v3102
    %v3231 = vunpack.c.l.b16 %v3103
    %v3232 = vunpack.c.l.b16 %v3104
    %v3233 = vunpack.c.l.b16 %v3105
    %v3234 = vunpack.c.l.b16 %v3106
    %v3235 = vunpack.c.l.b16 %v3107
    %v3236 = vunpack.c.l.b16 %v3108
    %v3237 = vunpack.c.l.b16 %v3109
    %v3238 = vunpack.c.l.b16 %v3110
    %v3239 = vunpack.c.l.b16 %v3111
    %v3240 = vunpack.c.l.b16 %v3112
    %v3241 = vunpack.c.l.b16 %v3113
    %v3242 = vunpack.c.l.b16 %v3114
    %v3243 = vunpack.c.l.b16 %v3115
    %v3244 = vunpack.c.l.b16 %v3116
    %v3245 = vunpack.c.l.b16 %v3117
    %v3246 = vunpack.c.l.b16 %v3118
    %v3247 = vunpack.c.l.b16 %v3119
    %v3248 = vunpack.c.l.b16 %v3120
    %v3249 = vunpack.c.l.b16 %v3121
    %v3250 = vunpack.c.l.b16 %v3122
    %v3251 = vunpack.c.l.b16 %v3123
    %v3252 = vunpack.c.l.b16 %v3124
    %v3253 = vunpack.c.l.b16 %v3125
    %v3254 = vunpack.c.l.b16 %v3126
    %v3255 = vunpack.c.l.b16 %v3127
    %v3256 = vunpack.c.l.b16 %v3128
    %v3257 = vunpack.c.l.b16 %v3129
    %v3258 = vunpack.c.l.b16 %v3130
    %v3259 = vunpack.c.l.b16 %v3131
    %v3260 = vunpack.c.l.b16 %v3132
    %v3261 = vunpack.c.l.b16 %v3133
    %v3262 = vunpack.c.l.b16 %v3134
    %v3263 = vunpack.c.l.b16 %v3135
    %v3264 = vunpack.c.l.b16 %v3136
    %v3265 = vunpack.c.l.b16 %v3137
    %v3266 = vunpack.c.l.b16 %v3138
    %v3267 = vunpack.c.l.b16 %v3139
    %v3268 = vunpack.c.l.b16 %v3140
    %v3269 = vunpack.c.l.b16 %v3141
    %v3270 = vunpack.c.l.b16 %v3142
    %v3271 = vunpack.c.l.b16 %v3143
    %v3272 = vunpack.c.l.b16 %v3144
    %v3273 = vunpack.c.l.b16 %v3145
    %v3274 = vunpack.c.l.b16 %v3146
    %v3275 = vunpack.c.l.b16 %v3147
    %v3276 = vunpack.c.l.b16 %v3148
    %v3277 = vunpack.c.l.b16 %v3149
    %v3278 = vunpack.c.l.b16 %v3150
    %v3279 = vunpack.c.l.b16 %v3151
    %vm3280 = vcmask 1042434
    %v3281 = vsel %vm3280, %v3153, %v3152
    %vm3282 = vcmask 1043459
    %v3283 = vsel %vm3282, %v3154, %v3281
    %vm3284 = vcmask 1044484
    %v3285 = vsel %vm3284, %v3155, %v3283
    %vm3286 = vcmask 1045509
    %v3287 = vsel %vm3286, %v3156, %v3285
    %vm3288 = vcmask 1046534
    %v3289 = vsel %vm3288, %v3157, %v3287
    %vm3290 = vcmask 1047559
    %v3291 = vsel %vm3290, %v3158, %v3289
    %v3292 = vsel %vm3280, %v3161, %v3160
    %v3293 = vsel %vm3282, %v3162, %v3292
    %v3294 = vsel %vm3284, %v3163, %v3293
    %v3295 = vsel %vm3286, %v3164, %v3294
    %v3296 = vsel %vm3288, %v3165, %v3295
    %v3297 = vsel %vm3290, %v3166, %v3296
    %v3298 = vsel %vm3280, %v3169, %v3168
    %v3299 = vsel %vm3282, %v3170, %v3298
    %v3300 = vsel %vm3284, %v3171, %v3299
    %v3301 = vsel %vm3286, %v3172, %v3300
    %v3302 = vsel %vm3288, %v3173, %v3301
    %v3303 = vsel %vm3290, %v3174, %v3302
    %v3304 = vsel %vm3280, %v3177, %v3176
    %v3305 = vsel %vm3282, %v3178, %v3304
    %v3306 = vsel %vm3284, %v3179, %v3305
    %v3307 = vsel %vm3286, %v3180, %v3306
    %v3308 = vsel %vm3288, %v3181, %v3307
    %v3309 = vsel %vm3290, %v3182, %v3308
    %v3310 = vsel %vm3280, %v3185, %v3184
    %v3311 = vsel %vm3282, %v3186, %v3310
    %v3312 = vsel %vm3284, %v3187, %v3311
    %v3313 = vsel %vm3286, %v3188, %v3312
    %v3314 = vsel %vm3288, %v3189, %v3313
    %v3315 = vsel %vm3290, %v3190, %v3314
    %v3316 = vsel %vm3280, %v3193, %v3192
    %v3317 = vsel %vm3282, %v3194, %v3316
    %v3318 = vsel %vm3284, %v3195, %v3317
    %v3319 = vsel %vm3286, %v3196, %v3318
    %v3320 = vsel %vm3288, %v3197, %v3319
    %v3321 = vsel %vm3290, %v3198, %v3320
    %v3322 = vsel %vm3280, %v3201, %v3200
    %v3323 = vsel %vm3282, %v3202, %v3322
    %v3324 = vsel %vm3284, %v3203, %v3323
    %v3325 = vsel %vm3286, %v3204, %v3324
    %v3326 = vsel %vm3288, %v3205, %v3325
    %v3327 = vsel %vm3290, %v3206, %v3326
    %v3328 = vsel %vm3280, %v3209, %v3208
    %v3329 = vsel %vm3282, %v3210, %v3328
    %v3330 = vsel %vm3284, %v3211, %v3329
    %v3331 = vsel %vm3286, %v3212, %v3330
    %v3332 = vsel %vm3288, %v3213, %v3331
    %v3333 = vsel %vm3290, %v3214, %v3332
    %v3334 = vsel %vm3280, %v3217, %v3216
    %v3335 = vsel %vm3282, %v3218, %v3334
    %v3336 = vsel %vm3284, %v3219, %v3335
    %v3337 = vsel %vm3286, %v3220, %v3336
    %v3338 = vsel %vm3288, %v3221, %v3337
    %v3339 = vsel %vm3290, %v3222, %v3338
    %v3340 = vsel %vm3280, %v3225, %v3224
    %v3341 = vsel %vm3282, %v3226, %v3340
    %v3342 = vsel %vm3284, %v3227, %v3341
    %v3343 = vsel %vm3286, %v3228, %v3342
    %v3344 = vsel %vm3288, %v3229, %v3343
    %v3345 = vsel %vm3290, %v3230, %v3344
    %v3346 = vsel %vm3280, %v3233, %v3232
    %v3347 = vsel %vm3282, %v3234, %v3346
    %v3348 = vsel %vm3284, %v3235, %v3347
    %v3349 = vsel %vm3286, %v3236, %v3348
    %v3350 = vsel %vm3288, %v3237, %v3349
    %v3351 = vsel %vm3290, %v3238, %v3350
    %v3352 = vsel %vm3280, %v3241, %v3240
    %v3353 = vsel %vm3282, %v3242, %v3352
    %v3354 = vsel %vm3284, %v3243, %v3353
    %v3355 = vsel %vm3286, %v3244, %v3354
    %v3356 = vsel %vm3288, %v3245, %v3355
    %v3357 = vsel %vm3290, %v3246, %v3356
    %v3358 = vsel %vm3280, %v3249, %v3248
    %v3359 = vsel %vm3282, %v3250, %v3358
    %v3360 = vsel %vm3284, %v3251, %v3359
    %v3361 = vsel %vm3286, %v3252, %v3360
    %v3362 = vsel %vm3288, %v3253, %v3361
    %v3363 = vsel %vm3290, %v3254, %v3362
    %v3364 = vsel %vm3280, %v3257, %v3256
    %v3365 = vsel %vm3282, %v3258, %v3364
    %v3366 = vsel %vm3284, %v3259, %v3365
    %v3367 = vsel %vm3286, %v3260, %v3366
    %v3368 = vsel %vm3288, %v3261, %v3367
    %v3369 = vsel %vm3290, %v3262, %v3368
    %v3370 = vsel %vm3280, %v3265, %v3264
    %v3371 = vsel %vm3282, %v3266, %v3370
    %v3372 = vsel %vm3284, %v3267, %v3371
    %v3373 = vsel %vm3286, %v3268, %v3372
    %v3374 = vsel %vm3288, %v3269, %v3373
    %v3375 = vsel %vm3290, %v3270, %v3374
    %v3376 = vsel %vm3280, %v3273, %v3272
    %v3377 = vsel %vm3282, %v3274, %v3376
    %v3378 = vsel %vm3284, %v3275, %v3377
    %v3379 = vsel %vm3286, %v3276, %v3378
    %v3380 = vsel %vm3288, %v3277, %v3379
    %v3381 = vsel %vm3290, %v3278, %v3380
    %v3382 = vpack.c.b16 %v3291, %v3291
    %v3383 = vpack.c.b16 %v3159, %v3159
    %v3384 = vpack.c.b16 %v3297, %v3297
    %v3385 = vpack.c.b16 %v3167, %v3167
    %v3386 = vpack.c.b16 %v3303, %v3303
    %v3387 = vpack.c.b16 %v3175, %v3175
    %v3388 = vpack.c.b16 %v3309, %v3309
    %v3389 = vpack.c.b16 %v3183, %v3183
    %v3390 = vpack.c.b16 %v3315, %v3315
    %v3391 = vpack.c.b16 %v3191, %v3191
    %v3392 = vpack.c.b16 %v3321, %v3321
    %v3393 = vpack.c.b16 %v3199, %v3199
    %v3394 = vpack.c.b16 %v3327, %v3327
    %v3395 = vpack.c.b16 %v3207, %v3207
    %v3396 = vpack.c.b16 %v3333, %v3333
    %v3397 = vpack.c.b16 %v3215, %v3215
    %v3398 = vpack.c.b16 %v3339, %v3339
    %v3399 = vpack.c.b16 %v3223, %v3223
    %v3400 = vpack.c.b16 %v3345, %v3345
    %v3401 = vpack.c.b16 %v3231, %v3231
    %v3402 = vpack.c.b16 %v3351, %v3351
    %v3403 = vpack.c.b16 %v3239, %v3239
    %v3404 = vpack.c.b16 %v3357, %v3357
    %v3405 = vpack.c.b16 %v3247, %v3247
    %v3406 = vpack.c.b16 %v3363, %v3363
    %v3407 = vpack.c.b16 %v3255, %v3255
    %v3408 = vpack.c.b16 %v3369, %v3369
    %v3409 = vpack.c.b16 %v3263, %v3263
    %v3410 = vpack.c.b16 %v3375, %v3375
    %v3411 = vpack.c.b16 %v3271, %v3271
    %v3412 = vpack.c.b16 %v3381, %v3381
    %v3413 = vpack.c.b16 %v3279, %v3279
    %s3446 = scalar_lea.vmem [#allocation2], 8
    %vm3447 = vcmask 257024
    %vm3448 = vsmask.f32 7938
    %vm3449 = vmand %vm3447, %vm3448
    %v3450 = vld [vmem:[%s3446] sm:$0xf]
    %v3451 = vsel %vm3449, %v3382, %v3450
    %3452 = vst [vmem:[%s3446] sm:$0xf] %v3451
    %vm3453 = vcmask 253952
    %vm3454 = vsmask.f32 256
    %vm3455 = vmand %vm3453, %vm3454
    %v3456 = vld [vmem:[%s3446 + $0x4] sm:$0x1]
    %v3457 = vsel %vm3455, %v3383, %v3456
    %3458 = vst [vmem:[%s3446 + $0x4] sm:$0x1] %v3457
    %v3459 = vld [vmem:[%s3446 + $0x8] sm:$0xf]
    %v3460 = vsel %vm3449, %v3384, %v3459
    %3461 = vst [vmem:[%s3446 + $0x8] sm:$0xf] %v3460
    %v3462 = vld [vmem:[%s3446 + $0xc] sm:$0x1]
    %v3463 = vsel %vm3455, %v3385, %v3462
    %3464 = vst [vmem:[%s3446 + $0xc] sm:$0x1] %v3463
    %v3465 = vld [vmem:[%s3446 + $0x10] sm:$0xf]
    %v3466 = vsel %vm3449, %v3386, %v3465
    %3467 = vst [vmem:[%s3446 + $0x10] sm:$0xf] %v3466
    %v3468 = vld [vmem:[%s3446 + $0x14] sm:$0x1]
    %v3469 = vsel %vm3455, %v3387, %v3468
    %3470 = vst [vmem:[%s3446 + $0x14] sm:$0x1] %v3469
    %v3471 = vld [vmem:[%s3446 + $0x18] sm:$0xf]
    %v3472 = vsel %vm3449, %v3388, %v3471
    %3473 = vst [vmem:[%s3446 + $0x18] sm:$0xf] %v3472
    %v3474 = vld [vmem:[%s3446 + $0x1c] sm:$0x1]
    %v3475 = vsel %vm3455, %v3389, %v3474
    %3476 = vst [vmem:[%s3446 + $0x1c] sm:$0x1] %v3475
    %v3477 = vld [vmem:[%s3446 + $0x20] sm:$0xf]
    %v3478 = vsel %vm3449, %v3390, %v3477
    %3479 = vst [vmem:[%s3446 + $0x20] sm:$0xf] %v3478
    %v3480 = vld [vmem:[%s3446 + $0x24] sm:$0x1]
    %v3481 = vsel %vm3455, %v3391, %v3480
    %3482 = vst [vmem:[%s3446 + $0x24] sm:$0x1] %v3481
    %v3483 = vld [vmem:[%s3446 + $0x28] sm:$0xf]
    %v3484 = vsel %vm3449, %v3392, %v3483
    %3485 = vst [vmem:[%s3446 + $0x28] sm:$0xf] %v3484
    %v3486 = vld [vmem:[%s3446 + $0x2c] sm:$0x1]
    %v3487 = vsel %vm3455, %v3393, %v3486
    %3488 = vst [vmem:[%s3446 + $0x2c] sm:$0x1] %v3487
    %v3489 = vld [vmem:[%s3446 + $0x30] sm:$0xf]
    %v3490 = vsel %vm3449, %v3394, %v3489
    %3491 = vst [vmem:[%s3446 + $0x30] sm:$0xf] %v3490
    %v3492 = vld [vmem:[%s3446 + $0x34] sm:$0x1]
    %v3493 = vsel %vm3455, %v3395, %v3492
    %3494 = vst [vmem:[%s3446 + $0x34] sm:$0x1] %v3493
    %v3495 = vld [vmem:[%s3446 + $0x38] sm:$0xf]
    %v3496 = vsel %vm3449, %v3396, %v3495
    %3497 = vst [vmem:[%s3446 + $0x38] sm:$0xf] %v3496
    %v3498 = vld [vmem:[%s3446 + $0x3c] sm:$0x1]
    %v3499 = vsel %vm3455, %v3397, %v3498
    %3500 = vst [vmem:[%s3446 + $0x3c] sm:$0x1] %v3499
    %v3501 = vld [vmem:[%s3446 + $0x50] sm:$0xf]
    %v3502 = vsel %vm3449, %v3398, %v3501
    %3503 = vst [vmem:[%s3446 + $0x50] sm:$0xf] %v3502
    %v3504 = vld [vmem:[%s3446 + $0x54] sm:$0x1]
    %v3505 = vsel %vm3455, %v3399, %v3504
    %3506 = vst [vmem:[%s3446 + $0x54] sm:$0x1] %v3505
    %v3507 = vld [vmem:[%s3446 + $0x58] sm:$0xf]
    %v3508 = vsel %vm3449, %v3400, %v3507
    %3509 = vst [vmem:[%s3446 + $0x58] sm:$0xf] %v3508
    %v3510 = vld [vmem:[%s3446 + $0x5c] sm:$0x1]
    %v3511 = vsel %vm3455, %v3401, %v3510
    %3512 = vst [vmem:[%s3446 + $0x5c] sm:$0x1] %v3511
    %v3513 = vld [vmem:[%s3446 + $0x60] sm:$0xf]
    %v3514 = vsel %vm3449, %v3402, %v3513
    %3515 = vst [vmem:[%s3446 + $0x60] sm:$0xf] %v3514
    %v3516 = vld [vmem:[%s3446 + $0x64] sm:$0x1]
    %v3517 = vsel %vm3455, %v3403, %v3516
    %3518 = vst [vmem:[%s3446 + $0x64] sm:$0x1] %v3517
    %v3519 = vld [vmem:[%s3446 + $0x68] sm:$0xf]
    %v3520 = vsel %vm3449, %v3404, %v3519
    %3521 = vst [vmem:[%s3446 + $0x68] sm:$0xf] %v3520
    %v3522 = vld [vmem:[%s3446 + $0x6c] sm:$0x1]
    %v3523 = vsel %vm3455, %v3405, %v3522
    %3524 = vst [vmem:[%s3446 + $0x6c] sm:$0x1] %v3523
    %v3525 = vld [vmem:[%s3446 + $0x70] sm:$0xf]
    %v3526 = vsel %vm3449, %v3406, %v3525
    %3527 = vst [vmem:[%s3446 + $0x70] sm:$0xf] %v3526
    %v3528 = vld [vmem:[%s3446 + $0x74] sm:$0x1]
    %v3529 = vsel %vm3455, %v3407, %v3528
    %3530 = vst [vmem:[%s3446 + $0x74] sm:$0x1] %v3529
    %v3531 = vld [vmem:[%s3446 + $0x78] sm:$0xf]
    %v3532 = vsel %vm3449, %v3408, %v3531
    %3533 = vst [vmem:[%s3446 + $0x78] sm:$0xf] %v3532
    %v3534 = vld [vmem:[%s3446 + $0x7c] sm:$0x1]
    %v3535 = vsel %vm3455, %v3409, %v3534
    %3536 = vst [vmem:[%s3446 + $0x7c] sm:$0x1] %v3535
    %v3537 = vld [vmem:[%s3446 + $0x80] sm:$0xf]
    %v3538 = vsel %vm3449, %v3410, %v3537
    %3539 = vst [vmem:[%s3446 + $0x80] sm:$0xf] %v3538
    %v3540 = vld [vmem:[%s3446 + $0x84] sm:$0x1]
    %v3541 = vsel %vm3455, %v3411, %v3540
    %3542 = vst [vmem:[%s3446 + $0x84] sm:$0x1] %v3541
    %v3543 = vld [vmem:[%s3446 + $0x88] sm:$0xf]
    %v3544 = vsel %vm3449, %v3412, %v3543
    %3545 = vst [vmem:[%s3446 + $0x88] sm:$0xf] %v3544
    %v3546 = vld [vmem:[%s3446 + $0x8c] sm:$0x1]
    %v3547 = vsel %vm3455, %v3413, %v3546
    %3548 = vst [vmem:[%s3446 + $0x8c] sm:$0x1] %v3547
    %v3549 = vld [vmem:[#allocation2] sm:$0xf]
    %v3550 = vld [vmem:[#allocation2 + $0x8] sm:$0xf]
    %v3551 = vld [vmem:[#allocation2 + $0x10] sm:$0xf]
    %v3552 = vld [vmem:[#allocation2 + $0x18] sm:$0xf]
    %v3553 = vld [vmem:[#allocation2 + $0x20] sm:$0xf]
    %v3554 = vld [vmem:[#allocation2 + $0x28] sm:$0xf]
    %v3555 = vld [vmem:[#allocation2 + $0x30] sm:$0xf]
    %v3556 = vld [vmem:[#allocation2 + $0x38] sm:$0xf]
    %v3557 = vld [vmem:[#allocation2 + $0x50] sm:$0xf]
    %v3558 = vld [vmem:[#allocation2 + $0x58] sm:$0xf]
    %v3559 = vld [vmem:[#allocation2 + $0x60] sm:$0xf]
    %v3560 = vld [vmem:[#allocation2 + $0x68] sm:$0xf]
    %v3561 = vld [vmem:[#allocation2 + $0x70] sm:$0xf]
    %v3562 = vld [vmem:[#allocation2 + $0x78] sm:$0xf]
    %v3563 = vld [vmem:[#allocation2 + $0x80] sm:$0xf]
    %v3564 = vld [vmem:[#allocation2 + $0x88] sm:$0xf]
    %v3565 = vld [vmem:[#allocation2 + $0x4] sm:$0x1]
    %v3566 = vld [vmem:[#allocation2 + $0xc] sm:$0x1]
    %v3567 = vld [vmem:[#allocation2 + $0x14] sm:$0x1]
    %v3568 = vld [vmem:[#allocation2 + $0x1c] sm:$0x1]
    %v3569 = vld [vmem:[#allocation2 + $0x24] sm:$0x1]
    %v3570 = vld [vmem:[#allocation2 + $0x2c] sm:$0x1]
    %v3571 = vld [vmem:[#allocation2 + $0x34] sm:$0x1]
    %v3572 = vld [vmem:[#allocation2 + $0x3c] sm:$0x1]
    %v3573 = vld [vmem:[#allocation2 + $0x54] sm:$0x1]
    %v3574 = vld [vmem:[#allocation2 + $0x5c] sm:$0x1]
    %v3575 = vld [vmem:[#allocation2 + $0x64] sm:$0x1]
    %v3576 = vld [vmem:[#allocation2 + $0x6c] sm:$0x1]
    %v3577 = vld [vmem:[#allocation2 + $0x74] sm:$0x1]
    %v3578 = vld [vmem:[#allocation2 + $0x7c] sm:$0x1]
    %v3579 = vld [vmem:[#allocation2 + $0x84] sm:$0x1]
    %v3580 = vld [vmem:[#allocation2 + $0x8c] sm:$0x1]
    %v3581 = vld [vmem:[#allocation2] sm:$0xe]
    %v3582 = vld [vmem:[#allocation2 + $0x8] sm:$0xe]
    %v3583 = vld [vmem:[#allocation2 + $0x10] sm:$0xe]
    %v3584 = vld [vmem:[#allocation2 + $0x18] sm:$0xe]
    %v3585 = vld [vmem:[#allocation2 + $0x20] sm:$0xe]
    %v3586 = vld [vmem:[#allocation2 + $0x28] sm:$0xe]
    %v3587 = vld [vmem:[#allocation2 + $0x30] sm:$0xe]
    %v3588 = vld [vmem:[#allocation2 + $0x38] sm:$0xe]
    %v3589 = vld [vmem:[#allocation2 + $0x50] sm:$0xe]
    %v3590 = vld [vmem:[#allocation2 + $0x58] sm:$0xe]
    %v3591 = vld [vmem:[#allocation2 + $0x60] sm:$0xe]
    %v3592 = vld [vmem:[#allocation2 + $0x68] sm:$0xe]
    %v3593 = vld [vmem:[#allocation2 + $0x70] sm:$0xe]
    %v3594 = vld [vmem:[#allocation2 + $0x78] sm:$0xe]
    %v3595 = vld [vmem:[#allocation2 + $0x80] sm:$0xe]
    %v3596 = vld [vmem:[#allocation2 + $0x88] sm:$0xe]
    %v3629 = vunpack.c.l.b16 %v3549
    %v3630 = vunpack.c.l.b16 %v3565
    %v3631 = vunpack.c.l.b16 %v3550
    %v3632 = vunpack.c.l.b16 %v3566
    %v3633 = vunpack.c.l.b16 %v3551
    %v3634 = vunpack.c.l.b16 %v3567
    %v3635 = vunpack.c.l.b16 %v3552
    %v3636 = vunpack.c.l.b16 %v3568
    %v3637 = vunpack.c.l.b16 %v3553
    %v3638 = vunpack.c.l.b16 %v3569
    %v3639 = vunpack.c.l.b16 %v3554
    %v3640 = vunpack.c.l.b16 %v3570
    %v3641 = vunpack.c.l.b16 %v3555
    %v3642 = vunpack.c.l.b16 %v3571
    %v3643 = vunpack.c.l.b16 %v3556
    %v3644 = vunpack.c.l.b16 %v3572
    %v3645 = vunpack.c.l.b16 %v3557
    %v3646 = vunpack.c.l.b16 %v3573
    %v3647 = vunpack.c.l.b16 %v3558
    %v3648 = vunpack.c.l.b16 %v3574
    %v3649 = vunpack.c.l.b16 %v3559
    %v3650 = vunpack.c.l.b16 %v3575
    %v3651 = vunpack.c.l.b16 %v3560
    %v3652 = vunpack.c.l.b16 %v3576
    %v3653 = vunpack.c.l.b16 %v3561
    %v3654 = vunpack.c.l.b16 %v3577
    %v3655 = vunpack.c.l.b16 %v3562
    %v3656 = vunpack.c.l.b16 %v3578
    %v3657 = vunpack.c.l.b16 %v3563
    %v3658 = vunpack.c.l.b16 %v3579
    %v3659 = vunpack.c.l.b16 %v3564
    %v3660 = vunpack.c.l.b16 %v3580
    %v3661 = vpack.c.b16 %v3630, %v3629
    %v3662 = vpack.c.b16 %v3632, %v3631
    %v3663 = vpack.c.b16 %v3634, %v3633
    %v3664 = vpack.c.b16 %v3636, %v3635
    %v3665 = vpack.c.b16 %v3638, %v3637
    %v3666 = vpack.c.b16 %v3640, %v3639
    %v3667 = vpack.c.b16 %v3642, %v3641
    %v3668 = vpack.c.b16 %v3644, %v3643
    %v3669 = vpack.c.b16 %v3646, %v3645
    %v3670 = vpack.c.b16 %v3648, %v3647
    %v3671 = vpack.c.b16 %v3650, %v3649
    %v3672 = vpack.c.b16 %v3652, %v3651
    %v3673 = vpack.c.b16 %v3654, %v3653
    %v3674 = vpack.c.b16 %v3656, %v3655
    %v3675 = vpack.c.b16 %v3658, %v3657
    %v3676 = vpack.c.b16 %v3660, %v3659
    %v3678 = vshrl.u32 %v3661, 16
    %v3680 = vshll.u32 %v3661, 16
    %v3682 = vrot.slane %v3680, 1
    %v3683 = vor.u32 %v3678, %v3682
    %v3685 = vshrl.u32 %v3662, 16
    %v3687 = vshll.u32 %v3662, 16
    %v3689 = vrot.slane %v3687, 1
    %v3690 = vor.u32 %v3685, %v3689
    %v3692 = vshrl.u32 %v3663, 16
    %v3694 = vshll.u32 %v3663, 16
    %v3696 = vrot.slane %v3694, 1
    %v3697 = vor.u32 %v3692, %v3696
    %v3699 = vshrl.u32 %v3664, 16
    %v3701 = vshll.u32 %v3664, 16
    %v3703 = vrot.slane %v3701, 1
    %v3704 = vor.u32 %v3699, %v3703
    %v3706 = vshrl.u32 %v3665, 16
    %v3708 = vshll.u32 %v3665, 16
    %v3710 = vrot.slane %v3708, 1
    %v3711 = vor.u32 %v3706, %v3710
    %v3713 = vshrl.u32 %v3666, 16
    %v3715 = vshll.u32 %v3666, 16
    %v3717 = vrot.slane %v3715, 1
    %v3718 = vor.u32 %v3713, %v3717
    %v3720 = vshrl.u32 %v3667, 16
    %v3722 = vshll.u32 %v3667, 16
    %v3724 = vrot.slane %v3722, 1
    %v3725 = vor.u32 %v3720, %v3724
    %v3727 = vshrl.u32 %v3668, 16
    %v3729 = vshll.u32 %v3668, 16
    %v3731 = vrot.slane %v3729, 1
    %v3732 = vor.u32 %v3727, %v3731
    %v3734 = vshrl.u32 %v3669, 16
    %v3736 = vshll.u32 %v3669, 16
    %v3738 = vrot.slane %v3736, 1
    %v3739 = vor.u32 %v3734, %v3738
    %v3741 = vshrl.u32 %v3670, 16
    %v3743 = vshll.u32 %v3670, 16
    %v3745 = vrot.slane %v3743, 1
    %v3746 = vor.u32 %v3741, %v3745
    %v3748 = vshrl.u32 %v3671, 16
    %v3750 = vshll.u32 %v3671, 16
    %v3752 = vrot.slane %v3750, 1
    %v3753 = vor.u32 %v3748, %v3752
    %v3755 = vshrl.u32 %v3672, 16
    %v3757 = vshll.u32 %v3672, 16
    %v3759 = vrot.slane %v3757, 1
    %v3760 = vor.u32 %v3755, %v3759
    %v3762 = vshrl.u32 %v3673, 16
    %v3764 = vshll.u32 %v3673, 16
    %v3766 = vrot.slane %v3764, 1
    %v3767 = vor.u32 %v3762, %v3766
    %v3769 = vshrl.u32 %v3674, 16
    %v3771 = vshll.u32 %v3674, 16
    %v3773 = vrot.slane %v3771, 1
    %v3774 = vor.u32 %v3769, %v3773
    %v3776 = vshrl.u32 %v3675, 16
    %v3778 = vshll.u32 %v3675, 16
    %v3780 = vrot.slane %v3778, 1
    %v3781 = vor.u32 %v3776, %v3780
    %v3783 = vshrl.u32 %v3676, 16
    %v3785 = vshll.u32 %v3676, 16
    %v3787 = vrot.slane %v3785, 1
    %v3788 = vor.u32 %v3783, %v3787
    %3789 = vrot.lane.b32.xlu0 %v3683, 32
    %v3790 = vpop.permute.xlu0 %3789
    %3791 = vrot.lane.b32.xlu0 %v3690, 32
    %v3792 = vpop.permute.xlu0 %3791
    %3793 = vrot.lane.b32.xlu0 %v3697, 32
    %v3794 = vpop.permute.xlu0 %3793
    %3795 = vrot.lane.b32.xlu0 %v3704, 32
    %v3796 = vpop.permute.xlu0 %3795
    %3797 = vrot.lane.b32.xlu0 %v3711, 32
    %v3798 = vpop.permute.xlu0 %3797
    %3799 = vrot.lane.b32.xlu0 %v3718, 32
    %v3800 = vpop.permute.xlu0 %3799
    %3801 = vrot.lane.b32.xlu0 %v3725, 32
    %v3802 = vpop.permute.xlu0 %3801
    %3803 = vrot.lane.b32.xlu0 %v3732, 32
    %v3804 = vpop.permute.xlu0 %3803
    %3805 = vrot.lane.b32.xlu0 %v3739, 32
    %v3806 = vpop.permute.xlu0 %3805
    %3807 = vrot.lane.b32.xlu0 %v3746, 32
    %v3808 = vpop.permute.xlu0 %3807
    %3809 = vrot.lane.b32.xlu0 %v3753, 32
    %v3810 = vpop.permute.xlu0 %3809
    %3811 = vrot.lane.b32.xlu0 %v3760, 32
    %v3812 = vpop.permute.xlu0 %3811
    %3813 = vrot.lane.b32.xlu0 %v3767, 32
    %v3814 = vpop.permute.xlu0 %3813
    %3815 = vrot.lane.b32.xlu0 %v3774, 32
    %v3816 = vpop.permute.xlu0 %3815
    %3817 = vrot.lane.b32.xlu0 %v3781, 32
    %v3818 = vpop.permute.xlu0 %3817
    %3819 = vrot.lane.b32.xlu0 %v3788, 32
    %v3820 = vpop.permute.xlu0 %3819
    %v3837 = vunpack.c.l.b16 %v3581
    %v3838 = vunpack.c.l.b16 %v3582
    %v3839 = vunpack.c.l.b16 %v3583
    %v3840 = vunpack.c.l.b16 %v3584
    %v3841 = vunpack.c.l.b16 %v3585
    %v3842 = vunpack.c.l.b16 %v3586
    %v3843 = vunpack.c.l.b16 %v3587
    %v3844 = vunpack.c.l.b16 %v3588
    %v3845 = vunpack.c.l.b16 %v3589
    %v3846 = vunpack.c.l.b16 %v3590
    %v3847 = vunpack.c.l.b16 %v3591
    %v3848 = vunpack.c.l.b16 %v3592
    %v3849 = vunpack.c.l.b16 %v3593
    %v3850 = vunpack.c.l.b16 %v3594
    %v3851 = vunpack.c.l.b16 %v3595
    %v3852 = vunpack.c.l.b16 %v3596
    %v3853 = vpack.c.b16 %v3630, %v3837
    %v3854 = vpack.c.b16 %v3632, %v3838
    %v3855 = vpack.c.b16 %v3634, %v3839
    %v3856 = vpack.c.b16 %v3636, %v3840
    %v3857 = vpack.c.b16 %v3638, %v3841
    %v3858 = vpack.c.b16 %v3640, %v3842
    %v3859 = vpack.c.b16 %v3642, %v3843
    %v3860 = vpack.c.b16 %v3644, %v3844
    %v3861 = vpack.c.b16 %v3646, %v3845
    %v3862 = vpack.c.b16 %v3648, %v3846
    %v3863 = vpack.c.b16 %v3650, %v3847
    %v3864 = vpack.c.b16 %v3652, %v3848
    %v3865 = vpack.c.b16 %v3654, %v3849
    %v3866 = vpack.c.b16 %v3656, %v3850
    %v3867 = vpack.c.b16 %v3658, %v3851
    %v3868 = vpack.c.b16 %v3660, %v3852
    %v3869 = vrot.slane %v3853, 1
    %v3870 = vrot.slane %v3854, 1
    %v3871 = vrot.slane %v3855, 1
    %v3872 = vrot.slane %v3856, 1
    %v3873 = vrot.slane %v3857, 1
    %v3874 = vrot.slane %v3858, 1
    %v3875 = vrot.slane %v3859, 1
    %v3876 = vrot.slane %v3860, 1
    %v3877 = vrot.slane %v3861, 1
    %v3878 = vrot.slane %v3862, 1
    %v3879 = vrot.slane %v3863, 1
    %v3880 = vrot.slane %v3864, 1
    %v3881 = vrot.slane %v3865, 1
    %v3882 = vrot.slane %v3866, 1
    %v3883 = vrot.slane %v3867, 1
    %v3884 = vrot.slane %v3868, 1
    %3885 = vrot.lane.b32.xlu0 %v3869, 64
    %v3886 = vpop.permute.xlu0 %3885
    %3887 = vrot.lane.b32.xlu0 %v3870, 64
    %v3888 = vpop.permute.xlu0 %3887
    %3889 = vrot.lane.b32.xlu0 %v3871, 64
    %v3890 = vpop.permute.xlu0 %3889
    %3891 = vrot.lane.b32.xlu0 %v3872, 64
    %v3892 = vpop.permute.xlu0 %3891
    %3893 = vrot.lane.b32.xlu0 %v3873, 64
    %v3894 = vpop.permute.xlu0 %3893
    %3895 = vrot.lane.b32.xlu0 %v3874, 64
    %v3896 = vpop.permute.xlu0 %3895
    %3897 = vrot.lane.b32.xlu0 %v3875, 64
    %v3898 = vpop.permute.xlu0 %3897
    %3899 = vrot.lane.b32.xlu0 %v3876, 64
    %v3900 = vpop.permute.xlu0 %3899
    %3901 = vrot.lane.b32.xlu0 %v3877, 64
    %v3902 = vpop.permute.xlu0 %3901
    %3903 = vrot.lane.b32.xlu0 %v3878, 64
    %v3904 = vpop.permute.xlu0 %3903
    %3905 = vrot.lane.b32.xlu0 %v3879, 64
    %v3906 = vpop.permute.xlu0 %3905
    %3907 = vrot.lane.b32.xlu0 %v3880, 64
    %v3908 = vpop.permute.xlu0 %3907
    %3909 = vrot.lane.b32.xlu0 %v3881, 64
    %v3910 = vpop.permute.xlu0 %3909
    %3911 = vrot.lane.b32.xlu0 %v3882, 64
    %v3912 = vpop.permute.xlu0 %3911
    %3913 = vrot.lane.b32.xlu0 %v3883, 64
    %v3914 = vpop.permute.xlu0 %3913
    %3915 = vrot.lane.b32.xlu0 %v3884, 64
    %v3916 = vpop.permute.xlu0 %3915
    %v3919 = vsel %vm942, %v3549, %v3790
    %v3922 = vsel %vm942, %v3550, %v3792
    %v3925 = vsel %vm942, %v3551, %v3794
    %v3928 = vsel %vm942, %v3552, %v3796
    %v3931 = vsel %vm942, %v3553, %v3798
    %v3934 = vsel %vm942, %v3554, %v3800
    %v3937 = vsel %vm942, %v3555, %v3802
    %v3940 = vsel %vm942, %v3556, %v3804
    %v3943 = vsel %vm942, %v3557, %v3806
    %v3946 = vsel %vm942, %v3558, %v3808
    %v3949 = vsel %vm942, %v3559, %v3810
    %v3952 = vsel %vm942, %v3560, %v3812
    %v3955 = vsel %vm942, %v3561, %v3814
    %v3958 = vsel %vm942, %v3562, %v3816
    %v3961 = vsel %vm942, %v3563, %v3818
    %v3964 = vsel %vm942, %v3564, %v3820
    %vm3965 = vcmask 523264
    %v3967 = vsel %vm3965, %v3919, %v3886
    %v3969 = vsel %vm3965, %v3922, %v3888
    %v3971 = vsel %vm3965, %v3925, %v3890
    %v3973 = vsel %vm3965, %v3928, %v3892
    %v3975 = vsel %vm3965, %v3931, %v3894
    %v3977 = vsel %vm3965, %v3934, %v3896
    %v3979 = vsel %vm3965, %v3937, %v3898
    %v3981 = vsel %vm3965, %v3940, %v3900
    %v3983 = vsel %vm3965, %v3943, %v3902
    %v3985 = vsel %vm3965, %v3946, %v3904
    %v3987 = vsel %vm3965, %v3949, %v3906
    %v3989 = vsel %vm3965, %v3952, %v3908
    %v3991 = vsel %vm3965, %v3955, %v3910
    %v3993 = vsel %vm3965, %v3958, %v3912
    %v3995 = vsel %vm3965, %v3961, %v3914
    %v3997 = vsel %vm3965, %v3964, %v3916
    %v3998 = vld [vmem:[%s3] sm:$0xf]
    %v3999 = vld [vmem:[%s3 + $0x4] sm:$0xf]
    %v4000 = vld [vmem:[%s3 + $0x8] sm:$0xf]
    %v4001 = vld [vmem:[%s3 + $0xc] sm:$0xf]
    %v4002 = vld [vmem:[%s3 + $0x10] sm:$0xf]
    %v4003 = vld [vmem:[%s3 + $0x14] sm:$0xf]
    %v4004 = vld [vmem:[%s3 + $0x18] sm:$0xf]
    %v4005 = vld [vmem:[%s3 + $0x1c] sm:$0xf]
    %v4006 = vld [vmem:[%s3 + $0x20] sm:$0xf]
    %v4007 = vld [vmem:[%s3 + $0x24] sm:$0xf]
    %v4008 = vld [vmem:[%s3 + $0x28] sm:$0xf]
    %v4009 = vld [vmem:[%s3 + $0x2c] sm:$0xf]
    %v4010 = vld [vmem:[%s3446] sm:$0xf]
    %v4011 = vld [vmem:[%s3446 + $0x8] sm:$0xf]
    %v4012 = vld [vmem:[%s3446 + $0x10] sm:$0xf]
    %v4013 = vld [vmem:[%s3446 + $0x18] sm:$0xf]
    %v4014 = vld [vmem:[%s3446 + $0x20] sm:$0xf]
    %v4015 = vld [vmem:[%s3446 + $0x28] sm:$0xf]
    %v4016 = vld [vmem:[%s3446 + $0x30] sm:$0xf]
    %v4017 = vld [vmem:[%s3446 + $0x38] sm:$0xf]
    %v4018 = vld [vmem:[%s3446 + $0x50] sm:$0xf]
    %v4019 = vld [vmem:[%s3446 + $0x58] sm:$0xf]
    %v4020 = vld [vmem:[%s3446 + $0x60] sm:$0xf]
    %v4021 = vld [vmem:[%s3446 + $0x68] sm:$0xf]
    %v4022 = vld [vmem:[%s3446 + $0x70] sm:$0xf]
    %v4023 = vld [vmem:[%s3446 + $0x78] sm:$0xf]
    %v4024 = vld [vmem:[%s3446 + $0x80] sm:$0xf]
    %v4025 = vld [vmem:[%s3446 + $0x88] sm:$0xf]
    %v4026 = vld [vmem:[%s3446 + $0x4] sm:$0x1]
    %v4027 = vld [vmem:[%s3446 + $0xc] sm:$0x1]
    %v4028 = vld [vmem:[%s3446 + $0x14] sm:$0x1]
    %v4029 = vld [vmem:[%s3446 + $0x1c] sm:$0x1]
    %v4030 = vld [vmem:[%s3446 + $0x24] sm:$0x1]
    %v4031 = vld [vmem:[%s3446 + $0x2c] sm:$0x1]
    %v4032 = vld [vmem:[%s3446 + $0x34] sm:$0x1]
    %v4033 = vld [vmem:[%s3446 + $0x3c] sm:$0x1]
    %v4034 = vld [vmem:[%s3446 + $0x54] sm:$0x1]
    %v4035 = vld [vmem:[%s3446 + $0x5c] sm:$0x1]
    %v4036 = vld [vmem:[%s3446 + $0x64] sm:$0x1]
    %v4037 = vld [vmem:[%s3446 + $0x6c] sm:$0x1]
    %v4038 = vld [vmem:[%s3446 + $0x74] sm:$0x1]
    %v4039 = vld [vmem:[%s3446 + $0x7c] sm:$0x1]
    %v4040 = vld [vmem:[%s3446 + $0x84] sm:$0x1]
    %v4041 = vld [vmem:[%s3446 + $0x8c] sm:$0x1]
    %v4042 = vld [vmem:[%s3446] sm:$0xe]
    %v4043 = vld [vmem:[%s3446 + $0x8] sm:$0xe]
    %v4044 = vld [vmem:[%s3446 + $0x10] sm:$0xe]
    %v4045 = vld [vmem:[%s3446 + $0x18] sm:$0xe]
    %v4046 = vld [vmem:[%s3446 + $0x20] sm:$0xe]
    %v4047 = vld [vmem:[%s3446 + $0x28] sm:$0xe]
    %v4048 = vld [vmem:[%s3446 + $0x30] sm:$0xe]
    %v4049 = vld [vmem:[%s3446 + $0x38] sm:$0xe]
    %v4050 = vld [vmem:[%s3446 + $0x50] sm:$0xe]
    %v4051 = vld [vmem:[%s3446 + $0x58] sm:$0xe]
    %v4052 = vld [vmem:[%s3446 + $0x60] sm:$0xe]
    %v4053 = vld [vmem:[%s3446 + $0x68] sm:$0xe]
    %v4054 = vld [vmem:[%s3446 + $0x70] sm:$0xe]
    %v4055 = vld [vmem:[%s3446 + $0x78] sm:$0xe]
    %v4056 = vld [vmem:[%s3446 + $0x80] sm:$0xe]
    %v4057 = vld [vmem:[%s3446 + $0x88] sm:$0xe]
    %v4090 = vunpack.c.l.b16 %v4010
    %v4091 = vunpack.c.l.b16 %v4026
    %v4092 = vunpack.c.l.b16 %v4011
    %v4093 = vunpack.c.l.b16 %v4027
    %v4094 = vunpack.c.l.b16 %v4012
    %v4095 = vunpack.c.l.b16 %v4028
    %v4096 = vunpack.c.l.b16 %v4013
    %v4097 = vunpack.c.l.b16 %v4029
    %v4098 = vunpack.c.l.b16 %v4014
    %v4099 = vunpack.c.l.b16 %v4030
    %v4100 = vunpack.c.l.b16 %v4015
    %v4101 = vunpack.c.l.b16 %v4031
    %v4102 = vunpack.c.l.b16 %v4016
    %v4103 = vunpack.c.l.b16 %v4032
    %v4104 = vunpack.c.l.b16 %v4017
    %v4105 = vunpack.c.l.b16 %v4033
    %v4106 = vunpack.c.l.b16 %v4018
    %v4107 = vunpack.c.l.b16 %v4034
    %v4108 = vunpack.c.l.b16 %v4019
    %v4109 = vunpack.c.l.b16 %v4035
    %v4110 = vunpack.c.l.b16 %v4020
    %v4111 = vunpack.c.l.b16 %v4036
    %v4112 = vunpack.c.l.b16 %v4021
    %v4113 = vunpack.c.l.b16 %v4037
    %v4114 = vunpack.c.l.b16 %v4022
    %v4115 = vunpack.c.l.b16 %v4038
    %v4116 = vunpack.c.l.b16 %v4023
    %v4117 = vunpack.c.l.b16 %v4039
    %v4118 = vunpack.c.l.b16 %v4024
    %v4119 = vunpack.c.l.b16 %v4040
    %v4120 = vunpack.c.l.b16 %v4025
    %v4121 = vunpack.c.l.b16 %v4041
    %v4122 = vpack.c.b16 %v4091, %v4090
    %v4123 = vpack.c.b16 %v4093, %v4092
    %v4124 = vpack.c.b16 %v4095, %v4094
    %v4125 = vpack.c.b16 %v4097, %v4096
    %v4126 = vpack.c.b16 %v4099, %v4098
    %v4127 = vpack.c.b16 %v4101, %v4100
    %v4128 = vpack.c.b16 %v4103, %v4102
    %v4129 = vpack.c.b16 %v4105, %v4104
    %v4130 = vpack.c.b16 %v4107, %v4106
    %v4131 = vpack.c.b16 %v4109, %v4108
    %v4132 = vpack.c.b16 %v4111, %v4110
    %v4133 = vpack.c.b16 %v4113, %v4112
    %v4134 = vpack.c.b16 %v4115, %v4114
    %v4135 = vpack.c.b16 %v4117, %v4116
    %v4136 = vpack.c.b16 %v4119, %v4118
    %v4137 = vpack.c.b16 %v4121, %v4120
    %v4139 = vshrl.u32 %v4122, 16
    %v4141 = vshll.u32 %v4122, 16
    %v4143 = vrot.slane %v4141, 1
    %v4144 = vor.u32 %v4139, %v4143
    %v4146 = vshrl.u32 %v4123, 16
    %v4148 = vshll.u32 %v4123, 16
    %v4150 = vrot.slane %v4148, 1
    %v4151 = vor.u32 %v4146, %v4150
    %v4153 = vshrl.u32 %v4124, 16
    %v4155 = vshll.u32 %v4124, 16
    %v4157 = vrot.slane %v4155, 1
    %v4158 = vor.u32 %v4153, %v4157
    %v4160 = vshrl.u32 %v4125, 16
    %v4162 = vshll.u32 %v4125, 16
    %v4164 = vrot.slane %v4162, 1
    %v4165 = vor.u32 %v4160, %v4164
    %v4167 = vshrl.u32 %v4126, 16
    %v4169 = vshll.u32 %v4126, 16
    %v4171 = vrot.slane %v4169, 1
    %v4172 = vor.u32 %v4167, %v4171
    %v4174 = vshrl.u32 %v4127, 16
    %v4176 = vshll.u32 %v4127, 16
    %v4178 = vrot.slane %v4176, 1
    %v4179 = vor.u32 %v4174, %v4178
    %v4181 = vshrl.u32 %v4128, 16
    %v4183 = vshll.u32 %v4128, 16
    %v4185 = vrot.slane %v4183, 1
    %v4186 = vor.u32 %v4181, %v4185
    %v4188 = vshrl.u32 %v4129, 16
    %v4190 = vshll.u32 %v4129, 16
    %v4192 = vrot.slane %v4190, 1
    %v4193 = vor.u32 %v4188, %v4192
    %v4195 = vshrl.u32 %v4130, 16
    %v4197 = vshll.u32 %v4130, 16
    %v4199 = vrot.slane %v4197, 1
    %v4200 = vor.u32 %v4195, %v4199
    %v4202 = vshrl.u32 %v4131, 16
    %v4204 = vshll.u32 %v4131, 16
    %v4206 = vrot.slane %v4204, 1
    %v4207 = vor.u32 %v4202, %v4206
    %v4209 = vshrl.u32 %v4132, 16
    %v4211 = vshll.u32 %v4132, 16
    %v4213 = vrot.slane %v4211, 1
    %v4214 = vor.u32 %v4209, %v4213
    %v4216 = vshrl.u32 %v4133, 16
    %v4218 = vshll.u32 %v4133, 16
    %v4220 = vrot.slane %v4218, 1
    %v4221 = vor.u32 %v4216, %v4220
    %v4223 = vshrl.u32 %v4134, 16
    %v4225 = vshll.u32 %v4134, 16
    %v4227 = vrot.slane %v4225, 1
    %v4228 = vor.u32 %v4223, %v4227
    %v4230 = vshrl.u32 %v4135, 16
    %v4232 = vshll.u32 %v4135, 16
    %v4234 = vrot.slane %v4232, 1
    %v4235 = vor.u32 %v4230, %v4234
    %v4237 = vshrl.u32 %v4136, 16
    %v4239 = vshll.u32 %v4136, 16
    %v4241 = vrot.slane %v4239, 1
    %v4242 = vor.u32 %v4237, %v4241
    %v4244 = vshrl.u32 %v4137, 16
    %v4246 = vshll.u32 %v4137, 16
    %v4248 = vrot.slane %v4246, 1
    %v4249 = vor.u32 %v4244, %v4248
    %4250 = vrot.lane.b32.xlu0 %v4144, 32
    %v4251 = vpop.permute.xlu0 %4250
    %4252 = vrot.lane.b32.xlu0 %v4151, 32
    %v4253 = vpop.permute.xlu0 %4252
    %4254 = vrot.lane.b32.xlu0 %v4158, 32
    %v4255 = vpop.permute.xlu0 %4254
    %4256 = vrot.lane.b32.xlu0 %v4165, 32
    %v4257 = vpop.permute.xlu0 %4256
    %4258 = vrot.lane.b32.xlu0 %v4172, 32
    %v4259 = vpop.permute.xlu0 %4258
    %4260 = vrot.lane.b32.xlu0 %v4179, 32
    %v4261 = vpop.permute.xlu0 %4260
    %4262 = vrot.lane.b32.xlu0 %v4186, 32
    %v4263 = vpop.permute.xlu0 %4262
    %4264 = vrot.lane.b32.xlu0 %v4193, 32
    %v4265 = vpop.permute.xlu0 %4264
    %4266 = vrot.lane.b32.xlu0 %v4200, 32
    %v4267 = vpop.permute.xlu0 %4266
    %4268 = vrot.lane.b32.xlu0 %v4207, 32
    %v4269 = vpop.permute.xlu0 %4268
    %4270 = vrot.lane.b32.xlu0 %v4214, 32
    %v4271 = vpop.permute.xlu0 %4270
    %4272 = vrot.lane.b32.xlu0 %v4221, 32
    %v4273 = vpop.permute.xlu0 %4272
    %4274 = vrot.lane.b32.xlu0 %v4228, 32
    %v4275 = vpop.permute.xlu0 %4274
    %4276 = vrot.lane.b32.xlu0 %v4235, 32
    %v4277 = vpop.permute.xlu0 %4276
    %4278 = vrot.lane.b32.xlu0 %v4242, 32
    %v4279 = vpop.permute.xlu0 %4278
    %4280 = vrot.lane.b32.xlu0 %v4249, 32
    %v4281 = vpop.permute.xlu0 %4280
    %v4298 = vunpack.c.l.b16 %v4042
    %v4299 = vunpack.c.l.b16 %v4043
    %v4300 = vunpack.c.l.b16 %v4044
    %v4301 = vunpack.c.l.b16 %v4045
    %v4302 = vunpack.c.l.b16 %v4046
    %v4303 = vunpack.c.l.b16 %v4047
    %v4304 = vunpack.c.l.b16 %v4048
    %v4305 = vunpack.c.l.b16 %v4049
    %v4306 = vunpack.c.l.b16 %v4050
    %v4307 = vunpack.c.l.b16 %v4051
    %v4308 = vunpack.c.l.b16 %v4052
    %v4309 = vunpack.c.l.b16 %v4053
    %v4310 = vunpack.c.l.b16 %v4054
    %v4311 = vunpack.c.l.b16 %v4055
    %v4312 = vunpack.c.l.b16 %v4056
    %v4313 = vunpack.c.l.b16 %v4057
    %v4314 = vpack.c.b16 %v4091, %v4298
    %v4315 = vpack.c.b16 %v4093, %v4299
    %v4316 = vpack.c.b16 %v4095, %v4300
    %v4317 = vpack.c.b16 %v4097, %v4301
    %v4318 = vpack.c.b16 %v4099, %v4302
    %v4319 = vpack.c.b16 %v4101, %v4303
    %v4320 = vpack.c.b16 %v4103, %v4304
    %v4321 = vpack.c.b16 %v4105, %v4305
    %v4322 = vpack.c.b16 %v4107, %v4306
    %v4323 = vpack.c.b16 %v4109, %v4307
    %v4324 = vpack.c.b16 %v4111, %v4308
    %v4325 = vpack.c.b16 %v4113, %v4309
    %v4326 = vpack.c.b16 %v4115, %v4310
    %v4327 = vpack.c.b16 %v4117, %v4311
    %v4328 = vpack.c.b16 %v4119, %v4312
    %v4329 = vpack.c.b16 %v4121, %v4313
    %v4330 = vrot.slane %v4314, 1
    %v4331 = vrot.slane %v4315, 1
    %v4332 = vrot.slane %v4316, 1
    %v4333 = vrot.slane %v4317, 1
    %v4334 = vrot.slane %v4318, 1
    %v4335 = vrot.slane %v4319, 1
    %v4336 = vrot.slane %v4320, 1
    %v4337 = vrot.slane %v4321, 1
    %v4338 = vrot.slane %v4322, 1
    %v4339 = vrot.slane %v4323, 1
    %v4340 = vrot.slane %v4324, 1
    %v4341 = vrot.slane %v4325, 1
    %v4342 = vrot.slane %v4326, 1
    %v4343 = vrot.slane %v4327, 1
    %v4344 = vrot.slane %v4328, 1
    %v4345 = vrot.slane %v4329, 1
    %4346 = vrot.lane.b32.xlu0 %v4330, 64
    %v4347 = vpop.permute.xlu0 %4346
    %4348 = vrot.lane.b32.xlu0 %v4331, 64
    %v4349 = vpop.permute.xlu0 %4348
    %4350 = vrot.lane.b32.xlu0 %v4332, 64
    %v4351 = vpop.permute.xlu0 %4350
    %4352 = vrot.lane.b32.xlu0 %v4333, 64
    %v4353 = vpop.permute.xlu0 %4352
    %4354 = vrot.lane.b32.xlu0 %v4334, 64
    %v4355 = vpop.permute.xlu0 %4354
    %4356 = vrot.lane.b32.xlu0 %v4335, 64
    %v4357 = vpop.permute.xlu0 %4356
    %4358 = vrot.lane.b32.xlu0 %v4336, 64
    %v4359 = vpop.permute.xlu0 %4358
    %4360 = vrot.lane.b32.xlu0 %v4337, 64
    %v4361 = vpop.permute.xlu0 %4360
    %4362 = vrot.lane.b32.xlu0 %v4338, 64
    %v4363 = vpop.permute.xlu0 %4362
    %4364 = vrot.lane.b32.xlu0 %v4339, 64
    %v4365 = vpop.permute.xlu0 %4364
    %4366 = vrot.lane.b32.xlu0 %v4340, 64
    %v4367 = vpop.permute.xlu0 %4366
    %4368 = vrot.lane.b32.xlu0 %v4341, 64
    %v4369 = vpop.permute.xlu0 %4368
    %4370 = vrot.lane.b32.xlu0 %v4342, 64
    %v4371 = vpop.permute.xlu0 %4370
    %4372 = vrot.lane.b32.xlu0 %v4343, 64
    %v4373 = vpop.permute.xlu0 %4372
    %4374 = vrot.lane.b32.xlu0 %v4344, 64
    %v4375 = vpop.permute.xlu0 %4374
    %4376 = vrot.lane.b32.xlu0 %v4345, 64
    %v4377 = vpop.permute.xlu0 %4376
    %v4380 = vsel %vm942, %v4010, %v4251
    %v4383 = vsel %vm942, %v4011, %v4253
    %v4386 = vsel %vm942, %v4012, %v4255
    %v4389 = vsel %vm942, %v4013, %v4257
    %v4392 = vsel %vm942, %v4014, %v4259
    %v4395 = vsel %vm942, %v4015, %v4261
    %v4398 = vsel %vm942, %v4016, %v4263
    %v4401 = vsel %vm942, %v4017, %v4265
    %v4404 = vsel %vm942, %v4018, %v4267
    %v4407 = vsel %vm942, %v4019, %v4269
    %v4410 = vsel %vm942, %v4020, %v4271
    %v4413 = vsel %vm942, %v4021, %v4273
    %v4416 = vsel %vm942, %v4022, %v4275
    %v4419 = vsel %vm942, %v4023, %v4277
    %v4422 = vsel %vm942, %v4024, %v4279
    %v4425 = vsel %vm942, %v4025, %v4281
    %v4427 = vsel %vm3965, %v4380, %v4347
    %v4429 = vsel %vm3965, %v4383, %v4349
    %v4431 = vsel %vm3965, %v4386, %v4351
    %v4433 = vsel %vm3965, %v4389, %v4353
    %v4435 = vsel %vm3965, %v4392, %v4355
    %v4437 = vsel %vm3965, %v4395, %v4357
    %v4439 = vsel %vm3965, %v4398, %v4359
    %v4441 = vsel %vm3965, %v4401, %v4361
    %v4443 = vsel %vm3965, %v4404, %v4363
    %v4445 = vsel %vm3965, %v4407, %v4365
    %v4447 = vsel %vm3965, %v4410, %v4367
    %v4449 = vsel %vm3965, %v4413, %v4369
    %v4451 = vsel %vm3965, %v4416, %v4371
    %v4453 = vsel %vm3965, %v4419, %v4373
    %v4455 = vsel %vm3965, %v4422, %v4375
    %v4457 = vsel %vm3965, %v4425, %v4377
    %s4458 = scalar_lea.vmem %s3, 48
    %v4459 = vld [vmem:[%s4458] sm:$0xf]
    %v4460 = vld [vmem:[%s4458 + $0x4] sm:$0xf]
    %v4461 = vld [vmem:[%s4458 + $0x8] sm:$0xf]
    %v4462 = vld [vmem:[%s4458 + $0xc] sm:$0xf]
    %v4463 = vld [vmem:[%s4458 + $0x10] sm:$0xf]
    %v4464 = vld [vmem:[%s4458 + $0x14] sm:$0xf]
    %v4465 = vld [vmem:[%s4458 + $0x18] sm:$0xf]
    %v4466 = vld [vmem:[%s4458 + $0x1c] sm:$0xf]
    %v4467 = vld [vmem:[%s4458 + $0x20] sm:$0xf]
    %v4468 = vld [vmem:[%s4458 + $0x24] sm:$0xf]
    %v4469 = vld [vmem:[%s4458 + $0x28] sm:$0xf]
    %v4470 = vld [vmem:[%s4458 + $0x2c] sm:$0xf]
    %v4487 = vunpack.c.l.b16 %v4427
    %v4488 = vunpack.c.l.b16 %v4429
    %v4489 = vunpack.c.l.b16 %v4431
    %v4490 = vunpack.c.l.b16 %v4433
    %v4491 = vunpack.c.l.b16 %v4435
    %v4492 = vunpack.c.l.b16 %v4437
    %v4493 = vunpack.c.l.b16 %v4439
    %v4494 = vunpack.c.l.b16 %v4441
    %v4495 = vunpack.c.l.b16 %v4443
    %v4496 = vunpack.c.l.b16 %v4445
    %v4497 = vunpack.c.l.b16 %v4447
    %v4498 = vunpack.c.l.b16 %v4449
    %v4499 = vunpack.c.l.b16 %v4451
    %v4500 = vunpack.c.l.b16 %v4453
    %v4501 = vunpack.c.l.b16 %v4455
    %v4502 = vunpack.c.l.b16 %v4457
    %v4503 = vpack.c.b16 %v4488, %v4487
    %v4504 = vpack.c.b16 %v4490, %v4489
    %v4505 = vpack.c.b16 %v4492, %v4491
    %v4506 = vpack.c.b16 %v4494, %v4493
    %v4507 = vpack.c.b16 %v4496, %v4495
    %v4508 = vpack.c.b16 %v4498, %v4497
    %v4509 = vpack.c.b16 %v4500, %v4499
    %v4510 = vpack.c.b16 %v4502, %v4501
    %v4523 = vunpack.c.l.b16 %v4459
    %v4524 = vunpack.c.l.b16 %v4460
    %v4525 = vunpack.c.l.b16 %v4461
    %v4526 = vunpack.c.l.b16 %v4462
    %v4527 = vunpack.c.l.b16 %v4463
    %v4528 = vunpack.c.l.b16 %v4464
    %v4529 = vunpack.c.l.b16 %v4465
    %v4530 = vunpack.c.l.b16 %v4466
    %v4531 = vunpack.c.l.b16 %v4467
    %v4532 = vunpack.c.l.b16 %v4468
    %v4533 = vunpack.c.l.b16 %v4469
    %v4534 = vunpack.c.l.b16 %v4470
    %v4535 = vpack.c.b16 %v4524, %v4523
    %v4536 = vpack.c.b16 %v4526, %v4525
    %v4537 = vpack.c.b16 %v4528, %v4527
    %v4538 = vpack.c.b16 %v4530, %v4529
    %v4539 = vpack.c.b16 %v4532, %v4531
    %v4540 = vpack.c.b16 %v4534, %v4533
    %vm4547 = vcmask 785408
    %v4549 = vsel %vm4547, %v4503, 0
    %v4552 = vsel %vm4547, %v4504, 0
    %v4555 = vsel %vm4547, %v4505, 0
    %v4558 = vsel %vm4547, %v4506, 0
    %v4561 = vsel %vm4547, %v4507, 0
    %v4564 = vsel %vm4547, %v4508, 0
    %v4567 = vsel %vm4547, %v4509, 0
    %v4570 = vsel %vm4547, %v4510, 0
    %4572 = vmatprep.subr.bf16.mxu0 0
    %4573 = vmatpush1.bf16.msra.mxu0 %v4535
    %4574 = vmatprep.subr.bf16.mxu0 0
    %4575 = vmatpush1.bf16.msra.mxu0 %v4536
    %4576 = vmatprep.subr.bf16.mxu0 0
    %4577 = vmatpush1.bf16.msra.mxu0 %v4537
    %4578 = vmatprep.subr.bf16.mxu0 0
    %4579 = vmatpush1.bf16.msra.mxu0 %v4538
    %4580 = vmatprep.subr.bf16.mxu0 0
    %4581 = vmatpush1.bf16.msra.mxu0 %v4539
    %4582 = vmatprep.subr.bf16.mxu0 0
    %4583 = vmatpush1.bf16.msra.mxu0 %v4540
    %4584 = vmatprep.subr.bf16.mxu0 0
    %4585 = vmatpush1.bf16.msra.mxu0 0
    %4586 = vmatprep.subr.bf16.mxu0 0
    %4587 = vmatpush1.bf16.msra.mxu0 0
    %4588 = vmatprep.subr.bf16.mxu0 0
    %4589 = vmatpush1.bf16.msra.mxu0 0
    %4590 = vmatprep.subr.bf16.mxu0 0
    %4591 = vmatpush1.bf16.msra.mxu0 0
    %4592 = vmatprep.subr.bf16.mxu0 0
    %4593 = vmatpush1.bf16.msra.mxu0 0
    %4594 = vmatprep.subr.bf16.mxu0 0
    %4595 = vmatpush1.bf16.msra.mxu0 0
    %4596 = vmatprep.subr.bf16.mxu0 0
    %4597 = vmatpush1.bf16.msra.mxu0 0
    %4598 = vmatprep.subr.bf16.mxu0 0
    %4599 = vmatpush1.bf16.msra.mxu0 0
    %4600 = vmatprep.subr.bf16.mxu0 0
    %4601 = vmatpush1.bf16.msra.mxu0 0
    %4602 = vmatprep.subr.bf16.mxu0 0
    %4603 = vmatpush1.bf16.msra.mxu0 0
    %4604 = vmatprep.mubr.bf16.mxu0 0
    %4605 = vmatmul.mubr.bf16.gmra.mrb[0].mxu0 %v4549
    %v4606 = vpop.f32.mrb[0].mxu0
    %v4607 = vadd.f32 0.0, %v4606
    %v4608 = vpop.f32.mrb[0].mxu0
    %v4609 = vpop.f32.mrb[0].mxu0
    %v4610 = vadd.f32 0.0, %v4609
    %v4611 = vpop.f32.mrb[0].mxu0
    %4612 = vmatprep.mubr.bf16.mxu0 0
    %4613 = vmatmul.mubr.bf16.gmra.mrb[0].mxu0 %v4552
    %v4614 = vpop.f32.mrb[0].mxu0
    %v4615 = vadd.f32 0.0, %v4614
    %v4616 = vpop.f32.mrb[0].mxu0
    %v4617 = vpop.f32.mrb[0].mxu0
    %v4618 = vadd.f32 0.0, %v4617
    %v4619 = vpop.f32.mrb[0].mxu0
    %4620 = vmatprep.mubr.bf16.mxu0 0
    %4621 = vmatmul.mubr.bf16.gmra.mrb[0].mxu0 %v4555
    %v4622 = vpop.f32.mrb[0].mxu0
    %v4623 = vadd.f32 0.0, %v4622
    %v4624 = vpop.f32.mrb[0].mxu0
    %v4625 = vpop.f32.mrb[0].mxu0
    %v4626 = vadd.f32 0.0, %v4625
    %v4627 = vpop.f32.mrb[0].mxu0
    %4628 = vmatprep.mubr.bf16.mxu0 0
    %4629 = vmatmul.mubr.bf16.gmra.mrb[0].mxu0 %v4558
    %v4630 = vpop.f32.mrb[0].mxu0
    %v4631 = vadd.f32 0.0, %v4630
    %v4632 = vpop.f32.mrb[0].mxu0
    %v4633 = vpop.f32.mrb[0].mxu0
    %v4634 = vadd.f32 0.0, %v4633
    %v4635 = vpop.f32.mrb[0].mxu0
    %4636 = vmatprep.mubr.bf16.mxu0 0
    %4637 = vmatmul.mubr.bf16.gmra.mrb[0].mxu0 %v4561
    %v4638 = vpop.f32.mrb[0].mxu0
    %v4639 = vadd.f32 0.0, %v4638
    %v4640 = vpop.f32.mrb[0].mxu0
    %v4641 = vpop.f32.mrb[0].mxu0
    %v4642 = vadd.f32 0.0, %v4641
    %v4643 = vpop.f32.mrb[0].mxu0
    %4644 = vmatprep.mubr.bf16.mxu0 0
    %4645 = vmatmul.mubr.bf16.gmra.mrb[0].mxu0 %v4564
    %v4646 = vpop.f32.mrb[0].mxu0
    %v4647 = vadd.f32 0.0, %v4646
    %v4648 = vpop.f32.mrb[0].mxu0
    %v4649 = vpop.f32.mrb[0].mxu0
    %v4650 = vadd.f32 0.0, %v4649
    %v4651 = vpop.f32.mrb[0].mxu0
    %4652 = vmatprep.mubr.bf16.mxu0 0
    %4653 = vmatmul.mubr.bf16.gmra.mrb[0].mxu0 %v4567
    %v4654 = vpop.f32.mrb[0].mxu0
    %v4655 = vadd.f32 0.0, %v4654
    %v4656 = vpop.f32.mrb[0].mxu0
    %v4657 = vpop.f32.mrb[0].mxu0
    %v4658 = vadd.f32 0.0, %v4657
    %v4659 = vpop.f32.mrb[0].mxu0
    %4660 = vmatprep.mubr.bf16.mxu0 0
    %4661 = vmatmul.mubr.bf16.gmra.mrb[0].mxu0 %v4570
    %v4662 = vpop.f32.mrb[0].mxu0
    %v4663 = vadd.f32 0.0, %v4662
    %v4664 = vpop.f32.mrb[0].mxu0
    %v4665 = vpop.f32.mrb[0].mxu0
    %v4666 = vadd.f32 0.0, %v4665
    %v4667 = vpop.f32.mrb[0].mxu0
    %4668 = vdwg.mxu0
    %v4685 = vunpack.c.l.b16 %v3967
    %v4686 = vunpack.c.l.b16 %v3969
    %v4687 = vunpack.c.l.b16 %v3971
    %v4688 = vunpack.c.l.b16 %v3973
    %v4689 = vunpack.c.l.b16 %v3975
    %v4690 = vunpack.c.l.b16 %v3977
    %v4691 = vunpack.c.l.b16 %v3979
    %v4692 = vunpack.c.l.b16 %v3981
    %v4693 = vunpack.c.l.b16 %v3983
    %v4694 = vunpack.c.l.b16 %v3985
    %v4695 = vunpack.c.l.b16 %v3987
    %v4696 = vunpack.c.l.b16 %v3989
    %v4697 = vunpack.c.l.b16 %v3991
    %v4698 = vunpack.c.l.b16 %v3993
    %v4699 = vunpack.c.l.b16 %v3995
    %v4700 = vunpack.c.l.b16 %v3997
    %v4701 = vpack.c.b16 %v4686, %v4685
    %v4702 = vpack.c.b16 %v4688, %v4687
    %v4703 = vpack.c.b16 %v4690, %v4689
    %v4704 = vpack.c.b16 %v4692, %v4691
    %v4705 = vpack.c.b16 %v4694, %v4693
    %v4706 = vpack.c.b16 %v4696, %v4695
    %v4707 = vpack.c.b16 %v4698, %v4697
    %v4708 = vpack.c.b16 %v4700, %v4699
    %v4721 = vunpack.c.l.b16 %v3998
    %v4722 = vunpack.c.l.b16 %v3999
    %v4723 = vunpack.c.l.b16 %v4000
    %v4724 = vunpack.c.l.b16 %v4001
    %v4725 = vunpack.c.l.b16 %v4002
    %v4726 = vunpack.c.l.b16 %v4003
    %v4727 = vunpack.c.l.b16 %v4004
    %v4728 = vunpack.c.l.b16 %v4005
    %v4729 = vunpack.c.l.b16 %v4006
    %v4730 = vunpack.c.l.b16 %v4007
    %v4731 = vunpack.c.l.b16 %v4008
    %v4732 = vunpack.c.l.b16 %v4009
    %v4733 = vpack.c.b16 %v4722, %v4721
    %v4734 = vpack.c.b16 %v4724, %v4723
    %v4735 = vpack.c.b16 %v4726, %v4725
    %v4736 = vpack.c.b16 %v4728, %v4727
    %v4737 = vpack.c.b16 %v4730, %v4729
    %v4738 = vpack.c.b16 %v4732, %v4731
    %v4746 = vsel %vm4547, %v4701, 0
    %v4749 = vsel %vm4547, %v4702, 0
    %v4752 = vsel %vm4547, %v4703, 0
    %v4755 = vsel %vm4547, %v4704, 0
    %v4758 = vsel %vm4547, %v4705, 0
    %v4761 = vsel %vm4547, %v4706, 0
    %v4764 = vsel %vm4547, %v4707, 0
    %v4767 = vsel %vm4547, %v4708, 0
    %4769 = vmatprep.subr.bf16.mxu0 0
    %4770 = vmatpush1.bf16.msra.mxu0 %v4733
    %4771 = vmatprep.subr.bf16.mxu0 0
    %4772 = vmatpush1.bf16.msra.mxu0 %v4734
    %4773 = vmatprep.subr.bf16.mxu0 0
    %4774 = vmatpush1.bf16.msra.mxu0 %v4735
    %4775 = vmatprep.subr.bf16.mxu0 0
    %4776 = vmatpush1.bf16.msra.mxu0 %v4736
    %4777 = vmatprep.subr.bf16.mxu0 0
    %4778 = vmatpush1.bf16.msra.mxu0 %v4737
    %4779 = vmatprep.subr.bf16.mxu0 0
    %4780 = vmatpush1.bf16.msra.mxu0 %v4738
    %4781 = vmatprep.subr.bf16.mxu0 0
    %4782 = vmatpush1.bf16.msra.mxu0 0
    %4783 = vmatprep.subr.bf16.mxu0 0
    %4784 = vmatpush1.bf16.msra.mxu0 0
    %4785 = vmatprep.subr.bf16.mxu0 0
    %4786 = vmatpush1.bf16.msra.mxu0 0
    %4787 = vmatprep.subr.bf16.mxu0 0
    %4788 = vmatpush1.bf16.msra.mxu0 0
    %4789 = vmatprep.subr.bf16.mxu0 0
    %4790 = vmatpush1.bf16.msra.mxu0 0
    %4791 = vmatprep.subr.bf16.mxu0 0
    %4792 = vmatpush1.bf16.msra.mxu0 0
    %4793 = vmatprep.subr.bf16.mxu0 0
    %4794 = vmatpush1.bf16.msra.mxu0 0
    %4795 = vmatprep.subr.bf16.mxu0 0
    %4796 = vmatpush1.bf16.msra.mxu0 0
    %4797 = vmatprep.subr.bf16.mxu0 0
    %4798 = vmatpush1.bf16.msra.mxu0 0
    %4799 = vmatprep.subr.bf16.mxu0 0
    %4800 = vmatpush1.bf16.msra.mxu0 0
    %4801 = vmatprep.mubr.bf16.mxu0 0
    %4802 = vmatmul.mubr.bf16.gmra.mrb[0].mxu0 %v4746
    %v4803 = vpop.f32.mrb[0].mxu0
    %v4804 = vadd.f32 %v4607, %v4803
    %v4805 = vpop.f32.mrb[0].mxu0
    %v4806 = vpop.f32.mrb[0].mxu0
    %v4807 = vadd.f32 %v4610, %v4806
    %v4808 = vpop.f32.mrb[0].mxu0
    %4809 = vmatprep.mubr.bf16.mxu0 0
    %4810 = vmatmul.mubr.bf16.gmra.mrb[0].mxu0 %v4749
    %v4811 = vpop.f32.mrb[0].mxu0
    %v4812 = vadd.f32 %v4615, %v4811
    %v4813 = vpop.f32.mrb[0].mxu0
    %v4814 = vpop.f32.mrb[0].mxu0
    %v4815 = vadd.f32 %v4618, %v4814
    %v4816 = vpop.f32.mrb[0].mxu0
    %4817 = vmatprep.mubr.bf16.mxu0 0
    %4818 = vmatmul.mubr.bf16.gmra.mrb[0].mxu0 %v4752
    %v4819 = vpop.f32.mrb[0].mxu0
    %v4820 = vadd.f32 %v4623, %v4819
    %v4821 = vpop.f32.mrb[0].mxu0
    %v4822 = vpop.f32.mrb[0].mxu0
    %v4823 = vadd.f32 %v4626, %v4822
    %v4824 = vpop.f32.mrb[0].mxu0
    %4825 = vmatprep.mubr.bf16.mxu0 0
    %4826 = vmatmul.mubr.bf16.gmra.mrb[0].mxu0 %v4755
    %v4827 = vpop.f32.mrb[0].mxu0
    %v4828 = vadd.f32 %v4631, %v4827
    %v4829 = vpop.f32.mrb[0].mxu0
    %v4830 = vpop.f32.mrb[0].mxu0
    %v4831 = vadd.f32 %v4634, %v4830
    %v4832 = vpop.f32.mrb[0].mxu0
    %4833 = vmatprep.mubr.bf16.mxu0 0
    %4834 = vmatmul.mubr.bf16.gmra.mrb[0].mxu0 %v4758
    %v4835 = vpop.f32.mrb[0].mxu0
    %v4836 = vadd.f32 %v4639, %v4835
    %v4837 = vpop.f32.mrb[0].mxu0
    %v4838 = vpop.f32.mrb[0].mxu0
    %v4839 = vadd.f32 %v4642, %v4838
    %v4840 = vpop.f32.mrb[0].mxu0
    %4841 = vmatprep.mubr.bf16.mxu0 0
    %4842 = vmatmul.mubr.bf16.gmra.mrb[0].mxu0 %v4761
    %v4843 = vpop.f32.mrb[0].mxu0
    %v4844 = vadd.f32 %v4647, %v4843
    %v4845 = vpop.f32.mrb[0].mxu0
    %v4846 = vpop.f32.mrb[0].mxu0
    %v4847 = vadd.f32 %v4650, %v4846
    %v4848 = vpop.f32.mrb[0].mxu0
    %4849 = vmatprep.mubr.bf16.mxu0 0
    %4850 = vmatmul.mubr.bf16.gmra.mrb[0].mxu0 %v4764
    %v4851 = vpop.f32.mrb[0].mxu0
    %v4852 = vadd.f32 %v4655, %v4851
    %v4853 = vpop.f32.mrb[0].mxu0
    %v4854 = vpop.f32.mrb[0].mxu0
    %v4855 = vadd.f32 %v4658, %v4854
    %v4856 = vpop.f32.mrb[0].mxu0
    %4857 = vmatprep.mubr.bf16.mxu0 0
    %4858 = vmatmul.mubr.bf16.gmra.mrb[0].mxu0 %v4767
    %v4859 = vpop.f32.mrb[0].mxu0
    %v4860 = vadd.f32 %v4663, %v4859
    %v4861 = vpop.f32.mrb[0].mxu0
    %v4862 = vpop.f32.mrb[0].mxu0
    %v4863 = vadd.f32 %v4666, %v4862
    %v4864 = vpop.f32.mrb[0].mxu0
    %4865 = vdwg.mxu0
    %s4866 = scalar_lea.vmem [#allocation2], 16
    %v4867 = vld [vmem:[%s4866] sm:$0xf]
    %v4868 = vld [vmem:[%s4866 + $0x8] sm:$0xf]
    %v4869 = vld [vmem:[%s4866 + $0x10] sm:$0xf]
    %v4870 = vld [vmem:[%s4866 + $0x18] sm:$0xf]
    %v4871 = vld [vmem:[%s4866 + $0x20] sm:$0xf]
    %v4872 = vld [vmem:[%s4866 + $0x28] sm:$0xf]
    %v4873 = vld [vmem:[%s4866 + $0x30] sm:$0xf]
    %v4874 = vld [vmem:[%s4866 + $0x38] sm:$0xf]
    %v4875 = vld [vmem:[%s4866 + $0x50] sm:$0xf]
    %v4876 = vld [vmem:[%s4866 + $0x58] sm:$0xf]
    %v4877 = vld [vmem:[%s4866 + $0x60] sm:$0xf]
    %v4878 = vld [vmem:[%s4866 + $0x68] sm:$0xf]
    %v4879 = vld [vmem:[%s4866 + $0x70] sm:$0xf]
    %v4880 = vld [vmem:[%s4866 + $0x78] sm:$0xf]
    %v4881 = vld [vmem:[%s4866 + $0x80] sm:$0xf]
    %v4882 = vld [vmem:[%s4866 + $0x88] sm:$0xf]
    %v4883 = vld [vmem:[%s4866 + $0x4] sm:$0x1]
    %v4884 = vld [vmem:[%s4866 + $0xc] sm:$0x1]
    %v4885 = vld [vmem:[%s4866 + $0x14] sm:$0x1]
    %v4886 = vld [vmem:[%s4866 + $0x1c] sm:$0x1]
    %v4887 = vld [vmem:[%s4866 + $0x24] sm:$0x1]
    %v4888 = vld [vmem:[%s4866 + $0x2c] sm:$0x1]
    %v4889 = vld [vmem:[%s4866 + $0x34] sm:$0x1]
    %v4890 = vld [vmem:[%s4866 + $0x3c] sm:$0x1]
    %v4891 = vld [vmem:[%s4866 + $0x54] sm:$0x1]
    %v4892 = vld [vmem:[%s4866 + $0x5c] sm:$0x1]
    %v4893 = vld [vmem:[%s4866 + $0x64] sm:$0x1]
    %v4894 = vld [vmem:[%s4866 + $0x6c] sm:$0x1]
    %v4895 = vld [vmem:[%s4866 + $0x74] sm:$0x1]
    %v4896 = vld [vmem:[%s4866 + $0x7c] sm:$0x1]
    %v4897 = vld [vmem:[%s4866 + $0x84] sm:$0x1]
    %v4898 = vld [vmem:[%s4866 + $0x8c] sm:$0x1]
    %v4899 = vld [vmem:[%s4866] sm:$0xe]
    %v4900 = vld [vmem:[%s4866 + $0x8] sm:$0xe]
    %v4901 = vld [vmem:[%s4866 + $0x10] sm:$0xe]
    %v4902 = vld [vmem:[%s4866 + $0x18] sm:$0xe]
    %v4903 = vld [vmem:[%s4866 + $0x20] sm:$0xe]
    %v4904 = vld [vmem:[%s4866 + $0x28] sm:$0xe]
    %v4905 = vld [vmem:[%s4866 + $0x30] sm:$0xe]
    %v4906 = vld [vmem:[%s4866 + $0x38] sm:$0xe]
    %v4907 = vld [vmem:[%s4866 + $0x50] sm:$0xe]
    %v4908 = vld [vmem:[%s4866 + $0x58] sm:$0xe]
    %v4909 = vld [vmem:[%s4866 + $0x60] sm:$0xe]
    %v4910 = vld [vmem:[%s4866 + $0x68] sm:$0xe]
    %v4911 = vld [vmem:[%s4866 + $0x70] sm:$0xe]
    %v4912 = vld [vmem:[%s4866 + $0x78] sm:$0xe]
    %v4913 = vld [vmem:[%s4866 + $0x80] sm:$0xe]
    %v4914 = vld [vmem:[%s4866 + $0x88] sm:$0xe]
    %v4947 = vunpack.c.l.b16 %v4867
    %v4948 = vunpack.c.l.b16 %v4883
    %v4949 = vunpack.c.l.b16 %v4868
    %v4950 = vunpack.c.l.b16 %v4884
    %v4951 = vunpack.c.l.b16 %v4869
    %v4952 = vunpack.c.l.b16 %v4885
    %v4953 = vunpack.c.l.b16 %v4870
    %v4954 = vunpack.c.l.b16 %v4886
    %v4955 = vunpack.c.l.b16 %v4871
    %v4956 = vunpack.c.l.b16 %v4887
    %v4957 = vunpack.c.l.b16 %v4872
    %v4958 = vunpack.c.l.b16 %v4888
    %v4959 = vunpack.c.l.b16 %v4873
    %v4960 = vunpack.c.l.b16 %v4889
    %v4961 = vunpack.c.l.b16 %v4874
    %v4962 = vunpack.c.l.b16 %v4890
    %v4963 = vunpack.c.l.b16 %v4875
    %v4964 = vunpack.c.l.b16 %v4891
    %v4965 = vunpack.c.l.b16 %v4876
    %v4966 = vunpack.c.l.b16 %v4892
    %v4967 = vunpack.c.l.b16 %v4877
    %v4968 = vunpack.c.l.b16 %v4893
    %v4969 = vunpack.c.l.b16 %v4878
    %v4970 = vunpack.c.l.b16 %v4894
    %v4971 = vunpack.c.l.b16 %v4879
    %v4972 = vunpack.c.l.b16 %v4895
    %v4973 = vunpack.c.l.b16 %v4880
    %v4974 = vunpack.c.l.b16 %v4896
    %v4975 = vunpack.c.l.b16 %v4881
    %v4976 = vunpack.c.l.b16 %v4897
    %v4977 = vunpack.c.l.b16 %v4882
    %v4978 = vunpack.c.l.b16 %v4898
    %v4979 = vpack.c.b16 %v4948, %v4947
    %v4980 = vpack.c.b16 %v4950, %v4949
    %v4981 = vpack.c.b16 %v4952, %v4951
    %v4982 = vpack.c.b16 %v4954, %v4953
    %v4983 = vpack.c.b16 %v4956, %v4955
    %v4984 = vpack.c.b16 %v4958, %v4957
    %v4985 = vpack.c.b16 %v4960, %v4959
    %v4986 = vpack.c.b16 %v4962, %v4961
    %v4987 = vpack.c.b16 %v4964, %v4963
    %v4988 = vpack.c.b16 %v4966, %v4965
    %v4989 = vpack.c.b16 %v4968, %v4967
    %v4990 = vpack.c.b16 %v4970, %v4969
    %v4991 = vpack.c.b16 %v4972, %v4971
    %v4992 = vpack.c.b16 %v4974, %v4973
    %v4993 = vpack.c.b16 %v4976, %v4975
    %v4994 = vpack.c.b16 %v4978, %v4977
    %v4996 = vshrl.u32 %v4979, 16
    %v4998 = vshll.u32 %v4979, 16
    %v5000 = vrot.slane %v4998, 1
    %v5001 = vor.u32 %v4996, %v5000
    %v5003 = vshrl.u32 %v4980, 16
    %v5005 = vshll.u32 %v4980, 16
    %v5007 = vrot.slane %v5005, 1
    %v5008 = vor.u32 %v5003, %v5007
    %v5010 = vshrl.u32 %v4981, 16
    %v5012 = vshll.u32 %v4981, 16
    %v5014 = vrot.slane %v5012, 1
    %v5015 = vor.u32 %v5010, %v5014
    %v5017 = vshrl.u32 %v4982, 16
    %v5019 = vshll.u32 %v4982, 16
    %v5021 = vrot.slane %v5019, 1
    %v5022 = vor.u32 %v5017, %v5021
    %v5024 = vshrl.u32 %v4983, 16
    %v5026 = vshll.u32 %v4983, 16
    %v5028 = vrot.slane %v5026, 1
    %v5029 = vor.u32 %v5024, %v5028
    %v5031 = vshrl.u32 %v4984, 16
    %v5033 = vshll.u32 %v4984, 16
    %v5035 = vrot.slane %v5033, 1
    %v5036 = vor.u32 %v5031, %v5035
    %v5038 = vshrl.u32 %v4985, 16
    %v5040 = vshll.u32 %v4985, 16
    %v5042 = vrot.slane %v5040, 1
    %v5043 = vor.u32 %v5038, %v5042
    %v5045 = vshrl.u32 %v4986, 16
    %v5047 = vshll.u32 %v4986, 16
    %v5049 = vrot.slane %v5047, 1
    %v5050 = vor.u32 %v5045, %v5049
    %v5052 = vshrl.u32 %v4987, 16
    %v5054 = vshll.u32 %v4987, 16
    %v5056 = vrot.slane %v5054, 1
    %v5057 = vor.u32 %v5052, %v5056
    %v5059 = vshrl.u32 %v4988, 16
    %v5061 = vshll.u32 %v4988, 16
    %v5063 = vrot.slane %v5061, 1
    %v5064 = vor.u32 %v5059, %v5063
    %v5066 = vshrl.u32 %v4989, 16
    %v5068 = vshll.u32 %v4989, 16
    %v5070 = vrot.slane %v5068, 1
    %v5071 = vor.u32 %v5066, %v5070
    %v5073 = vshrl.u32 %v4990, 16
    %v5075 = vshll.u32 %v4990, 16
    %v5077 = vrot.slane %v5075, 1
    %v5078 = vor.u32 %v5073, %v5077
    %v5080 = vshrl.u32 %v4991, 16
    %v5082 = vshll.u32 %v4991, 16
    %v5084 = vrot.slane %v5082, 1
    %v5085 = vor.u32 %v5080, %v5084
    %v5087 = vshrl.u32 %v4992, 16
    %v5089 = vshll.u32 %v4992, 16
    %v5091 = vrot.slane %v5089, 1
    %v5092 = vor.u32 %v5087, %v5091
    %v5094 = vshrl.u32 %v4993, 16
    %v5096 = vshll.u32 %v4993, 16
    %v5098 = vrot.slane %v5096, 1
    %v5099 = vor.u32 %v5094, %v5098
    %v5101 = vshrl.u32 %v4994, 16
    %v5103 = vshll.u32 %v4994, 16
    %v5105 = vrot.slane %v5103, 1
    %v5106 = vor.u32 %v5101, %v5105
    %5107 = vrot.lane.b32.xlu0 %v5001, 32
    %v5108 = vpop.permute.xlu0 %5107
    %5109 = vrot.lane.b32.xlu0 %v5008, 32
    %v5110 = vpop.permute.xlu0 %5109
    %5111 = vrot.lane.b32.xlu0 %v5015, 32
    %v5112 = vpop.permute.xlu0 %5111
    %5113 = vrot.lane.b32.xlu0 %v5022, 32
    %v5114 = vpop.permute.xlu0 %5113
    %5115 = vrot.lane.b32.xlu0 %v5029, 32
    %v5116 = vpop.permute.xlu0 %5115
    %5117 = vrot.lane.b32.xlu0 %v5036, 32
    %v5118 = vpop.permute.xlu0 %5117
    %5119 = vrot.lane.b32.xlu0 %v5043, 32
    %v5120 = vpop.permute.xlu0 %5119
    %5121 = vrot.lane.b32.xlu0 %v5050, 32
    %v5122 = vpop.permute.xlu0 %5121
    %5123 = vrot.lane.b32.xlu0 %v5057, 32
    %v5124 = vpop.permute.xlu0 %5123
    %5125 = vrot.lane.b32.xlu0 %v5064, 32
    %v5126 = vpop.permute.xlu0 %5125
    %5127 = vrot.lane.b32.xlu0 %v5071, 32
    %v5128 = vpop.permute.xlu0 %5127
    %5129 = vrot.lane.b32.xlu0 %v5078, 32
    %v5130 = vpop.permute.xlu0 %5129
    %5131 = vrot.lane.b32.xlu0 %v5085, 32
    %v5132 = vpop.permute.xlu0 %5131
    %5133 = vrot.lane.b32.xlu0 %v5092, 32
    %v5134 = vpop.permute.xlu0 %5133
    %5135 = vrot.lane.b32.xlu0 %v5099, 32
    %v5136 = vpop.permute.xlu0 %5135
    %5137 = vrot.lane.b32.xlu0 %v5106, 32
    %v5138 = vpop.permute.xlu0 %5137
    %v5155 = vunpack.c.l.b16 %v4899
    %v5156 = vunpack.c.l.b16 %v4900
    %v5157 = vunpack.c.l.b16 %v4901
    %v5158 = vunpack.c.l.b16 %v4902
    %v5159 = vunpack.c.l.b16 %v4903
    %v5160 = vunpack.c.l.b16 %v4904
    %v5161 = vunpack.c.l.b16 %v4905
    %v5162 = vunpack.c.l.b16 %v4906
    %v5163 = vunpack.c.l.b16 %v4907
    %v5164 = vunpack.c.l.b16 %v4908
    %v5165 = vunpack.c.l.b16 %v4909
    %v5166 = vunpack.c.l.b16 %v4910
    %v5167 = vunpack.c.l.b16 %v4911
    %v5168 = vunpack.c.l.b16 %v4912
    %v5169 = vunpack.c.l.b16 %v4913
    %v5170 = vunpack.c.l.b16 %v4914
    %v5171 = vpack.c.b16 %v4948, %v5155
    %v5172 = vpack.c.b16 %v4950, %v5156
    %v5173 = vpack.c.b16 %v4952, %v5157
    %v5174 = vpack.c.b16 %v4954, %v5158
    %v5175 = vpack.c.b16 %v4956, %v5159
    %v5176 = vpack.c.b16 %v4958, %v5160
    %v5177 = vpack.c.b16 %v4960, %v5161
    %v5178 = vpack.c.b16 %v4962, %v5162
    %v5179 = vpack.c.b16 %v4964, %v5163
    %v5180 = vpack.c.b16 %v4966, %v5164
    %v5181 = vpack.c.b16 %v4968, %v5165
    %v5182 = vpack.c.b16 %v4970, %v5166
    %v5183 = vpack.c.b16 %v4972, %v5167
    %v5184 = vpack.c.b16 %v4974, %v5168
    %v5185 = vpack.c.b16 %v4976, %v5169
    %v5186 = vpack.c.b16 %v4978, %v5170
    %v5187 = vrot.slane %v5171, 1
    %v5188 = vrot.slane %v5172, 1
    %v5189 = vrot.slane %v5173, 1
    %v5190 = vrot.slane %v5174, 1
    %v5191 = vrot.slane %v5175, 1
    %v5192 = vrot.slane %v5176, 1
    %v5193 = vrot.slane %v5177, 1
    %v5194 = vrot.slane %v5178, 1
    %v5195 = vrot.slane %v5179, 1
    %v5196 = vrot.slane %v5180, 1
    %v5197 = vrot.slane %v5181, 1
    %v5198 = vrot.slane %v5182, 1
    %v5199 = vrot.slane %v5183, 1
    %v5200 = vrot.slane %v5184, 1
    %v5201 = vrot.slane %v5185, 1
    %v5202 = vrot.slane %v5186, 1
    %5203 = vrot.lane.b32.xlu0 %v5187, 64
    %v5204 = vpop.permute.xlu0 %5203
    %5205 = vrot.lane.b32.xlu0 %v5188, 64
    %v5206 = vpop.permute.xlu0 %5205
    %5207 = vrot.lane.b32.xlu0 %v5189, 64
    %v5208 = vpop.permute.xlu0 %5207
    %5209 = vrot.lane.b32.xlu0 %v5190, 64
    %v5210 = vpop.permute.xlu0 %5209
    %5211 = vrot.lane.b32.xlu0 %v5191, 64
    %v5212 = vpop.permute.xlu0 %5211
    %5213 = vrot.lane.b32.xlu0 %v5192, 64
    %v5214 = vpop.permute.xlu0 %5213
    %5215 = vrot.lane.b32.xlu0 %v5193, 64
    %v5216 = vpop.permute.xlu0 %5215
    %5217 = vrot.lane.b32.xlu0 %v5194, 64
    %v5218 = vpop.permute.xlu0 %5217
    %5219 = vrot.lane.b32.xlu0 %v5195, 64
    %v5220 = vpop.permute.xlu0 %5219
    %5221 = vrot.lane.b32.xlu0 %v5196, 64
    %v5222 = vpop.permute.xlu0 %5221
    %5223 = vrot.lane.b32.xlu0 %v5197, 64
    %v5224 = vpop.permute.xlu0 %5223
    %5225 = vrot.lane.b32.xlu0 %v5198, 64
    %v5226 = vpop.permute.xlu0 %5225
    %5227 = vrot.lane.b32.xlu0 %v5199, 64
    %v5228 = vpop.permute.xlu0 %5227
    %5229 = vrot.lane.b32.xlu0 %v5200, 64
    %v5230 = vpop.permute.xlu0 %5229
    %5231 = vrot.lane.b32.xlu0 %v5201, 64
    %v5232 = vpop.permute.xlu0 %5231
    %5233 = vrot.lane.b32.xlu0 %v5202, 64
    %v5234 = vpop.permute.xlu0 %5233
    %v5237 = vsel %vm942, %v4867, %v5108
    %v5240 = vsel %vm942, %v4868, %v5110
    %v5243 = vsel %vm942, %v4869, %v5112
    %v5246 = vsel %vm942, %v4870, %v5114
    %v5249 = vsel %vm942, %v4871, %v5116
    %v5252 = vsel %vm942, %v4872, %v5118
    %v5255 = vsel %vm942, %v4873, %v5120
    %v5258 = vsel %vm942, %v4874, %v5122
    %v5261 = vsel %vm942, %v4875, %v5124
    %v5264 = vsel %vm942, %v4876, %v5126
    %v5267 = vsel %vm942, %v4877, %v5128
    %v5270 = vsel %vm942, %v4878, %v5130
    %v5273 = vsel %vm942, %v4879, %v5132
    %v5276 = vsel %vm942, %v4880, %v5134
    %v5279 = vsel %vm942, %v4881, %v5136
    %v5282 = vsel %vm942, %v4882, %v5138
    %v5284 = vsel %vm3965, %v5237, %v5204
    %v5286 = vsel %vm3965, %v5240, %v5206
    %v5288 = vsel %vm3965, %v5243, %v5208
    %v5290 = vsel %vm3965, %v5246, %v5210
    %v5292 = vsel %vm3965, %v5249, %v5212
    %v5294 = vsel %vm3965, %v5252, %v5214
    %v5296 = vsel %vm3965, %v5255, %v5216
    %v5298 = vsel %vm3965, %v5258, %v5218
    %v5300 = vsel %vm3965, %v5261, %v5220
    %v5302 = vsel %vm3965, %v5264, %v5222
    %v5304 = vsel %vm3965, %v5267, %v5224
    %v5306 = vsel %vm3965, %v5270, %v5226
    %v5308 = vsel %vm3965, %v5273, %v5228
    %v5310 = vsel %vm3965, %v5276, %v5230
    %v5312 = vsel %vm3965, %v5279, %v5232
    %v5314 = vsel %vm3965, %v5282, %v5234
    %s5315 = scalar_lea.vmem %s3, 96
    %v5316 = vld [vmem:[%s5315] sm:$0xf]
    %v5317 = vld [vmem:[%s5315 + $0x4] sm:$0xf]
    %v5318 = vld [vmem:[%s5315 + $0x8] sm:$0xf]
    %v5319 = vld [vmem:[%s5315 + $0xc] sm:$0xf]
    %v5320 = vld [vmem:[%s5315 + $0x10] sm:$0xf]
    %v5321 = vld [vmem:[%s5315 + $0x14] sm:$0xf]
    %v5322 = vld [vmem:[%s5315 + $0x18] sm:$0xf]
    %v5323 = vld [vmem:[%s5315 + $0x1c] sm:$0xf]
    %v5324 = vld [vmem:[%s5315 + $0x20] sm:$0xf]
    %v5325 = vld [vmem:[%s5315 + $0x24] sm:$0xf]
    %v5326 = vld [vmem:[%s5315 + $0x28] sm:$0xf]
    %v5327 = vld [vmem:[%s5315 + $0x2c] sm:$0xf]
    %v5344 = vunpack.c.l.b16 %v5284
    %v5345 = vunpack.c.l.b16 %v5286
    %v5346 = vunpack.c.l.b16 %v5288
    %v5347 = vunpack.c.l.b16 %v5290
    %v5348 = vunpack.c.l.b16 %v5292
    %v5349 = vunpack.c.l.b16 %v5294
    %v5350 = vunpack.c.l.b16 %v5296
    %v5351 = vunpack.c.l.b16 %v5298
    %v5352 = vunpack.c.l.b16 %v5300
    %v5353 = vunpack.c.l.b16 %v5302
    %v5354 = vunpack.c.l.b16 %v5304
    %v5355 = vunpack.c.l.b16 %v5306
    %v5356 = vunpack.c.l.b16 %v5308
    %v5357 = vunpack.c.l.b16 %v5310
    %v5358 = vunpack.c.l.b16 %v5312
    %v5359 = vunpack.c.l.b16 %v5314
    %v5360 = vpack.c.b16 %v5345, %v5344
    %v5361 = vpack.c.b16 %v5347, %v5346
    %v5362 = vpack.c.b16 %v5349, %v5348
    %v5363 = vpack.c.b16 %v5351, %v5350
    %v5364 = vpack.c.b16 %v5353, %v5352
    %v5365 = vpack.c.b16 %v5355, %v5354
    %v5366 = vpack.c.b16 %v5357, %v5356
    %v5367 = vpack.c.b16 %v5359, %v5358
    %v5380 = vunpack.c.l.b16 %v5316
    %v5381 = vunpack.c.l.b16 %v5317
    %v5382 = vunpack.c.l.b16 %v5318
    %v5383 = vunpack.c.l.b16 %v5319
    %v5384 = vunpack.c.l.b16 %v5320
    %v5385 = vunpack.c.l.b16 %v5321
    %v5386 = vunpack.c.l.b16 %v5322
    %v5387 = vunpack.c.l.b16 %v5323
    %v5388 = vunpack.c.l.b16 %v5324
    %v5389 = vunpack.c.l.b16 %v5325
    %v5390 = vunpack.c.l.b16 %v5326
    %v5391 = vunpack.c.l.b16 %v5327
    %v5392 = vpack.c.b16 %v5381, %v5380
    %v5393 = vpack.c.b16 %v5383, %v5382
    %v5394 = vpack.c.b16 %v5385, %v5384
    %v5395 = vpack.c.b16 %v5387, %v5386
    %v5396 = vpack.c.b16 %v5389, %v5388
    %v5397 = vpack.c.b16 %v5391, %v5390
    %v5405 = vsel %vm4547, %v5360, 0
    %v5408 = vsel %vm4547, %v5361, 0
    %v5411 = vsel %vm4547, %v5362, 0
    %v5414 = vsel %vm4547, %v5363, 0
    %v5417 = vsel %vm4547, %v5364, 0
    %v5420 = vsel %vm4547, %v5365, 0
    %v5423 = vsel %vm4547, %v5366, 0
    %v5426 = vsel %vm4547, %v5367, 0
    %5428 = vmatprep.subr.bf16.mxu0 0
    %5429 = vmatpush1.bf16.msra.mxu0 %v5392
    %5430 = vmatprep.subr.bf16.mxu0 0
    %5431 = vmatpush1.bf16.msra.mxu0 %v5393
    %5432 = vmatprep.subr.bf16.mxu0 0
    %5433 = vmatpush1.bf16.msra.mxu0 %v5394
    %5434 = vmatprep.subr.bf16.mxu0 0
    %5435 = vmatpush1.bf16.msra.mxu0 %v5395
    %5436 = vmatprep.subr.bf16.mxu0 0
    %5437 = vmatpush1.bf16.msra.mxu0 %v5396
    %5438 = vmatprep.subr.bf16.mxu0 0
    %5439 = vmatpush1.bf16.msra.mxu0 %v5397
    %5440 = vmatprep.subr.bf16.mxu0 0
    %5441 = vmatpush1.bf16.msra.mxu0 0
    %5442 = vmatprep.subr.bf16.mxu0 0
    %5443 = vmatpush1.bf16.msra.mxu0 0
    %5444 = vmatprep.subr.bf16.mxu0 0
    %5445 = vmatpush1.bf16.msra.mxu0 0
    %5446 = vmatprep.subr.bf16.mxu0 0
    %5447 = vmatpush1.bf16.msra.mxu0 0
    %5448 = vmatprep.subr.bf16.mxu0 0
    %5449 = vmatpush1.bf16.msra.mxu0 0
    %5450 = vmatprep.subr.bf16.mxu0 0
    %5451 = vmatpush1.bf16.msra.mxu0 0
    %5452 = vmatprep.subr.bf16.mxu0 0
    %5453 = vmatpush1.bf16.msra.mxu0 0
    %5454 = vmatprep.subr.bf16.mxu0 0
    %5455 = vmatpush1.bf16.msra.mxu0 0
    %5456 = vmatprep.subr.bf16.mxu0 0
    %5457 = vmatpush1.bf16.msra.mxu0 0
    %5458 = vmatprep.subr.bf16.mxu0 0
    %5459 = vmatpush1.bf16.msra.mxu0 0
    %5460 = vmatprep.mubr.bf16.mxu0 0
    %5461 = vmatmul.mubr.bf16.gmra.mrb[0].mxu0 %v5405
    %v5462 = vpop.f32.mrb[0].mxu0
    %v5463 = vadd.f32 0.0, %v5462
    %v5464 = vpop.f32.mrb[0].mxu0
    %v5465 = vpop.f32.mrb[0].mxu0
    %v5466 = vadd.f32 0.0, %v5465
    %v5467 = vpop.f32.mrb[0].mxu0
    %5468 = vmatprep.mubr.bf16.mxu0 0
    %5469 = vmatmul.mubr.bf16.gmra.mrb[0].mxu0 %v5408
    %v5470 = vpop.f32.mrb[0].mxu0
    %v5471 = vadd.f32 0.0, %v5470
    %v5472 = vpop.f32.mrb[0].mxu0
    %v5473 = vpop.f32.mrb[0].mxu0
    %v5474 = vadd.f32 0.0, %v5473
    %v5475 = vpop.f32.mrb[0].mxu0
    %5476 = vmatprep.mubr.bf16.mxu0 0
    %5477 = vmatmul.mubr.bf16.gmra.mrb[0].mxu0 %v5411
    %v5478 = vpop.f32.mrb[0].mxu0
    %v5479 = vadd.f32 0.0, %v5478
    %v5480 = vpop.f32.mrb[0].mxu0
    %v5481 = vpop.f32.mrb[0].mxu0
    %v5482 = vadd.f32 0.0, %v5481
    %v5483 = vpop.f32.mrb[0].mxu0
    %5484 = vmatprep.mubr.bf16.mxu0 0
    %5485 = vmatmul.mubr.bf16.gmra.mrb[0].mxu0 %v5414
    %v5486 = vpop.f32.mrb[0].mxu0
    %v5487 = vadd.f32 0.0, %v5486
    %v5488 = vpop.f32.mrb[0].mxu0
    %v5489 = vpop.f32.mrb[0].mxu0
    %v5490 = vadd.f32 0.0, %v5489
    %v5491 = vpop.f32.mrb[0].mxu0
    %5492 = vmatprep.mubr.bf16.mxu0 0
    %5493 = vmatmul.mubr.bf16.gmra.mrb[0].mxu0 %v5417
    %v5494 = vpop.f32.mrb[0].mxu0
    %v5495 = vadd.f32 0.0, %v5494
    %v5496 = vpop.f32.mrb[0].mxu0
    %v5497 = vpop.f32.mrb[0].mxu0
    %v5498 = vadd.f32 0.0, %v5497
    %v5499 = vpop.f32.mrb[0].mxu0
    %5500 = vmatprep.mubr.bf16.mxu0 0
    %5501 = vmatmul.mubr.bf16.gmra.mrb[0].mxu0 %v5420
    %v5502 = vpop.f32.mrb[0].mxu0
    %v5503 = vadd.f32 0.0, %v5502
    %v5504 = vpop.f32.mrb[0].mxu0
    %v5505 = vpop.f32.mrb[0].mxu0
    %v5506 = vadd.f32 0.0, %v5505
    %v5507 = vpop.f32.mrb[0].mxu0
    %5508 = vmatprep.mubr.bf16.mxu0 0
    %5509 = vmatmul.mubr.bf16.gmra.mrb[0].mxu0 %v5423
    %v5510 = vpop.f32.mrb[0].mxu0
    %v5511 = vadd.f32 0.0, %v5510
    %v5512 = vpop.f32.mrb[0].mxu0
    %v5513 = vpop.f32.mrb[0].mxu0
    %v5514 = vadd.f32 0.0, %v5513
    %v5515 = vpop.f32.mrb[0].mxu0
    %5516 = vmatprep.mubr.bf16.mxu0 0
    %5517 = vmatmul.mubr.bf16.gmra.mrb[0].mxu0 %v5426
    %v5518 = vpop.f32.mrb[0].mxu0
    %v5519 = vadd.f32 0.0, %v5518
    %v5520 = vpop.f32.mrb[0].mxu0
    %v5521 = vpop.f32.mrb[0].mxu0
    %v5522 = vadd.f32 0.0, %v5521
    %v5523 = vpop.f32.mrb[0].mxu0
    %5524 = vdwg.mxu0
    %v5525 = vadd.f32 %v4804, %v5463
    %v5526 = vadd.f32 %v4807, %v5466
    %v5527 = vadd.f32 %v4812, %v5471
    %v5528 = vadd.f32 %v4815, %v5474
    %v5529 = vadd.f32 %v4820, %v5479
    %v5530 = vadd.f32 %v4823, %v5482
    %v5531 = vadd.f32 %v4828, %v5487
    %v5532 = vadd.f32 %v4831, %v5490
    %v5533 = vadd.f32 %v4836, %v5495
    %v5534 = vadd.f32 %v4839, %v5498
    %v5535 = vadd.f32 %v4844, %v5503
    %v5536 = vadd.f32 %v4847, %v5506
    %v5537 = vadd.f32 %v4852, %v5511
    %v5538 = vadd.f32 %v4855, %v5514
    %v5539 = vadd.f32 %v4860, %v5519
    %v5540 = vadd.f32 %v4863, %v5522
    %v5541 = vld [vmem:[%s4] sm:$0x1]
    %v5542 = vlaneseq
    %v5543 = vshrl.u32 %v5542, 7
    %v5544 = vsub.s32 0, %v5543
    %v5545 = vrot.slane %v5541, %v5544
    %v5546 = vadd.f32 %v5525, %v5545
    %v5547 = vadd.f32 %v5526, %v5545
    %v5548 = vadd.f32 %v5527, %v5545
    %v5549 = vadd.f32 %v5528, %v5545
    %v5550 = vadd.f32 %v5529, %v5545
    %v5551 = vadd.f32 %v5530, %v5545
    %v5552 = vadd.f32 %v5531, %v5545
    %v5553 = vadd.f32 %v5532, %v5545
    %v5554 = vadd.f32 %v5533, %v5545
    %v5555 = vadd.f32 %v5534, %v5545
    %v5556 = vadd.f32 %v5535, %v5545
    %v5557 = vadd.f32 %v5536, %v5545
    %v5558 = vadd.f32 %v5537, %v5545
    %v5559 = vadd.f32 %v5538, %v5545
    %v5560 = vadd.f32 %v5539, %v5545
    %v5561 = vadd.f32 %v5540, %v5545
    %v5562 = vmax.f32 %v5546, 0.0
    %v5563 = vmax.f32 %v5547, 0.0
    %v5564 = vmax.f32 %v5548, 0.0
    %v5565 = vmax.f32 %v5549, 0.0
    %v5566 = vmax.f32 %v5550, 0.0
    %v5567 = vmax.f32 %v5551, 0.0
    %v5568 = vmax.f32 %v5552, 0.0
    %v5569 = vmax.f32 %v5553, 0.0
    %v5570 = vmax.f32 %v5554, 0.0
    %v5571 = vmax.f32 %v5555, 0.0
    %v5572 = vmax.f32 %v5556, 0.0
    %v5573 = vmax.f32 %v5557, 0.0
    %v5574 = vmax.f32 %v5558, 0.0
    %v5575 = vmax.f32 %v5559, 0.0
    %v5576 = vmax.f32 %v5560, 0.0
    %v5577 = vmax.f32 %v5561, 0.0
    %v5578 = vld [vmem:[%s4 + $0x1] sm:$0x1]
    %v5579 = vlaneseq
    %v5580 = vshrl.u32 %v5579, 7
    %v5581 = vsub.s32 0, %v5580
    %v5582 = vrot.slane %v5578, %v5581
    %v5583 = vmul.f32 %v5562, %v5582
    %v5584 = vmul.f32 %v5563, %v5582
    %v5585 = vmul.f32 %v5564, %v5582
    %v5586 = vmul.f32 %v5565, %v5582
    %v5587 = vmul.f32 %v5566, %v5582
    %v5588 = vmul.f32 %v5567, %v5582
    %v5589 = vmul.f32 %v5568, %v5582
    %v5590 = vmul.f32 %v5569, %v5582
    %v5591 = vmul.f32 %v5570, %v5582
    %v5592 = vmul.f32 %v5571, %v5582
    %v5593 = vmul.f32 %v5572, %v5582
    %v5594 = vmul.f32 %v5573, %v5582
    %v5595 = vmul.f32 %v5574, %v5582
    %v5596 = vmul.f32 %v5575, %v5582
    %v5597 = vmul.f32 %v5576, %v5582
    %v5598 = vmul.f32 %v5577, %v5582
    %v5599 = vld [vmem:[%s4 + $0x2] sm:$0x1]
    %v5600 = vlaneseq
    %v5601 = vshrl.u32 %v5600, 7
    %v5602 = vsub.s32 0, %v5601
    %v5603 = vrot.slane %v5599, %v5602
    %v5604 = vadd.f32 %v5583, %v5603
    %v5605 = vadd.f32 %v5584, %v5603
    %v5606 = vadd.f32 %v5585, %v5603
    %v5607 = vadd.f32 %v5586, %v5603
    %v5608 = vadd.f32 %v5587, %v5603
    %v5609 = vadd.f32 %v5588, %v5603
    %v5610 = vadd.f32 %v5589, %v5603
    %v5611 = vadd.f32 %v5590, %v5603
    %v5612 = vadd.f32 %v5591, %v5603
    %v5613 = vadd.f32 %v5592, %v5603
    %v5614 = vadd.f32 %v5593, %v5603
    %v5615 = vadd.f32 %v5594, %v5603
    %v5616 = vadd.f32 %v5595, %v5603
    %v5617 = vadd.f32 %v5596, %v5603
    %v5618 = vadd.f32 %v5597, %v5603
    %v5619 = vadd.f32 %v5598, %v5603
    %v5620 = vsel %vm3965, %v5604, -inf
    %v5621 = vsel %vm3965, %v5605, -inf
    %v5622 = vmax.f32 %v5620, %v5621
    %v5623 = vsel %vm3965, %v5606, -inf
    %v5624 = vsel %vm3965, %v5607, -inf
    %v5625 = vmax.f32 %v5623, %v5624
    %v5626 = vsel %vm3965, %v5608, -inf
    %v5627 = vsel %vm3965, %v5609, -inf
    %v5628 = vmax.f32 %v5626, %v5627
    %v5629 = vsel %vm3965, %v5610, -inf
    %v5630 = vsel %vm3965, %v5611, -inf
    %v5631 = vmax.f32 %v5629, %v5630
    %v5632 = vsel %vm3965, %v5612, -inf
    %v5633 = vsel %vm3965, %v5613, -inf
    %v5634 = vmax.f32 %v5632, %v5633
    %v5635 = vsel %vm3965, %v5614, -inf
    %v5636 = vsel %vm3965, %v5615, -inf
    %v5637 = vmax.f32 %v5635, %v5636
    %v5638 = vsel %vm3965, %v5616, -inf
    %v5639 = vsel %vm3965, %v5617, -inf
    %v5640 = vmax.f32 %v5638, %v5639
    %v5641 = vsel %vm3965, %v5618, -inf
    %v5642 = vsel %vm3965, %v5619, -inf
    %v5643 = vmax.f32 %v5641, %v5642
    %v5652 = vcombine.high %v5622, %v5622
    %v5654 = vunpack.c.l.s4 1983009808
    %v5655 = vunpack.c.0.s8 %v5654
    %v5656 = vlaneseq
    %v5657 = vshrl.u32 %v5656, 7
    %v5658 = vsub.s32 %v5655, %v5657
    %v5659 = vrot.slane %v5622, %v5658
    %v5661 = vunpack.c.l.s4 1983009808
    %v5662 = vunpack.c.0.s8 %v5661
    %v5663 = vlaneseq
    %v5664 = vshrl.u32 %v5663, 7
    %v5665 = vsub.s32 %v5662, %v5664
    %v5666 = vrot.slane %v5652, %v5665
    %v5667 = vcombine.high %v5659, %v5659
    %v5668 = vcombine.high %v5666, %v5666
    %v5669 = vcombine.high %v5625, %v5625
    %v5671 = vunpack.c.l.s4 1983009808
    %v5672 = vunpack.c.0.s8 %v5671
    %v5673 = vlaneseq
    %v5674 = vshrl.u32 %v5673, 7
    %v5675 = vsub.s32 %v5672, %v5674
    %v5676 = vrot.slane %v5625, %v5675
    %v5678 = vunpack.c.l.s4 1983009808
    %v5679 = vunpack.c.0.s8 %v5678
    %v5680 = vlaneseq
    %v5681 = vshrl.u32 %v5680, 7
    %v5682 = vsub.s32 %v5679, %v5681
    %v5683 = vrot.slane %v5669, %v5682
    %v5684 = vcombine.high %v5676, %v5676
    %v5685 = vcombine.high %v5683, %v5683
    %v5686 = vcombine.high %v5628, %v5628
    %v5688 = vunpack.c.l.s4 1983009808
    %v5689 = vunpack.c.0.s8 %v5688
    %v5690 = vlaneseq
    %v5691 = vshrl.u32 %v5690, 7
    %v5692 = vsub.s32 %v5689, %v5691
    %v5693 = vrot.slane %v5628, %v5692
    %v5695 = vunpack.c.l.s4 1983009808
    %v5696 = vunpack.c.0.s8 %v5695
    %v5697 = vlaneseq
    %v5698 = vshrl.u32 %v5697, 7
    %v5699 = vsub.s32 %v5696, %v5698
    %v5700 = vrot.slane %v5686, %v5699
    %v5701 = vcombine.high %v5693, %v5693
    %v5702 = vcombine.high %v5700, %v5700
    %v5703 = vcombine.high %v5631, %v5631
    %v5705 = vunpack.c.l.s4 1983009808
    %v5706 = vunpack.c.0.s8 %v5705
    %v5707 = vlaneseq
    %v5708 = vshrl.u32 %v5707, 7
    %v5709 = vsub.s32 %v5706, %v5708
    %v5710 = vrot.slane %v5631, %v5709
    %v5712 = vunpack.c.l.s4 1983009808
    %v5713 = vunpack.c.0.s8 %v5712
    %v5714 = vlaneseq
    %v5715 = vshrl.u32 %v5714, 7
    %v5716 = vsub.s32 %v5713, %v5715
    %v5717 = vrot.slane %v5703, %v5716
    %v5718 = vcombine.high %v5710, %v5710
    %v5719 = vcombine.high %v5717, %v5717
    %v5720 = vcombine.high %v5634, %v5634
    %v5722 = vunpack.c.l.s4 1983009808
    %v5723 = vunpack.c.0.s8 %v5722
    %v5724 = vlaneseq
    %v5725 = vshrl.u32 %v5724, 7
    %v5726 = vsub.s32 %v5723, %v5725
    %v5727 = vrot.slane %v5634, %v5726
    %v5729 = vunpack.c.l.s4 1983009808
    %v5730 = vunpack.c.0.s8 %v5729
    %v5731 = vlaneseq
    %v5732 = vshrl.u32 %v5731, 7
    %v5733 = vsub.s32 %v5730, %v5732
    %v5734 = vrot.slane %v5720, %v5733
    %v5735 = vcombine.high %v5727, %v5727
    %v5736 = vcombine.high %v5734, %v5734
    %v5737 = vcombine.high %v5637, %v5637
    %v5739 = vunpack.c.l.s4 1983009808
    %v5740 = vunpack.c.0.s8 %v5739
    %v5741 = vlaneseq
    %v5742 = vshrl.u32 %v5741, 7
    %v5743 = vsub.s32 %v5740, %v5742
    %v5744 = vrot.slane %v5637, %v5743
    %v5746 = vunpack.c.l.s4 1983009808
    %v5747 = vunpack.c.0.s8 %v5746
    %v5748 = vlaneseq
    %v5749 = vshrl.u32 %v5748, 7
    %v5750 = vsub.s32 %v5747, %v5749
    %v5751 = vrot.slane %v5737, %v5750
    %v5752 = vcombine.high %v5744, %v5744
    %v5753 = vcombine.high %v5751, %v5751
    %v5754 = vcombine.high %v5640, %v5640
    %v5756 = vunpack.c.l.s4 1983009808
    %v5757 = vunpack.c.0.s8 %v5756
    %v5758 = vlaneseq
    %v5759 = vshrl.u32 %v5758, 7
    %v5760 = vsub.s32 %v5757, %v5759
    %v5761 = vrot.slane %v5640, %v5760
    %v5763 = vunpack.c.l.s4 1983009808
    %v5764 = vunpack.c.0.s8 %v5763
    %v5765 = vlaneseq
    %v5766 = vshrl.u32 %v5765, 7
    %v5767 = vsub.s32 %v5764, %v5766
    %v5768 = vrot.slane %v5754, %v5767
    %v5769 = vcombine.high %v5761, %v5761
    %v5770 = vcombine.high %v5768, %v5768
    %v5771 = vcombine.high %v5643, %v5643
    %v5773 = vunpack.c.l.s4 1983009808
    %v5774 = vunpack.c.0.s8 %v5773
    %v5775 = vlaneseq
    %v5776 = vshrl.u32 %v5775, 7
    %v5777 = vsub.s32 %v5774, %v5776
    %v5778 = vrot.slane %v5643, %v5777
    %v5780 = vunpack.c.l.s4 1983009808
    %v5781 = vunpack.c.0.s8 %v5780
    %v5782 = vlaneseq
    %v5783 = vshrl.u32 %v5782, 7
    %v5784 = vsub.s32 %v5781, %v5783
    %v5785 = vrot.slane %v5771, %v5784
    %v5786 = vcombine.high %v5778, %v5778
    %v5787 = vcombine.high %v5785, %v5785
    %vm5820 = vcmask 517120
    %v5821 = vsel %vm5820, %v5659, -inf
    %v5822 = vrot.slane %v5821, 4
    %v5823 = vmax.f32 %v5821, %v5822
    %v5824 = vrot.slane %v5823, 2
    %v5825 = vmax.f32 %v5823, %v5824
    %v5826 = vrot.slane %v5825, 1
    %v5827 = vmax.f32 %v5825, %v5826
    %v5828 = vsel %vm5820, %v5667, -inf
    %v5829 = vrot.slane %v5828, 4
    %v5830 = vmax.f32 %v5828, %v5829
    %v5831 = vrot.slane %v5830, 2
    %v5832 = vmax.f32 %v5830, %v5831
    %v5833 = vrot.slane %v5832, 1
    %v5834 = vmax.f32 %v5832, %v5833
    %v5835 = vsel %vm5820, %v5666, -inf
    %v5836 = vrot.slane %v5835, 4
    %v5837 = vmax.f32 %v5835, %v5836
    %v5838 = vrot.slane %v5837, 2
    %v5839 = vmax.f32 %v5837, %v5838
    %v5840 = vrot.slane %v5839, 1
    %v5841 = vmax.f32 %v5839, %v5840
    %v5842 = vsel %vm5820, %v5668, -inf
    %v5843 = vrot.slane %v5842, 4
    %v5844 = vmax.f32 %v5842, %v5843
    %v5845 = vrot.slane %v5844, 2
    %v5846 = vmax.f32 %v5844, %v5845
    %v5847 = vrot.slane %v5846, 1
    %v5848 = vmax.f32 %v5846, %v5847
    %v5849 = vsel %vm5820, %v5676, -inf
    %v5850 = vrot.slane %v5849, 4
    %v5851 = vmax.f32 %v5849, %v5850
    %v5852 = vrot.slane %v5851, 2
    %v5853 = vmax.f32 %v5851, %v5852
    %v5854 = vrot.slane %v5853, 1
    %v5855 = vmax.f32 %v5853, %v5854
    %v5856 = vsel %vm5820, %v5684, -inf
    %v5857 = vrot.slane %v5856, 4
    %v5858 = vmax.f32 %v5856, %v5857
    %v5859 = vrot.slane %v5858, 2
    %v5860 = vmax.f32 %v5858, %v5859
    %v5861 = vrot.slane %v5860, 1
    %v5862 = vmax.f32 %v5860, %v5861
    %v5863 = vsel %vm5820, %v5683, -inf
    %v5864 = vrot.slane %v5863, 4
    %v5865 = vmax.f32 %v5863, %v5864
    %v5866 = vrot.slane %v5865, 2
    %v5867 = vmax.f32 %v5865, %v5866
    %v5868 = vrot.slane %v5867, 1
    %v5869 = vmax.f32 %v5867, %v5868
    %v5870 = vsel %vm5820, %v5685, -inf
    %v5871 = vrot.slane %v5870, 4
    %v5872 = vmax.f32 %v5870, %v5871
    %v5873 = vrot.slane %v5872, 2
    %v5874 = vmax.f32 %v5872, %v5873
    %v5875 = vrot.slane %v5874, 1
    %v5876 = vmax.f32 %v5874, %v5875
    %v5877 = vsel %vm5820, %v5693, -inf
    %v5878 = vrot.slane %v5877, 4
    %v5879 = vmax.f32 %v5877, %v5878
    %v5880 = vrot.slane %v5879, 2
    %v5881 = vmax.f32 %v5879, %v5880
    %v5882 = vrot.slane %v5881, 1
    %v5883 = vmax.f32 %v5881, %v5882
    %v5884 = vsel %vm5820, %v5701, -inf
    %v5885 = vrot.slane %v5884, 4
    %v5886 = vmax.f32 %v5884, %v5885
    %v5887 = vrot.slane %v5886, 2
    %v5888 = vmax.f32 %v5886, %v5887
    %v5889 = vrot.slane %v5888, 1
    %v5890 = vmax.f32 %v5888, %v5889
    %v5891 = vsel %vm5820, %v5700, -inf
    %v5892 = vrot.slane %v5891, 4
    %v5893 = vmax.f32 %v5891, %v5892
    %v5894 = vrot.slane %v5893, 2
    %v5895 = vmax.f32 %v5893, %v5894
    %v5896 = vrot.slane %v5895, 1
    %v5897 = vmax.f32 %v5895, %v5896
    %v5898 = vsel %vm5820, %v5702, -inf
    %v5899 = vrot.slane %v5898, 4
    %v5900 = vmax.f32 %v5898, %v5899
    %v5901 = vrot.slane %v5900, 2
    %v5902 = vmax.f32 %v5900, %v5901
    %v5903 = vrot.slane %v5902, 1
    %v5904 = vmax.f32 %v5902, %v5903
    %v5905 = vsel %vm5820, %v5710, -inf
    %v5906 = vrot.slane %v5905, 4
    %v5907 = vmax.f32 %v5905, %v5906
    %v5908 = vrot.slane %v5907, 2
    %v5909 = vmax.f32 %v5907, %v5908
    %v5910 = vrot.slane %v5909, 1
    %v5911 = vmax.f32 %v5909, %v5910
    %v5912 = vsel %vm5820, %v5718, -inf
    %v5913 = vrot.slane %v5912, 4
    %v5914 = vmax.f32 %v5912, %v5913
    %v5915 = vrot.slane %v5914, 2
    %v5916 = vmax.f32 %v5914, %v5915
    %v5917 = vrot.slane %v5916, 1
    %v5918 = vmax.f32 %v5916, %v5917
    %v5919 = vsel %vm5820, %v5717, -inf
    %v5920 = vrot.slane %v5919, 4
    %v5921 = vmax.f32 %v5919, %v5920
    %v5922 = vrot.slane %v5921, 2
    %v5923 = vmax.f32 %v5921, %v5922
    %v5924 = vrot.slane %v5923, 1
    %v5925 = vmax.f32 %v5923, %v5924
    %v5926 = vsel %vm5820, %v5719, -inf
    %v5927 = vrot.slane %v5926, 4
    %v5928 = vmax.f32 %v5926, %v5927
    %v5929 = vrot.slane %v5928, 2
    %v5930 = vmax.f32 %v5928, %v5929
    %v5931 = vrot.slane %v5930, 1
    %v5932 = vmax.f32 %v5930, %v5931
    %v5933 = vsel %vm5820, %v5727, -inf
    %v5934 = vrot.slane %v5933, 4
    %v5935 = vmax.f32 %v5933, %v5934
    %v5936 = vrot.slane %v5935, 2
    %v5937 = vmax.f32 %v5935, %v5936
    %v5938 = vrot.slane %v5937, 1
    %v5939 = vmax.f32 %v5937, %v5938
    %v5940 = vsel %vm5820, %v5735, -inf
    %v5941 = vrot.slane %v5940, 4
    %v5942 = vmax.f32 %v5940, %v5941
    %v5943 = vrot.slane %v5942, 2
    %v5944 = vmax.f32 %v5942, %v5943
    %v5945 = vrot.slane %v5944, 1
    %v5946 = vmax.f32 %v5944, %v5945
    %v5947 = vsel %vm5820, %v5734, -inf
    %v5948 = vrot.slane %v5947, 4
    %v5949 = vmax.f32 %v5947, %v5948
    %v5950 = vrot.slane %v5949, 2
    %v5951 = vmax.f32 %v5949, %v5950
    %v5952 = vrot.slane %v5951, 1
    %v5953 = vmax.f32 %v5951, %v5952
    %v5954 = vsel %vm5820, %v5736, -inf
    %v5955 = vrot.slane %v5954, 4
    %v5956 = vmax.f32 %v5954, %v5955
    %v5957 = vrot.slane %v5956, 2
    %v5958 = vmax.f32 %v5956, %v5957
    %v5959 = vrot.slane %v5958, 1
    %v5960 = vmax.f32 %v5958, %v5959
    %v5961 = vsel %vm5820, %v5744, -inf
    %v5962 = vrot.slane %v5961, 4
    %v5963 = vmax.f32 %v5961, %v5962
    %v5964 = vrot.slane %v5963, 2
    %v5965 = vmax.f32 %v5963, %v5964
    %v5966 = vrot.slane %v5965, 1
    %v5967 = vmax.f32 %v5965, %v5966
    %v5968 = vsel %vm5820, %v5752, -inf
    %v5969 = vrot.slane %v5968, 4
    %v5970 = vmax.f32 %v5968, %v5969
    %v5971 = vrot.slane %v5970, 2
    %v5972 = vmax.f32 %v5970, %v5971
    %v5973 = vrot.slane %v5972, 1
    %v5974 = vmax.f32 %v5972, %v5973
    %v5975 = vsel %vm5820, %v5751, -inf
    %v5976 = vrot.slane %v5975, 4
    %v5977 = vmax.f32 %v5975, %v5976
    %v5978 = vrot.slane %v5977, 2
    %v5979 = vmax.f32 %v5977, %v5978
    %v5980 = vrot.slane %v5979, 1
    %v5981 = vmax.f32 %v5979, %v5980
    %v5982 = vsel %vm5820, %v5753, -inf
    %v5983 = vrot.slane %v5982, 4
    %v5984 = vmax.f32 %v5982, %v5983
    %v5985 = vrot.slane %v5984, 2
    %v5986 = vmax.f32 %v5984, %v5985
    %v5987 = vrot.slane %v5986, 1
    %v5988 = vmax.f32 %v5986, %v5987
    %v5989 = vsel %vm5820, %v5761, -inf
    %v5990 = vrot.slane %v5989, 4
    %v5991 = vmax.f32 %v5989, %v5990
    %v5992 = vrot.slane %v5991, 2
    %v5993 = vmax.f32 %v5991, %v5992
    %v5994 = vrot.slane %v5993, 1
    %v5995 = vmax.f32 %v5993, %v5994
    %v5996 = vsel %vm5820, %v5769, -inf
    %v5997 = vrot.slane %v5996, 4
    %v5998 = vmax.f32 %v5996, %v5997
    %v5999 = vrot.slane %v5998, 2
    %v6000 = vmax.f32 %v5998, %v5999
    %v6001 = vrot.slane %v6000, 1
    %v6002 = vmax.f32 %v6000, %v6001
    %v6003 = vsel %vm5820, %v5768, -inf
    %v6004 = vrot.slane %v6003, 4
    %v6005 = vmax.f32 %v6003, %v6004
    %v6006 = vrot.slane %v6005, 2
    %v6007 = vmax.f32 %v6005, %v6006
    %v6008 = vrot.slane %v6007, 1
    %v6009 = vmax.f32 %v6007, %v6008
    %v6010 = vsel %vm5820, %v5770, -inf
    %v6011 = vrot.slane %v6010, 4
    %v6012 = vmax.f32 %v6010, %v6011
    %v6013 = vrot.slane %v6012, 2
    %v6014 = vmax.f32 %v6012, %v6013
    %v6015 = vrot.slane %v6014, 1
    %v6016 = vmax.f32 %v6014, %v6015
    %v6017 = vsel %vm5820, %v5778, -inf
    %v6018 = vrot.slane %v6017, 4
    %v6019 = vmax.f32 %v6017, %v6018
    %v6020 = vrot.slane %v6019, 2
    %v6021 = vmax.f32 %v6019, %v6020
    %v6022 = vrot.slane %v6021, 1
    %v6023 = vmax.f32 %v6021, %v6022
    %v6024 = vsel %vm5820, %v5786, -inf
    %v6025 = vrot.slane %v6024, 4
    %v6026 = vmax.f32 %v6024, %v6025
    %v6027 = vrot.slane %v6026, 2
    %v6028 = vmax.f32 %v6026, %v6027
    %v6029 = vrot.slane %v6028, 1
    %v6030 = vmax.f32 %v6028, %v6029
    %v6031 = vsel %vm5820, %v5785, -inf
    %v6032 = vrot.slane %v6031, 4
    %v6033 = vmax.f32 %v6031, %v6032
    %v6034 = vrot.slane %v6033, 2
    %v6035 = vmax.f32 %v6033, %v6034
    %v6036 = vrot.slane %v6035, 1
    %v6037 = vmax.f32 %v6035, %v6036
    %v6038 = vsel %vm5820, %v5787, -inf
    %v6039 = vrot.slane %v6038, 4
    %v6040 = vmax.f32 %v6038, %v6039
    %v6041 = vrot.slane %v6040, 2
    %v6042 = vmax.f32 %v6040, %v6041
    %v6043 = vrot.slane %v6042, 1
    %v6044 = vmax.f32 %v6042, %v6043
    %v6045 = vpack.c.bf16 %v5827, %v5827
    %v6046 = vpack.c.bf16 %v5834, %v5834
    %v6047 = vpack.c.bf16 %v5841, %v5841
    %v6048 = vpack.c.bf16 %v5848, %v5848
    %v6049 = vpack.c.bf16 %v5855, %v5855
    %v6050 = vpack.c.bf16 %v5862, %v5862
    %v6051 = vpack.c.bf16 %v5869, %v5869
    %v6052 = vpack.c.bf16 %v5876, %v5876
    %v6053 = vpack.c.bf16 %v5883, %v5883
    %v6054 = vpack.c.bf16 %v5890, %v5890
    %v6055 = vpack.c.bf16 %v5897, %v5897
    %v6056 = vpack.c.bf16 %v5904, %v5904
    %v6057 = vpack.c.bf16 %v5911, %v5911
    %v6058 = vpack.c.bf16 %v5918, %v5918
    %v6059 = vpack.c.bf16 %v5925, %v5925
    %v6060 = vpack.c.bf16 %v5932, %v5932
    %v6061 = vpack.c.bf16 %v5939, %v5939
    %v6062 = vpack.c.bf16 %v5946, %v5946
    %v6063 = vpack.c.bf16 %v5953, %v5953
    %v6064 = vpack.c.bf16 %v5960, %v5960
    %v6065 = vpack.c.bf16 %v5967, %v5967
    %v6066 = vpack.c.bf16 %v5974, %v5974
    %v6067 = vpack.c.bf16 %v5981, %v5981
    %v6068 = vpack.c.bf16 %v5988, %v5988
    %v6069 = vpack.c.bf16 %v5995, %v5995
    %v6070 = vpack.c.bf16 %v6002, %v6002
    %v6071 = vpack.c.bf16 %v6009, %v6009
    %v6072 = vpack.c.bf16 %v6016, %v6016
    %v6073 = vpack.c.bf16 %v6023, %v6023
    %v6074 = vpack.c.bf16 %v6030, %v6030
    %v6075 = vpack.c.bf16 %v6037, %v6037
    %v6076 = vpack.c.bf16 %v6044, %v6044
    %v6109 = vunpack.c.l.b16 %v6045
    %v6110 = vunpack.c.l.b16 %v6046
    %v6111 = vunpack.c.l.b16 %v6047
    %v6112 = vunpack.c.l.b16 %v6048
    %v6113 = vunpack.c.l.b16 %v6049
    %v6114 = vunpack.c.l.b16 %v6050
    %v6115 = vunpack.c.l.b16 %v6051
    %v6116 = vunpack.c.l.b16 %v6052
    %v6117 = vunpack.c.l.b16 %v6053
    %v6118 = vunpack.c.l.b16 %v6054
    %v6119 = vunpack.c.l.b16 %v6055
    %v6120 = vunpack.c.l.b16 %v6056
    %v6121 = vunpack.c.l.b16 %v6057
    %v6122 = vunpack.c.l.b16 %v6058
    %v6123 = vunpack.c.l.b16 %v6059
    %v6124 = vunpack.c.l.b16 %v6060
    %v6125 = vunpack.c.l.b16 %v6061
    %v6126 = vunpack.c.l.b16 %v6062
    %v6127 = vunpack.c.l.b16 %v6063
    %v6128 = vunpack.c.l.b16 %v6064
    %v6129 = vunpack.c.l.b16 %v6065
    %v6130 = vunpack.c.l.b16 %v6066
    %v6131 = vunpack.c.l.b16 %v6067
    %v6132 = vunpack.c.l.b16 %v6068
    %v6133 = vunpack.c.l.b16 %v6069
    %v6134 = vunpack.c.l.b16 %v6070
    %v6135 = vunpack.c.l.b16 %v6071
    %v6136 = vunpack.c.l.b16 %v6072
    %v6137 = vunpack.c.l.b16 %v6073
    %v6138 = vunpack.c.l.b16 %v6074
    %v6139 = vunpack.c.l.b16 %v6075
    %v6140 = vunpack.c.l.b16 %v6076
    %v6141 = vpack.c.b16 %v6109, %v6109
    %v6142 = vpack.c.b16 %v6110, %v6110
    %v6143 = vpack.c.b16 %v6111, %v6111
    %v6144 = vpack.c.b16 %v6112, %v6112
    %v6145 = vpack.c.b16 %v6113, %v6113
    %v6146 = vpack.c.b16 %v6114, %v6114
    %v6147 = vpack.c.b16 %v6115, %v6115
    %v6148 = vpack.c.b16 %v6116, %v6116
    %v6149 = vpack.c.b16 %v6117, %v6117
    %v6150 = vpack.c.b16 %v6118, %v6118
    %v6151 = vpack.c.b16 %v6119, %v6119
    %v6152 = vpack.c.b16 %v6120, %v6120
    %v6153 = vpack.c.b16 %v6121, %v6121
    %v6154 = vpack.c.b16 %v6122, %v6122
    %v6155 = vpack.c.b16 %v6123, %v6123
    %v6156 = vpack.c.b16 %v6124, %v6124
    %v6157 = vpack.c.b16 %v6125, %v6125
    %v6158 = vpack.c.b16 %v6126, %v6126
    %v6159 = vpack.c.b16 %v6127, %v6127
    %v6160 = vpack.c.b16 %v6128, %v6128
    %v6161 = vpack.c.b16 %v6129, %v6129
    %v6162 = vpack.c.b16 %v6130, %v6130
    %v6163 = vpack.c.b16 %v6131, %v6131
    %v6164 = vpack.c.b16 %v6132, %v6132
    %v6165 = vpack.c.b16 %v6133, %v6133
    %v6166 = vpack.c.b16 %v6134, %v6134
    %v6167 = vpack.c.b16 %v6135, %v6135
    %v6168 = vpack.c.b16 %v6136, %v6136
    %v6169 = vpack.c.b16 %v6137, %v6137
    %v6170 = vpack.c.b16 %v6138, %v6138
    %v6171 = vpack.c.b16 %v6139, %v6139
    %v6172 = vpack.c.b16 %v6140, %v6140
    %v6173 = vunpack.c.l.b16 %v6141
    %v6174 = vunpack.c.l.b16 %v6142
    %v6175 = vunpack.c.l.b16 %v6143
    %v6176 = vunpack.c.l.b16 %v6144
    %v6177 = vunpack.c.l.b16 %v6145
    %v6178 = vunpack.c.l.b16 %v6146
    %v6179 = vunpack.c.l.b16 %v6147
    %v6180 = vunpack.c.l.b16 %v6148
    %v6181 = vunpack.c.l.b16 %v6149
    %v6182 = vunpack.c.l.b16 %v6150
    %v6183 = vunpack.c.l.b16 %v6151
    %v6184 = vunpack.c.l.b16 %v6152
    %v6185 = vunpack.c.l.b16 %v6153
    %v6186 = vunpack.c.l.b16 %v6154
    %v6187 = vunpack.c.l.b16 %v6155
    %v6188 = vunpack.c.l.b16 %v6156
    %v6189 = vunpack.c.l.b16 %v6157
    %v6190 = vunpack.c.l.b16 %v6158
    %v6191 = vunpack.c.l.b16 %v6159
    %v6192 = vunpack.c.l.b16 %v6160
    %v6193 = vunpack.c.l.b16 %v6161
    %v6194 = vunpack.c.l.b16 %v6162
    %v6195 = vunpack.c.l.b16 %v6163
    %v6196 = vunpack.c.l.b16 %v6164
    %v6197 = vunpack.c.l.b16 %v6165
    %v6198 = vunpack.c.l.b16 %v6166
    %v6199 = vunpack.c.l.b16 %v6167
    %v6200 = vunpack.c.l.b16 %v6168
    %v6201 = vunpack.c.l.b16 %v6169
    %v6202 = vunpack.c.l.b16 %v6170
    %v6203 = vunpack.c.l.b16 %v6171
    %v6204 = vunpack.c.l.b16 %v6172
    %v6205 = vsel %vm3280, %v6174, %v6173
    %v6206 = vsel %vm3282, %v6175, %v6205
    %v6207 = vsel %vm3284, %v6176, %v6206
    %v6208 = vsel %vm3280, %v6178, %v6177
    %v6209 = vsel %vm3282, %v6179, %v6208
    %v6210 = vsel %vm3284, %v6180, %v6209
    %v6211 = vsel %vm3280, %v6182, %v6181
    %v6212 = vsel %vm3282, %v6183, %v6211
    %v6213 = vsel %vm3284, %v6184, %v6212
    %v6214 = vsel %vm3280, %v6186, %v6185
    %v6215 = vsel %vm3282, %v6187, %v6214
    %v6216 = vsel %vm3284, %v6188, %v6215
    %v6217 = vsel %vm3280, %v6190, %v6189
    %v6218 = vsel %vm3282, %v6191, %v6217
    %v6219 = vsel %vm3284, %v6192, %v6218
    %v6220 = vsel %vm3280, %v6194, %v6193
    %v6221 = vsel %vm3282, %v6195, %v6220
    %v6222 = vsel %vm3284, %v6196, %v6221
    %v6223 = vsel %vm3280, %v6198, %v6197
    %v6224 = vsel %vm3282, %v6199, %v6223
    %v6225 = vsel %vm3284, %v6200, %v6224
    %v6226 = vsel %vm3280, %v6202, %v6201
    %v6227 = vsel %vm3282, %v6203, %v6226
    %v6228 = vsel %vm3284, %v6204, %v6227
    %v6229 = vpack.c.b16 %v6207, %v6207
    %v6230 = vpack.c.b16 %v6210, %v6210
    %v6231 = vpack.c.b16 %v6213, %v6213
    %v6232 = vpack.c.b16 %v6216, %v6216
    %v6233 = vpack.c.b16 %v6219, %v6219
    %v6234 = vpack.c.b16 %v6222, %v6222
    %v6235 = vpack.c.b16 %v6225, %v6225
    %v6236 = vpack.c.b16 %v6228, %v6228
    %s6245 = scalar_lea.vmem [#allocation3], 4
    %vm6246 = vcmask 518144
    %vm6247 = vsmask.f32 2306
    %vm6248 = vmand %vm6246, %vm6247
    %v6249 = vld [vmem:[%s6245] sm:$0x7]
    %v6250 = vsel %vm6248, %v6229, %v6249
    %6251 = vst [vmem:[%s6245] sm:$0x7] %v6250
    %v6252 = vld [vmem:[%s6245 + $0x4] sm:$0x7]
    %v6253 = vsel %vm6248, %v6230, %v6252
    %6254 = vst [vmem:[%s6245 + $0x4] sm:$0x7] %v6253
    %v6255 = vld [vmem:[%s6245 + $0x8] sm:$0x7]
    %v6256 = vsel %vm6248, %v6231, %v6255
    %6257 = vst [vmem:[%s6245 + $0x8] sm:$0x7] %v6256
    %v6258 = vld [vmem:[%s6245 + $0xc] sm:$0x7]
    %v6259 = vsel %vm6248, %v6232, %v6258
    %6260 = vst [vmem:[%s6245 + $0xc] sm:$0x7] %v6259
    %v6261 = vld [vmem:[%s6245 + $0x18] sm:$0x7]
    %v6262 = vsel %vm6248, %v6233, %v6261
    %6263 = vst [vmem:[%s6245 + $0x18] sm:$0x7] %v6262
    %v6264 = vld [vmem:[%s6245 + $0x1c] sm:$0x7]
    %v6265 = vsel %vm6248, %v6234, %v6264
    %6266 = vst [vmem:[%s6245 + $0x1c] sm:$0x7] %v6265
    %v6267 = vld [vmem:[%s6245 + $0x20] sm:$0x7]
    %v6268 = vsel %vm6248, %v6235, %v6267
    %6269 = vst [vmem:[%s6245 + $0x20] sm:$0x7] %v6268
    %v6270 = vld [vmem:[%s6245 + $0x24] sm:$0x7]
    %v6271 = vsel %vm6248, %v6236, %v6270
    %6272 = vst [vmem:[%s6245 + $0x24] sm:$0x7] %v6271
    %v6273 = vld [vmem:[#allocation3] sm:$0x3]
    %v6274 = vld [vmem:[#allocation3 + $0x4] sm:$0x3]
    %v6275 = vld [vmem:[#allocation3 + $0x8] sm:$0x3]
    %v6276 = vld [vmem:[#allocation3 + $0xc] sm:$0x3]
    %v6277 = vld [vmem:[#allocation3 + $0x18] sm:$0x3]
    %v6278 = vld [vmem:[#allocation3 + $0x1c] sm:$0x3]
    %v6279 = vld [vmem:[#allocation3 + $0x20] sm:$0x3]
    %v6280 = vld [vmem:[#allocation3 + $0x24] sm:$0x3]
    %v6281 = vld [vmem:[#allocation3] sm:$0x7]
    %v6282 = vld [vmem:[#allocation3 + $0x4] sm:$0x7]
    %v6283 = vld [vmem:[#allocation3 + $0x8] sm:$0x7]
    %v6284 = vld [vmem:[#allocation3 + $0xc] sm:$0x7]
    %v6285 = vld [vmem:[#allocation3 + $0x18] sm:$0x7]
    %v6286 = vld [vmem:[#allocation3 + $0x1c] sm:$0x7]
    %v6287 = vld [vmem:[#allocation3 + $0x20] sm:$0x7]
    %v6288 = vld [vmem:[#allocation3 + $0x24] sm:$0x7]
    %v6289 = vld [vmem:[#allocation3] sm:$0x6]
    %v6290 = vld [vmem:[#allocation3 + $0x4] sm:$0x6]
    %v6291 = vld [vmem:[#allocation3 + $0x8] sm:$0x6]
    %v6292 = vld [vmem:[#allocation3 + $0xc] sm:$0x6]
    %v6293 = vld [vmem:[#allocation3 + $0x18] sm:$0x6]
    %v6294 = vld [vmem:[#allocation3 + $0x1c] sm:$0x6]
    %v6295 = vld [vmem:[#allocation3 + $0x20] sm:$0x6]
    %v6296 = vld [vmem:[#allocation3 + $0x24] sm:$0x6]
    %v6305 = vunpack.c.l.b16 %v6281
    %v6306 = vunpack.c.l.b16 %v6282
    %v6307 = vunpack.c.l.b16 %v6283
    %v6308 = vunpack.c.l.b16 %v6284
    %v6309 = vunpack.c.l.b16 %v6285
    %v6310 = vunpack.c.l.b16 %v6286
    %v6311 = vunpack.c.l.b16 %v6287
    %v6312 = vunpack.c.l.b16 %v6288
    %v6313 = vpack.c.b16 %v6305, %v6305
    %v6314 = vpack.c.b16 %v6306, %v6306
    %v6315 = vpack.c.b16 %v6307, %v6307
    %v6316 = vpack.c.b16 %v6308, %v6308
    %v6317 = vpack.c.b16 %v6309, %v6309
    %v6318 = vpack.c.b16 %v6310, %v6310
    %v6319 = vpack.c.b16 %v6311, %v6311
    %v6320 = vpack.c.b16 %v6312, %v6312
    %v6322 = vshrl.u32 %v6313, 16
    %v6324 = vshll.u32 %v6313, 16
    %v6326 = vrot.slane %v6324, 1
    %v6327 = vor.u32 %v6322, %v6326
    %v6329 = vshrl.u32 %v6314, 16
    %v6331 = vshll.u32 %v6314, 16
    %v6333 = vrot.slane %v6331, 1
    %v6334 = vor.u32 %v6329, %v6333
    %v6336 = vshrl.u32 %v6315, 16
    %v6338 = vshll.u32 %v6315, 16
    %v6340 = vrot.slane %v6338, 1
    %v6341 = vor.u32 %v6336, %v6340
    %v6343 = vshrl.u32 %v6316, 16
    %v6345 = vshll.u32 %v6316, 16
    %v6347 = vrot.slane %v6345, 1
    %v6348 = vor.u32 %v6343, %v6347
    %v6350 = vshrl.u32 %v6317, 16
    %v6352 = vshll.u32 %v6317, 16
    %v6354 = vrot.slane %v6352, 1
    %v6355 = vor.u32 %v6350, %v6354
    %v6357 = vshrl.u32 %v6318, 16
    %v6359 = vshll.u32 %v6318, 16
    %v6361 = vrot.slane %v6359, 1
    %v6362 = vor.u32 %v6357, %v6361
    %v6364 = vshrl.u32 %v6319, 16
    %v6366 = vshll.u32 %v6319, 16
    %v6368 = vrot.slane %v6366, 1
    %v6369 = vor.u32 %v6364, %v6368
    %v6371 = vshrl.u32 %v6320, 16
    %v6373 = vshll.u32 %v6320, 16
    %v6375 = vrot.slane %v6373, 1
    %v6376 = vor.u32 %v6371, %v6375
    %6377 = vrot.lane.b32.xlu0 %v6327, 64
    %v6378 = vpop.permute.xlu0 %6377
    %6379 = vrot.lane.b32.xlu0 %v6334, 64
    %v6380 = vpop.permute.xlu0 %6379
    %6381 = vrot.lane.b32.xlu0 %v6341, 64
    %v6382 = vpop.permute.xlu0 %6381
    %6383 = vrot.lane.b32.xlu0 %v6348, 64
    %v6384 = vpop.permute.xlu0 %6383
    %6385 = vrot.lane.b32.xlu0 %v6355, 64
    %v6386 = vpop.permute.xlu0 %6385
    %6387 = vrot.lane.b32.xlu0 %v6362, 64
    %v6388 = vpop.permute.xlu0 %6387
    %6389 = vrot.lane.b32.xlu0 %v6369, 64
    %v6390 = vpop.permute.xlu0 %6389
    %6391 = vrot.lane.b32.xlu0 %v6376, 64
    %v6392 = vpop.permute.xlu0 %6391
    %v6401 = vunpack.c.l.b16 %v6289
    %v6402 = vunpack.c.l.b16 %v6290
    %v6403 = vunpack.c.l.b16 %v6291
    %v6404 = vunpack.c.l.b16 %v6292
    %v6405 = vunpack.c.l.b16 %v6293
    %v6406 = vunpack.c.l.b16 %v6294
    %v6407 = vunpack.c.l.b16 %v6295
    %v6408 = vunpack.c.l.b16 %v6296
    %v6409 = vpack.c.b16 %v6401, %v6401
    %v6410 = vpack.c.b16 %v6402, %v6402
    %v6411 = vpack.c.b16 %v6403, %v6403
    %v6412 = vpack.c.b16 %v6404, %v6404
    %v6413 = vpack.c.b16 %v6405, %v6405
    %v6414 = vpack.c.b16 %v6406, %v6406
    %v6415 = vpack.c.b16 %v6407, %v6407
    %v6416 = vpack.c.b16 %v6408, %v6408
    %v6417 = vrot.slane %v6409, 1
    %v6418 = vrot.slane %v6410, 1
    %v6419 = vrot.slane %v6411, 1
    %v6420 = vrot.slane %v6412, 1
    %v6421 = vrot.slane %v6413, 1
    %v6422 = vrot.slane %v6414, 1
    %v6423 = vrot.slane %v6415, 1
    %v6424 = vrot.slane %v6416, 1
    %v6427 = vsel %vm3965, %v6273, %v6378
    %v6430 = vsel %vm3965, %v6274, %v6380
    %v6433 = vsel %vm3965, %v6275, %v6382
    %v6436 = vsel %vm3965, %v6276, %v6384
    %v6439 = vsel %vm3965, %v6277, %v6386
    %v6442 = vsel %vm3965, %v6278, %v6388
    %v6445 = vsel %vm3965, %v6279, %v6390
    %v6448 = vsel %vm3965, %v6280, %v6392
    %v6457 = vcombine.low %v6427, %v6417
    %v6459 = vunpack.c.l.s4 1983009808
    %v6460 = vunpack.c.0.s8 %v6459
    %v6461 = vlaneseq
    %v6462 = vshrl.u32 %v6461, 7
    %v6463 = vsub.s32 %v6460, %v6462
    %v6464 = vrot.slane %v6457, %v6463
    %v6465 = vcombine.low %v6430, %v6418
    %v6467 = vunpack.c.l.s4 1983009808
    %v6468 = vunpack.c.0.s8 %v6467
    %v6469 = vlaneseq
    %v6470 = vshrl.u32 %v6469, 7
    %v6471 = vsub.s32 %v6468, %v6470
    %v6472 = vrot.slane %v6465, %v6471
    %v6473 = vcombine.low %v6433, %v6419
    %v6475 = vunpack.c.l.s4 1983009808
    %v6476 = vunpack.c.0.s8 %v6475
    %v6477 = vlaneseq
    %v6478 = vshrl.u32 %v6477, 7
    %v6479 = vsub.s32 %v6476, %v6478
    %v6480 = vrot.slane %v6473, %v6479
    %v6481 = vcombine.low %v6436, %v6420
    %v6483 = vunpack.c.l.s4 1983009808
    %v6484 = vunpack.c.0.s8 %v6483
    %v6485 = vlaneseq
    %v6486 = vshrl.u32 %v6485, 7
    %v6487 = vsub.s32 %v6484, %v6486
    %v6488 = vrot.slane %v6481, %v6487
    %v6489 = vcombine.low %v6439, %v6421
    %v6491 = vunpack.c.l.s4 1983009808
    %v6492 = vunpack.c.0.s8 %v6491
    %v6493 = vlaneseq
    %v6494 = vshrl.u32 %v6493, 7
    %v6495 = vsub.s32 %v6492, %v6494
    %v6496 = vrot.slane %v6489, %v6495
    %v6497 = vcombine.low %v6442, %v6422
    %v6499 = vunpack.c.l.s4 1983009808
    %v6500 = vunpack.c.0.s8 %v6499
    %v6501 = vlaneseq
    %v6502 = vshrl.u32 %v6501, 7
    %v6503 = vsub.s32 %v6500, %v6502
    %v6504 = vrot.slane %v6497, %v6503
    %v6505 = vcombine.low %v6445, %v6423
    %v6507 = vunpack.c.l.s4 1983009808
    %v6508 = vunpack.c.0.s8 %v6507
    %v6509 = vlaneseq
    %v6510 = vshrl.u32 %v6509, 7
    %v6511 = vsub.s32 %v6508, %v6510
    %v6512 = vrot.slane %v6505, %v6511
    %v6513 = vcombine.low %v6448, %v6424
    %v6515 = vunpack.c.l.s4 1983009808
    %v6516 = vunpack.c.0.s8 %v6515
    %v6517 = vlaneseq
    %v6518 = vshrl.u32 %v6517, 7
    %v6519 = vsub.s32 %v6516, %v6518
    %v6520 = vrot.slane %v6513, %v6519
    %v6521 = vld [vmem:[%s5] sm:$0xf]
    %v6522 = vld [vmem:[%s5 + $0x4] sm:$0xf]
    %v6523 = vld [vmem:[%s5 + $0x8] sm:$0xf]
    %v6524 = vld [vmem:[%s5 + $0xc] sm:$0xf]
    %v6525 = vld [vmem:[%s5 + $0x10] sm:$0xf]
    %v6526 = vld [vmem:[%s5 + $0x14] sm:$0xf]
    %v6527 = vld [vmem:[%s5 + $0x18] sm:$0xf]
    %v6528 = vld [vmem:[%s5 + $0x1c] sm:$0xf]
    %v6529 = vld [vmem:[%s5 + $0x20] sm:$0xf]
    %v6530 = vld [vmem:[%s5 + $0x24] sm:$0xf]
    %v6531 = vld [vmem:[%s5 + $0x28] sm:$0xf]
    %v6532 = vld [vmem:[%s5 + $0x2c] sm:$0xf]
    %v6533 = vld [vmem:[%s5 + $0x30] sm:$0xf]
    %v6534 = vld [vmem:[%s5 + $0x34] sm:$0xf]
    %v6535 = vld [vmem:[%s5 + $0x38] sm:$0xf]
    %v6536 = vld [vmem:[%s5 + $0x3c] sm:$0xf]
    %v6537 = vld [vmem:[%s5 + $0x40] sm:$0xf]
    %v6538 = vld [vmem:[%s5 + $0x44] sm:$0xf]
    %v6539 = vld [vmem:[%s5 + $0x48] sm:$0xf]
    %v6540 = vld [vmem:[%s5 + $0x4c] sm:$0xf]
    %v6541 = vld [vmem:[%s5 + $0x50] sm:$0xf]
    %v6542 = vld [vmem:[%s5 + $0x54] sm:$0xf]
    %v6543 = vld [vmem:[%s5 + $0x58] sm:$0xf]
    %v6544 = vld [vmem:[%s5 + $0x5c] sm:$0xf]
    %v6545 = vld [vmem:[%s6245] sm:$0x3]
    %v6546 = vld [vmem:[%s6245 + $0x4] sm:$0x3]
    %v6547 = vld [vmem:[%s6245 + $0x8] sm:$0x3]
    %v6548 = vld [vmem:[%s6245 + $0xc] sm:$0x3]
    %v6549 = vld [vmem:[%s6245 + $0x18] sm:$0x3]
    %v6550 = vld [vmem:[%s6245 + $0x1c] sm:$0x3]
    %v6551 = vld [vmem:[%s6245 + $0x20] sm:$0x3]
    %v6552 = vld [vmem:[%s6245 + $0x24] sm:$0x3]
    %v6553 = vld [vmem:[%s6245] sm:$0x7]
    %v6554 = vld [vmem:[%s6245 + $0x4] sm:$0x7]
    %v6555 = vld [vmem:[%s6245 + $0x8] sm:$0x7]
    %v6556 = vld [vmem:[%s6245 + $0xc] sm:$0x7]
    %v6557 = vld [vmem:[%s6245 + $0x18] sm:$0x7]
    %v6558 = vld [vmem:[%s6245 + $0x1c] sm:$0x7]
    %v6559 = vld [vmem:[%s6245 + $0x20] sm:$0x7]
    %v6560 = vld [vmem:[%s6245 + $0x24] sm:$0x7]
    %v6561 = vld [vmem:[%s6245] sm:$0x6]
    %v6562 = vld [vmem:[%s6245 + $0x4] sm:$0x6]
    %v6563 = vld [vmem:[%s6245 + $0x8] sm:$0x6]
    %v6564 = vld [vmem:[%s6245 + $0xc] sm:$0x6]
    %v6565 = vld [vmem:[%s6245 + $0x18] sm:$0x6]
    %v6566 = vld [vmem:[%s6245 + $0x1c] sm:$0x6]
    %v6567 = vld [vmem:[%s6245 + $0x20] sm:$0x6]
    %v6568 = vld [vmem:[%s6245 + $0x24] sm:$0x6]
    %v6577 = vunpack.c.l.b16 %v6553
    %v6578 = vunpack.c.l.b16 %v6554
    %v6579 = vunpack.c.l.b16 %v6555
    %v6580 = vunpack.c.l.b16 %v6556
    %v6581 = vunpack.c.l.b16 %v6557
    %v6582 = vunpack.c.l.b16 %v6558
    %v6583 = vunpack.c.l.b16 %v6559
    %v6584 = vunpack.c.l.b16 %v6560
    %v6585 = vpack.c.b16 %v6577, %v6577
    %v6586 = vpack.c.b16 %v6578, %v6578
    %v6587 = vpack.c.b16 %v6579, %v6579
    %v6588 = vpack.c.b16 %v6580, %v6580
    %v6589 = vpack.c.b16 %v6581, %v6581
    %v6590 = vpack.c.b16 %v6582, %v6582
    %v6591 = vpack.c.b16 %v6583, %v6583
    %v6592 = vpack.c.b16 %v6584, %v6584
    %v6594 = vshrl.u32 %v6585, 16
    %v6596 = vshll.u32 %v6585, 16
    %v6598 = vrot.slane %v6596, 1
    %v6599 = vor.u32 %v6594, %v6598
    %v6601 = vshrl.u32 %v6586, 16
    %v6603 = vshll.u32 %v6586, 16
    %v6605 = vrot.slane %v6603, 1
    %v6606 = vor.u32 %v6601, %v6605
    %v6608 = vshrl.u32 %v6587, 16
    %v6610 = vshll.u32 %v6587, 16
    %v6612 = vrot.slane %v6610, 1
    %v6613 = vor.u32 %v6608, %v6612
    %v6615 = vshrl.u32 %v6588, 16
    %v6617 = vshll.u32 %v6588, 16
    %v6619 = vrot.slane %v6617, 1
    %v6620 = vor.u32 %v6615, %v6619
    %v6622 = vshrl.u32 %v6589, 16
    %v6624 = vshll.u32 %v6589, 16
    %v6626 = vrot.slane %v6624, 1
    %v6627 = vor.u32 %v6622, %v6626
    %v6629 = vshrl.u32 %v6590, 16
    %v6631 = vshll.u32 %v6590, 16
    %v6633 = vrot.slane %v6631, 1
    %v6634 = vor.u32 %v6629, %v6633
    %v6636 = vshrl.u32 %v6591, 16
    %v6638 = vshll.u32 %v6591, 16
    %v6640 = vrot.slane %v6638, 1
    %v6641 = vor.u32 %v6636, %v6640
    %v6643 = vshrl.u32 %v6592, 16
    %v6645 = vshll.u32 %v6592, 16
    %v6647 = vrot.slane %v6645, 1
    %v6648 = vor.u32 %v6643, %v6647
    %6649 = vrot.lane.b32.xlu0 %v6599, 64
    %v6650 = vpop.permute.xlu0 %6649
    %6651 = vrot.lane.b32.xlu0 %v6606, 64
    %v6652 = vpop.permute.xlu0 %6651
    %6653 = vrot.lane.b32.xlu0 %v6613, 64
    %v6654 = vpop.permute.xlu0 %6653
    %6655 = vrot.lane.b32.xlu0 %v6620, 64
    %v6656 = vpop.permute.xlu0 %6655
    %6657 = vrot.lane.b32.xlu0 %v6627, 64
    %v6658 = vpop.permute.xlu0 %6657
    %6659 = vrot.lane.b32.xlu0 %v6634, 64
    %v6660 = vpop.permute.xlu0 %6659
    %6661 = vrot.lane.b32.xlu0 %v6641, 64
    %v6662 = vpop.permute.xlu0 %6661
    %6663 = vrot.lane.b32.xlu0 %v6648, 64
    %v6664 = vpop.permute.xlu0 %6663
    %v6673 = vunpack.c.l.b16 %v6561
    %v6674 = vunpack.c.l.b16 %v6562
    %v6675 = vunpack.c.l.b16 %v6563
    %v6676 = vunpack.c.l.b16 %v6564
    %v6677 = vunpack.c.l.b16 %v6565
    %v6678 = vunpack.c.l.b16 %v6566
    %v6679 = vunpack.c.l.b16 %v6567
    %v6680 = vunpack.c.l.b16 %v6568
    %v6681 = vpack.c.b16 %v6673, %v6673
    %v6682 = vpack.c.b16 %v6674, %v6674
    %v6683 = vpack.c.b16 %v6675, %v6675
    %v6684 = vpack.c.b16 %v6676, %v6676
    %v6685 = vpack.c.b16 %v6677, %v6677
    %v6686 = vpack.c.b16 %v6678, %v6678
    %v6687 = vpack.c.b16 %v6679, %v6679
    %v6688 = vpack.c.b16 %v6680, %v6680
    %v6689 = vrot.slane %v6681, 1
    %v6690 = vrot.slane %v6682, 1
    %v6691 = vrot.slane %v6683, 1
    %v6692 = vrot.slane %v6684, 1
    %v6693 = vrot.slane %v6685, 1
    %v6694 = vrot.slane %v6686, 1
    %v6695 = vrot.slane %v6687, 1
    %v6696 = vrot.slane %v6688, 1
    %v6699 = vsel %vm3965, %v6545, %v6650
    %v6702 = vsel %vm3965, %v6546, %v6652
    %v6705 = vsel %vm3965, %v6547, %v6654
    %v6708 = vsel %vm3965, %v6548, %v6656
    %v6711 = vsel %vm3965, %v6549, %v6658
    %v6714 = vsel %vm3965, %v6550, %v6660
    %v6717 = vsel %vm3965, %v6551, %v6662
    %v6720 = vsel %vm3965, %v6552, %v6664
    %v6729 = vcombine.low %v6699, %v6689
    %v6731 = vunpack.c.l.s4 1983009808
    %v6732 = vunpack.c.0.s8 %v6731
    %v6733 = vlaneseq
    %v6734 = vshrl.u32 %v6733, 7
    %v6735 = vsub.s32 %v6732, %v6734
    %v6736 = vrot.slane %v6729, %v6735
    %v6737 = vcombine.low %v6702, %v6690
    %v6739 = vunpack.c.l.s4 1983009808
    %v6740 = vunpack.c.0.s8 %v6739
    %v6741 = vlaneseq
    %v6742 = vshrl.u32 %v6741, 7
    %v6743 = vsub.s32 %v6740, %v6742
    %v6744 = vrot.slane %v6737, %v6743
    %v6745 = vcombine.low %v6705, %v6691
    %v6747 = vunpack.c.l.s4 1983009808
    %v6748 = vunpack.c.0.s8 %v6747
    %v6749 = vlaneseq
    %v6750 = vshrl.u32 %v6749, 7
    %v6751 = vsub.s32 %v6748, %v6750
    %v6752 = vrot.slane %v6745, %v6751
    %v6753 = vcombine.low %v6708, %v6692
    %v6755 = vunpack.c.l.s4 1983009808
    %v6756 = vunpack.c.0.s8 %v6755
    %v6757 = vlaneseq
    %v6758 = vshrl.u32 %v6757, 7
    %v6759 = vsub.s32 %v6756, %v6758
    %v6760 = vrot.slane %v6753, %v6759
    %v6761 = vcombine.low %v6711, %v6693
    %v6763 = vunpack.c.l.s4 1983009808
    %v6764 = vunpack.c.0.s8 %v6763
    %v6765 = vlaneseq
    %v6766 = vshrl.u32 %v6765, 7
    %v6767 = vsub.s32 %v6764, %v6766
    %v6768 = vrot.slane %v6761, %v6767
    %v6769 = vcombine.low %v6714, %v6694
    %v6771 = vunpack.c.l.s4 1983009808
    %v6772 = vunpack.c.0.s8 %v6771
    %v6773 = vlaneseq
    %v6774 = vshrl.u32 %v6773, 7
    %v6775 = vsub.s32 %v6772, %v6774
    %v6776 = vrot.slane %v6769, %v6775
    %v6777 = vcombine.low %v6717, %v6695
    %v6779 = vunpack.c.l.s4 1983009808
    %v6780 = vunpack.c.0.s8 %v6779
    %v6781 = vlaneseq
    %v6782 = vshrl.u32 %v6781, 7
    %v6783 = vsub.s32 %v6780, %v6782
    %v6784 = vrot.slane %v6777, %v6783
    %v6785 = vcombine.low %v6720, %v6696
    %v6787 = vunpack.c.l.s4 1983009808
    %v6788 = vunpack.c.0.s8 %v6787
    %v6789 = vlaneseq
    %v6790 = vshrl.u32 %v6789, 7
    %v6791 = vsub.s32 %v6788, %v6790
    %v6792 = vrot.slane %v6785, %v6791
    %s6793 = scalar_lea.vmem %s5, 96
    %v6794 = vld [vmem:[%s6793] sm:$0xf]
    %v6795 = vld [vmem:[%s6793 + $0x4] sm:$0xf]
    %v6796 = vld [vmem:[%s6793 + $0x8] sm:$0xf]
    %v6797 = vld [vmem:[%s6793 + $0xc] sm:$0xf]
    %v6798 = vld [vmem:[%s6793 + $0x10] sm:$0xf]
    %v6799 = vld [vmem:[%s6793 + $0x14] sm:$0xf]
    %v6800 = vld [vmem:[%s6793 + $0x18] sm:$0xf]
    %v6801 = vld [vmem:[%s6793 + $0x1c] sm:$0xf]
    %v6802 = vld [vmem:[%s6793 + $0x20] sm:$0xf]
    %v6803 = vld [vmem:[%s6793 + $0x24] sm:$0xf]
    %v6804 = vld [vmem:[%s6793 + $0x28] sm:$0xf]
    %v6805 = vld [vmem:[%s6793 + $0x2c] sm:$0xf]
    %v6806 = vld [vmem:[%s6793 + $0x30] sm:$0xf]
    %v6807 = vld [vmem:[%s6793 + $0x34] sm:$0xf]
    %v6808 = vld [vmem:[%s6793 + $0x38] sm:$0xf]
    %v6809 = vld [vmem:[%s6793 + $0x3c] sm:$0xf]
    %v6810 = vld [vmem:[%s6793 + $0x40] sm:$0xf]
    %v6811 = vld [vmem:[%s6793 + $0x44] sm:$0xf]
    %v6812 = vld [vmem:[%s6793 + $0x48] sm:$0xf]
    %v6813 = vld [vmem:[%s6793 + $0x4c] sm:$0xf]
    %v6814 = vld [vmem:[%s6793 + $0x50] sm:$0xf]
    %v6815 = vld [vmem:[%s6793 + $0x54] sm:$0xf]
    %v6816 = vld [vmem:[%s6793 + $0x58] sm:$0xf]
    %v6817 = vld [vmem:[%s6793 + $0x5c] sm:$0xf]
    %v6818 = vcombine.low %v6736, %v6744
    %v6819 = vcombine.low %v6752, %v6760
    %v6821 = vunpack.c.l.s4 1983009808
    %v6822 = vunpack.c.0.s8 %v6821
    %v6823 = vlaneseq
    %v6824 = vshrl.u32 %v6823, 7
    %v6825 = vsub.s32 %v6822, %v6824
    %v6826 = vrot.slane %v6818, %v6825
    %v6828 = vunpack.c.l.s4 1983009808
    %v6829 = vunpack.c.0.s8 %v6828
    %v6830 = vlaneseq
    %v6831 = vshrl.u32 %v6830, 7
    %v6832 = vsub.s32 %v6829, %v6831
    %v6833 = vrot.slane %v6819, %v6832
    %v6834 = vcombine.low %v6826, %v6833
    %v6835 = vcombine.high %v6826, %v6833
    %v6836 = vcombine.low %v6768, %v6776
    %v6837 = vcombine.low %v6784, %v6792
    %v6839 = vunpack.c.l.s4 1983009808
    %v6840 = vunpack.c.0.s8 %v6839
    %v6841 = vlaneseq
    %v6842 = vshrl.u32 %v6841, 7
    %v6843 = vsub.s32 %v6840, %v6842
    %v6844 = vrot.slane %v6836, %v6843
    %v6846 = vunpack.c.l.s4 1983009808
    %v6847 = vunpack.c.0.s8 %v6846
    %v6848 = vlaneseq
    %v6849 = vshrl.u32 %v6848, 7
    %v6850 = vsub.s32 %v6847, %v6849
    %v6851 = vrot.slane %v6837, %v6850
    %v6852 = vcombine.low %v6844, %v6851
    %v6853 = vcombine.high %v6844, %v6851
    %v6880 = vunpack.c.l.b16 %v6794
    %v6881 = vunpack.c.l.b16 %v6795
    %v6882 = vunpack.c.l.b16 %v6796
    %v6883 = vunpack.c.l.b16 %v6797
    %v6884 = vunpack.c.l.b16 %v6798
    %v6885 = vunpack.c.l.b16 %v6799
    %v6886 = vunpack.c.l.b16 %v6800
    %v6887 = vunpack.c.l.b16 %v6801
    %v6888 = vunpack.c.l.b16 %v6802
    %v6889 = vunpack.c.l.b16 %v6803
    %v6890 = vunpack.c.l.b16 %v6804
    %v6891 = vunpack.c.l.b16 %v6805
    %v6892 = vunpack.c.l.b16 %v6806
    %v6893 = vunpack.c.l.b16 %v6807
    %v6894 = vunpack.c.l.b16 %v6808
    %v6895 = vunpack.c.l.b16 %v6809
    %v6896 = vunpack.c.l.b16 %v6810
    %v6897 = vunpack.c.l.b16 %v6811
    %v6898 = vunpack.c.l.b16 %v6812
    %v6899 = vunpack.c.l.b16 %v6813
    %v6900 = vunpack.c.l.b16 %v6814
    %v6901 = vunpack.c.l.b16 %v6815
    %v6902 = vunpack.c.l.b16 %v6816
    %v6903 = vunpack.c.l.b16 %v6817
    %v6904 = vpack.c.b16 %v6881, %v6880
    %v6905 = vpack.c.b16 %v6883, %v6882
    %v6906 = vpack.c.b16 %v6885, %v6884
    %v6907 = vpack.c.b16 %v6887, %v6886
    %v6908 = vpack.c.b16 %v6889, %v6888
    %v6909 = vpack.c.b16 %v6891, %v6890
    %v6910 = vpack.c.b16 %v6893, %v6892
    %v6911 = vpack.c.b16 %v6895, %v6894
    %v6912 = vpack.c.b16 %v6897, %v6896
    %v6913 = vpack.c.b16 %v6899, %v6898
    %v6914 = vpack.c.b16 %v6901, %v6900
    %v6915 = vpack.c.b16 %v6903, %v6902
    %v6929 = vsel %vm3965, %v6835, 0
    %v6932 = vsel %vm3965, %v6853, 0
    %6934 = vmatprep.subr.bf16.mxu0 0
    %6935 = vmatpush1.bf16.msra.mxu0 %v6904
    %6936 = vmatprep.subr.bf16.mxu0 0
    %6937 = vmatpush1.bf16.msra.mxu0 %v6905
    %6938 = vmatprep.subr.bf16.mxu0 0
    %6939 = vmatpush1.bf16.msra.mxu0 %v6906
    %6940 = vmatprep.subr.bf16.mxu0 0
    %6941 = vmatpush1.bf16.msra.mxu0 %v6907
    %6942 = vmatprep.subr.bf16.mxu0 0
    %6943 = vmatpush1.bf16.msra.mxu0 %v6908
    %6944 = vmatprep.subr.bf16.mxu0 0
    %6945 = vmatpush1.bf16.msra.mxu0 %v6909
    %6946 = vmatprep.subr.bf16.mxu0 0
    %6947 = vmatpush1.bf16.msra.mxu0 %v6910
    %6948 = vmatprep.subr.bf16.mxu0 0
    %6949 = vmatpush1.bf16.msra.mxu0 %v6911
    %6950 = vmatprep.subr.bf16.mxu0 0
    %6951 = vmatpush1.bf16.msra.mxu0 %v6912
    %6952 = vmatprep.subr.bf16.mxu0 0
    %6953 = vmatpush1.bf16.msra.mxu0 %v6913
    %6954 = vmatprep.subr.bf16.mxu0 0
    %6955 = vmatpush1.bf16.msra.mxu0 %v6914
    %6956 = vmatprep.subr.bf16.mxu0 0
    %6957 = vmatpush1.bf16.msra.mxu0 %v6915
    %6958 = vmatprep.subr.bf16.mxu0 0
    %6959 = vmatpush1.bf16.msra.mxu0 0
    %6960 = vmatprep.subr.bf16.mxu0 0
    %6961 = vmatpush1.bf16.msra.mxu0 0
    %6962 = vmatprep.subr.bf16.mxu0 0
    %6963 = vmatpush1.bf16.msra.mxu0 0
    %6964 = vmatprep.subr.bf16.mxu0 0
    %6965 = vmatpush1.bf16.msra.mxu0 0
    %6966 = vmatprep.mubr.bf16.mxu0 %v6929
    %6967 = vmatmul.mubr.bf16.gmra.mrb[0].mxu0 %v6834
    %v6968 = vpop.f32.mrb[0].mxu0
    %v6969 = vadd.f32 0.0, %v6968
    %v6970 = vpop.f32.mrb[0].mxu0
    %v6971 = vpop.f32.mrb[0].mxu0
    %v6972 = vadd.f32 0.0, %v6971
    %v6973 = vpop.f32.mrb[0].mxu0
    %6974 = vmatprep.mubr.bf16.mxu0 %v6932
    %6975 = vmatmul.mubr.bf16.gmra.mrb[0].mxu0 %v6852
    %v6976 = vpop.f32.mrb[0].mxu0
    %v6977 = vadd.f32 0.0, %v6976
    %v6978 = vpop.f32.mrb[0].mxu0
    %v6979 = vpop.f32.mrb[0].mxu0
    %v6980 = vadd.f32 0.0, %v6979
    %v6981 = vpop.f32.mrb[0].mxu0
    %6982 = vdwg.mxu0
    %v6983 = vcombine.low %v6464, %v6472
    %v6984 = vcombine.low %v6480, %v6488
    %v6986 = vunpack.c.l.s4 1983009808
    %v6987 = vunpack.c.0.s8 %v6986
    %v6988 = vlaneseq
    %v6989 = vshrl.u32 %v6988, 7
    %v6990 = vsub.s32 %v6987, %v6989
    %v6991 = vrot.slane %v6983, %v6990
    %v6993 = vunpack.c.l.s4 1983009808
    %v6994 = vunpack.c.0.s8 %v6993
    %v6995 = vlaneseq
    %v6996 = vshrl.u32 %v6995, 7
    %v6997 = vsub.s32 %v6994, %v6996
    %v6998 = vrot.slane %v6984, %v6997
    %v6999 = vcombine.low %v6991, %v6998
    %v7000 = vcombine.high %v6991, %v6998
    %v7001 = vcombine.low %v6496, %v6504
    %v7002 = vcombine.low %v6512, %v6520
    %v7004 = vunpack.c.l.s4 1983009808
    %v7005 = vunpack.c.0.s8 %v7004
    %v7006 = vlaneseq
    %v7007 = vshrl.u32 %v7006, 7
    %v7008 = vsub.s32 %v7005, %v7007
    %v7009 = vrot.slane %v7001, %v7008
    %v7011 = vunpack.c.l.s4 1983009808
    %v7012 = vunpack.c.0.s8 %v7011
    %v7013 = vlaneseq
    %v7014 = vshrl.u32 %v7013, 7
    %v7015 = vsub.s32 %v7012, %v7014
    %v7016 = vrot.slane %v7002, %v7015
    %v7017 = vcombine.low %v7009, %v7016
    %v7018 = vcombine.high %v7009, %v7016
    %v7045 = vunpack.c.l.b16 %v6521
    %v7046 = vunpack.c.l.b16 %v6522
    %v7047 = vunpack.c.l.b16 %v6523
    %v7048 = vunpack.c.l.b16 %v6524
    %v7049 = vunpack.c.l.b16 %v6525
    %v7050 = vunpack.c.l.b16 %v6526
    %v7051 = vunpack.c.l.b16 %v6527
    %v7052 = vunpack.c.l.b16 %v6528
    %v7053 = vunpack.c.l.b16 %v6529
    %v7054 = vunpack.c.l.b16 %v6530
    %v7055 = vunpack.c.l.b16 %v6531
    %v7056 = vunpack.c.l.b16 %v6532
    %v7057 = vunpack.c.l.b16 %v6533
    %v7058 = vunpack.c.l.b16 %v6534
    %v7059 = vunpack.c.l.b16 %v6535
    %v7060 = vunpack.c.l.b16 %v6536
    %v7061 = vunpack.c.l.b16 %v6537
    %v7062 = vunpack.c.l.b16 %v6538
    %v7063 = vunpack.c.l.b16 %v6539
    %v7064 = vunpack.c.l.b16 %v6540
    %v7065 = vunpack.c.l.b16 %v6541
    %v7066 = vunpack.c.l.b16 %v6542
    %v7067 = vunpack.c.l.b16 %v6543
    %v7068 = vunpack.c.l.b16 %v6544
    %v7069 = vpack.c.b16 %v7046, %v7045
    %v7070 = vpack.c.b16 %v7048, %v7047
    %v7071 = vpack.c.b16 %v7050, %v7049
    %v7072 = vpack.c.b16 %v7052, %v7051
    %v7073 = vpack.c.b16 %v7054, %v7053
    %v7074 = vpack.c.b16 %v7056, %v7055
    %v7075 = vpack.c.b16 %v7058, %v7057
    %v7076 = vpack.c.b16 %v7060, %v7059
    %v7077 = vpack.c.b16 %v7062, %v7061
    %v7078 = vpack.c.b16 %v7064, %v7063
    %v7079 = vpack.c.b16 %v7066, %v7065
    %v7080 = vpack.c.b16 %v7068, %v7067
    %v7094 = vsel %vm3965, %v7000, 0
    %v7097 = vsel %vm3965, %v7018, 0
    %7099 = vmatprep.subr.bf16.mxu0 0
    %7100 = vmatpush1.bf16.msra.mxu0 %v7069
    %7101 = vmatprep.subr.bf16.mxu0 0
    %7102 = vmatpush1.bf16.msra.mxu0 %v7070
    %7103 = vmatprep.subr.bf16.mxu0 0
    %7104 = vmatpush1.bf16.msra.mxu0 %v7071
    %7105 = vmatprep.subr.bf16.mxu0 0
    %7106 = vmatpush1.bf16.msra.mxu0 %v7072
    %7107 = vmatprep.subr.bf16.mxu0 0
    %7108 = vmatpush1.bf16.msra.mxu0 %v7073
    %7109 = vmatprep.subr.bf16.mxu0 0
    %7110 = vmatpush1.bf16.msra.mxu0 %v7074
    %7111 = vmatprep.subr.bf16.mxu0 0
    %7112 = vmatpush1.bf16.msra.mxu0 %v7075
    %7113 = vmatprep.subr.bf16.mxu0 0
    %7114 = vmatpush1.bf16.msra.mxu0 %v7076
    %7115 = vmatprep.subr.bf16.mxu0 0
    %7116 = vmatpush1.bf16.msra.mxu0 %v7077
    %7117 = vmatprep.subr.bf16.mxu0 0
    %7118 = vmatpush1.bf16.msra.mxu0 %v7078
    %7119 = vmatprep.subr.bf16.mxu0 0
    %7120 = vmatpush1.bf16.msra.mxu0 %v7079
    %7121 = vmatprep.subr.bf16.mxu0 0
    %7122 = vmatpush1.bf16.msra.mxu0 %v7080
    %7123 = vmatprep.subr.bf16.mxu0 0
    %7124 = vmatpush1.bf16.msra.mxu0 0
    %7125 = vmatprep.subr.bf16.mxu0 0
    %7126 = vmatpush1.bf16.msra.mxu0 0
    %7127 = vmatprep.subr.bf16.mxu0 0
    %7128 = vmatpush1.bf16.msra.mxu0 0
    %7129 = vmatprep.subr.bf16.mxu0 0
    %7130 = vmatpush1.bf16.msra.mxu0 0
    %7131 = vmatprep.mubr.bf16.mxu0 %v7094
    %7132 = vmatmul.mubr.bf16.gmra.mrb[0].mxu0 %v6999
    %v7133 = vpop.f32.mrb[0].mxu0
    %v7134 = vadd.f32 %v6969, %v7133
    %v7135 = vpop.f32.mrb[0].mxu0
    %v7136 = vpop.f32.mrb[0].mxu0
    %v7137 = vadd.f32 %v6972, %v7136
    %v7138 = vpop.f32.mrb[0].mxu0
    %7139 = vmatprep.mubr.bf16.mxu0 %v7097
    %7140 = vmatmul.mubr.bf16.gmra.mrb[0].mxu0 %v7017
    %v7141 = vpop.f32.mrb[0].mxu0
    %v7142 = vadd.f32 %v6977, %v7141
    %v7143 = vpop.f32.mrb[0].mxu0
    %v7144 = vpop.f32.mrb[0].mxu0
    %v7145 = vadd.f32 %v6980, %v7144
    %v7146 = vpop.f32.mrb[0].mxu0
    %7147 = vdwg.mxu0
    %s7148 = scalar_lea.vmem [#allocation3], 8
    %v7149 = vld [vmem:[%s7148] sm:$0x3]
    %v7150 = vld [vmem:[%s7148 + $0x4] sm:$0x3]
    %v7151 = vld [vmem:[%s7148 + $0x8] sm:$0x3]
    %v7152 = vld [vmem:[%s7148 + $0xc] sm:$0x3]
    %v7153 = vld [vmem:[%s7148 + $0x18] sm:$0x3]
    %v7154 = vld [vmem:[%s7148 + $0x1c] sm:$0x3]
    %v7155 = vld [vmem:[%s7148 + $0x20] sm:$0x3]
    %v7156 = vld [vmem:[%s7148 + $0x24] sm:$0x3]
    %v7157 = vld [vmem:[%s7148] sm:$0x7]
    %v7158 = vld [vmem:[%s7148 + $0x4] sm:$0x7]
    %v7159 = vld [vmem:[%s7148 + $0x8] sm:$0x7]
    %v7160 = vld [vmem:[%s7148 + $0xc] sm:$0x7]
    %v7161 = vld [vmem:[%s7148 + $0x18] sm:$0x7]
    %v7162 = vld [vmem:[%s7148 + $0x1c] sm:$0x7]
    %v7163 = vld [vmem:[%s7148 + $0x20] sm:$0x7]
    %v7164 = vld [vmem:[%s7148 + $0x24] sm:$0x7]
    %v7165 = vld [vmem:[%s7148] sm:$0x6]
    %v7166 = vld [vmem:[%s7148 + $0x4] sm:$0x6]
    %v7167 = vld [vmem:[%s7148 + $0x8] sm:$0x6]
    %v7168 = vld [vmem:[%s7148 + $0xc] sm:$0x6]
    %v7169 = vld [vmem:[%s7148 + $0x18] sm:$0x6]
    %v7170 = vld [vmem:[%s7148 + $0x1c] sm:$0x6]
    %v7171 = vld [vmem:[%s7148 + $0x20] sm:$0x6]
    %v7172 = vld [vmem:[%s7148 + $0x24] sm:$0x6]
    %v7181 = vunpack.c.l.b16 %v7157
    %v7182 = vunpack.c.l.b16 %v7158
    %v7183 = vunpack.c.l.b16 %v7159
    %v7184 = vunpack.c.l.b16 %v7160
    %v7185 = vunpack.c.l.b16 %v7161
    %v7186 = vunpack.c.l.b16 %v7162
    %v7187 = vunpack.c.l.b16 %v7163
    %v7188 = vunpack.c.l.b16 %v7164
    %v7189 = vpack.c.b16 %v7181, %v7181
    %v7190 = vpack.c.b16 %v7182, %v7182
    %v7191 = vpack.c.b16 %v7183, %v7183
    %v7192 = vpack.c.b16 %v7184, %v7184
    %v7193 = vpack.c.b16 %v7185, %v7185
    %v7194 = vpack.c.b16 %v7186, %v7186
    %v7195 = vpack.c.b16 %v7187, %v7187
    %v7196 = vpack.c.b16 %v7188, %v7188
    %v7198 = vshrl.u32 %v7189, 16
    %v7200 = vshll.u32 %v7189, 16
    %v7202 = vrot.slane %v7200, 1
    %v7203 = vor.u32 %v7198, %v7202
    %v7205 = vshrl.u32 %v7190, 16
    %v7207 = vshll.u32 %v7190, 16
    %v7209 = vrot.slane %v7207, 1
    %v7210 = vor.u32 %v7205, %v7209
    %v7212 = vshrl.u32 %v7191, 16
    %v7214 = vshll.u32 %v7191, 16
    %v7216 = vrot.slane %v7214, 1
    %v7217 = vor.u32 %v7212, %v7216
    %v7219 = vshrl.u32 %v7192, 16
    %v7221 = vshll.u32 %v7192, 16
    %v7223 = vrot.slane %v7221, 1
    %v7224 = vor.u32 %v7219, %v7223
    %v7226 = vshrl.u32 %v7193, 16
    %v7228 = vshll.u32 %v7193, 16
    %v7230 = vrot.slane %v7228, 1
    %v7231 = vor.u32 %v7226, %v7230
    %v7233 = vshrl.u32 %v7194, 16
    %v7235 = vshll.u32 %v7194, 16
    %v7237 = vrot.slane %v7235, 1
    %v7238 = vor.u32 %v7233, %v7237
    %v7240 = vshrl.u32 %v7195, 16
    %v7242 = vshll.u32 %v7195, 16
    %v7244 = vrot.slane %v7242, 1
    %v7245 = vor.u32 %v7240, %v7244
    %v7247 = vshrl.u32 %v7196, 16
    %v7249 = vshll.u32 %v7196, 16
    %v7251 = vrot.slane %v7249, 1
    %v7252 = vor.u32 %v7247, %v7251
    %7253 = vrot.lane.b32.xlu0 %v7203, 64
    %v7254 = vpop.permute.xlu0 %7253
    %7255 = vrot.lane.b32.xlu0 %v7210, 64
    %v7256 = vpop.permute.xlu0 %7255
    %7257 = vrot.lane.b32.xlu0 %v7217, 64
    %v7258 = vpop.permute.xlu0 %7257
    %7259 = vrot.lane.b32.xlu0 %v7224, 64
    %v7260 = vpop.permute.xlu0 %7259
    %7261 = vrot.lane.b32.xlu0 %v7231, 64
    %v7262 = vpop.permute.xlu0 %7261
    %7263 = vrot.lane.b32.xlu0 %v7238, 64
    %v7264 = vpop.permute.xlu0 %7263
    %7265 = vrot.lane.b32.xlu0 %v7245, 64
    %v7266 = vpop.permute.xlu0 %7265
    %7267 = vrot.lane.b32.xlu0 %v7252, 64
    %v7268 = vpop.permute.xlu0 %7267
    %v7277 = vunpack.c.l.b16 %v7165
    %v7278 = vunpack.c.l.b16 %v7166
    %v7279 = vunpack.c.l.b16 %v7167
    %v7280 = vunpack.c.l.b16 %v7168
    %v7281 = vunpack.c.l.b16 %v7169
    %v7282 = vunpack.c.l.b16 %v7170
    %v7283 = vunpack.c.l.b16 %v7171
    %v7284 = vunpack.c.l.b16 %v7172
    %v7285 = vpack.c.b16 %v7277, %v7277
    %v7286 = vpack.c.b16 %v7278, %v7278
    %v7287 = vpack.c.b16 %v7279, %v7279
    %v7288 = vpack.c.b16 %v7280, %v7280
    %v7289 = vpack.c.b16 %v7281, %v7281
    %v7290 = vpack.c.b16 %v7282, %v7282
    %v7291 = vpack.c.b16 %v7283, %v7283
    %v7292 = vpack.c.b16 %v7284, %v7284
    %v7293 = vrot.slane %v7285, 1
    %v7294 = vrot.slane %v7286, 1
    %v7295 = vrot.slane %v7287, 1
    %v7296 = vrot.slane %v7288, 1
    %v7297 = vrot.slane %v7289, 1
    %v7298 = vrot.slane %v7290, 1
    %v7299 = vrot.slane %v7291, 1
    %v7300 = vrot.slane %v7292, 1
    %v7303 = vsel %vm3965, %v7149, %v7254
    %v7306 = vsel %vm3965, %v7150, %v7256
    %v7309 = vsel %vm3965, %v7151, %v7258
    %v7312 = vsel %vm3965, %v7152, %v7260
    %v7315 = vsel %vm3965, %v7153, %v7262
    %v7318 = vsel %vm3965, %v7154, %v7264
    %v7321 = vsel %vm3965, %v7155, %v7266
    %v7324 = vsel %vm3965, %v7156, %v7268
    %v7333 = vcombine.low %v7303, %v7293
    %v7335 = vunpack.c.l.s4 1983009808
    %v7336 = vunpack.c.0.s8 %v7335
    %v7337 = vlaneseq
    %v7338 = vshrl.u32 %v7337, 7
    %v7339 = vsub.s32 %v7336, %v7338
    %v7340 = vrot.slane %v7333, %v7339
    %v7341 = vcombine.low %v7306, %v7294
    %v7343 = vunpack.c.l.s4 1983009808
    %v7344 = vunpack.c.0.s8 %v7343
    %v7345 = vlaneseq
    %v7346 = vshrl.u32 %v7345, 7
    %v7347 = vsub.s32 %v7344, %v7346
    %v7348 = vrot.slane %v7341, %v7347
    %v7349 = vcombine.low %v7309, %v7295
    %v7351 = vunpack.c.l.s4 1983009808
    %v7352 = vunpack.c.0.s8 %v7351
    %v7353 = vlaneseq
    %v7354 = vshrl.u32 %v7353, 7
    %v7355 = vsub.s32 %v7352, %v7354
    %v7356 = vrot.slane %v7349, %v7355
    %v7357 = vcombine.low %v7312, %v7296
    %v7359 = vunpack.c.l.s4 1983009808
    %v7360 = vunpack.c.0.s8 %v7359
    %v7361 = vlaneseq
    %v7362 = vshrl.u32 %v7361, 7
    %v7363 = vsub.s32 %v7360, %v7362
    %v7364 = vrot.slane %v7357, %v7363
    %v7365 = vcombine.low %v7315, %v7297
    %v7367 = vunpack.c.l.s4 1983009808
    %v7368 = vunpack.c.0.s8 %v7367
    %v7369 = vlaneseq
    %v7370 = vshrl.u32 %v7369, 7
    %v7371 = vsub.s32 %v7368, %v7370
    %v7372 = vrot.slane %v7365, %v7371
    %v7373 = vcombine.low %v7318, %v7298
    %v7375 = vunpack.c.l.s4 1983009808
    %v7376 = vunpack.c.0.s8 %v7375
    %v7377 = vlaneseq
    %v7378 = vshrl.u32 %v7377, 7
    %v7379 = vsub.s32 %v7376, %v7378
    %v7380 = vrot.slane %v7373, %v7379
    %v7381 = vcombine.low %v7321, %v7299
    %v7383 = vunpack.c.l.s4 1983009808
    %v7384 = vunpack.c.0.s8 %v7383
    %v7385 = vlaneseq
    %v7386 = vshrl.u32 %v7385, 7
    %v7387 = vsub.s32 %v7384, %v7386
    %v7388 = vrot.slane %v7381, %v7387
    %v7389 = vcombine.low %v7324, %v7300
    %v7391 = vunpack.c.l.s4 1983009808
    %v7392 = vunpack.c.0.s8 %v7391
    %v7393 = vlaneseq
    %v7394 = vshrl.u32 %v7393, 7
    %v7395 = vsub.s32 %v7392, %v7394
    %v7396 = vrot.slane %v7389, %v7395
    %s7397 = scalar_lea.vmem %s5, 192
    %v7398 = vld [vmem:[%s7397] sm:$0xf]
    %v7399 = vld [vmem:[%s7397 + $0x4] sm:$0xf]
    %v7400 = vld [vmem:[%s7397 + $0x8] sm:$0xf]
    %v7401 = vld [vmem:[%s7397 + $0xc] sm:$0xf]
    %v7402 = vld [vmem:[%s7397 + $0x10] sm:$0xf]
    %v7403 = vld [vmem:[%s7397 + $0x14] sm:$0xf]
    %v7404 = vld [vmem:[%s7397 + $0x18] sm:$0xf]
    %v7405 = vld [vmem:[%s7397 + $0x1c] sm:$0xf]
    %v7406 = vld [vmem:[%s7397 + $0x20] sm:$0xf]
    %v7407 = vld [vmem:[%s7397 + $0x24] sm:$0xf]
    %v7408 = vld [vmem:[%s7397 + $0x28] sm:$0xf]
    %v7409 = vld [vmem:[%s7397 + $0x2c] sm:$0xf]
    %v7410 = vld [vmem:[%s7397 + $0x30] sm:$0xf]
    %v7411 = vld [vmem:[%s7397 + $0x34] sm:$0xf]
    %v7412 = vld [vmem:[%s7397 + $0x38] sm:$0xf]
    %v7413 = vld [vmem:[%s7397 + $0x3c] sm:$0xf]
    %v7414 = vld [vmem:[%s7397 + $0x40] sm:$0xf]
    %v7415 = vld [vmem:[%s7397 + $0x44] sm:$0xf]
    %v7416 = vld [vmem:[%s7397 + $0x48] sm:$0xf]
    %v7417 = vld [vmem:[%s7397 + $0x4c] sm:$0xf]
    %v7418 = vld [vmem:[%s7397 + $0x50] sm:$0xf]
    %v7419 = vld [vmem:[%s7397 + $0x54] sm:$0xf]
    %v7420 = vld [vmem:[%s7397 + $0x58] sm:$0xf]
    %v7421 = vld [vmem:[%s7397 + $0x5c] sm:$0xf]
    %v7422 = vcombine.low %v7340, %v7348
    %v7423 = vcombine.low %v7356, %v7364
    %v7425 = vunpack.c.l.s4 1983009808
    %v7426 = vunpack.c.0.s8 %v7425
    %v7427 = vlaneseq
    %v7428 = vshrl.u32 %v7427, 7
    %v7429 = vsub.s32 %v7426, %v7428
    %v7430 = vrot.slane %v7422, %v7429
    %v7432 = vunpack.c.l.s4 1983009808
    %v7433 = vunpack.c.0.s8 %v7432
    %v7434 = vlaneseq
    %v7435 = vshrl.u32 %v7434, 7
    %v7436 = vsub.s32 %v7433, %v7435
    %v7437 = vrot.slane %v7423, %v7436
    %v7438 = vcombine.low %v7430, %v7437
    %v7439 = vcombine.high %v7430, %v7437
    %v7440 = vcombine.low %v7372, %v7380
    %v7441 = vcombine.low %v7388, %v7396
    %v7443 = vunpack.c.l.s4 1983009808
    %v7444 = vunpack.c.0.s8 %v7443
    %v7445 = vlaneseq
    %v7446 = vshrl.u32 %v7445, 7
    %v7447 = vsub.s32 %v7444, %v7446
    %v7448 = vrot.slane %v7440, %v7447
    %v7450 = vunpack.c.l.s4 1983009808
    %v7451 = vunpack.c.0.s8 %v7450
    %v7452 = vlaneseq
    %v7453 = vshrl.u32 %v7452, 7
    %v7454 = vsub.s32 %v7451, %v7453
    %v7455 = vrot.slane %v7441, %v7454
    %v7456 = vcombine.low %v7448, %v7455
    %v7457 = vcombine.high %v7448, %v7455
    %v7484 = vunpack.c.l.b16 %v7398
    %v7485 = vunpack.c.l.b16 %v7399
    %v7486 = vunpack.c.l.b16 %v7400
    %v7487 = vunpack.c.l.b16 %v7401
    %v7488 = vunpack.c.l.b16 %v7402
    %v7489 = vunpack.c.l.b16 %v7403
    %v7490 = vunpack.c.l.b16 %v7404
    %v7491 = vunpack.c.l.b16 %v7405
    %v7492 = vunpack.c.l.b16 %v7406
    %v7493 = vunpack.c.l.b16 %v7407
    %v7494 = vunpack.c.l.b16 %v7408
    %v7495 = vunpack.c.l.b16 %v7409
    %v7496 = vunpack.c.l.b16 %v7410
    %v7497 = vunpack.c.l.b16 %v7411
    %v7498 = vunpack.c.l.b16 %v7412
    %v7499 = vunpack.c.l.b16 %v7413
    %v7500 = vunpack.c.l.b16 %v7414
    %v7501 = vunpack.c.l.b16 %v7415
    %v7502 = vunpack.c.l.b16 %v7416
    %v7503 = vunpack.c.l.b16 %v7417
    %v7504 = vunpack.c.l.b16 %v7418
    %v7505 = vunpack.c.l.b16 %v7419
    %v7506 = vunpack.c.l.b16 %v7420
    %v7507 = vunpack.c.l.b16 %v7421
    %v7508 = vpack.c.b16 %v7485, %v7484
    %v7509 = vpack.c.b16 %v7487, %v7486
    %v7510 = vpack.c.b16 %v7489, %v7488
    %v7511 = vpack.c.b16 %v7491, %v7490
    %v7512 = vpack.c.b16 %v7493, %v7492
    %v7513 = vpack.c.b16 %v7495, %v7494
    %v7514 = vpack.c.b16 %v7497, %v7496
    %v7515 = vpack.c.b16 %v7499, %v7498
    %v7516 = vpack.c.b16 %v7501, %v7500
    %v7517 = vpack.c.b16 %v7503, %v7502
    %v7518 = vpack.c.b16 %v7505, %v7504
    %v7519 = vpack.c.b16 %v7507, %v7506
    %v7533 = vsel %vm3965, %v7439, 0
    %v7536 = vsel %vm3965, %v7457, 0
    %7538 = vmatprep.subr.bf16.mxu0 0
    %7539 = vmatpush1.bf16.msra.mxu0 %v7508
    %7540 = vmatprep.subr.bf16.mxu0 0
    %7541 = vmatpush1.bf16.msra.mxu0 %v7509
    %7542 = vmatprep.subr.bf16.mxu0 0
    %7543 = vmatpush1.bf16.msra.mxu0 %v7510
    %7544 = vmatprep.subr.bf16.mxu0 0
    %7545 = vmatpush1.bf16.msra.mxu0 %v7511
    %7546 = vmatprep.subr.bf16.mxu0 0
    %7547 = vmatpush1.bf16.msra.mxu0 %v7512
    %7548 = vmatprep.subr.bf16.mxu0 0
    %7549 = vmatpush1.bf16.msra.mxu0 %v7513
    %7550 = vmatprep.subr.bf16.mxu0 0
    %7551 = vmatpush1.bf16.msra.mxu0 %v7514
    %7552 = vmatprep.subr.bf16.mxu0 0
    %7553 = vmatpush1.bf16.msra.mxu0 %v7515
    %7554 = vmatprep.subr.bf16.mxu0 0
    %7555 = vmatpush1.bf16.msra.mxu0 %v7516
    %7556 = vmatprep.subr.bf16.mxu0 0
    %7557 = vmatpush1.bf16.msra.mxu0 %v7517
    %7558 = vmatprep.subr.bf16.mxu0 0
    %7559 = vmatpush1.bf16.msra.mxu0 %v7518
    %7560 = vmatprep.subr.bf16.mxu0 0
    %7561 = vmatpush1.bf16.msra.mxu0 %v7519
    %7562 = vmatprep.subr.bf16.mxu0 0
    %7563 = vmatpush1.bf16.msra.mxu0 0
    %7564 = vmatprep.subr.bf16.mxu0 0
    %7565 = vmatpush1.bf16.msra.mxu0 0
    %7566 = vmatprep.subr.bf16.mxu0 0
    %7567 = vmatpush1.bf16.msra.mxu0 0
    %7568 = vmatprep.subr.bf16.mxu0 0
    %7569 = vmatpush1.bf16.msra.mxu0 0
    %7570 = vmatprep.mubr.bf16.mxu0 %v7533
    %7571 = vmatmul.mubr.bf16.gmra.mrb[0].mxu0 %v7438
    %v7572 = vpop.f32.mrb[0].mxu0
    %v7573 = vadd.f32 0.0, %v7572
    %v7574 = vpop.f32.mrb[0].mxu0
    %v7575 = vpop.f32.mrb[0].mxu0
    %v7576 = vadd.f32 0.0, %v7575
    %v7577 = vpop.f32.mrb[0].mxu0
    %7578 = vmatprep.mubr.bf16.mxu0 %v7536
    %7579 = vmatmul.mubr.bf16.gmra.mrb[0].mxu0 %v7456
    %v7580 = vpop.f32.mrb[0].mxu0
    %v7581 = vadd.f32 0.0, %v7580
    %v7582 = vpop.f32.mrb[0].mxu0
    %v7583 = vpop.f32.mrb[0].mxu0
    %v7584 = vadd.f32 0.0, %v7583
    %v7585 = vpop.f32.mrb[0].mxu0
    %7586 = vdwg.mxu0
    %v7587 = vadd.f32 %v7134, %v7573
    %v7588 = vadd.f32 %v7137, %v7576
    %v7589 = vadd.f32 %v7142, %v7581
    %v7590 = vadd.f32 %v7145, %v7584
    %v7591 = vld [vmem:[%s6] sm:$0x1]
    %v7592 = vlaneseq
    %v7593 = vshrl.u32 %v7592, 7
    %v7594 = vsub.s32 0, %v7593
    %v7595 = vrot.slane %v7591, %v7594
    %v7596 = vadd.f32 %v7587, %v7595
    %v7597 = vadd.f32 %v7588, %v7595
    %v7598 = vadd.f32 %v7589, %v7595
    %v7599 = vadd.f32 %v7590, %v7595
    %v7600 = vmax.f32 %v7596, 0.0
    %v7601 = vmax.f32 %v7597, 0.0
    %v7602 = vmax.f32 %v7598, 0.0
    %v7603 = vmax.f32 %v7599, 0.0
    %v7604 = vld [vmem:[%s6 + $0x1] sm:$0x1]
    %v7605 = vlaneseq
    %v7606 = vshrl.u32 %v7605, 7
    %v7607 = vsub.s32 0, %v7606
    %v7608 = vrot.slane %v7604, %v7607
    %v7609 = vmul.f32 %v7600, %v7608
    %v7610 = vmul.f32 %v7601, %v7608
    %v7611 = vmul.f32 %v7602, %v7608
    %v7612 = vmul.f32 %v7603, %v7608
    %v7613 = vld [vmem:[%s6 + $0x2] sm:$0x1]
    %v7614 = vlaneseq
    %v7615 = vshrl.u32 %v7614, 7
    %v7616 = vsub.s32 0, %v7615
    %v7617 = vrot.slane %v7613, %v7616
    %v7618 = vadd.f32 %v7609, %v7617
    %v7619 = vadd.f32 %v7610, %v7617
    %v7620 = vadd.f32 %v7611, %v7617
    %v7621 = vadd.f32 %v7612, %v7617
    %v7626 = vcombine.high %v7618, %v7618
    %v7627 = vcombine.high %v7619, %v7619
    %v7628 = vcombine.high %v7620, %v7620
    %v7629 = vcombine.high %v7621, %v7621
    %vm7634 = vcmask 1043456
    %v7635 = vsel %vm7634, %v7618, -inf
    %v7636 = vsel %vm7634, %v7626, -inf
    %v7637 = vmax.f32 %v7635, %v7636
    %v7638 = vsel %vm7634, %v7619, -inf
    %v7639 = vsel %vm7634, %v7627, -inf
    %v7640 = vmax.f32 %v7638, %v7639
    %v7641 = vsel %vm7634, %v7620, -inf
    %v7642 = vsel %vm7634, %v7628, -inf
    %v7643 = vmax.f32 %v7641, %v7642
    %v7644 = vsel %vm7634, %v7621, -inf
    %v7645 = vsel %vm7634, %v7629, -inf
    %v7646 = vmax.f32 %v7644, %v7645
    %v7652 = vunpack.c.l.s4 1983009808
    %v7653 = vunpack.c.0.s8 %v7652
    %v7654 = vlaneseq
    %v7655 = vshrl.u32 %v7654, 7
    %v7656 = vsub.s32 %v7653, %v7655
    %v7657 = vrot.slane %v7637, %v7656
    %v7658 = vcombine.high %v7657, %v7657
    %v7660 = vunpack.c.l.s4 1983009808
    %v7661 = vunpack.c.0.s8 %v7660
    %v7662 = vlaneseq
    %v7663 = vshrl.u32 %v7662, 7
    %v7664 = vsub.s32 %v7661, %v7663
    %v7665 = vrot.slane %v7640, %v7664
    %v7666 = vcombine.high %v7665, %v7665
    %v7668 = vunpack.c.l.s4 1983009808
    %v7669 = vunpack.c.0.s8 %v7668
    %v7670 = vlaneseq
    %v7671 = vshrl.u32 %v7670, 7
    %v7672 = vsub.s32 %v7669, %v7671
    %v7673 = vrot.slane %v7643, %v7672
    %v7674 = vcombine.high %v7673, %v7673
    %v7676 = vunpack.c.l.s4 1983009808
    %v7677 = vunpack.c.0.s8 %v7676
    %v7678 = vlaneseq
    %v7679 = vshrl.u32 %v7678, 7
    %v7680 = vsub.s32 %v7677, %v7679
    %v7681 = vrot.slane %v7646, %v7680
    %v7682 = vcombine.high %v7681, %v7681
    %vm7691 = vcmask 1041408
    %v7692 = vsel %vm7691, %v7657, -inf
    %v7693 = vrot.slane %v7692, 4
    %v7694 = vmax.f32 %v7692, %v7693
    %v7695 = vrot.slane %v7694, 2
    %v7696 = vmax.f32 %v7694, %v7695
    %v7697 = vrot.slane %v7696, 1
    %v7698 = vmax.f32 %v7696, %v7697
    %v7699 = vsel %vm7691, %v7658, -inf
    %v7700 = vrot.slane %v7699, 4
    %v7701 = vmax.f32 %v7699, %v7700
    %v7702 = vrot.slane %v7701, 2
    %v7703 = vmax.f32 %v7701, %v7702
    %v7704 = vrot.slane %v7703, 1
    %v7705 = vmax.f32 %v7703, %v7704
    %v7706 = vsel %vm7691, %v7665, -inf
    %v7707 = vrot.slane %v7706, 4
    %v7708 = vmax.f32 %v7706, %v7707
    %v7709 = vrot.slane %v7708, 2
    %v7710 = vmax.f32 %v7708, %v7709
    %v7711 = vrot.slane %v7710, 1
    %v7712 = vmax.f32 %v7710, %v7711
    %v7713 = vsel %vm7691, %v7666, -inf
    %v7714 = vrot.slane %v7713, 4
    %v7715 = vmax.f32 %v7713, %v7714
    %v7716 = vrot.slane %v7715, 2
    %v7717 = vmax.f32 %v7715, %v7716
    %v7718 = vrot.slane %v7717, 1
    %v7719 = vmax.f32 %v7717, %v7718
    %v7720 = vsel %vm7691, %v7673, -inf
    %v7721 = vrot.slane %v7720, 4
    %v7722 = vmax.f32 %v7720, %v7721
    %v7723 = vrot.slane %v7722, 2
    %v7724 = vmax.f32 %v7722, %v7723
    %v7725 = vrot.slane %v7724, 1
    %v7726 = vmax.f32 %v7724, %v7725
    %v7727 = vsel %vm7691, %v7674, -inf
    %v7728 = vrot.slane %v7727, 4
    %v7729 = vmax.f32 %v7727, %v7728
    %v7730 = vrot.slane %v7729, 2
    %v7731 = vmax.f32 %v7729, %v7730
    %v7732 = vrot.slane %v7731, 1
    %v7733 = vmax.f32 %v7731, %v7732
    %v7734 = vsel %vm7691, %v7681, -inf
    %v7735 = vrot.slane %v7734, 4
    %v7736 = vmax.f32 %v7734, %v7735
    %v7737 = vrot.slane %v7736, 2
    %v7738 = vmax.f32 %v7736, %v7737
    %v7739 = vrot.slane %v7738, 1
    %v7740 = vmax.f32 %v7738, %v7739
    %v7741 = vsel %vm7691, %v7682, -inf
    %v7742 = vrot.slane %v7741, 4
    %v7743 = vmax.f32 %v7741, %v7742
    %v7744 = vrot.slane %v7743, 2
    %v7745 = vmax.f32 %v7743, %v7744
    %v7746 = vrot.slane %v7745, 1
    %v7747 = vmax.f32 %v7745, %v7746
    %v7748 = vpack.c.bf16 %v7698, %v7698
    %v7749 = vpack.c.bf16 %v7705, %v7705
    %v7750 = vpack.c.bf16 %v7712, %v7712
    %v7751 = vpack.c.bf16 %v7719, %v7719
    %v7752 = vpack.c.bf16 %v7726, %v7726
    %v7753 = vpack.c.bf16 %v7733, %v7733
    %v7754 = vpack.c.bf16 %v7740, %v7740
    %v7755 = vpack.c.bf16 %v7747, %v7747
    %v7765 = vunpack.c.l.s4 1983009808
    %v7766 = vunpack.c.0.s8 %v7765
    %v7767 = vlaneseq
    %v7768 = vshrl.u32 %v7767, 7
    %v7769 = vsub.s32 %v7766, %v7768
    %v7770 = vrot.slane %v7748, %v7769
    %v7772 = vunpack.c.l.s4 1983009808
    %v7773 = vunpack.c.0.s8 %v7772
    %v7774 = vlaneseq
    %v7775 = vshrl.u32 %v7774, 7
    %v7776 = vsub.s32 %v7773, %v7775
    %v7777 = vrot.slane %v7749, %v7776
    %v7779 = vunpack.c.l.s4 1983009808
    %v7780 = vunpack.c.0.s8 %v7779
    %v7781 = vlaneseq
    %v7782 = vshrl.u32 %v7781, 7
    %v7783 = vsub.s32 %v7780, %v7782
    %v7784 = vrot.slane %v7750, %v7783
    %v7786 = vunpack.c.l.s4 1983009808
    %v7787 = vunpack.c.0.s8 %v7786
    %v7788 = vlaneseq
    %v7789 = vshrl.u32 %v7788, 7
    %v7790 = vsub.s32 %v7787, %v7789
    %v7791 = vrot.slane %v7751, %v7790
    %v7793 = vunpack.c.l.s4 1983009808
    %v7794 = vunpack.c.0.s8 %v7793
    %v7795 = vlaneseq
    %v7796 = vshrl.u32 %v7795, 7
    %v7797 = vsub.s32 %v7794, %v7796
    %v7798 = vrot.slane %v7752, %v7797
    %v7800 = vunpack.c.l.s4 1983009808
    %v7801 = vunpack.c.0.s8 %v7800
    %v7802 = vlaneseq
    %v7803 = vshrl.u32 %v7802, 7
    %v7804 = vsub.s32 %v7801, %v7803
    %v7805 = vrot.slane %v7753, %v7804
    %v7807 = vunpack.c.l.s4 1983009808
    %v7808 = vunpack.c.0.s8 %v7807
    %v7809 = vlaneseq
    %v7810 = vshrl.u32 %v7809, 7
    %v7811 = vsub.s32 %v7808, %v7810
    %v7812 = vrot.slane %v7754, %v7811
    %v7814 = vunpack.c.l.s4 1983009808
    %v7815 = vunpack.c.0.s8 %v7814
    %v7816 = vlaneseq
    %v7817 = vshrl.u32 %v7816, 7
    %v7818 = vsub.s32 %v7815, %v7817
    %v7819 = vrot.slane %v7755, %v7818
    %v7821 = vunpack.c.l.s4 1983009808
    %v7822 = vunpack.c.0.s8 %v7821
    %v7823 = vlaneseq
    %v7824 = vshrl.u32 %v7823, 7
    %v7825 = vsub.s32 %v7822, %v7824
    %v7826 = vrot.slane %v7770, %v7825
    %v7828 = vunpack.c.l.s4 1983009808
    %v7829 = vunpack.c.0.s8 %v7828
    %v7830 = vlaneseq
    %v7831 = vshrl.u32 %v7830, 7
    %v7832 = vsub.s32 %v7829, %v7831
    %v7833 = vrot.slane %v7777, %v7832
    %v7835 = vunpack.c.l.s4 1983009808
    %v7836 = vunpack.c.0.s8 %v7835
    %v7837 = vlaneseq
    %v7838 = vshrl.u32 %v7837, 7
    %v7839 = vsub.s32 %v7836, %v7838
    %v7840 = vrot.slane %v7784, %v7839
    %v7842 = vunpack.c.l.s4 1983009808
    %v7843 = vunpack.c.0.s8 %v7842
    %v7844 = vlaneseq
    %v7845 = vshrl.u32 %v7844, 7
    %v7846 = vsub.s32 %v7843, %v7845
    %v7847 = vrot.slane %v7791, %v7846
    %v7849 = vunpack.c.l.s4 1983009808
    %v7850 = vunpack.c.0.s8 %v7849
    %v7851 = vlaneseq
    %v7852 = vshrl.u32 %v7851, 7
    %v7853 = vsub.s32 %v7850, %v7852
    %v7854 = vrot.slane %v7798, %v7853
    %v7856 = vunpack.c.l.s4 1983009808
    %v7857 = vunpack.c.0.s8 %v7856
    %v7858 = vlaneseq
    %v7859 = vshrl.u32 %v7858, 7
    %v7860 = vsub.s32 %v7857, %v7859
    %v7861 = vrot.slane %v7805, %v7860
    %v7863 = vunpack.c.l.s4 1983009808
    %v7864 = vunpack.c.0.s8 %v7863
    %v7865 = vlaneseq
    %v7866 = vshrl.u32 %v7865, 7
    %v7867 = vsub.s32 %v7864, %v7866
    %v7868 = vrot.slane %v7812, %v7867
    %v7870 = vunpack.c.l.s4 1983009808
    %v7871 = vunpack.c.0.s8 %v7870
    %v7872 = vlaneseq
    %v7873 = vshrl.u32 %v7872, 7
    %v7874 = vsub.s32 %v7871, %v7873
    %v7875 = vrot.slane %v7819, %v7874
    %v7876 = vunpack.c.l.b16 %v7826
    %v7877 = vunpack.c.l.b16 %v7833
    %v7878 = vunpack.c.l.b16 %v7840
    %v7879 = vunpack.c.l.b16 %v7847
    %v7880 = vunpack.c.l.b16 %v7854
    %v7881 = vunpack.c.l.b16 %v7861
    %v7882 = vunpack.c.l.b16 %v7868
    %v7883 = vunpack.c.l.b16 %v7875
    %v7884 = vrot.slane %v7876, 7
    %v7885 = vrot.slane %v7877, 6
    %v7886 = vsel %vm3280, %v7885, %v7884
    %v7887 = vrot.slane %v7878, 7
    %v7888 = vrot.slane %v7879, 6
    %v7889 = vsel %vm3280, %v7888, %v7887
    %v7890 = vrot.slane %v7880, 7
    %v7891 = vrot.slane %v7881, 6
    %v7892 = vsel %vm3280, %v7891, %v7890
    %v7893 = vrot.slane %v7882, 7
    %v7894 = vrot.slane %v7883, 6
    %v7895 = vsel %vm3280, %v7894, %v7893
    %v7896 = vpack.c.b16 %v7886, %v7886
    %v7897 = vpack.c.b16 %v7889, %v7889
    %v7898 = vpack.c.b16 %v7892, %v7892
    %v7899 = vpack.c.b16 %v7895, %v7895
    %v7901 = vunpack.c.l.s4 1983009808
    %v7902 = vunpack.c.0.s8 %v7901
    %v7903 = vlaneseq
    %v7904 = vshrl.u32 %v7903, 7
    %v7905 = vsub.s32 %v7902, %v7904
    %v7906 = vrot.slane %v7896, %v7905
    %v7908 = vunpack.c.l.s4 1983009808
    %v7909 = vunpack.c.0.s8 %v7908
    %v7910 = vlaneseq
    %v7911 = vshrl.u32 %v7910, 7
    %v7912 = vsub.s32 %v7909, %v7911
    %v7913 = vrot.slane %v7897, %v7912
    %v7915 = vunpack.c.l.s4 1983009808
    %v7916 = vunpack.c.0.s8 %v7915
    %v7917 = vlaneseq
    %v7918 = vshrl.u32 %v7917, 7
    %v7919 = vsub.s32 %v7916, %v7918
    %v7920 = vrot.slane %v7898, %v7919
    %v7922 = vunpack.c.l.s4 1983009808
    %v7923 = vunpack.c.0.s8 %v7922
    %v7924 = vlaneseq
    %v7925 = vshrl.u32 %v7924, 7
    %v7926 = vsub.s32 %v7923, %v7925
    %v7927 = vrot.slane %v7899, %v7926
    %s7932 = scalar_lea.vmem [#allocation4], 2
    %vm7933 = vcmask 1041408
    %vm7934 = vsmask.f32 1282
    %vm7935 = vmand %vm7933, %vm7934
    %v7936 = vld [vmem:[%s7932] sm:$0x3]
    %v7937 = vsel %vm7935, %v7906, %v7936
    %7938 = vst [vmem:[%s7932] sm:$0x3] %v7937
    %v7939 = vld [vmem:[%s7932 + $0x2] sm:$0x3]
    %v7940 = vsel %vm7935, %v7913, %v7939
    %7941 = vst [vmem:[%s7932 + $0x2] sm:$0x3] %v7940
    %v7942 = vld [vmem:[%s7932 + $0x8] sm:$0x3]
    %v7943 = vsel %vm7935, %v7920, %v7942
    %7944 = vst [vmem:[%s7932 + $0x8] sm:$0x3] %v7943
    %v7945 = vld [vmem:[%s7932 + $0xa] sm:$0x3]
    %v7946 = vsel %vm7935, %v7927, %v7945
    %7947 = vst [vmem:[%s7932 + $0xa] sm:$0x3] %v7946
    %v7948 = vld [vmem:[#allocation4] sm:$0x1]
    %v7949 = vld [vmem:[#allocation4 + $0x2] sm:$0x1]
    %v7950 = vld [vmem:[#allocation4 + $0x8] sm:$0x1]
    %v7951 = vld [vmem:[#allocation4 + $0xa] sm:$0x1]
    %v7952 = vld [vmem:[#allocation4] sm:$0x3]
    %v7953 = vld [vmem:[#allocation4 + $0x2] sm:$0x3]
    %v7954 = vld [vmem:[#allocation4 + $0x8] sm:$0x3]
    %v7955 = vld [vmem:[#allocation4 + $0xa] sm:$0x3]
    %v7956 = vld [vmem:[#allocation4] sm:$0x2]
    %v7957 = vld [vmem:[#allocation4 + $0x2] sm:$0x2]
    %v7958 = vld [vmem:[#allocation4 + $0x8] sm:$0x2]
    %v7959 = vld [vmem:[#allocation4 + $0xa] sm:$0x2]
    %v7965 = vunpack.c.l.s4 1983009808
    %v7966 = vunpack.c.0.s8 %v7965
    %v7967 = vlaneseq
    %v7968 = vshrl.u32 %v7967, 7
    %v7969 = vsub.s32 %v7966, %v7968
    %v7970 = vrot.slane %v7952, %v7969
    %v7972 = vunpack.c.l.s4 1983009808
    %v7973 = vunpack.c.0.s8 %v7972
    %v7974 = vlaneseq
    %v7975 = vshrl.u32 %v7974, 7
    %v7976 = vsub.s32 %v7973, %v7975
    %v7977 = vrot.slane %v7953, %v7976
    %v7979 = vunpack.c.l.s4 1983009808
    %v7980 = vunpack.c.0.s8 %v7979
    %v7981 = vlaneseq
    %v7982 = vshrl.u32 %v7981, 7
    %v7983 = vsub.s32 %v7980, %v7982
    %v7984 = vrot.slane %v7954, %v7983
    %v7986 = vunpack.c.l.s4 1983009808
    %v7987 = vunpack.c.0.s8 %v7986
    %v7988 = vlaneseq
    %v7989 = vshrl.u32 %v7988, 7
    %v7990 = vsub.s32 %v7987, %v7989
    %v7991 = vrot.slane %v7955, %v7990
    %v7993 = vshrl.u32 %v7970, 16
    %v7995 = vshll.u32 %v7970, 16
    %v7997 = vrot.slane %v7995, 1
    %v7998 = vor.u32 %v7993, %v7997
    %v8000 = vshrl.u32 %v7977, 16
    %v8002 = vshll.u32 %v7977, 16
    %v8004 = vrot.slane %v8002, 1
    %v8005 = vor.u32 %v8000, %v8004
    %v8007 = vshrl.u32 %v7984, 16
    %v8009 = vshll.u32 %v7984, 16
    %v8011 = vrot.slane %v8009, 1
    %v8012 = vor.u32 %v8007, %v8011
    %v8014 = vshrl.u32 %v7991, 16
    %v8016 = vshll.u32 %v7991, 16
    %v8018 = vrot.slane %v8016, 1
    %v8019 = vor.u32 %v8014, %v8018
    %v8025 = vunpack.c.l.s4 1983009808
    %v8026 = vunpack.c.0.s8 %v8025
    %v8027 = vlaneseq
    %v8028 = vshrl.u32 %v8027, 7
    %v8029 = vsub.s32 %v8026, %v8028
    %v8030 = vrot.slane %v7956, %v8029
    %v8032 = vunpack.c.l.s4 1983009808
    %v8033 = vunpack.c.0.s8 %v8032
    %v8034 = vlaneseq
    %v8035 = vshrl.u32 %v8034, 7
    %v8036 = vsub.s32 %v8033, %v8035
    %v8037 = vrot.slane %v7957, %v8036
    %v8039 = vunpack.c.l.s4 1983009808
    %v8040 = vunpack.c.0.s8 %v8039
    %v8041 = vlaneseq
    %v8042 = vshrl.u32 %v8041, 7
    %v8043 = vsub.s32 %v8040, %v8042
    %v8044 = vrot.slane %v7958, %v8043
    %v8046 = vunpack.c.l.s4 1983009808
    %v8047 = vunpack.c.0.s8 %v8046
    %v8048 = vlaneseq
    %v8049 = vshrl.u32 %v8048, 7
    %v8050 = vsub.s32 %v8047, %v8049
    %v8051 = vrot.slane %v7959, %v8050
    %v8052 = vrot.slane %v8030, 1
    %v8053 = vrot.slane %v8037, 1
    %v8054 = vrot.slane %v8044, 1
    %v8055 = vrot.slane %v8051, 1
    %v8060 = vcombine.low %v7948, %v7998
    %v8062 = vunpack.c.l.s4 1966171168
    %v8063 = vunpack.c.0.s8 %v8062
    %v8064 = vlaneseq
    %v8065 = vshrl.u32 %v8064, 7
    %v8066 = vsub.s32 %v8063, %v8065
    %v8067 = vrot.slane %v8060, %v8066
    %v8069 = vunpack.c.l.s4 1966171168
    %v8070 = vunpack.c.0.s8 %v8069
    %v8071 = vlaneseq
    %v8072 = vshrl.u32 %v8071, 7
    %v8073 = vsub.s32 %v8070, %v8072
    %v8074 = vrot.slane %v8052, %v8073
    %v8075 = vcombine.low %v8067, %v8074
    %v8077 = vunpack.c.l.s4 1966171168
    %v8078 = vunpack.c.0.s8 %v8077
    %v8079 = vlaneseq
    %v8080 = vshrl.u32 %v8079, 7
    %v8081 = vsub.s32 %v8078, %v8080
    %v8082 = vrot.slane %v8075, %v8081
    %v8083 = vcombine.low %v7949, %v8005
    %v8085 = vunpack.c.l.s4 1966171168
    %v8086 = vunpack.c.0.s8 %v8085
    %v8087 = vlaneseq
    %v8088 = vshrl.u32 %v8087, 7
    %v8089 = vsub.s32 %v8086, %v8088
    %v8090 = vrot.slane %v8083, %v8089
    %v8092 = vunpack.c.l.s4 1966171168
    %v8093 = vunpack.c.0.s8 %v8092
    %v8094 = vlaneseq
    %v8095 = vshrl.u32 %v8094, 7
    %v8096 = vsub.s32 %v8093, %v8095
    %v8097 = vrot.slane %v8053, %v8096
    %v8098 = vcombine.low %v8090, %v8097
    %v8100 = vunpack.c.l.s4 1966171168
    %v8101 = vunpack.c.0.s8 %v8100
    %v8102 = vlaneseq
    %v8103 = vshrl.u32 %v8102, 7
    %v8104 = vsub.s32 %v8101, %v8103
    %v8105 = vrot.slane %v8098, %v8104
    %v8106 = vcombine.low %v7950, %v8012
    %v8108 = vunpack.c.l.s4 1966171168
    %v8109 = vunpack.c.0.s8 %v8108
    %v8110 = vlaneseq
    %v8111 = vshrl.u32 %v8110, 7
    %v8112 = vsub.s32 %v8109, %v8111
    %v8113 = vrot.slane %v8106, %v8112
    %v8115 = vunpack.c.l.s4 1966171168
    %v8116 = vunpack.c.0.s8 %v8115
    %v8117 = vlaneseq
    %v8118 = vshrl.u32 %v8117, 7
    %v8119 = vsub.s32 %v8116, %v8118
    %v8120 = vrot.slane %v8054, %v8119
    %v8121 = vcombine.low %v8113, %v8120
    %v8123 = vunpack.c.l.s4 1966171168
    %v8124 = vunpack.c.0.s8 %v8123
    %v8125 = vlaneseq
    %v8126 = vshrl.u32 %v8125, 7
    %v8127 = vsub.s32 %v8124, %v8126
    %v8128 = vrot.slane %v8121, %v8127
    %v8129 = vcombine.low %v7951, %v8019
    %v8131 = vunpack.c.l.s4 1966171168
    %v8132 = vunpack.c.0.s8 %v8131
    %v8133 = vlaneseq
    %v8134 = vshrl.u32 %v8133, 7
    %v8135 = vsub.s32 %v8132, %v8134
    %v8136 = vrot.slane %v8129, %v8135
    %v8138 = vunpack.c.l.s4 1966171168
    %v8139 = vunpack.c.0.s8 %v8138
    %v8140 = vlaneseq
    %v8141 = vshrl.u32 %v8140, 7
    %v8142 = vsub.s32 %v8139, %v8141
    %v8143 = vrot.slane %v8055, %v8142
    %v8144 = vcombine.low %v8136, %v8143
    %v8146 = vunpack.c.l.s4 1966171168
    %v8147 = vunpack.c.0.s8 %v8146
    %v8148 = vlaneseq
    %v8149 = vshrl.u32 %v8148, 7
    %v8150 = vsub.s32 %v8147, %v8149
    %v8151 = vrot.slane %v8144, %v8150
    %v8152 = vld [vmem:[%s7] sm:$0xff]
    %v8153 = vld [vmem:[%s7 + $0x8] sm:$0xff]
    %v8154 = vld [vmem:[%s7 + $0x10] sm:$0xff]
    %v8155 = vld [vmem:[%s7 + $0x18] sm:$0xff]
    %v8156 = vld [vmem:[%s7 + $0x20] sm:$0xff]
    %v8157 = vld [vmem:[%s7 + $0x28] sm:$0xff]
    %v8158 = vld [vmem:[%s7 + $0x30] sm:$0xff]
    %v8159 = vld [vmem:[%s7 + $0x38] sm:$0xff]
    %v8160 = vld [vmem:[%s7 + $0x40] sm:$0xff]
    %v8161 = vld [vmem:[%s7 + $0x48] sm:$0xff]
    %v8162 = vld [vmem:[%s7 + $0x50] sm:$0xff]
    %v8163 = vld [vmem:[%s7 + $0x58] sm:$0xff]
    %v8164 = vld [vmem:[%s7 + $0x60] sm:$0xff]
    %v8165 = vld [vmem:[%s7 + $0x68] sm:$0xff]
    %v8166 = vld [vmem:[%s7 + $0x70] sm:$0xff]
    %v8167 = vld [vmem:[%s7 + $0x78] sm:$0xff]
    %v8168 = vld [vmem:[%s7 + $0x80] sm:$0xff]
    %v8169 = vld [vmem:[%s7 + $0x88] sm:$0xff]
    %v8170 = vld [vmem:[%s7 + $0x90] sm:$0xff]
    %v8171 = vld [vmem:[%s7 + $0x98] sm:$0xff]
    %v8172 = vld [vmem:[%s7 + $0xa0] sm:$0xff]
    %v8173 = vld [vmem:[%s7 + $0xa8] sm:$0xff]
    %v8174 = vld [vmem:[%s7 + $0xb0] sm:$0xff]
    %v8175 = vld [vmem:[%s7 + $0xb8] sm:$0xff]
    %v8176 = vld [vmem:[%s7 + $0xc0] sm:$0xff]
    %v8177 = vld [vmem:[%s7 + $0xc8] sm:$0xff]
    %v8178 = vld [vmem:[%s7 + $0xd0] sm:$0xff]
    %v8179 = vld [vmem:[%s7 + $0xd8] sm:$0xff]
    %v8180 = vld [vmem:[%s7 + $0xe0] sm:$0xff]
    %v8181 = vld [vmem:[%s7 + $0xe8] sm:$0xff]
    %v8182 = vld [vmem:[%s7 + $0xf0] sm:$0xff]
    %v8183 = vld [vmem:[%s7 + $0xf8] sm:$0xff]
    %v8184 = vld [vmem:[%s7 + $0x100] sm:$0xff]
    %v8185 = vld [vmem:[%s7 + $0x108] sm:$0xff]
    %v8186 = vld [vmem:[%s7 + $0x110] sm:$0xff]
    %v8187 = vld [vmem:[%s7 + $0x118] sm:$0xff]
    %v8188 = vld [vmem:[%s7 + $0x120] sm:$0xff]
    %v8189 = vld [vmem:[%s7 + $0x128] sm:$0xff]
    %v8190 = vld [vmem:[%s7 + $0x130] sm:$0xff]
    %v8191 = vld [vmem:[%s7 + $0x138] sm:$0xff]
    %v8192 = vld [vmem:[%s7 + $0x140] sm:$0xff]
    %v8193 = vld [vmem:[%s7 + $0x148] sm:$0xff]
    %v8194 = vld [vmem:[%s7 + $0x150] sm:$0xff]
    %v8195 = vld [vmem:[%s7 + $0x158] sm:$0xff]
    %v8196 = vld [vmem:[%s7 + $0x160] sm:$0xff]
    %v8197 = vld [vmem:[%s7 + $0x168] sm:$0xff]
    %v8198 = vld [vmem:[%s7 + $0x170] sm:$0xff]
    %v8199 = vld [vmem:[%s7 + $0x178] sm:$0xff]
    %v8200 = vld [vmem:[%s7932] sm:$0x1]
    %v8201 = vld [vmem:[%s7932 + $0x2] sm:$0x1]
    %v8202 = vld [vmem:[%s7932 + $0x8] sm:$0x1]
    %v8203 = vld [vmem:[%s7932 + $0xa] sm:$0x1]
    %v8204 = vld [vmem:[%s7932] sm:$0x3]
    %v8205 = vld [vmem:[%s7932 + $0x2] sm:$0x3]
    %v8206 = vld [vmem:[%s7932 + $0x8] sm:$0x3]
    %v8207 = vld [vmem:[%s7932 + $0xa] sm:$0x3]
    %v8208 = vld [vmem:[%s7932] sm:$0x2]
    %v8209 = vld [vmem:[%s7932 + $0x2] sm:$0x2]
    %v8210 = vld [vmem:[%s7932 + $0x8] sm:$0x2]
    %v8211 = vld [vmem:[%s7932 + $0xa] sm:$0x2]
    %v8217 = vunpack.c.l.s4 1983009808
    %v8218 = vunpack.c.0.s8 %v8217
    %v8219 = vlaneseq
    %v8220 = vshrl.u32 %v8219, 7
    %v8221 = vsub.s32 %v8218, %v8220
    %v8222 = vrot.slane %v8204, %v8221
    %v8224 = vunpack.c.l.s4 1983009808
    %v8225 = vunpack.c.0.s8 %v8224
    %v8226 = vlaneseq
    %v8227 = vshrl.u32 %v8226, 7
    %v8228 = vsub.s32 %v8225, %v8227
    %v8229 = vrot.slane %v8205, %v8228
    %v8231 = vunpack.c.l.s4 1983009808
    %v8232 = vunpack.c.0.s8 %v8231
    %v8233 = vlaneseq
    %v8234 = vshrl.u32 %v8233, 7
    %v8235 = vsub.s32 %v8232, %v8234
    %v8236 = vrot.slane %v8206, %v8235
    %v8238 = vunpack.c.l.s4 1983009808
    %v8239 = vunpack.c.0.s8 %v8238
    %v8240 = vlaneseq
    %v8241 = vshrl.u32 %v8240, 7
    %v8242 = vsub.s32 %v8239, %v8241
    %v8243 = vrot.slane %v8207, %v8242
    %v8245 = vshrl.u32 %v8222, 16
    %v8247 = vshll.u32 %v8222, 16
    %v8249 = vrot.slane %v8247, 1
    %v8250 = vor.u32 %v8245, %v8249
    %v8252 = vshrl.u32 %v8229, 16
    %v8254 = vshll.u32 %v8229, 16
    %v8256 = vrot.slane %v8254, 1
    %v8257 = vor.u32 %v8252, %v8256
    %v8259 = vshrl.u32 %v8236, 16
    %v8261 = vshll.u32 %v8236, 16
    %v8263 = vrot.slane %v8261, 1
    %v8264 = vor.u32 %v8259, %v8263
    %v8266 = vshrl.u32 %v8243, 16
    %v8268 = vshll.u32 %v8243, 16
    %v8270 = vrot.slane %v8268, 1
    %v8271 = vor.u32 %v8266, %v8270
    %v8277 = vunpack.c.l.s4 1983009808
    %v8278 = vunpack.c.0.s8 %v8277
    %v8279 = vlaneseq
    %v8280 = vshrl.u32 %v8279, 7
    %v8281 = vsub.s32 %v8278, %v8280
    %v8282 = vrot.slane %v8208, %v8281
    %v8284 = vunpack.c.l.s4 1983009808
    %v8285 = vunpack.c.0.s8 %v8284
    %v8286 = vlaneseq
    %v8287 = vshrl.u32 %v8286, 7
    %v8288 = vsub.s32 %v8285, %v8287
    %v8289 = vrot.slane %v8209, %v8288
    %v8291 = vunpack.c.l.s4 1983009808
    %v8292 = vunpack.c.0.s8 %v8291
    %v8293 = vlaneseq
    %v8294 = vshrl.u32 %v8293, 7
    %v8295 = vsub.s32 %v8292, %v8294
    %v8296 = vrot.slane %v8210, %v8295
    %v8298 = vunpack.c.l.s4 1983009808
    %v8299 = vunpack.c.0.s8 %v8298
    %v8300 = vlaneseq
    %v8301 = vshrl.u32 %v8300, 7
    %v8302 = vsub.s32 %v8299, %v8301
    %v8303 = vrot.slane %v8211, %v8302
    %v8304 = vrot.slane %v8282, 1
    %v8305 = vrot.slane %v8289, 1
    %v8306 = vrot.slane %v8296, 1
    %v8307 = vrot.slane %v8303, 1
    %v8312 = vcombine.low %v8200, %v8250
    %v8314 = vunpack.c.l.s4 1966171168
    %v8315 = vunpack.c.0.s8 %v8314
    %v8316 = vlaneseq
    %v8317 = vshrl.u32 %v8316, 7
    %v8318 = vsub.s32 %v8315, %v8317
    %v8319 = vrot.slane %v8312, %v8318
    %v8321 = vunpack.c.l.s4 1966171168
    %v8322 = vunpack.c.0.s8 %v8321
    %v8323 = vlaneseq
    %v8324 = vshrl.u32 %v8323, 7
    %v8325 = vsub.s32 %v8322, %v8324
    %v8326 = vrot.slane %v8304, %v8325
    %v8327 = vcombine.low %v8319, %v8326
    %v8329 = vunpack.c.l.s4 1966171168
    %v8330 = vunpack.c.0.s8 %v8329
    %v8331 = vlaneseq
    %v8332 = vshrl.u32 %v8331, 7
    %v8333 = vsub.s32 %v8330, %v8332
    %v8334 = vrot.slane %v8327, %v8333
    %v8335 = vcombine.low %v8201, %v8257
    %v8337 = vunpack.c.l.s4 1966171168
    %v8338 = vunpack.c.0.s8 %v8337
    %v8339 = vlaneseq
    %v8340 = vshrl.u32 %v8339, 7
    %v8341 = vsub.s32 %v8338, %v8340
    %v8342 = vrot.slane %v8335, %v8341
    %v8344 = vunpack.c.l.s4 1966171168
    %v8345 = vunpack.c.0.s8 %v8344
    %v8346 = vlaneseq
    %v8347 = vshrl.u32 %v8346, 7
    %v8348 = vsub.s32 %v8345, %v8347
    %v8349 = vrot.slane %v8305, %v8348
    %v8350 = vcombine.low %v8342, %v8349
    %v8352 = vunpack.c.l.s4 1966171168
    %v8353 = vunpack.c.0.s8 %v8352
    %v8354 = vlaneseq
    %v8355 = vshrl.u32 %v8354, 7
    %v8356 = vsub.s32 %v8353, %v8355
    %v8357 = vrot.slane %v8350, %v8356
    %v8358 = vcombine.low %v8202, %v8264
    %v8360 = vunpack.c.l.s4 1966171168
    %v8361 = vunpack.c.0.s8 %v8360
    %v8362 = vlaneseq
    %v8363 = vshrl.u32 %v8362, 7
    %v8364 = vsub.s32 %v8361, %v8363
    %v8365 = vrot.slane %v8358, %v8364
    %v8367 = vunpack.c.l.s4 1966171168
    %v8368 = vunpack.c.0.s8 %v8367
    %v8369 = vlaneseq
    %v8370 = vshrl.u32 %v8369, 7
    %v8371 = vsub.s32 %v8368, %v8370
    %v8372 = vrot.slane %v8306, %v8371
    %v8373 = vcombine.low %v8365, %v8372
    %v8375 = vunpack.c.l.s4 1966171168
    %v8376 = vunpack.c.0.s8 %v8375
    %v8377 = vlaneseq
    %v8378 = vshrl.u32 %v8377, 7
    %v8379 = vsub.s32 %v8376, %v8378
    %v8380 = vrot.slane %v8373, %v8379
    %v8381 = vcombine.low %v8203, %v8271
    %v8383 = vunpack.c.l.s4 1966171168
    %v8384 = vunpack.c.0.s8 %v8383
    %v8385 = vlaneseq
    %v8386 = vshrl.u32 %v8385, 7
    %v8387 = vsub.s32 %v8384, %v8386
    %v8388 = vrot.slane %v8381, %v8387
    %v8390 = vunpack.c.l.s4 1966171168
    %v8391 = vunpack.c.0.s8 %v8390
    %v8392 = vlaneseq
    %v8393 = vshrl.u32 %v8392, 7
    %v8394 = vsub.s32 %v8391, %v8393
    %v8395 = vrot.slane %v8307, %v8394
    %v8396 = vcombine.low %v8388, %v8395
    %v8398 = vunpack.c.l.s4 1966171168
    %v8399 = vunpack.c.0.s8 %v8398
    %v8400 = vlaneseq
    %v8401 = vshrl.u32 %v8400, 7
    %v8402 = vsub.s32 %v8399, %v8401
    %v8403 = vrot.slane %v8396, %v8402
    %s8404 = scalar_lea.vmem %s7, 384
    %v8405 = vld [vmem:[%s8404] sm:$0xff]
    %v8406 = vld [vmem:[%s8404 + $0x8] sm:$0xff]
    %v8407 = vld [vmem:[%s8404 + $0x10] sm:$0xff]
    %v8408 = vld [vmem:[%s8404 + $0x18] sm:$0xff]
    %v8409 = vld [vmem:[%s8404 + $0x20] sm:$0xff]
    %v8410 = vld [vmem:[%s8404 + $0x28] sm:$0xff]
    %v8411 = vld [vmem:[%s8404 + $0x30] sm:$0xff]
    %v8412 = vld [vmem:[%s8404 + $0x38] sm:$0xff]
    %v8413 = vld [vmem:[%s8404 + $0x40] sm:$0xff]
    %v8414 = vld [vmem:[%s8404 + $0x48] sm:$0xff]
    %v8415 = vld [vmem:[%s8404 + $0x50] sm:$0xff]
    %v8416 = vld [vmem:[%s8404 + $0x58] sm:$0xff]
    %v8417 = vld [vmem:[%s8404 + $0x60] sm:$0xff]
    %v8418 = vld [vmem:[%s8404 + $0x68] sm:$0xff]
    %v8419 = vld [vmem:[%s8404 + $0x70] sm:$0xff]
    %v8420 = vld [vmem:[%s8404 + $0x78] sm:$0xff]
    %v8421 = vld [vmem:[%s8404 + $0x80] sm:$0xff]
    %v8422 = vld [vmem:[%s8404 + $0x88] sm:$0xff]
    %v8423 = vld [vmem:[%s8404 + $0x90] sm:$0xff]
    %v8424 = vld [vmem:[%s8404 + $0x98] sm:$0xff]
    %v8425 = vld [vmem:[%s8404 + $0xa0] sm:$0xff]
    %v8426 = vld [vmem:[%s8404 + $0xa8] sm:$0xff]
    %v8427 = vld [vmem:[%s8404 + $0xb0] sm:$0xff]
    %v8428 = vld [vmem:[%s8404 + $0xb8] sm:$0xff]
    %v8429 = vld [vmem:[%s8404 + $0xc0] sm:$0xff]
    %v8430 = vld [vmem:[%s8404 + $0xc8] sm:$0xff]
    %v8431 = vld [vmem:[%s8404 + $0xd0] sm:$0xff]
    %v8432 = vld [vmem:[%s8404 + $0xd8] sm:$0xff]
    %v8433 = vld [vmem:[%s8404 + $0xe0] sm:$0xff]
    %v8434 = vld [vmem:[%s8404 + $0xe8] sm:$0xff]
    %v8435 = vld [vmem:[%s8404 + $0xf0] sm:$0xff]
    %v8436 = vld [vmem:[%s8404 + $0xf8] sm:$0xff]
    %v8437 = vld [vmem:[%s8404 + $0x100] sm:$0xff]
    %v8438 = vld [vmem:[%s8404 + $0x108] sm:$0xff]
    %v8439 = vld [vmem:[%s8404 + $0x110] sm:$0xff]
    %v8440 = vld [vmem:[%s8404 + $0x118] sm:$0xff]
    %v8441 = vld [vmem:[%s8404 + $0x120] sm:$0xff]
    %v8442 = vld [vmem:[%s8404 + $0x128] sm:$0xff]
    %v8443 = vld [vmem:[%s8404 + $0x130] sm:$0xff]
    %v8444 = vld [vmem:[%s8404 + $0x138] sm:$0xff]
    %v8445 = vld [vmem:[%s8404 + $0x140] sm:$0xff]
    %v8446 = vld [vmem:[%s8404 + $0x148] sm:$0xff]
    %v8447 = vld [vmem:[%s8404 + $0x150] sm:$0xff]
    %v8448 = vld [vmem:[%s8404 + $0x158] sm:$0xff]
    %v8449 = vld [vmem:[%s8404 + $0x160] sm:$0xff]
    %v8450 = vld [vmem:[%s8404 + $0x168] sm:$0xff]
    %v8451 = vld [vmem:[%s8404 + $0x170] sm:$0xff]
    %v8452 = vld [vmem:[%s8404 + $0x178] sm:$0xff]
    %v8453 = vcombine.low %v8334, %v8357
    %v8454 = vcombine.low %v8380, %v8403
    %v8456 = vunpack.c.l.s4 1966171168
    %v8457 = vunpack.c.0.s8 %v8456
    %v8458 = vlaneseq
    %v8459 = vshrl.u32 %v8458, 7
    %v8460 = vsub.s32 %v8457, %v8459
    %v8461 = vrot.slane %v8453, %v8460
    %v8463 = vunpack.c.l.s4 1966171168
    %v8464 = vunpack.c.0.s8 %v8463
    %v8465 = vlaneseq
    %v8466 = vshrl.u32 %v8465, 7
    %v8467 = vsub.s32 %v8464, %v8466
    %v8468 = vrot.slane %v8454, %v8467
    %v8469 = vcombine.low %v8461, %v8468
    %v8470 = vcombine.high %v8461, %v8468
    %v8472 = vunpack.c.l.s4 1966171168
    %v8473 = vunpack.c.0.s8 %v8472
    %v8474 = vlaneseq
    %v8475 = vshrl.u32 %v8474, 7
    %v8476 = vsub.s32 %v8473, %v8475
    %v8477 = vrot.slane %v8469, %v8476
    %v8479 = vunpack.c.l.s4 1966171168
    %v8480 = vunpack.c.0.s8 %v8479
    %v8481 = vlaneseq
    %v8482 = vshrl.u32 %v8481, 7
    %v8483 = vsub.s32 %v8480, %v8482
    %v8484 = vrot.slane %v8470, %v8483
    %v8485 = vcombine.high %v8477, %v8477
    %v8537 = vunpack.c.l.b16 %v8405
    %v8538 = vunpack.c.h.b16 %v8405
    %v8539 = vunpack.c.l.b16 %v8406
    %v8540 = vunpack.c.h.b16 %v8406
    %v8541 = vunpack.c.l.b16 %v8407
    %v8542 = vunpack.c.h.b16 %v8407
    %v8543 = vunpack.c.l.b16 %v8408
    %v8544 = vunpack.c.h.b16 %v8408
    %v8545 = vunpack.c.l.b16 %v8409
    %v8546 = vunpack.c.h.b16 %v8409
    %v8547 = vunpack.c.l.b16 %v8410
    %v8548 = vunpack.c.h.b16 %v8410
    %v8549 = vunpack.c.l.b16 %v8411
    %v8550 = vunpack.c.h.b16 %v8411
    %v8551 = vunpack.c.l.b16 %v8412
    %v8552 = vunpack.c.h.b16 %v8412
    %v8553 = vunpack.c.l.b16 %v8413
    %v8554 = vunpack.c.h.b16 %v8413
    %v8555 = vunpack.c.l.b16 %v8414
    %v8556 = vunpack.c.h.b16 %v8414
    %v8557 = vunpack.c.l.b16 %v8415
    %v8558 = vunpack.c.h.b16 %v8415
    %v8559 = vunpack.c.l.b16 %v8416
    %v8560 = vunpack.c.h.b16 %v8416
    %v8561 = vunpack.c.l.b16 %v8417
    %v8562 = vunpack.c.h.b16 %v8417
    %v8563 = vunpack.c.l.b16 %v8418
    %v8564 = vunpack.c.h.b16 %v8418
    %v8565 = vunpack.c.l.b16 %v8419
    %v8566 = vunpack.c.h.b16 %v8419
    %v8567 = vunpack.c.l.b16 %v8420
    %v8568 = vunpack.c.h.b16 %v8420
    %v8569 = vunpack.c.l.b16 %v8421
    %v8570 = vunpack.c.h.b16 %v8421
    %v8571 = vunpack.c.l.b16 %v8422
    %v8572 = vunpack.c.h.b16 %v8422
    %v8573 = vunpack.c.l.b16 %v8423
    %v8574 = vunpack.c.h.b16 %v8423
    %v8575 = vunpack.c.l.b16 %v8424
    %v8576 = vunpack.c.h.b16 %v8424
    %v8577 = vunpack.c.l.b16 %v8425
    %v8578 = vunpack.c.h.b16 %v8425
    %v8579 = vunpack.c.l.b16 %v8426
    %v8580 = vunpack.c.h.b16 %v8426
    %v8581 = vunpack.c.l.b16 %v8427
    %v8582 = vunpack.c.h.b16 %v8427
    %v8583 = vunpack.c.l.b16 %v8428
    %v8584 = vunpack.c.h.b16 %v8428
    %v8585 = vunpack.c.l.b16 %v8429
    %v8586 = vunpack.c.h.b16 %v8429
    %v8587 = vunpack.c.l.b16 %v8430
    %v8588 = vunpack.c.h.b16 %v8430
    %v8589 = vunpack.c.l.b16 %v8431
    %v8590 = vunpack.c.h.b16 %v8431
    %v8591 = vunpack.c.l.b16 %v8432
    %v8592 = vunpack.c.h.b16 %v8432
    %v8593 = vunpack.c.l.b16 %v8433
    %v8594 = vunpack.c.h.b16 %v8433
    %v8595 = vunpack.c.l.b16 %v8434
    %v8596 = vunpack.c.h.b16 %v8434
    %v8597 = vunpack.c.l.b16 %v8435
    %v8598 = vunpack.c.h.b16 %v8435
    %v8599 = vunpack.c.l.b16 %v8436
    %v8600 = vunpack.c.h.b16 %v8436
    %v8601 = vunpack.c.l.b16 %v8437
    %v8602 = vunpack.c.h.b16 %v8437
    %v8603 = vunpack.c.l.b16 %v8438
    %v8604 = vunpack.c.h.b16 %v8438
    %v8605 = vunpack.c.l.b16 %v8439
    %v8606 = vunpack.c.h.b16 %v8439
    %v8607 = vunpack.c.l.b16 %v8440
    %v8608 = vunpack.c.h.b16 %v8440
    %v8609 = vunpack.c.l.b16 %v8441
    %v8610 = vunpack.c.h.b16 %v8441
    %v8611 = vunpack.c.l.b16 %v8442
    %v8612 = vunpack.c.h.b16 %v8442
    %v8613 = vunpack.c.l.b16 %v8443
    %v8614 = vunpack.c.h.b16 %v8443
    %v8615 = vunpack.c.l.b16 %v8444
    %v8616 = vunpack.c.h.b16 %v8444
    %v8617 = vunpack.c.l.b16 %v8445
    %v8618 = vunpack.c.h.b16 %v8445
    %v8619 = vunpack.c.l.b16 %v8446
    %v8620 = vunpack.c.h.b16 %v8446
    %v8621 = vunpack.c.l.b16 %v8447
    %v8622 = vunpack.c.h.b16 %v8447
    %v8623 = vunpack.c.l.b16 %v8448
    %v8624 = vunpack.c.h.b16 %v8448
    %v8625 = vunpack.c.l.b16 %v8449
    %v8626 = vunpack.c.h.b16 %v8449
    %v8627 = vunpack.c.l.b16 %v8450
    %v8628 = vunpack.c.h.b16 %v8450
    %v8629 = vunpack.c.l.b16 %v8451
    %v8630 = vunpack.c.h.b16 %v8451
    %v8631 = vunpack.c.l.b16 %v8452
    %v8632 = vunpack.c.h.b16 %v8452
    %v8633 = vpack.c.b16 %v8539, %v8537
    %v8634 = vpack.c.b16 %v8540, %v8538
    %v8635 = vpack.c.b16 %v8543, %v8541
    %v8636 = vpack.c.b16 %v8544, %v8542
    %v8637 = vpack.c.b16 %v8547, %v8545
    %v8638 = vpack.c.b16 %v8548, %v8546
    %v8639 = vpack.c.b16 %v8551, %v8549
    %v8640 = vpack.c.b16 %v8552, %v8550
    %v8641 = vpack.c.b16 %v8555, %v8553
    %v8642 = vpack.c.b16 %v8556, %v8554
    %v8643 = vpack.c.b16 %v8559, %v8557
    %v8644 = vpack.c.b16 %v8560, %v8558
    %v8645 = vpack.c.b16 %v8563, %v8561
    %v8646 = vpack.c.b16 %v8564, %v8562
    %v8647 = vpack.c.b16 %v8567, %v8565
    %v8648 = vpack.c.b16 %v8568, %v8566
    %v8649 = vpack.c.b16 %v8571, %v8569
    %v8650 = vpack.c.b16 %v8572, %v8570
    %v8651 = vpack.c.b16 %v8575, %v8573
    %v8652 = vpack.c.b16 %v8576, %v8574
    %v8653 = vpack.c.b16 %v8579, %v8577
    %v8654 = vpack.c.b16 %v8580, %v8578
    %v8655 = vpack.c.b16 %v8583, %v8581
    %v8656 = vpack.c.b16 %v8584, %v8582
    %v8657 = vpack.c.b16 %v8587, %v8585
    %v8658 = vpack.c.b16 %v8588, %v8586
    %v8659 = vpack.c.b16 %v8591, %v8589
    %v8660 = vpack.c.b16 %v8592, %v8590
    %v8661 = vpack.c.b16 %v8595, %v8593
    %v8662 = vpack.c.b16 %v8596, %v8594
    %v8663 = vpack.c.b16 %v8599, %v8597
    %v8664 = vpack.c.b16 %v8600, %v8598
    %v8665 = vpack.c.b16 %v8603, %v8601
    %v8666 = vpack.c.b16 %v8604, %v8602
    %v8667 = vpack.c.b16 %v8607, %v8605
    %v8668 = vpack.c.b16 %v8608, %v8606
    %v8669 = vpack.c.b16 %v8611, %v8609
    %v8670 = vpack.c.b16 %v8612, %v8610
    %v8671 = vpack.c.b16 %v8615, %v8613
    %v8672 = vpack.c.b16 %v8616, %v8614
    %v8673 = vpack.c.b16 %v8619, %v8617
    %v8674 = vpack.c.b16 %v8620, %v8618
    %v8675 = vpack.c.b16 %v8623, %v8621
    %v8676 = vpack.c.b16 %v8624, %v8622
    %v8677 = vpack.c.b16 %v8627, %v8625
    %v8678 = vpack.c.b16 %v8628, %v8626
    %v8679 = vpack.c.b16 %v8631, %v8629
    %v8680 = vpack.c.b16 %v8632, %v8630
    %8729 = vmatprep.subr.bf16.mxu0 %v8634
    %8730 = vmatpush1.bf16.msra.mxu0 %v8633
    %8731 = vmatprep.subr.bf16.mxu0 %v8636
    %8732 = vmatpush1.bf16.msra.mxu0 %v8635
    %8733 = vmatprep.subr.bf16.mxu0 %v8638
    %8734 = vmatpush1.bf16.msra.mxu0 %v8637
    %8735 = vmatprep.subr.bf16.mxu0 %v8640
    %8736 = vmatpush1.bf16.msra.mxu0 %v8639
    %8737 = vmatprep.subr.bf16.mxu0 %v8642
    %8738 = vmatpush1.bf16.msra.mxu0 %v8641
    %8739 = vmatprep.subr.bf16.mxu0 %v8644
    %8740 = vmatpush1.bf16.msra.mxu0 %v8643
    %8741 = vmatprep.subr.bf16.mxu0 %v8646
    %8742 = vmatpush1.bf16.msra.mxu0 %v8645
    %8743 = vmatprep.subr.bf16.mxu0 %v8648
    %8744 = vmatpush1.bf16.msra.mxu0 %v8647
    %8745 = vmatprep.subr.bf16.mxu0 %v8650
    %8746 = vmatpush1.bf16.msra.mxu0 %v8649
    %8747 = vmatprep.subr.bf16.mxu0 %v8652
    %8748 = vmatpush1.bf16.msra.mxu0 %v8651
    %8749 = vmatprep.subr.bf16.mxu0 %v8654
    %8750 = vmatpush1.bf16.msra.mxu0 %v8653
    %8751 = vmatprep.subr.bf16.mxu0 %v8656
    %8752 = vmatpush1.bf16.msra.mxu0 %v8655
    %8753 = vmatprep.subr.bf16.mxu0 %v8658
    %8754 = vmatpush1.bf16.msra.mxu0 %v8657
    %8755 = vmatprep.subr.bf16.mxu0 %v8660
    %8756 = vmatpush1.bf16.msra.mxu0 %v8659
    %8757 = vmatprep.subr.bf16.mxu0 %v8662
    %8758 = vmatpush1.bf16.msra.mxu0 %v8661
    %8759 = vmatprep.subr.bf16.mxu0 %v8664
    %8760 = vmatpush1.bf16.msra.mxu0 %v8663
    %8761 = vmatprep.mubr.bf16.mxu0 %v8484
    %8762 = vmatmul.mubr.bf16.gmra.mrb[0].mxu0 %v8477
    %v8763 = vpop.f32.mrb[0].mxu0
    %v8764 = vadd.f32 0.0, %v8763
    %v8765 = vpop.f32.mrb[0].mxu0
    %v8766 = vadd.f32 0.0, %v8765
    %v8767 = vpop.f32.mrb[0].mxu0
    %v8768 = vpop.f32.mrb[0].mxu0
    %8769 = vdwg.mxu0
    %8770 = vmatprep.subr.bf16.mxu0 %v8666
    %8771 = vmatpush1.bf16.msra.mxu0 %v8665
    %8772 = vmatprep.subr.bf16.mxu0 %v8668
    %8773 = vmatpush1.bf16.msra.mxu0 %v8667
    %8774 = vmatprep.subr.bf16.mxu0 %v8670
    %8775 = vmatpush1.bf16.msra.mxu0 %v8669
    %8776 = vmatprep.subr.bf16.mxu0 %v8672
    %8777 = vmatpush1.bf16.msra.mxu0 %v8671
    %8778 = vmatprep.subr.bf16.mxu0 %v8674
    %8779 = vmatpush1.bf16.msra.mxu0 %v8673
    %8780 = vmatprep.subr.bf16.mxu0 %v8676
    %8781 = vmatpush1.bf16.msra.mxu0 %v8675
    %8782 = vmatprep.subr.bf16.mxu0 %v8678
    %8783 = vmatpush1.bf16.msra.mxu0 %v8677
    %8784 = vmatprep.subr.bf16.mxu0 %v8680
    %8785 = vmatpush1.bf16.msra.mxu0 %v8679
    %8786 = vmatprep.subr.bf16.mxu0 0
    %8787 = vmatpush1.bf16.msra.mxu0 0
    %8788 = vmatprep.subr.bf16.mxu0 0
    %8789 = vmatpush1.bf16.msra.mxu0 0
    %8790 = vmatprep.subr.bf16.mxu0 0
    %8791 = vmatpush1.bf16.msra.mxu0 0
    %8792 = vmatprep.subr.bf16.mxu0 0
    %8793 = vmatpush1.bf16.msra.mxu0 0
    %8794 = vmatprep.subr.bf16.mxu0 0
    %8795 = vmatpush1.bf16.msra.mxu0 0
    %8796 = vmatprep.subr.bf16.mxu0 0
    %8797 = vmatpush1.bf16.msra.mxu0 0
    %8798 = vmatprep.subr.bf16.mxu0 0
    %8799 = vmatpush1.bf16.msra.mxu0 0
    %8800 = vmatprep.subr.bf16.mxu0 0
    %8801 = vmatpush1.bf16.msra.mxu0 0
    %8802 = vmatprep.mubr.bf16.mxu0 0
    %8803 = vmatmul.mubr.bf16.gmra.mrb[0].mxu0 %v8485
    %v8804 = vpop.f32.mrb[0].mxu0
    %v8805 = vadd.f32 %v8764, %v8804
    %v8806 = vpop.f32.mrb[0].mxu0
    %v8807 = vadd.f32 %v8766, %v8806
    %v8808 = vpop.f32.mrb[0].mxu0
    %v8809 = vpop.f32.mrb[0].mxu0
    %8810 = vdwg.mxu0
    %v8811 = vcombine.low %v8082, %v8105
    %v8812 = vcombine.low %v8128, %v8151
    %v8814 = vunpack.c.l.s4 1966171168
    %v8815 = vunpack.c.0.s8 %v8814
    %v8816 = vlaneseq
    %v8817 = vshrl.u32 %v8816, 7
    %v8818 = vsub.s32 %v8815, %v8817
    %v8819 = vrot.slane %v8811, %v8818
    %v8821 = vunpack.c.l.s4 1966171168
    %v8822 = vunpack.c.0.s8 %v8821
    %v8823 = vlaneseq
    %v8824 = vshrl.u32 %v8823, 7
    %v8825 = vsub.s32 %v8822, %v8824
    %v8826 = vrot.slane %v8812, %v8825
    %v8827 = vcombine.low %v8819, %v8826
    %v8828 = vcombine.high %v8819, %v8826
    %v8830 = vunpack.c.l.s4 1966171168
    %v8831 = vunpack.c.0.s8 %v8830
    %v8832 = vlaneseq
    %v8833 = vshrl.u32 %v8832, 7
    %v8834 = vsub.s32 %v8831, %v8833
    %v8835 = vrot.slane %v8827, %v8834
    %v8837 = vunpack.c.l.s4 1966171168
    %v8838 = vunpack.c.0.s8 %v8837
    %v8839 = vlaneseq
    %v8840 = vshrl.u32 %v8839, 7
    %v8841 = vsub.s32 %v8838, %v8840
    %v8842 = vrot.slane %v8828, %v8841
    %v8843 = vcombine.high %v8835, %v8835
    %v8895 = vunpack.c.l.b16 %v8152
    %v8896 = vunpack.c.h.b16 %v8152
    %v8897 = vunpack.c.l.b16 %v8153
    %v8898 = vunpack.c.h.b16 %v8153
    %v8899 = vunpack.c.l.b16 %v8154
    %v8900 = vunpack.c.h.b16 %v8154
    %v8901 = vunpack.c.l.b16 %v8155
    %v8902 = vunpack.c.h.b16 %v8155
    %v8903 = vunpack.c.l.b16 %v8156
    %v8904 = vunpack.c.h.b16 %v8156
    %v8905 = vunpack.c.l.b16 %v8157
    %v8906 = vunpack.c.h.b16 %v8157
    %v8907 = vunpack.c.l.b16 %v8158
    %v8908 = vunpack.c.h.b16 %v8158
    %v8909 = vunpack.c.l.b16 %v8159
    %v8910 = vunpack.c.h.b16 %v8159
    %v8911 = vunpack.c.l.b16 %v8160
    %v8912 = vunpack.c.h.b16 %v8160
    %v8913 = vunpack.c.l.b16 %v8161
    %v8914 = vunpack.c.h.b16 %v8161
    %v8915 = vunpack.c.l.b16 %v8162
    %v8916 = vunpack.c.h.b16 %v8162
    %v8917 = vunpack.c.l.b16 %v8163
    %v8918 = vunpack.c.h.b16 %v8163
    %v8919 = vunpack.c.l.b16 %v8164
    %v8920 = vunpack.c.h.b16 %v8164
    %v8921 = vunpack.c.l.b16 %v8165
    %v8922 = vunpack.c.h.b16 %v8165
    %v8923 = vunpack.c.l.b16 %v8166
    %v8924 = vunpack.c.h.b16 %v8166
    %v8925 = vunpack.c.l.b16 %v8167
    %v8926 = vunpack.c.h.b16 %v8167
    %v8927 = vunpack.c.l.b16 %v8168
    %v8928 = vunpack.c.h.b16 %v8168
    %v8929 = vunpack.c.l.b16 %v8169
    %v8930 = vunpack.c.h.b16 %v8169
    %v8931 = vunpack.c.l.b16 %v8170
    %v8932 = vunpack.c.h.b16 %v8170
    %v8933 = vunpack.c.l.b16 %v8171
    %v8934 = vunpack.c.h.b16 %v8171
    %v8935 = vunpack.c.l.b16 %v8172
    %v8936 = vunpack.c.h.b16 %v8172
    %v8937 = vunpack.c.l.b16 %v8173
    %v8938 = vunpack.c.h.b16 %v8173
    %v8939 = vunpack.c.l.b16 %v8174
    %v8940 = vunpack.c.h.b16 %v8174
    %v8941 = vunpack.c.l.b16 %v8175
    %v8942 = vunpack.c.h.b16 %v8175
    %v8943 = vunpack.c.l.b16 %v8176
    %v8944 = vunpack.c.h.b16 %v8176
    %v8945 = vunpack.c.l.b16 %v8177
    %v8946 = vunpack.c.h.b16 %v8177
    %v8947 = vunpack.c.l.b16 %v8178
    %v8948 = vunpack.c.h.b16 %v8178
    %v8949 = vunpack.c.l.b16 %v8179
    %v8950 = vunpack.c.h.b16 %v8179
    %v8951 = vunpack.c.l.b16 %v8180
    %v8952 = vunpack.c.h.b16 %v8180
    %v8953 = vunpack.c.l.b16 %v8181
    %v8954 = vunpack.c.h.b16 %v8181
    %v8955 = vunpack.c.l.b16 %v8182
    %v8956 = vunpack.c.h.b16 %v8182
    %v8957 = vunpack.c.l.b16 %v8183
    %v8958 = vunpack.c.h.b16 %v8183
    %v8959 = vunpack.c.l.b16 %v8184
    %v8960 = vunpack.c.h.b16 %v8184
    %v8961 = vunpack.c.l.b16 %v8185
    %v8962 = vunpack.c.h.b16 %v8185
    %v8963 = vunpack.c.l.b16 %v8186
    %v8964 = vunpack.c.h.b16 %v8186
    %v8965 = vunpack.c.l.b16 %v8187
    %v8966 = vunpack.c.h.b16 %v8187
    %v8967 = vunpack.c.l.b16 %v8188
    %v8968 = vunpack.c.h.b16 %v8188
    %v8969 = vunpack.c.l.b16 %v8189
    %v8970 = vunpack.c.h.b16 %v8189
    %v8971 = vunpack.c.l.b16 %v8190
    %v8972 = vunpack.c.h.b16 %v8190
    %v8973 = vunpack.c.l.b16 %v8191
    %v8974 = vunpack.c.h.b16 %v8191
    %v8975 = vunpack.c.l.b16 %v8192
    %v8976 = vunpack.c.h.b16 %v8192
    %v8977 = vunpack.c.l.b16 %v8193
    %v8978 = vunpack.c.h.b16 %v8193
    %v8979 = vunpack.c.l.b16 %v8194
    %v8980 = vunpack.c.h.b16 %v8194
    %v8981 = vunpack.c.l.b16 %v8195
    %v8982 = vunpack.c.h.b16 %v8195
    %v8983 = vunpack.c.l.b16 %v8196
    %v8984 = vunpack.c.h.b16 %v8196
    %v8985 = vunpack.c.l.b16 %v8197
    %v8986 = vunpack.c.h.b16 %v8197
    %v8987 = vunpack.c.l.b16 %v8198
    %v8988 = vunpack.c.h.b16 %v8198
    %v8989 = vunpack.c.l.b16 %v8199
    %v8990 = vunpack.c.h.b16 %v8199
    %v8991 = vpack.c.b16 %v8897, %v8895
    %v8992 = vpack.c.b16 %v8898, %v8896
    %v8993 = vpack.c.b16 %v8901, %v8899
    %v8994 = vpack.c.b16 %v8902, %v8900
    %v8995 = vpack.c.b16 %v8905, %v8903
    %v8996 = vpack.c.b16 %v8906, %v8904
    %v8997 = vpack.c.b16 %v8909, %v8907
    %v8998 = vpack.c.b16 %v8910, %v8908
    %v8999 = vpack.c.b16 %v8913, %v8911
    %v9000 = vpack.c.b16 %v8914, %v8912
    %v9001 = vpack.c.b16 %v8917, %v8915
    %v9002 = vpack.c.b16 %v8918, %v8916
    %v9003 = vpack.c.b16 %v8921, %v8919
    %v9004 = vpack.c.b16 %v8922, %v8920
    %v9005 = vpack.c.b16 %v8925, %v8923
    %v9006 = vpack.c.b16 %v8926, %v8924
    %v9007 = vpack.c.b16 %v8929, %v8927
    %v9008 = vpack.c.b16 %v8930, %v8928
    %v9009 = vpack.c.b16 %v8933, %v8931
    %v9010 = vpack.c.b16 %v8934, %v8932
    %v9011 = vpack.c.b16 %v8937, %v8935
    %v9012 = vpack.c.b16 %v8938, %v8936
    %v9013 = vpack.c.b16 %v8941, %v8939
    %v9014 = vpack.c.b16 %v8942, %v8940
    %v9015 = vpack.c.b16 %v8945, %v8943
    %v9016 = vpack.c.b16 %v8946, %v8944
    %v9017 = vpack.c.b16 %v8949, %v8947
    %v9018 = vpack.c.b16 %v8950, %v8948
    %v9019 = vpack.c.b16 %v8953, %v8951
    %v9020 = vpack.c.b16 %v8954, %v8952
    %v9021 = vpack.c.b16 %v8957, %v8955
    %v9022 = vpack.c.b16 %v8958, %v8956
    %v9023 = vpack.c.b16 %v8961, %v8959
    %v9024 = vpack.c.b16 %v8962, %v8960
    %v9025 = vpack.c.b16 %v8965, %v8963
    %v9026 = vpack.c.b16 %v8966, %v8964
    %v9027 = vpack.c.b16 %v8969, %v8967
    %v9028 = vpack.c.b16 %v8970, %v8968
    %v9029 = vpack.c.b16 %v8973, %v8971
    %v9030 = vpack.c.b16 %v8974, %v8972
    %v9031 = vpack.c.b16 %v8977, %v8975
    %v9032 = vpack.c.b16 %v8978, %v8976
    %v9033 = vpack.c.b16 %v8981, %v8979
    %v9034 = vpack.c.b16 %v8982, %v8980
    %v9035 = vpack.c.b16 %v8985, %v8983
    %v9036 = vpack.c.b16 %v8986, %v8984
    %v9037 = vpack.c.b16 %v8989, %v8987
    %v9038 = vpack.c.b16 %v8990, %v8988
    %9087 = vmatprep.subr.bf16.mxu0 %v8992
    %9088 = vmatpush1.bf16.msra.mxu0 %v8991
    %9089 = vmatprep.subr.bf16.mxu0 %v8994
    %9090 = vmatpush1.bf16.msra.mxu0 %v8993
    %9091 = vmatprep.subr.bf16.mxu0 %v8996
    %9092 = vmatpush1.bf16.msra.mxu0 %v8995
    %9093 = vmatprep.subr.bf16.mxu0 %v8998
    %9094 = vmatpush1.bf16.msra.mxu0 %v8997
    %9095 = vmatprep.subr.bf16.mxu0 %v9000
    %9096 = vmatpush1.bf16.msra.mxu0 %v8999
    %9097 = vmatprep.subr.bf16.mxu0 %v9002
    %9098 = vmatpush1.bf16.msra.mxu0 %v9001
    %9099 = vmatprep.subr.bf16.mxu0 %v9004
    %9100 = vmatpush1.bf16.msra.mxu0 %v9003
    %9101 = vmatprep.subr.bf16.mxu0 %v9006
    %9102 = vmatpush1.bf16.msra.mxu0 %v9005
    %9103 = vmatprep.subr.bf16.mxu0 %v9008
    %9104 = vmatpush1.bf16.msra.mxu0 %v9007
    %9105 = vmatprep.subr.bf16.mxu0 %v9010
    %9106 = vmatpush1.bf16.msra.mxu0 %v9009
    %9107 = vmatprep.subr.bf16.mxu0 %v9012
    %9108 = vmatpush1.bf16.msra.mxu0 %v9011
    %9109 = vmatprep.subr.bf16.mxu0 %v9014
    %9110 = vmatpush1.bf16.msra.mxu0 %v9013
    %9111 = vmatprep.subr.bf16.mxu0 %v9016
    %9112 = vmatpush1.bf16.msra.mxu0 %v9015
    %9113 = vmatprep.subr.bf16.mxu0 %v9018
    %9114 = vmatpush1.bf16.msra.mxu0 %v9017
    %9115 = vmatprep.subr.bf16.mxu0 %v9020
    %9116 = vmatpush1.bf16.msra.mxu0 %v9019
    %9117 = vmatprep.subr.bf16.mxu0 %v9022
    %9118 = vmatpush1.bf16.msra.mxu0 %v9021
    %9119 = vmatprep.mubr.bf16.mxu0 %v8842
    %9120 = vmatmul.mubr.bf16.gmra.mrb[0].mxu0 %v8835
    %v9121 = vpop.f32.mrb[0].mxu0
    %v9122 = vadd.f32 %v8805, %v9121
    %v9123 = vpop.f32.mrb[0].mxu0
    %v9124 = vadd.f32 %v8807, %v9123
    %v9125 = vpop.f32.mrb[0].mxu0
    %v9126 = vpop.f32.mrb[0].mxu0
    %9127 = vdwg.mxu0
    %9128 = vmatprep.subr.bf16.mxu0 %v9024
    %9129 = vmatpush1.bf16.msra.mxu0 %v9023
    %9130 = vmatprep.subr.bf16.mxu0 %v9026
    %9131 = vmatpush1.bf16.msra.mxu0 %v9025
    %9132 = vmatprep.subr.bf16.mxu0 %v9028
    %9133 = vmatpush1.bf16.msra.mxu0 %v9027
    %9134 = vmatprep.subr.bf16.mxu0 %v9030
    %9135 = vmatpush1.bf16.msra.mxu0 %v9029
    %9136 = vmatprep.subr.bf16.mxu0 %v9032
    %9137 = vmatpush1.bf16.msra.mxu0 %v9031
    %9138 = vmatprep.subr.bf16.mxu0 %v9034
    %9139 = vmatpush1.bf16.msra.mxu0 %v9033
    %9140 = vmatprep.subr.bf16.mxu0 %v9036
    %9141 = vmatpush1.bf16.msra.mxu0 %v9035
    %9142 = vmatprep.subr.bf16.mxu0 %v9038
    %9143 = vmatpush1.bf16.msra.mxu0 %v9037
    %9144 = vmatprep.subr.bf16.mxu0 0
    %9145 = vmatpush1.bf16.msra.mxu0 0
    %9146 = vmatprep.subr.bf16.mxu0 0
    %9147 = vmatpush1.bf16.msra.mxu0 0
    %9148 = vmatprep.subr.bf16.mxu0 0
    %9149 = vmatpush1.bf16.msra.mxu0 0
    %9150 = vmatprep.subr.bf16.mxu0 0
    %9151 = vmatpush1.bf16.msra.mxu0 0
    %9152 = vmatprep.subr.bf16.mxu0 0
    %9153 = vmatpush1.bf16.msra.mxu0 0
    %9154 = vmatprep.subr.bf16.mxu0 0
    %9155 = vmatpush1.bf16.msra.mxu0 0
    %9156 = vmatprep.subr.bf16.mxu0 0
    %9157 = vmatpush1.bf16.msra.mxu0 0
    %9158 = vmatprep.subr.bf16.mxu0 0
    %9159 = vmatpush1.bf16.msra.mxu0 0
    %9160 = vmatprep.mubr.bf16.mxu0 0
    %9161 = vmatmul.mubr.bf16.gmra.mrb[0].mxu0 %v8843
    %v9162 = vpop.f32.mrb[0].mxu0
    %v9163 = vadd.f32 %v9122, %v9162
    %v9164 = vpop.f32.mrb[0].mxu0
    %v9165 = vadd.f32 %v9124, %v9164
    %v9166 = vpop.f32.mrb[0].mxu0
    %v9167 = vpop.f32.mrb[0].mxu0
    %9168 = vdwg.mxu0
    %s9169 = scalar_lea.vmem [#allocation4], 4
    %v9170 = vld [vmem:[%s9169] sm:$0x1]
    %v9171 = vld [vmem:[%s9169 + $0x2] sm:$0x1]
    %v9172 = vld [vmem:[%s9169 + $0x8] sm:$0x1]
    %v9173 = vld [vmem:[%s9169 + $0xa] sm:$0x1]
    %v9174 = vld [vmem:[%s9169] sm:$0x3]
    %v9175 = vld [vmem:[%s9169 + $0x2] sm:$0x3]
    %v9176 = vld [vmem:[%s9169 + $0x8] sm:$0x3]
    %v9177 = vld [vmem:[%s9169 + $0xa] sm:$0x3]
    %v9178 = vld [vmem:[%s9169] sm:$0x2]
    %v9179 = vld [vmem:[%s9169 + $0x2] sm:$0x2]
    %v9180 = vld [vmem:[%s9169 + $0x8] sm:$0x2]
    %v9181 = vld [vmem:[%s9169 + $0xa] sm:$0x2]
    %v9187 = vunpack.c.l.s4 1983009808
    %v9188 = vunpack.c.0.s8 %v9187
    %v9189 = vlaneseq
    %v9190 = vshrl.u32 %v9189, 7
    %v9191 = vsub.s32 %v9188, %v9190
    %v9192 = vrot.slane %v9174, %v9191
    %v9194 = vunpack.c.l.s4 1983009808
    %v9195 = vunpack.c.0.s8 %v9194
    %v9196 = vlaneseq
    %v9197 = vshrl.u32 %v9196, 7
    %v9198 = vsub.s32 %v9195, %v9197
    %v9199 = vrot.slane %v9175, %v9198
    %v9201 = vunpack.c.l.s4 1983009808
    %v9202 = vunpack.c.0.s8 %v9201
    %v9203 = vlaneseq
    %v9204 = vshrl.u32 %v9203, 7
    %v9205 = vsub.s32 %v9202, %v9204
    %v9206 = vrot.slane %v9176, %v9205
    %v9208 = vunpack.c.l.s4 1983009808
    %v9209 = vunpack.c.0.s8 %v9208
    %v9210 = vlaneseq
    %v9211 = vshrl.u32 %v9210, 7
    %v9212 = vsub.s32 %v9209, %v9211
    %v9213 = vrot.slane %v9177, %v9212
    %v9215 = vshrl.u32 %v9192, 16
    %v9217 = vshll.u32 %v9192, 16
    %v9219 = vrot.slane %v9217, 1
    %v9220 = vor.u32 %v9215, %v9219
    %v9222 = vshrl.u32 %v9199, 16
    %v9224 = vshll.u32 %v9199, 16
    %v9226 = vrot.slane %v9224, 1
    %v9227 = vor.u32 %v9222, %v9226
    %v9229 = vshrl.u32 %v9206, 16
    %v9231 = vshll.u32 %v9206, 16
    %v9233 = vrot.slane %v9231, 1
    %v9234 = vor.u32 %v9229, %v9233
    %v9236 = vshrl.u32 %v9213, 16
    %v9238 = vshll.u32 %v9213, 16
    %v9240 = vrot.slane %v9238, 1
    %v9241 = vor.u32 %v9236, %v9240
    %v9247 = vunpack.c.l.s4 1983009808
    %v9248 = vunpack.c.0.s8 %v9247
    %v9249 = vlaneseq
    %v9250 = vshrl.u32 %v9249, 7
    %v9251 = vsub.s32 %v9248, %v9250
    %v9252 = vrot.slane %v9178, %v9251
    %v9254 = vunpack.c.l.s4 1983009808
    %v9255 = vunpack.c.0.s8 %v9254
    %v9256 = vlaneseq
    %v9257 = vshrl.u32 %v9256, 7
    %v9258 = vsub.s32 %v9255, %v9257
    %v9259 = vrot.slane %v9179, %v9258
    %v9261 = vunpack.c.l.s4 1983009808
    %v9262 = vunpack.c.0.s8 %v9261
    %v9263 = vlaneseq
    %v9264 = vshrl.u32 %v9263, 7
    %v9265 = vsub.s32 %v9262, %v9264
    %v9266 = vrot.slane %v9180, %v9265
    %v9268 = vunpack.c.l.s4 1983009808
    %v9269 = vunpack.c.0.s8 %v9268
    %v9270 = vlaneseq
    %v9271 = vshrl.u32 %v9270, 7
    %v9272 = vsub.s32 %v9269, %v9271
    %v9273 = vrot.slane %v9181, %v9272
    %v9274 = vrot.slane %v9252, 1
    %v9275 = vrot.slane %v9259, 1
    %v9276 = vrot.slane %v9266, 1
    %v9277 = vrot.slane %v9273, 1
    %v9282 = vcombine.low %v9170, %v9220
    %v9284 = vunpack.c.l.s4 1966171168
    %v9285 = vunpack.c.0.s8 %v9284
    %v9286 = vlaneseq
    %v9287 = vshrl.u32 %v9286, 7
    %v9288 = vsub.s32 %v9285, %v9287
    %v9289 = vrot.slane %v9282, %v9288
    %v9291 = vunpack.c.l.s4 1966171168
    %v9292 = vunpack.c.0.s8 %v9291
    %v9293 = vlaneseq
    %v9294 = vshrl.u32 %v9293, 7
    %v9295 = vsub.s32 %v9292, %v9294
    %v9296 = vrot.slane %v9274, %v9295
    %v9297 = vcombine.low %v9289, %v9296
    %v9299 = vunpack.c.l.s4 1966171168
    %v9300 = vunpack.c.0.s8 %v9299
    %v9301 = vlaneseq
    %v9302 = vshrl.u32 %v9301, 7
    %v9303 = vsub.s32 %v9300, %v9302
    %v9304 = vrot.slane %v9297, %v9303
    %v9305 = vcombine.low %v9171, %v9227
    %v9307 = vunpack.c.l.s4 1966171168
    %v9308 = vunpack.c.0.s8 %v9307
    %v9309 = vlaneseq
    %v9310 = vshrl.u32 %v9309, 7
    %v9311 = vsub.s32 %v9308, %v9310
    %v9312 = vrot.slane %v9305, %v9311
    %v9314 = vunpack.c.l.s4 1966171168
    %v9315 = vunpack.c.0.s8 %v9314
    %v9316 = vlaneseq
    %v9317 = vshrl.u32 %v9316, 7
    %v9318 = vsub.s32 %v9315, %v9317
    %v9319 = vrot.slane %v9275, %v9318
    %v9320 = vcombine.low %v9312, %v9319
    %v9322 = vunpack.c.l.s4 1966171168
    %v9323 = vunpack.c.0.s8 %v9322
    %v9324 = vlaneseq
    %v9325 = vshrl.u32 %v9324, 7
    %v9326 = vsub.s32 %v9323, %v9325
    %v9327 = vrot.slane %v9320, %v9326
    %v9328 = vcombine.low %v9172, %v9234
    %v9330 = vunpack.c.l.s4 1966171168
    %v9331 = vunpack.c.0.s8 %v9330
    %v9332 = vlaneseq
    %v9333 = vshrl.u32 %v9332, 7
    %v9334 = vsub.s32 %v9331, %v9333
    %v9335 = vrot.slane %v9328, %v9334
    %v9337 = vunpack.c.l.s4 1966171168
    %v9338 = vunpack.c.0.s8 %v9337
    %v9339 = vlaneseq
    %v9340 = vshrl.u32 %v9339, 7
    %v9341 = vsub.s32 %v9338, %v9340
    %v9342 = vrot.slane %v9276, %v9341
    %v9343 = vcombine.low %v9335, %v9342
    %v9345 = vunpack.c.l.s4 1966171168
    %v9346 = vunpack.c.0.s8 %v9345
    %v9347 = vlaneseq
    %v9348 = vshrl.u32 %v9347, 7
    %v9349 = vsub.s32 %v9346, %v9348
    %v9350 = vrot.slane %v9343, %v9349
    %v9351 = vcombine.low %v9173, %v9241
    %v9353 = vunpack.c.l.s4 1966171168
    %v9354 = vunpack.c.0.s8 %v9353
    %v9355 = vlaneseq
    %v9356 = vshrl.u32 %v9355, 7
    %v9357 = vsub.s32 %v9354, %v9356
    %v9358 = vrot.slane %v9351, %v9357
    %v9360 = vunpack.c.l.s4 1966171168
    %v9361 = vunpack.c.0.s8 %v9360
    %v9362 = vlaneseq
    %v9363 = vshrl.u32 %v9362, 7
    %v9364 = vsub.s32 %v9361, %v9363
    %v9365 = vrot.slane %v9277, %v9364
    %v9366 = vcombine.low %v9358, %v9365
    %v9368 = vunpack.c.l.s4 1966171168
    %v9369 = vunpack.c.0.s8 %v9368
    %v9370 = vlaneseq
    %v9371 = vshrl.u32 %v9370, 7
    %v9372 = vsub.s32 %v9369, %v9371
    %v9373 = vrot.slane %v9366, %v9372
    %s9374 = scalar_lea.vmem %s7, 768
    %v9375 = vld [vmem:[%s9374] sm:$0xff]
    %v9376 = vld [vmem:[%s9374 + $0x8] sm:$0xff]
    %v9377 = vld [vmem:[%s9374 + $0x10] sm:$0xff]
    %v9378 = vld [vmem:[%s9374 + $0x18] sm:$0xff]
    %v9379 = vld [vmem:[%s9374 + $0x20] sm:$0xff]
    %v9380 = vld [vmem:[%s9374 + $0x28] sm:$0xff]
    %v9381 = vld [vmem:[%s9374 + $0x30] sm:$0xff]
    %v9382 = vld [vmem:[%s9374 + $0x38] sm:$0xff]
    %v9383 = vld [vmem:[%s9374 + $0x40] sm:$0xff]
    %v9384 = vld [vmem:[%s9374 + $0x48] sm:$0xff]
    %v9385 = vld [vmem:[%s9374 + $0x50] sm:$0xff]
    %v9386 = vld [vmem:[%s9374 + $0x58] sm:$0xff]
    %v9387 = vld [vmem:[%s9374 + $0x60] sm:$0xff]
    %v9388 = vld [vmem:[%s9374 + $0x68] sm:$0xff]
    %v9389 = vld [vmem:[%s9374 + $0x70] sm:$0xff]
    %v9390 = vld [vmem:[%s9374 + $0x78] sm:$0xff]
    %v9391 = vld [vmem:[%s9374 + $0x80] sm:$0xff]
    %v9392 = vld [vmem:[%s9374 + $0x88] sm:$0xff]
    %v9393 = vld [vmem:[%s9374 + $0x90] sm:$0xff]
    %v9394 = vld [vmem:[%s9374 + $0x98] sm:$0xff]
    %v9395 = vld [vmem:[%s9374 + $0xa0] sm:$0xff]
    %v9396 = vld [vmem:[%s9374 + $0xa8] sm:$0xff]
    %v9397 = vld [vmem:[%s9374 + $0xb0] sm:$0xff]
    %v9398 = vld [vmem:[%s9374 + $0xb8] sm:$0xff]
    %v9399 = vld [vmem:[%s9374 + $0xc0] sm:$0xff]
    %v9400 = vld [vmem:[%s9374 + $0xc8] sm:$0xff]
    %v9401 = vld [vmem:[%s9374 + $0xd0] sm:$0xff]
    %v9402 = vld [vmem:[%s9374 + $0xd8] sm:$0xff]
    %v9403 = vld [vmem:[%s9374 + $0xe0] sm:$0xff]
    %v9404 = vld [vmem:[%s9374 + $0xe8] sm:$0xff]
    %v9405 = vld [vmem:[%s9374 + $0xf0] sm:$0xff]
    %v9406 = vld [vmem:[%s9374 + $0xf8] sm:$0xff]
    %v9407 = vld [vmem:[%s9374 + $0x100] sm:$0xff]
    %v9408 = vld [vmem:[%s9374 + $0x108] sm:$0xff]
    %v9409 = vld [vmem:[%s9374 + $0x110] sm:$0xff]
    %v9410 = vld [vmem:[%s9374 + $0x118] sm:$0xff]
    %v9411 = vld [vmem:[%s9374 + $0x120] sm:$0xff]
    %v9412 = vld [vmem:[%s9374 + $0x128] sm:$0xff]
    %v9413 = vld [vmem:[%s9374 + $0x130] sm:$0xff]
    %v9414 = vld [vmem:[%s9374 + $0x138] sm:$0xff]
    %v9415 = vld [vmem:[%s9374 + $0x140] sm:$0xff]
    %v9416 = vld [vmem:[%s9374 + $0x148] sm:$0xff]
    %v9417 = vld [vmem:[%s9374 + $0x150] sm:$0xff]
    %v9418 = vld [vmem:[%s9374 + $0x158] sm:$0xff]
    %v9419 = vld [vmem:[%s9374 + $0x160] sm:$0xff]
    %v9420 = vld [vmem:[%s9374 + $0x168] sm:$0xff]
    %v9421 = vld [vmem:[%s9374 + $0x170] sm:$0xff]
    %v9422 = vld [vmem:[%s9374 + $0x178] sm:$0xff]
    %v9423 = vcombine.low %v9304, %v9327
    %v9424 = vcombine.low %v9350, %v9373
    %v9426 = vunpack.c.l.s4 1966171168
    %v9427 = vunpack.c.0.s8 %v9426
    %v9428 = vlaneseq
    %v9429 = vshrl.u32 %v9428, 7
    %v9430 = vsub.s32 %v9427, %v9429
    %v9431 = vrot.slane %v9423, %v9430
    %v9433 = vunpack.c.l.s4 1966171168
    %v9434 = vunpack.c.0.s8 %v9433
    %v9435 = vlaneseq
    %v9436 = vshrl.u32 %v9435, 7
    %v9437 = vsub.s32 %v9434, %v9436
    %v9438 = vrot.slane %v9424, %v9437
    %v9439 = vcombine.low %v9431, %v9438
    %v9440 = vcombine.high %v9431, %v9438
    %v9442 = vunpack.c.l.s4 1966171168
    %v9443 = vunpack.c.0.s8 %v9442
    %v9444 = vlaneseq
    %v9445 = vshrl.u32 %v9444, 7
    %v9446 = vsub.s32 %v9443, %v9445
    %v9447 = vrot.slane %v9439, %v9446
    %v9449 = vunpack.c.l.s4 1966171168
    %v9450 = vunpack.c.0.s8 %v9449
    %v9451 = vlaneseq
    %v9452 = vshrl.u32 %v9451, 7
    %v9453 = vsub.s32 %v9450, %v9452
    %v9454 = vrot.slane %v9440, %v9453
    %v9455 = vcombine.high %v9447, %v9447
    %v9507 = vunpack.c.l.b16 %v9375
    %v9508 = vunpack.c.h.b16 %v9375
    %v9509 = vunpack.c.l.b16 %v9376
    %v9510 = vunpack.c.h.b16 %v9376
    %v9511 = vunpack.c.l.b16 %v9377
    %v9512 = vunpack.c.h.b16 %v9377
    %v9513 = vunpack.c.l.b16 %v9378
    %v9514 = vunpack.c.h.b16 %v9378
    %v9515 = vunpack.c.l.b16 %v9379
    %v9516 = vunpack.c.h.b16 %v9379
    %v9517 = vunpack.c.l.b16 %v9380
    %v9518 = vunpack.c.h.b16 %v9380
    %v9519 = vunpack.c.l.b16 %v9381
    %v9520 = vunpack.c.h.b16 %v9381
    %v9521 = vunpack.c.l.b16 %v9382
    %v9522 = vunpack.c.h.b16 %v9382
    %v9523 = vunpack.c.l.b16 %v9383
    %v9524 = vunpack.c.h.b16 %v9383
    %v9525 = vunpack.c.l.b16 %v9384
    %v9526 = vunpack.c.h.b16 %v9384
    %v9527 = vunpack.c.l.b16 %v9385
    %v9528 = vunpack.c.h.b16 %v9385
    %v9529 = vunpack.c.l.b16 %v9386
    %v9530 = vunpack.c.h.b16 %v9386
    %v9531 = vunpack.c.l.b16 %v9387
    %v9532 = vunpack.c.h.b16 %v9387
    %v9533 = vunpack.c.l.b16 %v9388
    %v9534 = vunpack.c.h.b16 %v9388
    %v9535 = vunpack.c.l.b16 %v9389
    %v9536 = vunpack.c.h.b16 %v9389
    %v9537 = vunpack.c.l.b16 %v9390
    %v9538 = vunpack.c.h.b16 %v9390
    %v9539 = vunpack.c.l.b16 %v9391
    %v9540 = vunpack.c.h.b16 %v9391
    %v9541 = vunpack.c.l.b16 %v9392
    %v9542 = vunpack.c.h.b16 %v9392
    %v9543 = vunpack.c.l.b16 %v9393
    %v9544 = vunpack.c.h.b16 %v9393
    %v9545 = vunpack.c.l.b16 %v9394
    %v9546 = vunpack.c.h.b16 %v9394
    %v9547 = vunpack.c.l.b16 %v9395
    %v9548 = vunpack.c.h.b16 %v9395
    %v9549 = vunpack.c.l.b16 %v9396
    %v9550 = vunpack.c.h.b16 %v9396
    %v9551 = vunpack.c.l.b16 %v9397
    %v9552 = vunpack.c.h.b16 %v9397
    %v9553 = vunpack.c.l.b16 %v9398
    %v9554 = vunpack.c.h.b16 %v9398
    %v9555 = vunpack.c.l.b16 %v9399
    %v9556 = vunpack.c.h.b16 %v9399
    %v9557 = vunpack.c.l.b16 %v9400
    %v9558 = vunpack.c.h.b16 %v9400
    %v9559 = vunpack.c.l.b16 %v9401
    %v9560 = vunpack.c.h.b16 %v9401
    %v9561 = vunpack.c.l.b16 %v9402
    %v9562 = vunpack.c.h.b16 %v9402
    %v9563 = vunpack.c.l.b16 %v9403
    %v9564 = vunpack.c.h.b16 %v9403
    %v9565 = vunpack.c.l.b16 %v9404
    %v9566 = vunpack.c.h.b16 %v9404
    %v9567 = vunpack.c.l.b16 %v9405
    %v9568 = vunpack.c.h.b16 %v9405
    %v9569 = vunpack.c.l.b16 %v9406
    %v9570 = vunpack.c.h.b16 %v9406
    %v9571 = vunpack.c.l.b16 %v9407
    %v9572 = vunpack.c.h.b16 %v9407
    %v9573 = vunpack.c.l.b16 %v9408
    %v9574 = vunpack.c.h.b16 %v9408
    %v9575 = vunpack.c.l.b16 %v9409
    %v9576 = vunpack.c.h.b16 %v9409
    %v9577 = vunpack.c.l.b16 %v9410
    %v9578 = vunpack.c.h.b16 %v9410
    %v9579 = vunpack.c.l.b16 %v9411
    %v9580 = vunpack.c.h.b16 %v9411
    %v9581 = vunpack.c.l.b16 %v9412
    %v9582 = vunpack.c.h.b16 %v9412
    %v9583 = vunpack.c.l.b16 %v9413
    %v9584 = vunpack.c.h.b16 %v9413
    %v9585 = vunpack.c.l.b16 %v9414
    %v9586 = vunpack.c.h.b16 %v9414
    %v9587 = vunpack.c.l.b16 %v9415
    %v9588 = vunpack.c.h.b16 %v9415
    %v9589 = vunpack.c.l.b16 %v9416
    %v9590 = vunpack.c.h.b16 %v9416
    %v9591 = vunpack.c.l.b16 %v9417
    %v9592 = vunpack.c.h.b16 %v9417
    %v9593 = vunpack.c.l.b16 %v9418
    %v9594 = vunpack.c.h.b16 %v9418
    %v9595 = vunpack.c.l.b16 %v9419
    %v9596 = vunpack.c.h.b16 %v9419
    %v9597 = vunpack.c.l.b16 %v9420
    %v9598 = vunpack.c.h.b16 %v9420
    %v9599 = vunpack.c.l.b16 %v9421
    %v9600 = vunpack.c.h.b16 %v9421
    %v9601 = vunpack.c.l.b16 %v9422
    %v9602 = vunpack.c.h.b16 %v9422
    %v9603 = vpack.c.b16 %v9509, %v9507
    %v9604 = vpack.c.b16 %v9510, %v9508
    %v9605 = vpack.c.b16 %v9513, %v9511
    %v9606 = vpack.c.b16 %v9514, %v9512
    %v9607 = vpack.c.b16 %v9517, %v9515
    %v9608 = vpack.c.b16 %v9518, %v9516
    %v9609 = vpack.c.b16 %v9521, %v9519
    %v9610 = vpack.c.b16 %v9522, %v9520
    %v9611 = vpack.c.b16 %v9525, %v9523
    %v9612 = vpack.c.b16 %v9526, %v9524
    %v9613 = vpack.c.b16 %v9529, %v9527
    %v9614 = vpack.c.b16 %v9530, %v9528
    %v9615 = vpack.c.b16 %v9533, %v9531
    %v9616 = vpack.c.b16 %v9534, %v9532
    %v9617 = vpack.c.b16 %v9537, %v9535
    %v9618 = vpack.c.b16 %v9538, %v9536
    %v9619 = vpack.c.b16 %v9541, %v9539
    %v9620 = vpack.c.b16 %v9542, %v9540
    %v9621 = vpack.c.b16 %v9545, %v9543
    %v9622 = vpack.c.b16 %v9546, %v9544
    %v9623 = vpack.c.b16 %v9549, %v9547
    %v9624 = vpack.c.b16 %v9550, %v9548
    %v9625 = vpack.c.b16 %v9553, %v9551
    %v9626 = vpack.c.b16 %v9554, %v9552
    %v9627 = vpack.c.b16 %v9557, %v9555
    %v9628 = vpack.c.b16 %v9558, %v9556
    %v9629 = vpack.c.b16 %v9561, %v9559
    %v9630 = vpack.c.b16 %v9562, %v9560
    %v9631 = vpack.c.b16 %v9565, %v9563
    %v9632 = vpack.c.b16 %v9566, %v9564
    %v9633 = vpack.c.b16 %v9569, %v9567
    %v9634 = vpack.c.b16 %v9570, %v9568
    %v9635 = vpack.c.b16 %v9573, %v9571
    %v9636 = vpack.c.b16 %v9574, %v9572
    %v9637 = vpack.c.b16 %v9577, %v9575
    %v9638 = vpack.c.b16 %v9578, %v9576
    %v9639 = vpack.c.b16 %v9581, %v9579
    %v9640 = vpack.c.b16 %v9582, %v9580
    %v9641 = vpack.c.b16 %v9585, %v9583
    %v9642 = vpack.c.b16 %v9586, %v9584
    %v9643 = vpack.c.b16 %v9589, %v9587
    %v9644 = vpack.c.b16 %v9590, %v9588
    %v9645 = vpack.c.b16 %v9593, %v9591
    %v9646 = vpack.c.b16 %v9594, %v9592
    %v9647 = vpack.c.b16 %v9597, %v9595
    %v9648 = vpack.c.b16 %v9598, %v9596
    %v9649 = vpack.c.b16 %v9601, %v9599
    %v9650 = vpack.c.b16 %v9602, %v9600
    %9699 = vmatprep.subr.bf16.mxu0 %v9604
    %9700 = vmatpush1.bf16.msra.mxu0 %v9603
    %9701 = vmatprep.subr.bf16.mxu0 %v9606
    %9702 = vmatpush1.bf16.msra.mxu0 %v9605
    %9703 = vmatprep.subr.bf16.mxu0 %v9608
    %9704 = vmatpush1.bf16.msra.mxu0 %v9607
    %9705 = vmatprep.subr.bf16.mxu0 %v9610
    %9706 = vmatpush1.bf16.msra.mxu0 %v9609
    %9707 = vmatprep.subr.bf16.mxu0 %v9612
    %9708 = vmatpush1.bf16.msra.mxu0 %v9611
    %9709 = vmatprep.subr.bf16.mxu0 %v9614
    %9710 = vmatpush1.bf16.msra.mxu0 %v9613
    %9711 = vmatprep.subr.bf16.mxu0 %v9616
    %9712 = vmatpush1.bf16.msra.mxu0 %v9615
    %9713 = vmatprep.subr.bf16.mxu0 %v9618
    %9714 = vmatpush1.bf16.msra.mxu0 %v9617
    %9715 = vmatprep.subr.bf16.mxu0 %v9620
    %9716 = vmatpush1.bf16.msra.mxu0 %v9619
    %9717 = vmatprep.subr.bf16.mxu0 %v9622
    %9718 = vmatpush1.bf16.msra.mxu0 %v9621
    %9719 = vmatprep.subr.bf16.mxu0 %v9624
    %9720 = vmatpush1.bf16.msra.mxu0 %v9623
    %9721 = vmatprep.subr.bf16.mxu0 %v9626
    %9722 = vmatpush1.bf16.msra.mxu0 %v9625
    %9723 = vmatprep.subr.bf16.mxu0 %v9628
    %9724 = vmatpush1.bf16.msra.mxu0 %v9627
    %9725 = vmatprep.subr.bf16.mxu0 %v9630
    %9726 = vmatpush1.bf16.msra.mxu0 %v9629
    %9727 = vmatprep.subr.bf16.mxu0 %v9632
    %9728 = vmatpush1.bf16.msra.mxu0 %v9631
    %9729 = vmatprep.subr.bf16.mxu0 %v9634
    %9730 = vmatpush1.bf16.msra.mxu0 %v9633
    %9731 = vmatprep.mubr.bf16.mxu0 %v9454
    %9732 = vmatmul.mubr.bf16.gmra.mrb[0].mxu0 %v9447
    %v9733 = vpop.f32.mrb[0].mxu0
    %v9734 = vadd.f32 0.0, %v9733
    %v9735 = vpop.f32.mrb[0].mxu0
    %v9736 = vadd.f32 0.0, %v9735
    %v9737 = vpop.f32.mrb[0].mxu0
    %v9738 = vpop.f32.mrb[0].mxu0
    %9739 = vdwg.mxu0
    %9740 = vmatprep.subr.bf16.mxu0 %v9636
    %9741 = vmatpush1.bf16.msra.mxu0 %v9635
    %9742 = vmatprep.subr.bf16.mxu0 %v9638
    %9743 = vmatpush1.bf16.msra.mxu0 %v9637
    %9744 = vmatprep.subr.bf16.mxu0 %v9640
    %9745 = vmatpush1.bf16.msra.mxu0 %v9639
    %9746 = vmatprep.subr.bf16.mxu0 %v9642
    %9747 = vmatpush1.bf16.msra.mxu0 %v9641
    %9748 = vmatprep.subr.bf16.mxu0 %v9644
    %9749 = vmatpush1.bf16.msra.mxu0 %v9643
    %9750 = vmatprep.subr.bf16.mxu0 %v9646
    %9751 = vmatpush1.bf16.msra.mxu0 %v9645
    %9752 = vmatprep.subr.bf16.mxu0 %v9648
    %9753 = vmatpush1.bf16.msra.mxu0 %v9647
    %9754 = vmatprep.subr.bf16.mxu0 %v9650
    %9755 = vmatpush1.bf16.msra.mxu0 %v9649
    %9756 = vmatprep.subr.bf16.mxu0 0
    %9757 = vmatpush1.bf16.msra.mxu0 0
    %9758 = vmatprep.subr.bf16.mxu0 0
    %9759 = vmatpush1.bf16.msra.mxu0 0
    %9760 = vmatprep.subr.bf16.mxu0 0
    %9761 = vmatpush1.bf16.msra.mxu0 0
    %9762 = vmatprep.subr.bf16.mxu0 0
    %9763 = vmatpush1.bf16.msra.mxu0 0
    %9764 = vmatprep.subr.bf16.mxu0 0
    %9765 = vmatpush1.bf16.msra.mxu0 0
    %9766 = vmatprep.subr.bf16.mxu0 0
    %9767 = vmatpush1.bf16.msra.mxu0 0
    %9768 = vmatprep.subr.bf16.mxu0 0
    %9769 = vmatpush1.bf16.msra.mxu0 0
    %9770 = vmatprep.subr.bf16.mxu0 0
    %9771 = vmatpush1.bf16.msra.mxu0 0
    %9772 = vmatprep.mubr.bf16.mxu0 0
    %9773 = vmatmul.mubr.bf16.gmra.mrb[0].mxu0 %v9455
    %v9774 = vpop.f32.mrb[0].mxu0
    %v9775 = vadd.f32 %v9734, %v9774
    %v9776 = vpop.f32.mrb[0].mxu0
    %v9777 = vadd.f32 %v9736, %v9776
    %v9778 = vpop.f32.mrb[0].mxu0
    %v9779 = vpop.f32.mrb[0].mxu0
    %9780 = vdwg.mxu0
    %v9781 = vadd.f32 %v9163, %v9775
    %v9782 = vadd.f32 %v9165, %v9777
    %v9783 = vld [vmem:[%s8] ss:$4 sm:$0x3]
    %v9785 = vlaneseq
    %v9786 = vshrl.u32 %v9785, 7
    %v9787 = vsub.s32 0, %v9786
    %v9788 = vrot.slane %v9783, %v9787
    %v9789 = vlaneseq
    %v9790 = vshrl.u32 %v9789, 7
    %v9791 = vsub.s32 1, %v9790
    %v9792 = vrot.slane %v9783, %v9791
    %v9795 = vadd.f32 %v9781, %v9788
    %v9796 = vadd.f32 %v9782, %v9792
    %v9797 = vmax.f32 %v9795, 0.0
    %v9798 = vmax.f32 %v9796, 0.0
    %s9799 = scalar_lea.vmem %s8, 1
    %v9800 = vld [vmem:[%s9799] ss:$4 sm:$0x3]
    %v9802 = vlaneseq
    %v9803 = vshrl.u32 %v9802, 7
    %v9804 = vsub.s32 0, %v9803
    %v9805 = vrot.slane %v9800, %v9804
    %v9806 = vlaneseq
    %v9807 = vshrl.u32 %v9806, 7
    %v9808 = vsub.s32 1, %v9807
    %v9809 = vrot.slane %v9800, %v9808
    %v9812 = vmul.f32 %v9797, %v9805
    %v9813 = vmul.f32 %v9798, %v9809
    %s9814 = scalar_lea.vmem %s8, 2
    %v9815 = vld [vmem:[%s9814] ss:$4 sm:$0x3]
    %v9817 = vlaneseq
    %v9818 = vshrl.u32 %v9817, 7
    %v9819 = vsub.s32 0, %v9818
    %v9820 = vrot.slane %v9815, %v9819
    %v9821 = vlaneseq
    %v9822 = vshrl.u32 %v9821, 7
    %v9823 = vsub.s32 1, %v9822
    %v9824 = vrot.slane %v9815, %v9823
    %v9827 = vadd.f32 %v9812, %v9820
    %v9828 = vadd.f32 %v9813, %v9824
    %v9831 = vcombine.low %v9827, %v9828
    %v9832 = vcombine.high %v9827, %v9828
    %v9835 = vcombine.high %v9831, %v9831
    %v9836 = vcombine.high %v9832, %v9832
    %v9839 = vsel %vm7634, %v9831, 0.0
    %v9840 = vrot.slane %v9839, 4
    %v9841 = vadd.f32 %v9839, %v9840
    %v9842 = vrot.slane %v9841, 2
    %v9843 = vadd.f32 %v9841, %v9842
    %v9844 = vrot.slane %v9843, 1
    %v9845 = vadd.f32 %v9843, %v9844
    %v9846 = vsel %vm7634, %v9835, 0.0
    %v9847 = vrot.slane %v9846, 4
    %v9848 = vadd.f32 %v9846, %v9847
    %v9849 = vrot.slane %v9848, 2
    %v9850 = vadd.f32 %v9848, %v9849
    %v9851 = vrot.slane %v9850, 1
    %v9852 = vadd.f32 %v9850, %v9851
    %v9853 = vsel %vm7634, %v9832, 0.0
    %v9854 = vrot.slane %v9853, 4
    %v9855 = vadd.f32 %v9853, %v9854
    %v9856 = vrot.slane %v9855, 2
    %v9857 = vadd.f32 %v9855, %v9856
    %v9858 = vrot.slane %v9857, 1
    %v9859 = vadd.f32 %v9857, %v9858
    %v9860 = vsel %vm7634, %v9836, 0.0
    %v9861 = vrot.slane %v9860, 4
    %v9862 = vadd.f32 %v9860, %v9861
    %v9863 = vrot.slane %v9862, 2
    %v9864 = vadd.f32 %v9862, %v9863
    %v9865 = vrot.slane %v9864, 1
    %v9866 = vadd.f32 %v9864, %v9865
    %v9867 = vrcp.pop 4.0
    %v9868 = vmul.f32 %v9845, %v9867
    %v9869 = vmul.f32 %v9852, %v9867
    %v9870 = vmul.f32 %v9859, %v9867
    %v9871 = vmul.f32 %v9866, %v9867
    %v9872 = vld [vmem:[%s9] sm:$0xff]
    %v9873 = vld [vmem:[%s9 + $0x8] sm:$0xff]
    %v9874 = vld [vmem:[%s9 + $0x10] sm:$0xff]
    %v9875 = vld [vmem:[%s9 + $0x18] sm:$0xff]
    %v9876 = vld [vmem:[%s9 + $0x20] sm:$0xff]
    %v9877 = vld [vmem:[%s9 + $0x28] sm:$0xff]
    %v9878 = vld [vmem:[%s9 + $0x30] sm:$0xff]
    %v9879 = vld [vmem:[%s9 + $0x38] sm:$0xff]
    %v9880 = vld [vmem:[%s9 + $0x40] sm:$0xff]
    %v9881 = vld [vmem:[%s9 + $0x48] sm:$0xff]
    %v9882 = vld [vmem:[%s9 + $0x50] sm:$0xff]
    %v9883 = vld [vmem:[%s9 + $0x58] sm:$0xff]
    %v9884 = vld [vmem:[%s9 + $0x60] sm:$0xff]
    %v9885 = vld [vmem:[%s9 + $0x68] sm:$0xff]
    %v9886 = vld [vmem:[%s9 + $0x70] sm:$0xff]
    %v9887 = vld [vmem:[%s9 + $0x78] sm:$0xff]
    %v9888 = vld [vmem:[%s9 + $0x80] sm:$0xff]
    %v9889 = vld [vmem:[%s9 + $0x88] sm:$0xff]
    %v9890 = vld [vmem:[%s9 + $0x90] sm:$0xff]
    %v9891 = vld [vmem:[%s9 + $0x98] sm:$0xff]
    %v9892 = vld [vmem:[%s9 + $0xa0] sm:$0xff]
    %v9893 = vld [vmem:[%s9 + $0xa8] sm:$0xff]
    %v9894 = vld [vmem:[%s9 + $0xb0] sm:$0xff]
    %v9895 = vld [vmem:[%s9 + $0xb8] sm:$0xff]
    %v9896 = vld [vmem:[%s9 + $0xc0] sm:$0xff]
    %v9897 = vld [vmem:[%s9 + $0xc8] sm:$0xff]
    %v9898 = vld [vmem:[%s9 + $0xd0] sm:$0xff]
    %v9899 = vld [vmem:[%s9 + $0xd8] sm:$0xff]
    %v9900 = vld [vmem:[%s9 + $0xe0] sm:$0xff]
    %v9901 = vld [vmem:[%s9 + $0xe8] sm:$0xff]
    %v9902 = vld [vmem:[%s9 + $0xf0] sm:$0xff]
    %v9903 = vld [vmem:[%s9 + $0xf8] sm:$0xff]
    %v9904 = vld [vmem:[%s10] sm:$0x1]
    %v9906 = vlaneseq
    %v9907 = vshrl.u32 %v9906, 7
    %v9908 = vsub.s32 0, %v9907
    %v9909 = vrot.slane %v9904, %v9908
    %vm9915 = vcmask 1041409
    %v9916 = vsel %vm9915, %v9870, %v9868
    %v9917 = vsel %vm9915, %v9871, %v9869
    %9920 = vmatprep.subr.mxu0 0.0
    %9921 = vmatpush1.msra.mxu0 %v9872
    %9922 = vmatprep.subr.mxu0 0.0
    %9923 = vmatpush1.msra.mxu0 %v9873
    %9924 = vmatprep.subr.mxu0 0.0
    %9925 = vmatpush1.msra.mxu0 %v9874
    %9926 = vmatprep.subr.mxu0 0.0
    %9927 = vmatpush1.msra.mxu0 %v9875
    %9928 = vmatprep.subr.mxu0 0.0
    %9929 = vmatpush1.msra.mxu0 %v9876
    %9930 = vmatprep.subr.mxu0 0.0
    %9931 = vmatpush1.msra.mxu0 %v9877
    %9932 = vmatprep.subr.mxu0 0.0
    %9933 = vmatpush1.msra.mxu0 %v9878
    %9934 = vmatprep.subr.mxu0 0.0
    %9935 = vmatpush1.msra.mxu0 %v9879
    %9936 = vmatprep.subr.mxu0 0.0
    %9937 = vmatpush1.msra.mxu0 %v9880
    %9938 = vmatprep.subr.mxu0 0.0
    %9939 = vmatpush1.msra.mxu0 %v9881
    %9940 = vmatprep.subr.mxu0 0.0
    %9941 = vmatpush1.msra.mxu0 %v9882
    %9942 = vmatprep.subr.mxu0 0.0
    %9943 = vmatpush1.msra.mxu0 %v9883
    %9944 = vmatprep.subr.mxu0 0.0
    %9945 = vmatpush1.msra.mxu0 %v9884
    %9946 = vmatprep.subr.mxu0 0.0
    %9947 = vmatpush1.msra.mxu0 %v9885
    %9948 = vmatprep.subr.mxu0 0.0
    %9949 = vmatpush1.msra.mxu0 %v9886
    %9950 = vmatprep.subr.mxu0 0.0
    %9951 = vmatpush1.msra.mxu0 %v9887
    %9952 = vmatprep.subr.mxu0 0.0
    %9953 = vmatpush1.msra.mxu0 %v9888
    %9954 = vmatprep.subr.mxu0 0.0
    %9955 = vmatpush1.msra.mxu0 %v9889
    %9956 = vmatprep.subr.mxu0 0.0
    %9957 = vmatpush1.msra.mxu0 %v9890
    %9958 = vmatprep.subr.mxu0 0.0
    %9959 = vmatpush1.msra.mxu0 %v9891
    %9960 = vmatprep.subr.mxu0 0.0
    %9961 = vmatpush1.msra.mxu0 %v9892
    %9962 = vmatprep.subr.mxu0 0.0
    %9963 = vmatpush1.msra.mxu0 %v9893
    %9964 = vmatprep.subr.mxu0 0.0
    %9965 = vmatpush1.msra.mxu0 %v9894
    %9966 = vmatprep.subr.mxu0 0.0
    %9967 = vmatpush1.msra.mxu0 %v9895
    %9968 = vmatprep.subr.mxu0 0.0
    %9969 = vmatpush1.msra.mxu0 %v9896
    %9970 = vmatprep.subr.mxu0 0.0
    %9971 = vmatpush1.msra.mxu0 %v9897
    %9972 = vmatprep.subr.mxu0 0.0
    %9973 = vmatpush1.msra.mxu0 %v9898
    %9974 = vmatprep.subr.mxu0 0.0
    %9975 = vmatpush1.msra.mxu0 %v9899
    %9976 = vmatprep.subr.mxu0 0.0
    %9977 = vmatpush1.msra.mxu0 %v9900
    %9978 = vmatprep.subr.mxu0 0.0
    %9979 = vmatpush1.msra.mxu0 %v9901
    %9980 = vmatprep.subr.mxu0 0.0
    %9981 = vmatpush1.msra.mxu0 %v9902
    %9982 = vmatprep.subr.mxu0 0.0
    %9983 = vmatpush1.msra.mxu0 %v9903
    %9984 = vmatprep.mubr.f32.mxu0 %v9917
    %9985 = vmatmul.mubr.f32.gmra.mrb[0].mxu0 %v9916
    %v9986 = vpop.f32.mrb[0].mxu0
    %v9987 = vadd.f32 %v9909, %v9986
    %v9988 = vpop.f32.mrb[0].mxu0
    %9989 = vdwg.mxu0
    %vm9990 = vcmask 50176
    %9991 = vst.msk [vmem:[#allocation5] sm:$0x3] %vm9990, %v9987
    // Predicated region
    $region46: #{simplified_st_model_forward.1} parent=1 // pred_check
      _
    $region47: #{simplified_st_model_forward.1} parent=1 // pred_check_branch
      %9993 = sbr.rel (0) target = $region49
    $region48: #{simplified_st_model_forward.1} parent=1 // pred_region
      %s9995 = ssub.s32 32, 32
      %9996 = vsyncadd [#allocation6], %s9995
      %s9998 = sshll.u32 [#allocation5], 4
      %s9999 = int_to_ptr.vmem [resolvable:$true] %s9998
      %10001 = dma.vmem_to_hbm [thread:$0]  %s9999, 32, %s11, [#allocation6]
    $region49: #{simplified_st_model_forward.1} parent=1 // pred_fallthru
      _
    // Predicated region
    $region50: #{simplified_st_model_forward.1} parent=1 // pred_check
      _
    $region51: #{simplified_st_model_forward.1} parent=1 // pred_check_branch
      %10003 = sbr.rel (0) target = $region53
    $region52: #{simplified_st_model_forward.1} parent=1 // pred_region
      %10004 = dma.done [#allocation6], 32
    $region53: #{simplified_st_model_forward.1} parent=1 // pred_fallthru
      _
    %10005 = vsyncpa [#allocation6], 1

</llo_original>
